<compile_context>
chip_gen: v7x
topology: tpu7x:2x2x1
jax: 0.10.0
libtpu: 0.0.40
codegen_flags: <defaults>
</compile_context>

<pallas_src>
import functools

import jax
import jax.numpy as jnp
from jax.experimental import pallas as pl
from jax.experimental.pallas import tpu as pltpu

EPS = 1e-5


def _layernorm(v, g, b):
    # Centered variance (robust to large activation means, matches torch LN).
    mu = jnp.mean(v, axis=-1, keepdims=True)
    c = v - mu
    var = jnp.mean(c * c, axis=-1, keepdims=True)
    return c * jax.lax.rsqrt(var + EPS) * g + b


def _block_kernel(H,
                  x_ref,                 # (TR, D)  bf16 activation row tile
                  ng_ref, nb_ref,        # norm (pre-mixer) gamma/beta   (1, D)  f32
                  mw_ref, mb_ref,        # mixer Linear W (D, D) bf16, b (1, D)  f32
                  mg_ref, mbeta_ref,     # norm_mlp gamma/beta           (1, D)  f32
                  w12_ref, b12_ref,      # fused SwiGLU w1|w2 (D, 2H) bf16, (1, 2H) f32
                  w3_ref, b3_ref,        # SwiGLU w3 (H, D) bf16, (1, D) f32
                  out_ref):              # (TR, D)  bf16
    x = x_ref[...].astype(jnp.float32)                        # (TR, D)

    # ---- norm + mixer (token-wise Linear stand-in) + residual ----
    # The prepended mean token and the flip/unflip pair of the original module
    # are exact no-ops for a token-wise Linear mixer and are folded out here.
    xn = _layernorm(x, ng_ref[...], nb_ref[...])
    mixed = jnp.dot(xn.astype(jnp.bfloat16), mw_ref[...],
                    preferred_element_type=jnp.float32) + mb_ref[...]
    h = x + mixed                                             # residual 1 (drop_path = Identity)

    # ---- norm_mlp + SwiGLU (fused w1/w2 matmul) + residual ----
    hn = _layernorm(h, mg_ref[...], mbeta_ref[...])
    x12 = jnp.dot(hn.astype(jnp.bfloat16), w12_ref[...],
                  preferred_element_type=jnp.float32) + b12_ref[...]
    x1 = x12[:, :H]
    x2 = x12[:, H:]
    # Gate + cast to bf16 right after the lane split so the (TR, 2H) f32
    # temporary retires early (v5e has a single vector-store slot).
    hidden = ((x1 * jax.nn.sigmoid(x1)) * x2).astype(jnp.bfloat16)
    mlp_out = jnp.dot(hidden, w3_ref[...],
                      preferred_element_type=jnp.float32) + b3_ref[...]

    out_ref[...] = (h + mlp_out).astype(out_ref.dtype)        # residual 2


def _vmem_capacity_bytes():
    try:
        return int(pltpu.get_tpu_info().vmem_capacity_bytes)
    except Exception:
        return 64 * 2**20          # conservative fallback: v7x per-TensorCore VMEM


def _weight_bytes(D, H):
    # bf16 resident weights + f32 norm/bias vectors.
    return (D * D + 3 * H * D) * 2 + (6 * D + 2 * H) * 4


def _vmem_need_bytes(D, H, TR):
    acts = 2 * 2 * TR * D * 2                      # in/out tiles, double-buffered, bf16
    interm = (5 * TR * D + 3 * TR * H) * 4         # f32 in-kernel temporaries (x12 dominates)
    return _weight_bytes(D, H) + acts + interm


def _pick_row_tile(rows, D, H, vmem_budget):
    cands = [t for t in (1024, 512, 256, 128, 64, 32, 16, 8)
             if t <= rows and rows % t == 0
             and _vmem_need_bytes(D, H, t) <= vmem_budget]
    if not cands:
        return rows                                # whole-array block, single grid step
    for t in cands:                                # descending
        # Prefer >=2 grid points (both v7x TensorCores busy) while keeping a
        # full 256-row MXU M tile.
        if rows // t >= 2 and t >= 256:
            return t
    return cands[0]


def prepare_params(params):
    """One-time weight prep (hoisted out of the forward so no per-call cast/concat):
    bf16 matmul operands, fused w1|w2, f32 biases / norm vectors."""
    D, H = params["w1"].shape
    assert D % 128 == 0, "dim must be lane-aligned (multiple of 128)"
    # H % 128 keeps the x12[:, :H]/x12[:, H:] lane split and the w3 contraction
    # dim tile-aligned; H % 256 is preferred on v6e/v7x (256-wide MXU K).
    assert H % 128 == 0, "SwiGLU hidden dim must be a multiple of 128"
    f32, bf16 = jnp.float32, jnp.bfloat16
    return {
        "D": D, "H": H,
        "norm_g": params["norm_g"].astype(f32),
        "norm_b": params["norm_b"].astype(f32),
        "mix_w": params["mix_w"].astype(bf16),
        "mix_b": params["mix_b"].astype(f32),
        "nmlp_g": params["nmlp_g"].astype(f32),
        "nmlp_b": params["nmlp_b"].astype(f32),
        "w12": jnp.concatenate([params["w1"], params["w2"]], axis=1).astype(bf16),
        "b12": jnp.concatenate([params["b1"], params["b2"]], axis=1).astype(f32),
        "w3": params["w3"].astype(bf16),
        "b3": params["b3"].astype(f32),
    }


def block_forward(hidden_states, prepared, flip=False, row_tile=None):
    """hidden_states: (B, L, D), bf16 (recommended) or f32.  Returns same shape/dtype.

    `flip` is accepted for interface parity with the torch module; for the
    token-wise Linear stand-in mixer the flip/unflip pair cancels exactly, so
    it does not change the output (verified against the reference below).
    """
    del flip  # folded out -- see TODO(synk) at top of file.
    B, L, D = hidden_states.shape
    H = prepared["H"]
    assert D == prepared["D"]

    # Flatten (B, L) into one row axis so the MXU M tile is independent of L/B.
    rows = B * L
    x2d = hidden_states.reshape(rows, D)

    vmem_cap = _vmem_capacity_bytes()
    vmem_budget = int(0.80 * vmem_cap)
    # TODO(synk): for production dims on v7x (64 MiB VMEM) where the resident
    #             weights no longer fit, stream w12 (N-chunks) / w3 (K-chunks)
    #             from HBM via an inner grid axis instead of VMEM residents.
    assert _weight_bytes(D, H) <= vmem_budget, (
        "resident weights exceed the VMEM budget; weight streaming needed")

    TR = row_tile or _pick_row_tile(rows, D, H, vmem_budget)
    assert rows % TR == 0, "B*L must be divisible by the chosen row tile"
    vmem_limit = int(min(vmem_budget,
                         max(2 * _vmem_need_bytes(D, H, TR), 32 * 2**20)))

    def vmem_resident():
        # Whole array, single-buffered, grid-invariant VMEM resident.
        return pl.BlockSpec(memory_space=pltpu.MemorySpace.VMEM)

    grid_spec = pltpu.PrefetchScalarGridSpec(
        num_scalar_prefetch=0,
        grid=(rows // TR,),
        in_specs=[
            pl.BlockSpec((TR, D), lambda r: (r, 0)),   # activation row tile
            vmem_resident(), vmem_resident(),          # norm gamma/beta
            vmem_resident(), vmem_resident(),          # mixer W / b
            vmem_resident(), vmem_resident(),          # norm_mlp gamma/beta
            vmem_resident(), vmem_resident(),          # fused w12 / b12
            vmem_resident(), vmem_resident(),          # w3 / b3
        ],
        out_specs=pl.BlockSpec((TR, D), lambda r: (r, 0)),
    )

    kernel = functools.partial(_block_kernel, H)
    out2d = pl.pallas_call(
        kernel,
        out_shape=jax.ShapeDtypeStruct((rows, D), hidden_states.dtype),
        grid_spec=grid_spec,
        compiler_params=pltpu.CompilerParams(
            dimension_semantics=("parallel",),
            vmem_limit_bytes=vmem_limit),
    )(
        x2d,
        prepared["norm_g"], prepared["norm_b"],
        prepared["mix_w"], prepared["mix_b"],
        prepared["nmlp_g"], prepared["nmlp_b"],
        prepared["w12"], prepared["b12"],
        prepared["w3"], prepared["b3"],
    )
    return out2d.reshape(B, L, D)


def block_forward_ref(x, p, flip=False):
    """Pure-JAX f32 reference implementing the full original module semantics
    (mean-token prepend + optional flip), for correctness checking."""
    xn = _layernorm(x, p["norm_g"], p["norm_b"])
    if flip:
        xn = jnp.concatenate([jnp.flip(xn[:, :-1], axis=1), xn[:, -1:]], axis=1)
    xcat = jnp.concatenate([jnp.mean(xn, axis=1, keepdims=True), xn], axis=1)
    mixed = (xcat @ p["mix_w"] + p["mix_b"])[:, 1:]
    if flip:
        mixed = jnp.concatenate(
            [jnp.flip(mixed[:, :-1], axis=1), mixed[:, -1:]], axis=1)
    h = x + mixed
    hn = _layernorm(h, p["nmlp_g"], p["nmlp_b"])
    x1 = hn @ p["w1"] + p["b1"]
    x2 = hn @ p["w2"] + p["b2"]
    hid = (x1 * jax.nn.sigmoid(x1)) * x2
    return h + (hid @ p["w3"] + p["b3"])


def init_params(key, dim, hidden):
    ks = jax.random.split(key, 6)
    scale_d = 1.0 / jnp.sqrt(dim)
    scale_h = 1.0 / jnp.sqrt(hidden)
    return {
        "norm_g": jnp.ones((1, dim), jnp.float32),
        "norm_b": jnp.zeros((1, dim), jnp.float32),
        "mix_w": jax.random.normal(ks[0], (dim, dim), jnp.float32) * scale_d,
        "mix_b": jax.random.normal(ks[1], (1, dim), jnp.float32) * 0.02,
        "nmlp_g": jnp.ones((1, dim), jnp.float32),
        "nmlp_b": jnp.zeros((1, dim), jnp.float32),
        "w1": jax.random.normal(ks[2], (dim, hidden), jnp.float32) * scale_d,
        "b1": jnp.zeros((1, hidden), jnp.float32),
        "w2": jax.random.normal(ks[3], (dim, hidden), jnp.float32) * scale_d,
        "b2": jnp.zeros((1, hidden), jnp.float32),
        "w3": jax.random.normal(ks[4], (hidden, dim), jnp.float32) * scale_h,
        "b3": jnp.zeros((1, dim), jnp.float32),
    }


if __name__ == "__main__":
    # Small but lane-dense demo shapes: D multiple of 128, H = 2.5*D also a
    # multiple of 128, and B*L large enough that the flattened row grid has
    # >= 2 parallel 256-row tiles (both v7x TensorCores get work).
    B, L, D = 2, 256, 256
    H = int(D * 2.5)          # 640, as in SwiGLU(dim, int(dim * 2.5))

    key = jax.random.PRNGKey(0)
    k_x, k_p = jax.random.split(key)
    x_f32 = jax.random.normal(k_x, (B, L, D), jnp.float32)
    params = init_params(k_p, D, H)

    prepared = prepare_params(params)       # one-time weight prep (hoisted out of the call)
    x = x_f32.astype(jnp.bfloat16)          # bf16 activation I/O at the kernel boundary

    # bf16 matmul operands / bf16 activation I/O with f32 accumulation ->
    # looser tolerance vs the f32 reference.
    ATOL, RTOL = 1e-1, 2e-2
    x_ref_in = x.astype(jnp.float32)        # reference sees the same (rounded) input

    out = jax.block_until_ready(block_forward(x, prepared, flip=False))
    assert out.shape == (B, L, D) and out.dtype == x.dtype
    ref = block_forward_ref(x_ref_in, params, flip=False)
    out_f32 = out.astype(jnp.float32)
    err = float(jnp.max(jnp.abs(out_f32 - ref)))
    assert jnp.allclose(out_f32, ref, atol=ATOL, rtol=RTOL), (
        f"flip=False mismatch, max err {err}")

    out_flip = jax.block_until_ready(block_forward(x, prepared, flip=True))
    ref_flip = block_forward_ref(x_ref_in, params, flip=True)
    out_flip_f32 = out_flip.astype(jnp.float32)
    err_f = float(jnp.max(jnp.abs(out_flip_f32 - ref_flip)))
    assert jnp.allclose(out_flip_f32, ref_flip, atol=ATOL, rtol=RTOL), (
        f"flip=True mismatch, max err {err_f}")

    print("KERNEL_OK")
</pallas_src>

<mosaic_0001>
module attributes {stable_mosaic.version = 11 : i64} {
  func.func @_block_kernel(%arg0: i32, %arg1: memref<256x256xbf16, #tpu.memory_space<vmem>>, %arg2: memref<1x256xf32, #tpu.memory_space<vmem>>, %arg3: memref<1x256xf32, #tpu.memory_space<vmem>>, %arg4: memref<256x256xbf16, #tpu.memory_space<vmem>>, %arg5: memref<1x256xf32, #tpu.memory_space<vmem>>, %arg6: memref<1x256xf32, #tpu.memory_space<vmem>>, %arg7: memref<1x256xf32, #tpu.memory_space<vmem>>, %arg8: memref<256x1280xbf16, #tpu.memory_space<vmem>>, %arg9: memref<1x1280xf32, #tpu.memory_space<vmem>>, %arg10: memref<640x256xbf16, #tpu.memory_space<vmem>>, %arg11: memref<1x256xf32, #tpu.memory_space<vmem>>, %arg12: memref<256x256xbf16, #tpu.memory_space<vmem>>) attributes {dimension_semantics = [#tpu.dimension_semantics<parallel>], iteration_bounds = array<i64: 2>, scalar_prefetch = 0 : i64, scratch_operands = 0 : i64, tpu.core_type = #tpu.core_type<tc>, window_params = [{transform_indices = @transform_0, window_bounds = array<i64: 256, 256>}, {pipeline_mode = #tpu.pipeline_mode<synchronous>, transform_indices = @transform_1, window_bounds = array<i64: 1, 256>}, {pipeline_mode = #tpu.pipeline_mode<synchronous>, transform_indices = @transform_2, window_bounds = array<i64: 1, 256>}, {pipeline_mode = #tpu.pipeline_mode<synchronous>, transform_indices = @transform_3, window_bounds = array<i64: 256, 256>}, {pipeline_mode = #tpu.pipeline_mode<synchronous>, transform_indices = @transform_4, window_bounds = array<i64: 1, 256>}, {pipeline_mode = #tpu.pipeline_mode<synchronous>, transform_indices = @transform_5, window_bounds = array<i64: 1, 256>}, {pipeline_mode = #tpu.pipeline_mode<synchronous>, transform_indices = @transform_6, window_bounds = array<i64: 1, 256>}, {pipeline_mode = #tpu.pipeline_mode<synchronous>, transform_indices = @transform_7, window_bounds = array<i64: 256, 1280>}, {pipeline_mode = #tpu.pipeline_mode<synchronous>, transform_indices = @transform_8, window_bounds = array<i64: 1, 1280>}, {pipeline_mode = #tpu.pipeline_mode<synchronous>, transform_indices = @transform_9, window_bounds = array<i64: 640, 256>}, {pipeline_mode = #tpu.pipeline_mode<synchronous>, transform_indices = @transform_10, window_bounds = array<i64: 1, 256>}, {transform_indices = @transform_11, window_bounds = array<i64: 256, 256>}]} {
    %c0 = arith.constant 0 : index
    %c0_0 = arith.constant 0 : index
    %0 = vector.load %arg1[%c0, %c0_0] : memref<256x256xbf16, #tpu.memory_space<vmem>>, vector<256x256xbf16>
    %1 = arith.extf %0 : vector<256x256xbf16> to vector<256x256xf32>
    %c0_1 = arith.constant 0 : index
    %c0_2 = arith.constant 0 : index
    %2 = vector.load %arg2[%c0_1, %c0_2] : memref<1x256xf32, #tpu.memory_space<vmem>>, vector<1x256xf32>
    %c0_3 = arith.constant 0 : index
    %c0_4 = arith.constant 0 : index
    %3 = vector.load %arg3[%c0_3, %c0_4] : memref<1x256xf32, #tpu.memory_space<vmem>>, vector<1x256xf32>
    %cst = arith.constant dense<0.000000e+00> : vector<256xf32>
    %4 = vector.multi_reduction <add>, %1, %cst [1] : vector<256x256xf32> to vector<256xf32>
    %5 = vector.shape_cast %4 : vector<256xf32> to vector<256x1xf32>
    %cst_5 = arith.constant 2.560000e+02 : f32
    %6 = vector.broadcast %cst_5 : f32 to vector<256x1xf32>
    %7 = arith.divf %5, %6 : vector<256x1xf32>
    %8 = vector.broadcast %7 : vector<256x1xf32> to vector<256x256xf32>
    %9 = arith.subf %1, %8 : vector<256x256xf32>
    %10 = arith.mulf %9, %9 : vector<256x256xf32>
    %cst_6 = arith.constant dense<0.000000e+00> : vector<256xf32>
    %11 = vector.multi_reduction <add>, %10, %cst_6 [1] : vector<256x256xf32> to vector<256xf32>
    %12 = vector.shape_cast %11 : vector<256xf32> to vector<256x1xf32>
    %cst_7 = arith.constant 2.560000e+02 : f32
    %13 = vector.broadcast %cst_7 : f32 to vector<256x1xf32>
    %14 = arith.divf %12, %13 : vector<256x1xf32>
    %cst_8 = arith.constant 9.99999974E-6 : f32
    %15 = vector.broadcast %cst_8 : f32 to vector<256x1xf32>
    %16 = arith.addf %14, %15 : vector<256x1xf32>
    %17 = math.rsqrt %16 : vector<256x1xf32>
    %18 = vector.broadcast %17 : vector<256x1xf32> to vector<256x256xf32>
    %19 = arith.mulf %9, %18 : vector<256x256xf32>
    %20 = vector.broadcast %2 : vector<1x256xf32> to vector<256x256xf32>
    %21 = arith.mulf %19, %20 : vector<256x256xf32>
    %22 = vector.broadcast %3 : vector<1x256xf32> to vector<256x256xf32>
    %23 = arith.addf %21, %22 : vector<256x256xf32>
    %24 = arith.truncf %23 : vector<256x256xf32> to vector<256x256xbf16>
    %c0_9 = arith.constant 0 : index
    %c0_10 = arith.constant 0 : index
    %25 = vector.load %arg4[%c0_9, %c0_10] : memref<256x256xbf16, #tpu.memory_space<vmem>>, vector<256x256xbf16>
    %cst_11 = arith.constant dense<0.000000e+00> : vector<256x256xf32>
    %26 = tpu.matmul %24, %25, %cst_11 {dimension_numbers = #tpu.dot_dimension_numbers<[1], [0], [0], [1], [0, 0, 1, 1], [], []>} : vector<256x256xbf16>, vector<256x256xbf16>, vector<256x256xf32> -> vector<256x256xf32>
    %c0_12 = arith.constant 0 : index
    %c0_13 = arith.constant 0 : index
    %27 = vector.load %arg5[%c0_12, %c0_13] : memref<1x256xf32, #tpu.memory_space<vmem>>, vector<1x256xf32>
    %28 = vector.broadcast %27 : vector<1x256xf32> to vector<256x256xf32>
    %29 = arith.addf %26, %28 : vector<256x256xf32>
    %30 = arith.addf %1, %29 : vector<256x256xf32>
    %c0_14 = arith.constant 0 : index
    %c0_15 = arith.constant 0 : index
    %31 = vector.load %arg6[%c0_14, %c0_15] : memref<1x256xf32, #tpu.memory_space<vmem>>, vector<1x256xf32>
    %c0_16 = arith.constant 0 : index
    %c0_17 = arith.constant 0 : index
    %32 = vector.load %arg7[%c0_16, %c0_17] : memref<1x256xf32, #tpu.memory_space<vmem>>, vector<1x256xf32>
    %cst_18 = arith.constant dense<0.000000e+00> : vector<256xf32>
    %33 = vector.multi_reduction <add>, %30, %cst_18 [1] : vector<256x256xf32> to vector<256xf32>
    %34 = vector.shape_cast %33 : vector<256xf32> to vector<256x1xf32>
    %cst_19 = arith.constant 2.560000e+02 : f32
    %35 = vector.broadcast %cst_19 : f32 to vector<256x1xf32>
    %36 = arith.divf %34, %35 : vector<256x1xf32>
    %37 = vector.broadcast %36 : vector<256x1xf32> to vector<256x256xf32>
    %38 = arith.subf %30, %37 : vector<256x256xf32>
    %39 = arith.mulf %38, %38 : vector<256x256xf32>
    %cst_20 = arith.constant dense<0.000000e+00> : vector<256xf32>
    %40 = vector.multi_reduction <add>, %39, %cst_20 [1] : vector<256x256xf32> to vector<256xf32>
    %41 = vector.shape_cast %40 : vector<256xf32> to vector<256x1xf32>
    %cst_21 = arith.constant 2.560000e+02 : f32
    %42 = vector.broadcast %cst_21 : f32 to vector<256x1xf32>
    %43 = arith.divf %41, %42 : vector<256x1xf32>
    %cst_22 = arith.constant 9.99999974E-6 : f32
    %44 = vector.broadcast %cst_22 : f32 to vector<256x1xf32>
    %45 = arith.addf %43, %44 : vector<256x1xf32>
    %46 = math.rsqrt %45 : vector<256x1xf32>
    %47 = vector.broadcast %46 : vector<256x1xf32> to vector<256x256xf32>
    %48 = arith.mulf %38, %47 : vector<256x256xf32>
    %49 = vector.broadcast %31 : vector<1x256xf32> to vector<256x256xf32>
    %50 = arith.mulf %48, %49 : vector<256x256xf32>
    %51 = vector.broadcast %32 : vector<1x256xf32> to vector<256x256xf32>
    %52 = arith.addf %50, %51 : vector<256x256xf32>
    %53 = arith.truncf %52 : vector<256x256xf32> to vector<256x256xbf16>
    %c0_23 = arith.constant 0 : index
    %c0_24 = arith.constant 0 : index
    %54 = vector.load %arg8[%c0_23, %c0_24] : memref<256x1280xbf16, #tpu.memory_space<vmem>>, vector<256x1280xbf16>
    %cst_25 = arith.constant dense<0.000000e+00> : vector<256x1280xf32>
    %55 = tpu.matmul %53, %54, %cst_25 {dimension_numbers = #tpu.dot_dimension_numbers<[1], [0], [0], [1], [0, 0, 1, 1], [], []>} : vector<256x256xbf16>, vector<256x1280xbf16>, vector<256x1280xf32> -> vector<256x1280xf32>
    %c0_26 = arith.constant 0 : index
    %c0_27 = arith.constant 0 : index
    %56 = vector.load %arg9[%c0_26, %c0_27] : memref<1x1280xf32, #tpu.memory_space<vmem>>, vector<1x1280xf32>
    %57 = vector.broadcast %56 : vector<1x1280xf32> to vector<256x1280xf32>
    %58 = arith.addf %55, %57 : vector<256x1280xf32>
    %59 = vector.extract_strided_slice %58 {offsets = [0, 0], sizes = [256, 640], strides = [1, 1]} : vector<256x1280xf32> to vector<256x640xf32>
    %60 = vector.extract_strided_slice %58 {offsets = [0, 640], sizes = [256, 640], strides = [1, 1]} : vector<256x1280xf32> to vector<256x640xf32>
    %61 = arith.negf %59 : vector<256x640xf32>
    %62 = math.exp %61 : vector<256x640xf32>
    %cst_28 = arith.constant 1.000000e+00 : f32
    %63 = vector.broadcast %cst_28 : f32 to vector<256x640xf32>
    %64 = arith.addf %63, %62 : vector<256x640xf32>
    %65 = arith.divf %63, %64 : vector<256x640xf32>
    %66 = arith.mulf %59, %65 : vector<256x640xf32>
    %67 = arith.mulf %66, %60 : vector<256x640xf32>
    %68 = arith.truncf %67 : vector<256x640xf32> to vector<256x640xbf16>
    %c0_29 = arith.constant 0 : index
    %c0_30 = arith.constant 0 : index
    %69 = vector.load %arg10[%c0_29, %c0_30] : memref<640x256xbf16, #tpu.memory_space<vmem>>, vector<640x256xbf16>
    %cst_31 = arith.constant dense<0.000000e+00> : vector<256x256xf32>
    %70 = tpu.matmul %68, %69, %cst_31 {dimension_numbers = #tpu.dot_dimension_numbers<[1], [0], [0], [1], [0, 0, 1, 1], [], []>} : vector<256x640xbf16>, vector<640x256xbf16>, vector<256x256xf32> -> vector<256x256xf32>
    %c0_32 = arith.constant 0 : index
    %c0_33 = arith.constant 0 : index
    %71 = vector.load %arg11[%c0_32, %c0_33] : memref<1x256xf32, #tpu.memory_space<vmem>>, vector<1x256xf32>
    %72 = vector.broadcast %71 : vector<1x256xf32> to vector<256x256xf32>
    %73 = arith.addf %70, %72 : vector<256x256xf32>
    %74 = arith.addf %30, %73 : vector<256x256xf32>
    %75 = arith.truncf %74 : vector<256x256xf32> to vector<256x256xbf16>
    %c0_34 = arith.constant 0 : index
    %c0_35 = arith.constant 0 : index
    %76 = vector.load %arg12[%c0_34, %c0_35] : memref<256x256xbf16, #tpu.memory_space<vmem>>, vector<256x256xbf16>
    tpu.vector_store %arg12[%c0_34, %c0_35], %75 {strides = array<i32>} : memref<256x256xbf16, #tpu.memory_space<vmem>>, vector<256x256xbf16>,
    return
  }
  func.func @transform_0(%arg0: i32) -> (i32, i32) {
    %c0_i32 = arith.constant 0 : i32
    %c0_i32_0 = arith.constant 0 : i32
    return %arg0, %c0_i32 : i32, i32
  }
  func.func @transform_1(%arg0: i32) -> (i32, i32) {
    %c0_i32 = arith.constant 0 : i32
    %c0_i32_0 = arith.constant 0 : i32
    %c0_i32_1 = arith.constant 0 : i32
    return %c0_i32, %c0_i32_0 : i32, i32
  }
  func.func @transform_2(%arg0: i32) -> (i32, i32) {
    %c0_i32 = arith.constant 0 : i32
    %c0_i32_0 = arith.constant 0 : i32
    %c0_i32_1 = arith.constant 0 : i32
    return %c0_i32, %c0_i32_0 : i32, i32
  }
  func.func @transform_3(%arg0: i32) -> (i32, i32) {
    %c0_i32 = arith.constant 0 : i32
    %c0_i32_0 = arith.constant 0 : i32
    %c0_i32_1 = arith.constant 0 : i32
    return %c0_i32, %c0_i32_0 : i32, i32
  }
  func.func @transform_4(%arg0: i32) -> (i32, i32) {
    %c0_i32 = arith.constant 0 : i32
    %c0_i32_0 = arith.constant 0 : i32
    %c0_i32_1 = arith.constant 0 : i32
    return %c0_i32, %c0_i32_0 : i32, i32
  }
  func.func @transform_5(%arg0: i32) -> (i32, i32) {
    %c0_i32 = arith.constant 0 : i32
    %c0_i32_0 = arith.constant 0 : i32
    %c0_i32_1 = arith.constant 0 : i32
    return %c0_i32, %c0_i32_0 : i32, i32
  }
  func.func @transform_6(%arg0: i32) -> (i32, i32) {
    %c0_i32 = arith.constant 0 : i32
    %c0_i32_0 = arith.constant 0 : i32
    %c0_i32_1 = arith.constant 0 : i32
    return %c0_i32, %c0_i32_0 : i32, i32
  }
  func.func @transform_7(%arg0: i32) -> (i32, i32) {
    %c0_i32 = arith.constant 0 : i32
    %c0_i32_0 = arith.constant 0 : i32
    %c0_i32_1 = arith.constant 0 : i32
    return %c0_i32, %c0_i32_0 : i32, i32
  }
  func.func @transform_8(%arg0: i32) -> (i32, i32) {
    %c0_i32 = arith.constant 0 : i32
    %c0_i32_0 = arith.constant 0 : i32
    %c0_i32_1 = arith.constant 0 : i32
    return %c0_i32, %c0_i32_0 : i32, i32
  }
  func.func @transform_9(%arg0: i32) -> (i32, i32) {
    %c0_i32 = arith.constant 0 : i32
    %c0_i32_0 = arith.constant 0 : i32
    %c0_i32_1 = arith.constant 0 : i32
    return %c0_i32, %c0_i32_0 : i32, i32
  }
  func.func @transform_10(%arg0: i32) -> (i32, i32) {
    %c0_i32 = arith.constant 0 : i32
    %c0_i32_0 = arith.constant 0 : i32
    %c0_i32_1 = arith.constant 0 : i32
    return %c0_i32, %c0_i32_0 : i32, i32
  }
  func.func @transform_11(%arg0: i32) -> (i32, i32) {
    %c0_i32 = arith.constant 0 : i32
    %c0_i32_0 = arith.constant 0 : i32
    return %arg0, %c0_i32 : i32, i32
  }
}

</mosaic_0001>

<llo_original>
// kernel: tpu_custom_call.1
$region0: #{tpu_custom_call.1}
  #allocation0 [shape = 'u32[]', space=smem, size = 0x4, offset = 0x4, fixed_abs, tag = 'smem constant byte address 0x4 - core index']
  #allocation1 [shape = 'u32[144,128]{1,0:T(1,128)}', space=vmem, size = 0x12000, scoped, tag = 'internal scratch']
  %s0 = inlined_call_operand.hbm [shape: bf16[512,256], index: 0, kind: input, shape index: {}]
  %s1 = inlined_call_operand.vmem [shape: f32[1,256], index: 1, kind: input, shape index: {}]
  %s2 = inlined_call_operand.vmem [shape: f32[1,256], index: 2, kind: input, shape index: {}]
  %s3 = inlined_call_operand.hbm [shape: bf16[256,256], index: 3, kind: input, shape index: {}]
  %s4 = inlined_call_operand.vmem [shape: f32[1,256], index: 4, kind: input, shape index: {}]
  %s5 = inlined_call_operand.vmem [shape: f32[1,256], index: 5, kind: input, shape index: {}]
  %s6 = inlined_call_operand.vmem [shape: f32[1,256], index: 6, kind: input, shape index: {}]
  %s7 = inlined_call_operand.hbm [shape: bf16[256,1280], index: 7, kind: input, shape index: {}]
  %s8 = inlined_call_operand.vmem [shape: f32[1,1280], index: 8, kind: input, shape index: {}]
  %s9 = inlined_call_operand.hbm [shape: bf16[640,256], index: 9, kind: input, shape index: {}]
  %s10 = inlined_call_operand.vmem [shape: f32[1,256], index: 10, kind: input, shape index: {}]
  %s11 = inlined_call_operand.hbm [shape: bf16[512,256], index: 11, kind: output, shape index: {}]
  %s12 = sld [smem:[#allocation0]]
  $region93: #{tpu_custom_call.1} parent=0
    _
  %s14 = ssub.s32 1, %s12
  %s15 = scalar_select 0, %s14, %s12
  $region1: #{tpu_custom_call.1} parent=0
    #allocation2 [shape = 'u8[262144]{0}', space=vmem, size = 0x40000, scoped, tag = 'input window, operand 0']
    #allocation3 [shape = 's32[2]{0}', space=sflag, size = 0x8, scoped, tag = 'scoped memory for tpu_custom_call.1']
    #allocation4 [shape = 's32[2]{0}', space=sflag, size = 0x8, scoped, tag = 'scoped memory for tpu_custom_call.1']
    #allocation5 [shape = 'u8[131072]{0}', space=vmem, size = 0x20000, scoped, tag = 'input window, operand 3, single buffered']
    #allocation6 [shape = 's32[1]{0}', space=sflag, size = 0x4, scoped, tag = 'scoped memory for tpu_custom_call.1']
    #allocation7 [shape = 'u8[655360]{0}', space=vmem, size = 0xa0000, scoped, tag = 'input window, operand 7, single buffered']
    #allocation8 [shape = 'u8[327680]{0}', space=vmem, size = 0x50000, scoped, tag = 'input window, operand 9, single buffered']
    #allocation9 [shape = 's32[1]{0}', space=sflag, size = 0x4, scoped, tag = 'scoped memory for tpu_custom_call.1']
    #allocation10 [shape = 'u8[262144]{0}', space=vmem, size = 0x40000, scoped, tag = 'output window, operand 0']
    %16 = vsyncpa [#allocation3], 0
    %s17 = scalar_lea.sflag [#allocation3], 1
    %18 = vsyncpa %s17, 0
    %19 = vsyncpa [#allocation6], 0
    %20 = vsyncpa [#allocation9], 0
    %21 = vsyncpa [#allocation4], 0
    %s22 = scalar_lea.sflag [#allocation4], 1
    %23 = vsyncpa %s22, 0
    loop: start=0, step=1, limit=4
    $region2: #{tpu_custom_call.1} parent=1 // loop_pre_header
      _
    $region3: #{tpu_custom_call.1} parent=1 // loop_header
      %s25 = sphi 0, %s29
      %p26 = scmp.ge.s32.totalorder %s25, 4
      %s35 = sphi 0, %s37
      %s38 = sphi 0, %s35
      %s39 = sphi 0, %s38
      %s55 = sphi 0, %s39
      %s59 = sphi 0, %s59
      %s61 = sphi 0, %s59
      %s62 = sphi 0, %s61
      %s76 = sphi 0, %s62
      %s80 = sphi 0, %s80
      %s82 = sphi 0, %s80
      %s83 = sphi 0, %s82
      %s97 = sphi 0, %s83
      %s101 = sphi 0, %s101
      %s103 = sphi 0, %s101
      %s104 = sphi 0, %s103
      %s118 = sphi 0, %s104
      %s122 = sphi 0, %s122
      %s124 = sphi 0, %s122
      %s125 = sphi 0, %s124
      %s139 = sphi 0, %s125
      %s143 = sphi 0, %s143
      %s145 = sphi 0, %s143
      %s146 = sphi 0, %s145
      %s160 = sphi 0, %s146
      %s164 = sphi 0, %s164
      %s166 = sphi 0, %s164
      %s167 = sphi 0, %s166
      %s181 = sphi 0, %s167
      %s185 = sphi 0, %s185
      %s187 = sphi 0, %s185
      %s188 = sphi 0, %s187
      %s202 = sphi 0, %s188
      %s206 = sphi 0, %s206
      %s208 = sphi 0, %s206
      %s209 = sphi 0, %s208
      %s223 = sphi 0, %s209
      %s227 = sphi 0, %s227
      %s229 = sphi 0, %s227
      %s230 = sphi 0, %s229
      %s244 = sphi 0, %s230
      %s248 = sphi 0, %s248
      %s250 = sphi 0, %s248
      %s251 = sphi 0, %s250
      %s265 = sphi 0, %s251
      %s271 = sphi 0, %s273
      %s274 = sphi 0, %s271
      %s275 = sphi 0, %s274
      %s291 = sphi 0, %s275
    $region4: #{tpu_custom_call.1} parent=1 // loop_header_branch
      %28 = sbr.rel (%p26) target = $region8
    $region5: #{tpu_custom_call.1} parent=1 // loop_body
      %s30 = ssub.s32 %s25, 1
      %s31 = ssub.s32 %s25, 2
      %s32 = sadd.s32 %s25, 1
      %s33 = ssub.s32 %s25, %s32
      %p34 = scmp.eq.s32.totalorder %s33, 0
      %s36 = sadd.s32 %s35, 1
      %s37 = scalar_select %p34, %s35, %s36
      %p40 = pneg %p34
      %p41 = scmp.eq.s32.totalorder %s25, 1
      %p42 = por %p40, %p41
      %p43 = scmp.ne.s32.totalorder %s35, %s38
      %p44 = scmp.eq.s32.totalorder %s25, 0
      %p45 = por %p43, %p44
      %p46 = scmp.ne.s32.totalorder %s35, %s38
      %p47 = scmp.eq.s32.totalorder %s30, 1
      %p48 = por %p46, %p47
      %p49 = scmp.ne.s32.totalorder %s38, %s39
      %p50 = scmp.eq.s32.totalorder %s30, 0
      %p51 = por %p49, %p50
      %p52 = scmp.ne.s32.totalorder %s38, %s39
      %p53 = scmp.eq.s32.totalorder %s31, 1
      %p54 = por %p52, %p53
      %p56 = scmp.ne.s32.totalorder %s39, %s55
      %p57 = scmp.eq.s32.totalorder %s31, 0
      %p58 = por %p56, %p57
      %s60 = sadd.s32 %s59, 1
      %p63 = scmp.eq.s32.totalorder %s25, 1
      %p64 = scmp.ne.s32.totalorder %s59, %s61
      %p65 = scmp.eq.s32.totalorder %s25, 0
      %p66 = por %p64, %p65
      %p67 = scmp.ne.s32.totalorder %s59, %s61
      %p68 = scmp.eq.s32.totalorder %s30, 1
      %p69 = por %p67, %p68
      %p70 = scmp.ne.s32.totalorder %s61, %s62
      %p71 = scmp.eq.s32.totalorder %s30, 0
      %p72 = por %p70, %p71
      %p73 = scmp.ne.s32.totalorder %s61, %s62
      %p74 = scmp.eq.s32.totalorder %s31, 1
      %p75 = por %p73, %p74
      %p77 = scmp.ne.s32.totalorder %s62, %s76
      %p78 = scmp.eq.s32.totalorder %s31, 0
      %p79 = por %p77, %p78
      %s81 = sadd.s32 %s80, 1
      %p84 = scmp.eq.s32.totalorder %s25, 1
      %p85 = scmp.ne.s32.totalorder %s80, %s82
      %p86 = scmp.eq.s32.totalorder %s25, 0
      %p87 = por %p85, %p86
      %p88 = scmp.ne.s32.totalorder %s80, %s82
      %p89 = scmp.eq.s32.totalorder %s30, 1
      %p90 = por %p88, %p89
      %p91 = scmp.ne.s32.totalorder %s82, %s83
      %p92 = scmp.eq.s32.totalorder %s30, 0
      %p93 = por %p91, %p92
      %p94 = scmp.ne.s32.totalorder %s82, %s83
      %p95 = scmp.eq.s32.totalorder %s31, 1
      %p96 = por %p94, %p95
      %p98 = scmp.ne.s32.totalorder %s83, %s97
      %p99 = scmp.eq.s32.totalorder %s31, 0
      %p100 = por %p98, %p99
      %s102 = sadd.s32 %s101, 1
      %p105 = scmp.eq.s32.totalorder %s25, 1
      %p106 = scmp.ne.s32.totalorder %s101, %s103
      %p107 = scmp.eq.s32.totalorder %s25, 0
      %p108 = por %p106, %p107
      %p109 = scmp.ne.s32.totalorder %s101, %s103
      %p110 = scmp.eq.s32.totalorder %s30, 1
      %p111 = por %p109, %p110
      %p112 = scmp.ne.s32.totalorder %s103, %s104
      %p113 = scmp.eq.s32.totalorder %s30, 0
      %p114 = por %p112, %p113
      %p115 = scmp.ne.s32.totalorder %s103, %s104
      %p116 = scmp.eq.s32.totalorder %s31, 1
      %p117 = por %p115, %p116
      %p119 = scmp.ne.s32.totalorder %s104, %s118
      %p120 = scmp.eq.s32.totalorder %s31, 0
      %p121 = por %p119, %p120
      %s123 = sadd.s32 %s122, 1
      %p126 = scmp.eq.s32.totalorder %s25, 1
      %p127 = scmp.ne.s32.totalorder %s122, %s124
      %p128 = scmp.eq.s32.totalorder %s25, 0
      %p129 = por %p127, %p128
      %p130 = scmp.ne.s32.totalorder %s122, %s124
      %p131 = scmp.eq.s32.totalorder %s30, 1
      %p132 = por %p130, %p131
      %p133 = scmp.ne.s32.totalorder %s124, %s125
      %p134 = scmp.eq.s32.totalorder %s30, 0
      %p135 = por %p133, %p134
      %p136 = scmp.ne.s32.totalorder %s124, %s125
      %p137 = scmp.eq.s32.totalorder %s31, 1
      %p138 = por %p136, %p137
      %p140 = scmp.ne.s32.totalorder %s125, %s139
      %p141 = scmp.eq.s32.totalorder %s31, 0
      %p142 = por %p140, %p141
      %s144 = sadd.s32 %s143, 1
      %p147 = scmp.eq.s32.totalorder %s25, 1
      %p148 = scmp.ne.s32.totalorder %s143, %s145
      %p149 = scmp.eq.s32.totalorder %s25, 0
      %p150 = por %p148, %p149
      %p151 = scmp.ne.s32.totalorder %s143, %s145
      %p152 = scmp.eq.s32.totalorder %s30, 1
      %p153 = por %p151, %p152
      %p154 = scmp.ne.s32.totalorder %s145, %s146
      %p155 = scmp.eq.s32.totalorder %s30, 0
      %p156 = por %p154, %p155
      %p157 = scmp.ne.s32.totalorder %s145, %s146
      %p158 = scmp.eq.s32.totalorder %s31, 1
      %p159 = por %p157, %p158
      %p161 = scmp.ne.s32.totalorder %s146, %s160
      %p162 = scmp.eq.s32.totalorder %s31, 0
      %p163 = por %p161, %p162
      %s165 = sadd.s32 %s164, 1
      %p168 = scmp.eq.s32.totalorder %s25, 1
      %p169 = scmp.ne.s32.totalorder %s164, %s166
      %p170 = scmp.eq.s32.totalorder %s25, 0
      %p171 = por %p169, %p170
      %p172 = scmp.ne.s32.totalorder %s164, %s166
      %p173 = scmp.eq.s32.totalorder %s30, 1
      %p174 = por %p172, %p173
      %p175 = scmp.ne.s32.totalorder %s166, %s167
      %p176 = scmp.eq.s32.totalorder %s30, 0
      %p177 = por %p175, %p176
      %p178 = scmp.ne.s32.totalorder %s166, %s167
      %p179 = scmp.eq.s32.totalorder %s31, 1
      %p180 = por %p178, %p179
      %p182 = scmp.ne.s32.totalorder %s167, %s181
      %p183 = scmp.eq.s32.totalorder %s31, 0
      %p184 = por %p182, %p183
      %s186 = sadd.s32 %s185, 1
      %p189 = scmp.eq.s32.totalorder %s25, 1
      %p190 = scmp.ne.s32.totalorder %s185, %s187
      %p191 = scmp.eq.s32.totalorder %s25, 0
      %p192 = por %p190, %p191
      %p193 = scmp.ne.s32.totalorder %s185, %s187
      %p194 = scmp.eq.s32.totalorder %s30, 1
      %p195 = por %p193, %p194
      %p196 = scmp.ne.s32.totalorder %s187, %s188
      %p197 = scmp.eq.s32.totalorder %s30, 0
      %p198 = por %p196, %p197
      %p199 = scmp.ne.s32.totalorder %s187, %s188
      %p200 = scmp.eq.s32.totalorder %s31, 1
      %p201 = por %p199, %p200
      %p203 = scmp.ne.s32.totalorder %s188, %s202
      %p204 = scmp.eq.s32.totalorder %s31, 0
      %p205 = por %p203, %p204
      %s207 = sadd.s32 %s206, 1
      %p210 = scmp.eq.s32.totalorder %s25, 1
      %p211 = scmp.ne.s32.totalorder %s206, %s208
      %p212 = scmp.eq.s32.totalorder %s25, 0
      %p213 = por %p211, %p212
      %p214 = scmp.ne.s32.totalorder %s206, %s208
      %p215 = scmp.eq.s32.totalorder %s30, 1
      %p216 = por %p214, %p215
      %p217 = scmp.ne.s32.totalorder %s208, %s209
      %p218 = scmp.eq.s32.totalorder %s30, 0
      %p219 = por %p217, %p218
      %p220 = scmp.ne.s32.totalorder %s208, %s209
      %p221 = scmp.eq.s32.totalorder %s31, 1
      %p222 = por %p220, %p221
      %p224 = scmp.ne.s32.totalorder %s209, %s223
      %p225 = scmp.eq.s32.totalorder %s31, 0
      %p226 = por %p224, %p225
      %s228 = sadd.s32 %s227, 1
      %p231 = scmp.eq.s32.totalorder %s25, 1
      %p232 = scmp.ne.s32.totalorder %s227, %s229
      %p233 = scmp.eq.s32.totalorder %s25, 0
      %p234 = por %p232, %p233
      %p235 = scmp.ne.s32.totalorder %s227, %s229
      %p236 = scmp.eq.s32.totalorder %s30, 1
      %p237 = por %p235, %p236
      %p238 = scmp.ne.s32.totalorder %s229, %s230
      %p239 = scmp.eq.s32.totalorder %s30, 0
      %p240 = por %p238, %p239
      %p241 = scmp.ne.s32.totalorder %s229, %s230
      %p242 = scmp.eq.s32.totalorder %s31, 1
      %p243 = por %p241, %p242
      %p245 = scmp.ne.s32.totalorder %s230, %s244
      %p246 = scmp.eq.s32.totalorder %s31, 0
      %p247 = por %p245, %p246
      %s249 = sadd.s32 %s248, 1
      %p252 = scmp.eq.s32.totalorder %s25, 1
      %p253 = scmp.ne.s32.totalorder %s248, %s250
      %p254 = scmp.eq.s32.totalorder %s25, 0
      %p255 = por %p253, %p254
      %p256 = scmp.ne.s32.totalorder %s248, %s250
      %p257 = scmp.eq.s32.totalorder %s30, 1
      %p258 = por %p256, %p257
      %p259 = scmp.ne.s32.totalorder %s250, %s251
      %p260 = scmp.eq.s32.totalorder %s30, 0
      %p261 = por %p259, %p260
      %p262 = scmp.ne.s32.totalorder %s250, %s251
      %p263 = scmp.eq.s32.totalorder %s31, 1
      %p264 = por %p262, %p263
      %p266 = scmp.ne.s32.totalorder %s251, %s265
      %p267 = scmp.eq.s32.totalorder %s31, 0
      %p268 = por %p266, %p267
      %s269 = ssub.s32 %s25, %s32
      %p270 = scmp.eq.s32.totalorder %s269, 0
      %s272 = sadd.s32 %s271, 1
      %s273 = scalar_select %p270, %s271, %s272
      %p276 = pneg %p270
      %p277 = scmp.eq.s32.totalorder %s25, 1
      %p278 = por %p276, %p277
      %p279 = scmp.ne.s32.totalorder %s271, %s274
      %p280 = scmp.eq.s32.totalorder %s25, 0
      %p281 = por %p279, %p280
      %p282 = scmp.ne.s32.totalorder %s271, %s274
      %p283 = scmp.eq.s32.totalorder %s30, 1
      %p284 = por %p282, %p283
      %p285 = scmp.ne.s32.totalorder %s274, %s275
      %p286 = scmp.eq.s32.totalorder %s30, 0
      %p287 = por %p285, %p286
      %p288 = scmp.ne.s32.totalorder %s274, %s275
      %p289 = scmp.eq.s32.totalorder %s31, 1
      %p290 = por %p288, %p289
      %p292 = scmp.ne.s32.totalorder %s275, %s291
      %p293 = scmp.eq.s32.totalorder %s31, 0
      %p294 = por %p292, %p293
      %p295 = scmp.le.s32.totalorder 1, %s25
      %p296 = scmp.lt.s32.totalorder %s25, 3
      %p297 = pnand %p295, %p296
      %p298 = pneg %p297
      // Predicated region
      $region9: #{tpu_custom_call.1} parent=5 // pred_check
        _
      $region10: #{tpu_custom_call.1} parent=5 // pred_check_branch
        %300 = sbr.rel (%p297) target = $region12
      $region11: #{tpu_custom_call.1} parent=5 // pred_region
        %s301 = ssub.s32 %s25, 1
        // Predicated region
        $region13: #{tpu_custom_call.1} parent=11 // pred_check
          %p302 = pneg %p72
        $region14: #{tpu_custom_call.1} parent=11 // pred_check_branch
          %304 = sbr.rel (%p302) target = $region16
        $region15: #{tpu_custom_call.1} parent=11 // pred_region
          _
        $region16: #{tpu_custom_call.1} parent=11 // pred_fallthru
          _
        // Predicated region
        $region17: #{tpu_custom_call.1} parent=11 // pred_check
          %p305 = pneg %p93
        $region18: #{tpu_custom_call.1} parent=11 // pred_check_branch
          %307 = sbr.rel (%p305) target = $region20
        $region19: #{tpu_custom_call.1} parent=11 // pred_region
          _
        $region20: #{tpu_custom_call.1} parent=11 // pred_fallthru
          _
        // Predicated region
        $region21: #{tpu_custom_call.1} parent=11 // pred_check
          %p308 = pneg %p114
        $region22: #{tpu_custom_call.1} parent=11 // pred_check_branch
          %310 = sbr.rel (%p308) target = $region24
        $region23: #{tpu_custom_call.1} parent=11 // pred_region
          %s312 = ssub.s32 4096, 4096
          %313 = vsyncadd [#allocation6], %s312
          %s314 = sshll.u32 [#allocation5], 4
          %s315 = int_to_ptr.vmem [resolvable:$true] %s314
          %320 = dma.hbm_to_vmem [thread:$0]  %s3, 4096, %s315, [#allocation6], 128, 128, 8
        $region24: #{tpu_custom_call.1} parent=11 // pred_fallthru
          _
        // Predicated region
        $region25: #{tpu_custom_call.1} parent=11 // pred_check
          %p321 = pneg %p135
        $region26: #{tpu_custom_call.1} parent=11 // pred_check_branch
          %323 = sbr.rel (%p321) target = $region28
        $region27: #{tpu_custom_call.1} parent=11 // pred_region
          _
        $region28: #{tpu_custom_call.1} parent=11 // pred_fallthru
          _
        // Predicated region
        $region29: #{tpu_custom_call.1} parent=11 // pred_check
          %p324 = pneg %p156
        $region30: #{tpu_custom_call.1} parent=11 // pred_check_branch
          %326 = sbr.rel (%p324) target = $region32
        $region31: #{tpu_custom_call.1} parent=11 // pred_region
          _
        $region32: #{tpu_custom_call.1} parent=11 // pred_fallthru
          _
        // Predicated region
        $region33: #{tpu_custom_call.1} parent=11 // pred_check
          %p327 = pneg %p177
        $region34: #{tpu_custom_call.1} parent=11 // pred_check_branch
          %329 = sbr.rel (%p327) target = $region36
        $region35: #{tpu_custom_call.1} parent=11 // pred_region
          _
        $region36: #{tpu_custom_call.1} parent=11 // pred_fallthru
          _
        // Predicated region
        $region37: #{tpu_custom_call.1} parent=11 // pred_check
          %p330 = pneg %p198
        $region38: #{tpu_custom_call.1} parent=11 // pred_check_branch
          %332 = sbr.rel (%p330) target = $region40
        $region39: #{tpu_custom_call.1} parent=11 // pred_region
          %s334 = ssub.s32 20480, 20480
          %335 = vsyncadd [#allocation6], %s334
          %s336 = sshll.u32 [#allocation7], 4
          %s337 = int_to_ptr.vmem [resolvable:$true] %s336
          %342 = dma.hbm_to_vmem [thread:$0]  %s7, 20480, %s337, [#allocation6], 640, 640, 40
        $region40: #{tpu_custom_call.1} parent=11 // pred_fallthru
          _
        // Predicated region
        $region41: #{tpu_custom_call.1} parent=11 // pred_check
          %p343 = pneg %p219
        $region42: #{tpu_custom_call.1} parent=11 // pred_check_branch
          %345 = sbr.rel (%p343) target = $region44
        $region43: #{tpu_custom_call.1} parent=11 // pred_region
          _
        $region44: #{tpu_custom_call.1} parent=11 // pred_fallthru
          _
        // Predicated region
        $region45: #{tpu_custom_call.1} parent=11 // pred_check
          %p346 = pneg %p240
        $region46: #{tpu_custom_call.1} parent=11 // pred_check_branch
          %348 = sbr.rel (%p346) target = $region48
        $region47: #{tpu_custom_call.1} parent=11 // pred_region
          %s350 = ssub.s32 10240, 10240
          %351 = vsyncadd [#allocation9], %s350
          %s352 = sshll.u32 [#allocation8], 4
          %s353 = int_to_ptr.vmem [resolvable:$true] %s352
          %358 = dma.hbm_to_vmem [thread:$0]  %s9, 10240, %s353, [#allocation9], 128, 128, 8
        $region48: #{tpu_custom_call.1} parent=11 // pred_fallthru
          _
        // Predicated region
        $region49: #{tpu_custom_call.1} parent=11 // pred_check
          %p359 = pneg %p261
        $region50: #{tpu_custom_call.1} parent=11 // pred_check_branch
          %361 = sbr.rel (%p359) target = $region52
        $region51: #{tpu_custom_call.1} parent=11 // pred_region
          _
        $region52: #{tpu_custom_call.1} parent=11 // pred_fallthru
          _
      $region12: #{tpu_custom_call.1} parent=5 // pred_fallthru
        _
      %p362 = scmp.lt.s32.totalorder %s25, 2
      // Predicated region
      $region53: #{tpu_custom_call.1} parent=5 // pred_check
        %p363 = pneg %p362
      $region54: #{tpu_custom_call.1} parent=5 // pred_check_branch
        %365 = sbr.rel (%p363) target = $region56
      $region55: #{tpu_custom_call.1} parent=5 // pred_region
        // Predicated region
        $region57: #{tpu_custom_call.1} parent=55 // pred_check
          %p366 = pneg %p45
        $region58: #{tpu_custom_call.1} parent=55 // pred_check_branch
          %368 = sbr.rel (%p366) target = $region60
        $region59: #{tpu_custom_call.1} parent=55 // pred_region
          %s369 = sand.u32 %s35, 1
          %s370 = scalar_lea.sflag [#allocation3], %s369
          %s371 = sand.u32 %s35, 1
          %s372 = smul.addr %s371, 256
          %s373 = scalar_lea.vmem [#allocation2], %s372
          %s374 = smul.u32 32, %s25
          %s376 = ssub.s32 4096, 4096
          %377 = vsyncadd %s370, %s376
          %s378 = smul.addr %s374, 2
          %s379 = smul.addr %s378, 64
          %s380 = scalar_lea.hbm %s0, %s379
          %s381 = sshll.u32 %s373, 4
          %s382 = int_to_ptr.vmem [resolvable:$true] %s381
          %387 = dma.hbm_to_vmem [thread:$0]  %s380, 4096, %s382, %s370, 128, 128, 8
        $region60: #{tpu_custom_call.1} parent=55 // pred_fallthru
          _
      $region56: #{tpu_custom_call.1} parent=5 // pred_fallthru
        _
      %p388 = scmp.le.s32.totalorder 1, %s25
      %p389 = scmp.lt.s32.totalorder %s25, 3
      %p390 = pnand %p388, %p389
      %p391 = pneg %p390
      // Predicated region
      $region61: #{tpu_custom_call.1} parent=5 // pred_check
        _
      $region62: #{tpu_custom_call.1} parent=5 // pred_check_branch
        %393 = sbr.rel (%p390) target = $region64
      $region63: #{tpu_custom_call.1} parent=5 // pred_region
        %s394 = ssub.s32 %s25, 1
        %s395 = sand.u32 %s38, 1
        %s396 = scalar_lea.sflag [#allocation3], %s395
        %s397 = sand.u32 %s38, 1
        %s398 = smul.addr %s397, 256
        %s399 = scalar_lea.vmem [#allocation2], %s398
        // Predicated region
        $region65: #{tpu_custom_call.1} parent=63 // pred_check
          %p400 = pneg %p51
        $region66: #{tpu_custom_call.1} parent=63 // pred_check_branch
          %402 = sbr.rel (%p400) target = $region68
        $region67: #{tpu_custom_call.1} parent=63 // pred_region
          %403 = dma.done %s396, 4096
        $region68: #{tpu_custom_call.1} parent=63 // pred_fallthru
          _
        // Predicated region
        $region69: #{tpu_custom_call.1} parent=63 // pred_check
          %p404 = pneg %p114
        $region70: #{tpu_custom_call.1} parent=63 // pred_check_branch
          %406 = sbr.rel (%p404) target = $region72
        $region71: #{tpu_custom_call.1} parent=63 // pred_region
          %407 = dma.done [#allocation6], 4096
        $region72: #{tpu_custom_call.1} parent=63 // pred_fallthru
          _
        // Predicated region
        $region73: #{tpu_custom_call.1} parent=63 // pred_check
          %p408 = pneg %p198
        $region74: #{tpu_custom_call.1} parent=63 // pred_check_branch
          %410 = sbr.rel (%p408) target = $region76
        $region75: #{tpu_custom_call.1} parent=63 // pred_region
          %411 = dma.done [#allocation6], 20480
        $region76: #{tpu_custom_call.1} parent=63 // pred_fallthru
          _
        // Predicated region
        $region77: #{tpu_custom_call.1} parent=63 // pred_check
          %p412 = pneg %p240
        $region78: #{tpu_custom_call.1} parent=63 // pred_check_branch
          %414 = sbr.rel (%p412) target = $region80
        $region79: #{tpu_custom_call.1} parent=63 // pred_region
          %415 = dma.done [#allocation9], 10240
        $region80: #{tpu_custom_call.1} parent=63 // pred_fallthru
          _
        %s416 = sand.u32 %s38, 1
        %s417 = scalar_lea.sflag [#allocation3], %s416
        %s418 = sand.u32 %s38, 1
        %s419 = smul.addr %s418, 256
        %s420 = scalar_lea.vmem [#allocation2], %s419
        %p421 = pneg %p51
        %p422 = pneg %p48
        %p423 = pneg %p72
        %p424 = pneg %p69
        %p425 = pneg %p93
        %p426 = pneg %p90
        %p427 = pneg %p114
        %p428 = pneg %p111
        %p429 = pneg %p135
        %p430 = pneg %p132
        %p431 = pneg %p156
        %p432 = pneg %p153
        %p433 = pneg %p177
        %p434 = pneg %p174
        %p435 = pneg %p198
        %p436 = pneg %p195
        %p437 = pneg %p219
        %p438 = pneg %p216
        %p439 = pneg %p240
        %p440 = pneg %p237
        %p441 = pneg %p261
        %p442 = pneg %p258
        %p443 = pneg %p287
        %p444 = pneg %p284
        %s445 = sand.u32 %s274, 1
        %s446 = scalar_lea.sflag [#allocation4], %s445
        %s447 = sand.u32 %s274, 1
        %s448 = smul.addr %s447, 256
        %s449 = scalar_lea.vmem [#allocation10], %s448
        %s450 = smul.u32 32, %s30
        %s451 = smul.u32 32, %s30
        %v453 = vld [vmem:[%s399] sm:$0xff]
        %v454 = vld [vmem:[%s399 + $0x8] sm:$0xff]
        %v455 = vld [vmem:[%s399 + $0x10] sm:$0xff]
        %v456 = vld [vmem:[%s399 + $0x18] sm:$0xff]
        %v457 = vld [vmem:[%s399 + $0x20] sm:$0xff]
        %v458 = vld [vmem:[%s399 + $0x28] sm:$0xff]
        %v459 = vld [vmem:[%s399 + $0x30] sm:$0xff]
        %v460 = vld [vmem:[%s399 + $0x38] sm:$0xff]
        %v461 = vld [vmem:[%s399 + $0x40] sm:$0xff]
        %v462 = vld [vmem:[%s399 + $0x48] sm:$0xff]
        %v463 = vld [vmem:[%s399 + $0x50] sm:$0xff]
        %v464 = vld [vmem:[%s399 + $0x58] sm:$0xff]
        %v465 = vld [vmem:[%s399 + $0x60] sm:$0xff]
        %v466 = vld [vmem:[%s399 + $0x68] sm:$0xff]
        %v467 = vld [vmem:[%s399 + $0x70] sm:$0xff]
        %v468 = vld [vmem:[%s399 + $0x78] sm:$0xff]
        %v469 = vld [vmem:[%s399 + $0x80] sm:$0xff]
        %v470 = vld [vmem:[%s399 + $0x88] sm:$0xff]
        %v471 = vld [vmem:[%s399 + $0x90] sm:$0xff]
        %v472 = vld [vmem:[%s399 + $0x98] sm:$0xff]
        %v473 = vld [vmem:[%s399 + $0xa0] sm:$0xff]
        %v474 = vld [vmem:[%s399 + $0xa8] sm:$0xff]
        %v475 = vld [vmem:[%s399 + $0xb0] sm:$0xff]
        %v476 = vld [vmem:[%s399 + $0xb8] sm:$0xff]
        %v477 = vld [vmem:[%s399 + $0xc0] sm:$0xff]
        %v478 = vld [vmem:[%s399 + $0xc8] sm:$0xff]
        %v479 = vld [vmem:[%s399 + $0xd0] sm:$0xff]
        %v480 = vld [vmem:[%s399 + $0xd8] sm:$0xff]
        %v481 = vld [vmem:[%s399 + $0xe0] sm:$0xff]
        %v482 = vld [vmem:[%s399 + $0xe8] sm:$0xff]
        %v483 = vld [vmem:[%s399 + $0xf0] sm:$0xff]
        %v484 = vld [vmem:[%s399 + $0xf8] sm:$0xff]
        %v485 = vunpack.c.l.bf16 %v453
        %v486 = vunpack.c.h.bf16 %v453
        %v487 = vunpack.c.l.bf16 %v454
        %v488 = vunpack.c.h.bf16 %v454
        %v489 = vunpack.c.l.bf16 %v455
        %v490 = vunpack.c.h.bf16 %v455
        %v491 = vunpack.c.l.bf16 %v456
        %v492 = vunpack.c.h.bf16 %v456
        %v493 = vunpack.c.l.bf16 %v457
        %v494 = vunpack.c.h.bf16 %v457
        %v495 = vunpack.c.l.bf16 %v458
        %v496 = vunpack.c.h.bf16 %v458
        %v497 = vunpack.c.l.bf16 %v459
        %v498 = vunpack.c.h.bf16 %v459
        %v499 = vunpack.c.l.bf16 %v460
        %v500 = vunpack.c.h.bf16 %v460
        %v501 = vunpack.c.l.bf16 %v461
        %v502 = vunpack.c.h.bf16 %v461
        %v503 = vunpack.c.l.bf16 %v462
        %v504 = vunpack.c.h.bf16 %v462
        %v505 = vunpack.c.l.bf16 %v463
        %v506 = vunpack.c.h.bf16 %v463
        %v507 = vunpack.c.l.bf16 %v464
        %v508 = vunpack.c.h.bf16 %v464
        %v509 = vunpack.c.l.bf16 %v465
        %v510 = vunpack.c.h.bf16 %v465
        %v511 = vunpack.c.l.bf16 %v466
        %v512 = vunpack.c.h.bf16 %v466
        %v513 = vunpack.c.l.bf16 %v467
        %v514 = vunpack.c.h.bf16 %v467
        %v515 = vunpack.c.l.bf16 %v468
        %v516 = vunpack.c.h.bf16 %v468
        %v517 = vunpack.c.l.bf16 %v469
        %v518 = vunpack.c.h.bf16 %v469
        %v519 = vunpack.c.l.bf16 %v470
        %v520 = vunpack.c.h.bf16 %v470
        %v521 = vunpack.c.l.bf16 %v471
        %v522 = vunpack.c.h.bf16 %v471
        %v523 = vunpack.c.l.bf16 %v472
        %v524 = vunpack.c.h.bf16 %v472
        %v525 = vunpack.c.l.bf16 %v473
        %v526 = vunpack.c.h.bf16 %v473
        %v527 = vunpack.c.l.bf16 %v474
        %v528 = vunpack.c.h.bf16 %v474
        %v529 = vunpack.c.l.bf16 %v475
        %v530 = vunpack.c.h.bf16 %v475
        %v531 = vunpack.c.l.bf16 %v476
        %v532 = vunpack.c.h.bf16 %v476
        %v533 = vunpack.c.l.bf16 %v477
        %v534 = vunpack.c.h.bf16 %v477
        %v535 = vunpack.c.l.bf16 %v478
        %v536 = vunpack.c.h.bf16 %v478
        %v537 = vunpack.c.l.bf16 %v479
        %v538 = vunpack.c.h.bf16 %v479
        %v539 = vunpack.c.l.bf16 %v480
        %v540 = vunpack.c.h.bf16 %v480
        %v541 = vunpack.c.l.bf16 %v481
        %v542 = vunpack.c.h.bf16 %v481
        %v543 = vunpack.c.l.bf16 %v482
        %v544 = vunpack.c.h.bf16 %v482
        %v545 = vunpack.c.l.bf16 %v483
        %v546 = vunpack.c.h.bf16 %v483
        %v547 = vunpack.c.l.bf16 %v484
        %v548 = vunpack.c.h.bf16 %v484
        %v549 = vld [vmem:[%s1] sm:$0x3]
        %v550 = vld [vmem:[%s2] sm:$0x3]
        %v551 = vadd.f32 %v485, %v486
        %552 = vadd.xlane.f32.xlu0 %v551
        %v553 = vpop.xlane.xlu0 %552
        %v554 = vadd.f32 %v487, %v488
        %555 = vadd.xlane.f32.xlu0 %v554
        %v556 = vpop.xlane.xlu0 %555
        %v557 = vadd.f32 %v489, %v490
        %558 = vadd.xlane.f32.xlu0 %v557
        %v559 = vpop.xlane.xlu0 %558
        %v560 = vadd.f32 %v491, %v492
        %561 = vadd.xlane.f32.xlu0 %v560
        %v562 = vpop.xlane.xlu0 %561
        %v563 = vadd.f32 %v493, %v494
        %564 = vadd.xlane.f32.xlu0 %v563
        %v565 = vpop.xlane.xlu0 %564
        %v566 = vadd.f32 %v495, %v496
        %567 = vadd.xlane.f32.xlu0 %v566
        %v568 = vpop.xlane.xlu0 %567
        %v569 = vadd.f32 %v497, %v498
        %570 = vadd.xlane.f32.xlu0 %v569
        %v571 = vpop.xlane.xlu0 %570
        %v572 = vadd.f32 %v499, %v500
        %573 = vadd.xlane.f32.xlu0 %v572
        %v574 = vpop.xlane.xlu0 %573
        %v575 = vadd.f32 %v501, %v502
        %576 = vadd.xlane.f32.xlu0 %v575
        %v577 = vpop.xlane.xlu0 %576
        %v578 = vadd.f32 %v503, %v504
        %579 = vadd.xlane.f32.xlu0 %v578
        %v580 = vpop.xlane.xlu0 %579
        %v581 = vadd.f32 %v505, %v506
        %582 = vadd.xlane.f32.xlu0 %v581
        %v583 = vpop.xlane.xlu0 %582
        %v584 = vadd.f32 %v507, %v508
        %585 = vadd.xlane.f32.xlu0 %v584
        %v586 = vpop.xlane.xlu0 %585
        %v587 = vadd.f32 %v509, %v510
        %588 = vadd.xlane.f32.xlu0 %v587
        %v589 = vpop.xlane.xlu0 %588
        %v590 = vadd.f32 %v511, %v512
        %591 = vadd.xlane.f32.xlu0 %v590
        %v592 = vpop.xlane.xlu0 %591
        %v593 = vadd.f32 %v513, %v514
        %594 = vadd.xlane.f32.xlu0 %v593
        %v595 = vpop.xlane.xlu0 %594
        %v596 = vadd.f32 %v515, %v516
        %597 = vadd.xlane.f32.xlu0 %v596
        %v598 = vpop.xlane.xlu0 %597
        %v599 = vadd.f32 %v517, %v518
        %600 = vadd.xlane.f32.xlu0 %v599
        %v601 = vpop.xlane.xlu0 %600
        %v602 = vadd.f32 %v519, %v520
        %603 = vadd.xlane.f32.xlu0 %v602
        %v604 = vpop.xlane.xlu0 %603
        %v605 = vadd.f32 %v521, %v522
        %606 = vadd.xlane.f32.xlu0 %v605
        %v607 = vpop.xlane.xlu0 %606
        %v608 = vadd.f32 %v523, %v524
        %609 = vadd.xlane.f32.xlu0 %v608
        %v610 = vpop.xlane.xlu0 %609
        %v611 = vadd.f32 %v525, %v526
        %612 = vadd.xlane.f32.xlu0 %v611
        %v613 = vpop.xlane.xlu0 %612
        %v614 = vadd.f32 %v527, %v528
        %615 = vadd.xlane.f32.xlu0 %v614
        %v616 = vpop.xlane.xlu0 %615
        %v617 = vadd.f32 %v529, %v530
        %618 = vadd.xlane.f32.xlu0 %v617
        %v619 = vpop.xlane.xlu0 %618
        %v620 = vadd.f32 %v531, %v532
        %621 = vadd.xlane.f32.xlu0 %v620
        %v622 = vpop.xlane.xlu0 %621
        %v623 = vadd.f32 %v533, %v534
        %624 = vadd.xlane.f32.xlu0 %v623
        %v625 = vpop.xlane.xlu0 %624
        %v626 = vadd.f32 %v535, %v536
        %627 = vadd.xlane.f32.xlu0 %v626
        %v628 = vpop.xlane.xlu0 %627
        %v629 = vadd.f32 %v537, %v538
        %630 = vadd.xlane.f32.xlu0 %v629
        %v631 = vpop.xlane.xlu0 %630
        %v632 = vadd.f32 %v539, %v540
        %633 = vadd.xlane.f32.xlu0 %v632
        %v634 = vpop.xlane.xlu0 %633
        %v635 = vadd.f32 %v541, %v542
        %636 = vadd.xlane.f32.xlu0 %v635
        %v637 = vpop.xlane.xlu0 %636
        %v638 = vadd.f32 %v543, %v544
        %639 = vadd.xlane.f32.xlu0 %v638
        %v640 = vpop.xlane.xlu0 %639
        %v641 = vadd.f32 %v545, %v546
        %642 = vadd.xlane.f32.xlu0 %v641
        %v643 = vpop.xlane.xlu0 %642
        %v644 = vadd.f32 %v547, %v548
        %645 = vadd.xlane.f32.xlu0 %v644
        %v646 = vpop.xlane.xlu0 %645
        %v647 = vrcp.pop 256.0
        %v648 = vmul.f32 %v553, %v647
        %v649 = vmul.f32 %v556, %v647
        %v650 = vmul.f32 %v559, %v647
        %v651 = vmul.f32 %v562, %v647
        %v652 = vmul.f32 %v565, %v647
        %v653 = vmul.f32 %v568, %v647
        %v654 = vmul.f32 %v571, %v647
        %v655 = vmul.f32 %v574, %v647
        %v656 = vmul.f32 %v577, %v647
        %v657 = vmul.f32 %v580, %v647
        %v658 = vmul.f32 %v583, %v647
        %v659 = vmul.f32 %v586, %v647
        %v660 = vmul.f32 %v589, %v647
        %v661 = vmul.f32 %v592, %v647
        %v662 = vmul.f32 %v595, %v647
        %v663 = vmul.f32 %v598, %v647
        %v664 = vmul.f32 %v601, %v647
        %v665 = vmul.f32 %v604, %v647
        %v666 = vmul.f32 %v607, %v647
        %v667 = vmul.f32 %v610, %v647
        %v668 = vmul.f32 %v613, %v647
        %v669 = vmul.f32 %v616, %v647
        %v670 = vmul.f32 %v619, %v647
        %v671 = vmul.f32 %v622, %v647
        %v672 = vmul.f32 %v625, %v647
        %v673 = vmul.f32 %v628, %v647
        %v674 = vmul.f32 %v631, %v647
        %v675 = vmul.f32 %v634, %v647
        %v676 = vmul.f32 %v637, %v647
        %v677 = vmul.f32 %v640, %v647
        %v678 = vmul.f32 %v643, %v647
        %v679 = vmul.f32 %v646, %v647
        %v680 = vsub.f32 %v485, %v648
        %v681 = vsub.f32 %v486, %v648
        %v682 = vsub.f32 %v487, %v649
        %v683 = vsub.f32 %v488, %v649
        %v684 = vsub.f32 %v489, %v650
        %v685 = vsub.f32 %v490, %v650
        %v686 = vsub.f32 %v491, %v651
        %v687 = vsub.f32 %v492, %v651
        %v688 = vsub.f32 %v493, %v652
        %v689 = vsub.f32 %v494, %v652
        %v690 = vsub.f32 %v495, %v653
        %v691 = vsub.f32 %v496, %v653
        %v692 = vsub.f32 %v497, %v654
        %v693 = vsub.f32 %v498, %v654
        %v694 = vsub.f32 %v499, %v655
        %v695 = vsub.f32 %v500, %v655
        %v696 = vsub.f32 %v501, %v656
        %v697 = vsub.f32 %v502, %v656
        %v698 = vsub.f32 %v503, %v657
        %v699 = vsub.f32 %v504, %v657
        %v700 = vsub.f32 %v505, %v658
        %v701 = vsub.f32 %v506, %v658
        %v702 = vsub.f32 %v507, %v659
        %v703 = vsub.f32 %v508, %v659
        %v704 = vsub.f32 %v509, %v660
        %v705 = vsub.f32 %v510, %v660
        %v706 = vsub.f32 %v511, %v661
        %v707 = vsub.f32 %v512, %v661
        %v708 = vsub.f32 %v513, %v662
        %v709 = vsub.f32 %v514, %v662
        %v710 = vsub.f32 %v515, %v663
        %v711 = vsub.f32 %v516, %v663
        %v712 = vsub.f32 %v517, %v664
        %v713 = vsub.f32 %v518, %v664
        %v714 = vsub.f32 %v519, %v665
        %v715 = vsub.f32 %v520, %v665
        %v716 = vsub.f32 %v521, %v666
        %v717 = vsub.f32 %v522, %v666
        %v718 = vsub.f32 %v523, %v667
        %v719 = vsub.f32 %v524, %v667
        %v720 = vsub.f32 %v525, %v668
        %v721 = vsub.f32 %v526, %v668
        %v722 = vsub.f32 %v527, %v669
        %v723 = vsub.f32 %v528, %v669
        %v724 = vsub.f32 %v529, %v670
        %v725 = vsub.f32 %v530, %v670
        %v726 = vsub.f32 %v531, %v671
        %v727 = vsub.f32 %v532, %v671
        %v728 = vsub.f32 %v533, %v672
        %v729 = vsub.f32 %v534, %v672
        %v730 = vsub.f32 %v535, %v673
        %v731 = vsub.f32 %v536, %v673
        %v732 = vsub.f32 %v537, %v674
        %v733 = vsub.f32 %v538, %v674
        %v734 = vsub.f32 %v539, %v675
        %v735 = vsub.f32 %v540, %v675
        %v736 = vsub.f32 %v541, %v676
        %v737 = vsub.f32 %v542, %v676
        %v738 = vsub.f32 %v543, %v677
        %v739 = vsub.f32 %v544, %v677
        %v740 = vsub.f32 %v545, %v678
        %v741 = vsub.f32 %v546, %v678
        %v742 = vsub.f32 %v547, %v679
        %v743 = vsub.f32 %v548, %v679
        %v744 = vmul.f32 %v680, %v680
        %v745 = vmul.f32 %v681, %v681
        %v746 = vmul.f32 %v682, %v682
        %v747 = vmul.f32 %v683, %v683
        %v748 = vmul.f32 %v684, %v684
        %v749 = vmul.f32 %v685, %v685
        %v750 = vmul.f32 %v686, %v686
        %v751 = vmul.f32 %v687, %v687
        %v752 = vmul.f32 %v688, %v688
        %v753 = vmul.f32 %v689, %v689
        %v754 = vmul.f32 %v690, %v690
        %v755 = vmul.f32 %v691, %v691
        %v756 = vmul.f32 %v692, %v692
        %v757 = vmul.f32 %v693, %v693
        %v758 = vmul.f32 %v694, %v694
        %v759 = vmul.f32 %v695, %v695
        %v760 = vmul.f32 %v696, %v696
        %v761 = vmul.f32 %v697, %v697
        %v762 = vmul.f32 %v698, %v698
        %v763 = vmul.f32 %v699, %v699
        %v764 = vmul.f32 %v700, %v700
        %v765 = vmul.f32 %v701, %v701
        %v766 = vmul.f32 %v702, %v702
        %v767 = vmul.f32 %v703, %v703
        %v768 = vmul.f32 %v704, %v704
        %v769 = vmul.f32 %v705, %v705
        %v770 = vmul.f32 %v706, %v706
        %v771 = vmul.f32 %v707, %v707
        %v772 = vmul.f32 %v708, %v708
        %v773 = vmul.f32 %v709, %v709
        %v774 = vmul.f32 %v710, %v710
        %v775 = vmul.f32 %v711, %v711
        %v776 = vmul.f32 %v712, %v712
        %v777 = vmul.f32 %v713, %v713
        %v778 = vmul.f32 %v714, %v714
        %v779 = vmul.f32 %v715, %v715
        %v780 = vmul.f32 %v716, %v716
        %v781 = vmul.f32 %v717, %v717
        %v782 = vmul.f32 %v718, %v718
        %v783 = vmul.f32 %v719, %v719
        %v784 = vmul.f32 %v720, %v720
        %v785 = vmul.f32 %v721, %v721
        %v786 = vmul.f32 %v722, %v722
        %v787 = vmul.f32 %v723, %v723
        %v788 = vmul.f32 %v724, %v724
        %v789 = vmul.f32 %v725, %v725
        %v790 = vmul.f32 %v726, %v726
        %v791 = vmul.f32 %v727, %v727
        %v792 = vmul.f32 %v728, %v728
        %v793 = vmul.f32 %v729, %v729
        %v794 = vmul.f32 %v730, %v730
        %v795 = vmul.f32 %v731, %v731
        %v796 = vmul.f32 %v732, %v732
        %v797 = vmul.f32 %v733, %v733
        %v798 = vmul.f32 %v734, %v734
        %v799 = vmul.f32 %v735, %v735
        %v800 = vmul.f32 %v736, %v736
        %v801 = vmul.f32 %v737, %v737
        %v802 = vmul.f32 %v738, %v738
        %v803 = vmul.f32 %v739, %v739
        %v804 = vmul.f32 %v740, %v740
        %v805 = vmul.f32 %v741, %v741
        %v806 = vmul.f32 %v742, %v742
        %v807 = vmul.f32 %v743, %v743
        %v808 = vadd.f32 %v744, %v745
        %809 = vadd.xlane.f32.xlu0 %v808
        %v810 = vpop.xlane.xlu0 %809
        %v811 = vadd.f32 %v746, %v747
        %812 = vadd.xlane.f32.xlu0 %v811
        %v813 = vpop.xlane.xlu0 %812
        %v814 = vadd.f32 %v748, %v749
        %815 = vadd.xlane.f32.xlu0 %v814
        %v816 = vpop.xlane.xlu0 %815
        %v817 = vadd.f32 %v750, %v751
        %818 = vadd.xlane.f32.xlu0 %v817
        %v819 = vpop.xlane.xlu0 %818
        %v820 = vadd.f32 %v752, %v753
        %821 = vadd.xlane.f32.xlu0 %v820
        %v822 = vpop.xlane.xlu0 %821
        %v823 = vadd.f32 %v754, %v755
        %824 = vadd.xlane.f32.xlu0 %v823
        %v825 = vpop.xlane.xlu0 %824
        %v826 = vadd.f32 %v756, %v757
        %827 = vadd.xlane.f32.xlu0 %v826
        %v828 = vpop.xlane.xlu0 %827
        %v829 = vadd.f32 %v758, %v759
        %830 = vadd.xlane.f32.xlu0 %v829
        %v831 = vpop.xlane.xlu0 %830
        %v832 = vadd.f32 %v760, %v761
        %833 = vadd.xlane.f32.xlu0 %v832
        %v834 = vpop.xlane.xlu0 %833
        %v835 = vadd.f32 %v762, %v763
        %836 = vadd.xlane.f32.xlu0 %v835
        %v837 = vpop.xlane.xlu0 %836
        %v838 = vadd.f32 %v764, %v765
        %839 = vadd.xlane.f32.xlu0 %v838
        %v840 = vpop.xlane.xlu0 %839
        %v841 = vadd.f32 %v766, %v767
        %842 = vadd.xlane.f32.xlu0 %v841
        %v843 = vpop.xlane.xlu0 %842
        %v844 = vadd.f32 %v768, %v769
        %845 = vadd.xlane.f32.xlu0 %v844
        %v846 = vpop.xlane.xlu0 %845
        %v847 = vadd.f32 %v770, %v771
        %848 = vadd.xlane.f32.xlu0 %v847
        %v849 = vpop.xlane.xlu0 %848
        %v850 = vadd.f32 %v772, %v773
        %851 = vadd.xlane.f32.xlu0 %v850
        %v852 = vpop.xlane.xlu0 %851
        %v853 = vadd.f32 %v774, %v775
        %854 = vadd.xlane.f32.xlu0 %v853
        %v855 = vpop.xlane.xlu0 %854
        %v856 = vadd.f32 %v776, %v777
        %857 = vadd.xlane.f32.xlu0 %v856
        %v858 = vpop.xlane.xlu0 %857
        %v859 = vadd.f32 %v778, %v779
        %860 = vadd.xlane.f32.xlu0 %v859
        %v861 = vpop.xlane.xlu0 %860
        %v862 = vadd.f32 %v780, %v781
        %863 = vadd.xlane.f32.xlu0 %v862
        %v864 = vpop.xlane.xlu0 %863
        %v865 = vadd.f32 %v782, %v783
        %866 = vadd.xlane.f32.xlu0 %v865
        %v867 = vpop.xlane.xlu0 %866
        %v868 = vadd.f32 %v784, %v785
        %869 = vadd.xlane.f32.xlu0 %v868
        %v870 = vpop.xlane.xlu0 %869
        %v871 = vadd.f32 %v786, %v787
        %872 = vadd.xlane.f32.xlu0 %v871
        %v873 = vpop.xlane.xlu0 %872
        %v874 = vadd.f32 %v788, %v789
        %875 = vadd.xlane.f32.xlu0 %v874
        %v876 = vpop.xlane.xlu0 %875
        %v877 = vadd.f32 %v790, %v791
        %878 = vadd.xlane.f32.xlu0 %v877
        %v879 = vpop.xlane.xlu0 %878
        %v880 = vadd.f32 %v792, %v793
        %881 = vadd.xlane.f32.xlu0 %v880
        %v882 = vpop.xlane.xlu0 %881
        %v883 = vadd.f32 %v794, %v795
        %884 = vadd.xlane.f32.xlu0 %v883
        %v885 = vpop.xlane.xlu0 %884
        %v886 = vadd.f32 %v796, %v797
        %887 = vadd.xlane.f32.xlu0 %v886
        %v888 = vpop.xlane.xlu0 %887
        %v889 = vadd.f32 %v798, %v799
        %890 = vadd.xlane.f32.xlu0 %v889
        %v891 = vpop.xlane.xlu0 %890
        %v892 = vadd.f32 %v800, %v801
        %893 = vadd.xlane.f32.xlu0 %v892
        %v894 = vpop.xlane.xlu0 %893
        %v895 = vadd.f32 %v802, %v803
        %896 = vadd.xlane.f32.xlu0 %v895
        %v897 = vpop.xlane.xlu0 %896
        %v898 = vadd.f32 %v804, %v805
        %899 = vadd.xlane.f32.xlu0 %v898
        %v900 = vpop.xlane.xlu0 %899
        %v901 = vadd.f32 %v806, %v807
        %902 = vadd.xlane.f32.xlu0 %v901
        %v903 = vpop.xlane.xlu0 %902
        %v904 = vmul.f32 %v810, %v647
        %v905 = vmul.f32 %v813, %v647
        %v906 = vmul.f32 %v816, %v647
        %v907 = vmul.f32 %v819, %v647
        %v908 = vmul.f32 %v822, %v647
        %v909 = vmul.f32 %v825, %v647
        %v910 = vmul.f32 %v828, %v647
        %v911 = vmul.f32 %v831, %v647
        %v912 = vmul.f32 %v834, %v647
        %v913 = vmul.f32 %v837, %v647
        %v914 = vmul.f32 %v840, %v647
        %v915 = vmul.f32 %v843, %v647
        %v916 = vmul.f32 %v846, %v647
        %v917 = vmul.f32 %v849, %v647
        %v918 = vmul.f32 %v852, %v647
        %v919 = vmul.f32 %v855, %v647
        %v920 = vmul.f32 %v858, %v647
        %v921 = vmul.f32 %v861, %v647
        %v922 = vmul.f32 %v864, %v647
        %v923 = vmul.f32 %v867, %v647
        %v924 = vmul.f32 %v870, %v647
        %v925 = vmul.f32 %v873, %v647
        %v926 = vmul.f32 %v876, %v647
        %v927 = vmul.f32 %v879, %v647
        %v928 = vmul.f32 %v882, %v647
        %v929 = vmul.f32 %v885, %v647
        %v930 = vmul.f32 %v888, %v647
        %v931 = vmul.f32 %v891, %v647
        %v932 = vmul.f32 %v894, %v647
        %v933 = vmul.f32 %v897, %v647
        %v934 = vmul.f32 %v900, %v647
        %v935 = vmul.f32 %v903, %v647
        %v936 = vadd.f32 %v904, 1e-05
        %v937 = vadd.f32 %v905, 1e-05
        %v938 = vadd.f32 %v906, 1e-05
        %v939 = vadd.f32 %v907, 1e-05
        %v940 = vadd.f32 %v908, 1e-05
        %v941 = vadd.f32 %v909, 1e-05
        %v942 = vadd.f32 %v910, 1e-05
        %v943 = vadd.f32 %v911, 1e-05
        %v944 = vadd.f32 %v912, 1e-05
        %v945 = vadd.f32 %v913, 1e-05
        %v946 = vadd.f32 %v914, 1e-05
        %v947 = vadd.f32 %v915, 1e-05
        %v948 = vadd.f32 %v916, 1e-05
        %v949 = vadd.f32 %v917, 1e-05
        %v950 = vadd.f32 %v918, 1e-05
        %v951 = vadd.f32 %v919, 1e-05
        %v952 = vadd.f32 %v920, 1e-05
        %v953 = vadd.f32 %v921, 1e-05
        %v954 = vadd.f32 %v922, 1e-05
        %v955 = vadd.f32 %v923, 1e-05
        %v956 = vadd.f32 %v924, 1e-05
        %v957 = vadd.f32 %v925, 1e-05
        %v958 = vadd.f32 %v926, 1e-05
        %v959 = vadd.f32 %v927, 1e-05
        %v960 = vadd.f32 %v928, 1e-05
        %v961 = vadd.f32 %v929, 1e-05
        %v962 = vadd.f32 %v930, 1e-05
        %v963 = vadd.f32 %v931, 1e-05
        %v964 = vadd.f32 %v932, 1e-05
        %v965 = vadd.f32 %v933, 1e-05
        %v966 = vadd.f32 %v934, 1e-05
        %v967 = vadd.f32 %v935, 1e-05
        %v968 = vrsqrt.pop %v936
        %v969 = vrsqrt.pop %v937
        %v970 = vrsqrt.pop %v938
        %v971 = vrsqrt.pop %v939
        %v972 = vrsqrt.pop %v940
        %v973 = vrsqrt.pop %v941
        %v974 = vrsqrt.pop %v942
        %v975 = vrsqrt.pop %v943
        %v976 = vrsqrt.pop %v944
        %v977 = vrsqrt.pop %v945
        %v978 = vrsqrt.pop %v946
        %v979 = vrsqrt.pop %v947
        %v980 = vrsqrt.pop %v948
        %v981 = vrsqrt.pop %v949
        %v982 = vrsqrt.pop %v950
        %v983 = vrsqrt.pop %v951
        %v984 = vrsqrt.pop %v952
        %v985 = vrsqrt.pop %v953
        %v986 = vrsqrt.pop %v954
        %v987 = vrsqrt.pop %v955
        %v988 = vrsqrt.pop %v956
        %v989 = vrsqrt.pop %v957
        %v990 = vrsqrt.pop %v958
        %v991 = vrsqrt.pop %v959
        %v992 = vrsqrt.pop %v960
        %v993 = vrsqrt.pop %v961
        %v994 = vrsqrt.pop %v962
        %v995 = vrsqrt.pop %v963
        %v996 = vrsqrt.pop %v964
        %v997 = vrsqrt.pop %v965
        %v998 = vrsqrt.pop %v966
        %v999 = vrsqrt.pop %v967
        %v1000 = vmul.f32 %v680, %v968
        %v1001 = vmul.f32 %v681, %v968
        %v1002 = vmul.f32 %v682, %v969
        %v1003 = vmul.f32 %v683, %v969
        %v1004 = vmul.f32 %v684, %v970
        %v1005 = vmul.f32 %v685, %v970
        %v1006 = vmul.f32 %v686, %v971
        %v1007 = vmul.f32 %v687, %v971
        %v1008 = vmul.f32 %v688, %v972
        %v1009 = vmul.f32 %v689, %v972
        %v1010 = vmul.f32 %v690, %v973
        %v1011 = vmul.f32 %v691, %v973
        %v1012 = vmul.f32 %v692, %v974
        %v1013 = vmul.f32 %v693, %v974
        %v1014 = vmul.f32 %v694, %v975
        %v1015 = vmul.f32 %v695, %v975
        %v1016 = vmul.f32 %v696, %v976
        %v1017 = vmul.f32 %v697, %v976
        %v1018 = vmul.f32 %v698, %v977
        %v1019 = vmul.f32 %v699, %v977
        %v1020 = vmul.f32 %v700, %v978
        %v1021 = vmul.f32 %v701, %v978
        %v1022 = vmul.f32 %v702, %v979
        %v1023 = vmul.f32 %v703, %v979
        %v1024 = vmul.f32 %v704, %v980
        %v1025 = vmul.f32 %v705, %v980
        %v1026 = vmul.f32 %v706, %v981
        %v1027 = vmul.f32 %v707, %v981
        %v1028 = vmul.f32 %v708, %v982
        %v1029 = vmul.f32 %v709, %v982
        %v1030 = vmul.f32 %v710, %v983
        %v1031 = vmul.f32 %v711, %v983
        %v1032 = vmul.f32 %v712, %v984
        %v1033 = vmul.f32 %v713, %v984
        %v1034 = vmul.f32 %v714, %v985
        %v1035 = vmul.f32 %v715, %v985
        %v1036 = vmul.f32 %v716, %v986
        %v1037 = vmul.f32 %v717, %v986
        %v1038 = vmul.f32 %v718, %v987
        %v1039 = vmul.f32 %v719, %v987
        %v1040 = vmul.f32 %v720, %v988
        %v1041 = vmul.f32 %v721, %v988
        %v1042 = vmul.f32 %v722, %v989
        %v1043 = vmul.f32 %v723, %v989
        %v1044 = vmul.f32 %v724, %v990
        %v1045 = vmul.f32 %v725, %v990
        %v1046 = vmul.f32 %v726, %v991
        %v1047 = vmul.f32 %v727, %v991
        %v1048 = vmul.f32 %v728, %v992
        %v1049 = vmul.f32 %v729, %v992
        %v1050 = vmul.f32 %v730, %v993
        %v1051 = vmul.f32 %v731, %v993
        %v1052 = vmul.f32 %v732, %v994
        %v1053 = vmul.f32 %v733, %v994
        %v1054 = vmul.f32 %v734, %v995
        %v1055 = vmul.f32 %v735, %v995
        %v1056 = vmul.f32 %v736, %v996
        %v1057 = vmul.f32 %v737, %v996
        %v1058 = vmul.f32 %v738, %v997
        %v1059 = vmul.f32 %v739, %v997
        %v1060 = vmul.f32 %v740, %v998
        %v1061 = vmul.f32 %v741, %v998
        %v1062 = vmul.f32 %v742, %v999
        %v1063 = vmul.f32 %v743, %v999
        %v1065 = vlaneseq
        %v1066 = vshrl.u32 %v1065, 7
        %v1067 = vsub.s32 0, %v1066
        %v1068 = vrot.slane %v549, %v1067
        %v1069 = vlaneseq
        %v1070 = vshrl.u32 %v1069, 7
        %v1071 = vsub.s32 1, %v1070
        %v1072 = vrot.slane %v549, %v1071
        %v1075 = vmul.f32 %v1000, %v1068
        %v1076 = vmul.f32 %v1001, %v1072
        %v1077 = vmul.f32 %v1002, %v1068
        %v1078 = vmul.f32 %v1003, %v1072
        %v1079 = vmul.f32 %v1004, %v1068
        %v1080 = vmul.f32 %v1005, %v1072
        %v1081 = vmul.f32 %v1006, %v1068
        %v1082 = vmul.f32 %v1007, %v1072
        %v1083 = vmul.f32 %v1008, %v1068
        %v1084 = vmul.f32 %v1009, %v1072
        %v1085 = vmul.f32 %v1010, %v1068
        %v1086 = vmul.f32 %v1011, %v1072
        %v1087 = vmul.f32 %v1012, %v1068
        %v1088 = vmul.f32 %v1013, %v1072
        %v1089 = vmul.f32 %v1014, %v1068
        %v1090 = vmul.f32 %v1015, %v1072
        %v1091 = vmul.f32 %v1016, %v1068
        %v1092 = vmul.f32 %v1017, %v1072
        %v1093 = vmul.f32 %v1018, %v1068
        %v1094 = vmul.f32 %v1019, %v1072
        %v1095 = vmul.f32 %v1020, %v1068
        %v1096 = vmul.f32 %v1021, %v1072
        %v1097 = vmul.f32 %v1022, %v1068
        %v1098 = vmul.f32 %v1023, %v1072
        %v1099 = vmul.f32 %v1024, %v1068
        %v1100 = vmul.f32 %v1025, %v1072
        %v1101 = vmul.f32 %v1026, %v1068
        %v1102 = vmul.f32 %v1027, %v1072
        %v1103 = vmul.f32 %v1028, %v1068
        %v1104 = vmul.f32 %v1029, %v1072
        %v1105 = vmul.f32 %v1030, %v1068
        %v1106 = vmul.f32 %v1031, %v1072
        %v1107 = vmul.f32 %v1032, %v1068
        %v1108 = vmul.f32 %v1033, %v1072
        %v1109 = vmul.f32 %v1034, %v1068
        %v1110 = vmul.f32 %v1035, %v1072
        %v1111 = vmul.f32 %v1036, %v1068
        %v1112 = vmul.f32 %v1037, %v1072
        %v1113 = vmul.f32 %v1038, %v1068
        %v1114 = vmul.f32 %v1039, %v1072
        %v1115 = vmul.f32 %v1040, %v1068
        %v1116 = vmul.f32 %v1041, %v1072
        %v1117 = vmul.f32 %v1042, %v1068
        %v1118 = vmul.f32 %v1043, %v1072
        %v1119 = vmul.f32 %v1044, %v1068
        %v1120 = vmul.f32 %v1045, %v1072
        %v1121 = vmul.f32 %v1046, %v1068
        %v1122 = vmul.f32 %v1047, %v1072
        %v1123 = vmul.f32 %v1048, %v1068
        %v1124 = vmul.f32 %v1049, %v1072
        %v1125 = vmul.f32 %v1050, %v1068
        %v1126 = vmul.f32 %v1051, %v1072
        %v1127 = vmul.f32 %v1052, %v1068
        %v1128 = vmul.f32 %v1053, %v1072
        %v1129 = vmul.f32 %v1054, %v1068
        %v1130 = vmul.f32 %v1055, %v1072
        %v1131 = vmul.f32 %v1056, %v1068
        %v1132 = vmul.f32 %v1057, %v1072
        %v1133 = vmul.f32 %v1058, %v1068
        %v1134 = vmul.f32 %v1059, %v1072
        %v1135 = vmul.f32 %v1060, %v1068
        %v1136 = vmul.f32 %v1061, %v1072
        %v1137 = vmul.f32 %v1062, %v1068
        %v1138 = vmul.f32 %v1063, %v1072
        %v1140 = vlaneseq
        %v1141 = vshrl.u32 %v1140, 7
        %v1142 = vsub.s32 0, %v1141
        %v1143 = vrot.slane %v550, %v1142
        %v1144 = vlaneseq
        %v1145 = vshrl.u32 %v1144, 7
        %v1146 = vsub.s32 1, %v1145
        %v1147 = vrot.slane %v550, %v1146
        %v1150 = vadd.f32 %v1075, %v1143
        %v1151 = vadd.f32 %v1076, %v1147
        %v1152 = vadd.f32 %v1077, %v1143
        %v1153 = vadd.f32 %v1078, %v1147
        %v1154 = vadd.f32 %v1079, %v1143
        %v1155 = vadd.f32 %v1080, %v1147
        %v1156 = vadd.f32 %v1081, %v1143
        %v1157 = vadd.f32 %v1082, %v1147
        %v1158 = vadd.f32 %v1083, %v1143
        %v1159 = vadd.f32 %v1084, %v1147
        %v1160 = vadd.f32 %v1085, %v1143
        %v1161 = vadd.f32 %v1086, %v1147
        %v1162 = vadd.f32 %v1087, %v1143
        %v1163 = vadd.f32 %v1088, %v1147
        %v1164 = vadd.f32 %v1089, %v1143
        %v1165 = vadd.f32 %v1090, %v1147
        %v1166 = vadd.f32 %v1091, %v1143
        %v1167 = vadd.f32 %v1092, %v1147
        %v1168 = vadd.f32 %v1093, %v1143
        %v1169 = vadd.f32 %v1094, %v1147
        %v1170 = vadd.f32 %v1095, %v1143
        %v1171 = vadd.f32 %v1096, %v1147
        %v1172 = vadd.f32 %v1097, %v1143
        %v1173 = vadd.f32 %v1098, %v1147
        %v1174 = vadd.f32 %v1099, %v1143
        %v1175 = vadd.f32 %v1100, %v1147
        %v1176 = vadd.f32 %v1101, %v1143
        %v1177 = vadd.f32 %v1102, %v1147
        %v1178 = vadd.f32 %v1103, %v1143
        %v1179 = vadd.f32 %v1104, %v1147
        %v1180 = vadd.f32 %v1105, %v1143
        %v1181 = vadd.f32 %v1106, %v1147
        %v1182 = vadd.f32 %v1107, %v1143
        %v1183 = vadd.f32 %v1108, %v1147
        %v1184 = vadd.f32 %v1109, %v1143
        %v1185 = vadd.f32 %v1110, %v1147
        %v1186 = vadd.f32 %v1111, %v1143
        %v1187 = vadd.f32 %v1112, %v1147
        %v1188 = vadd.f32 %v1113, %v1143
        %v1189 = vadd.f32 %v1114, %v1147
        %v1190 = vadd.f32 %v1115, %v1143
        %v1191 = vadd.f32 %v1116, %v1147
        %v1192 = vadd.f32 %v1117, %v1143
        %v1193 = vadd.f32 %v1118, %v1147
        %v1194 = vadd.f32 %v1119, %v1143
        %v1195 = vadd.f32 %v1120, %v1147
        %v1196 = vadd.f32 %v1121, %v1143
        %v1197 = vadd.f32 %v1122, %v1147
        %v1198 = vadd.f32 %v1123, %v1143
        %v1199 = vadd.f32 %v1124, %v1147
        %v1200 = vadd.f32 %v1125, %v1143
        %v1201 = vadd.f32 %v1126, %v1147
        %v1202 = vadd.f32 %v1127, %v1143
        %v1203 = vadd.f32 %v1128, %v1147
        %v1204 = vadd.f32 %v1129, %v1143
        %v1205 = vadd.f32 %v1130, %v1147
        %v1206 = vadd.f32 %v1131, %v1143
        %v1207 = vadd.f32 %v1132, %v1147
        %v1208 = vadd.f32 %v1133, %v1143
        %v1209 = vadd.f32 %v1134, %v1147
        %v1210 = vadd.f32 %v1135, %v1143
        %v1211 = vadd.f32 %v1136, %v1147
        %v1212 = vadd.f32 %v1137, %v1143
        %v1213 = vadd.f32 %v1138, %v1147
        %v1214 = vpack.c.bf16 %v1152, %v1150
        %v1215 = vpack.c.bf16 %v1153, %v1151
        %v1216 = vpack.c.bf16 %v1156, %v1154
        %v1217 = vpack.c.bf16 %v1157, %v1155
        %v1218 = vpack.c.bf16 %v1160, %v1158
        %v1219 = vpack.c.bf16 %v1161, %v1159
        %v1220 = vpack.c.bf16 %v1164, %v1162
        %v1221 = vpack.c.bf16 %v1165, %v1163
        %v1222 = vpack.c.bf16 %v1168, %v1166
        %v1223 = vpack.c.bf16 %v1169, %v1167
        %v1224 = vpack.c.bf16 %v1172, %v1170
        %v1225 = vpack.c.bf16 %v1173, %v1171
        %v1226 = vpack.c.bf16 %v1176, %v1174
        %v1227 = vpack.c.bf16 %v1177, %v1175
        %v1228 = vpack.c.bf16 %v1180, %v1178
        %v1229 = vpack.c.bf16 %v1181, %v1179
        %v1230 = vpack.c.bf16 %v1184, %v1182
        %v1231 = vpack.c.bf16 %v1185, %v1183
        %v1232 = vpack.c.bf16 %v1188, %v1186
        %v1233 = vpack.c.bf16 %v1189, %v1187
        %v1234 = vpack.c.bf16 %v1192, %v1190
        %v1235 = vpack.c.bf16 %v1193, %v1191
        %v1236 = vpack.c.bf16 %v1196, %v1194
        %v1237 = vpack.c.bf16 %v1197, %v1195
        %v1238 = vpack.c.bf16 %v1200, %v1198
        %v1239 = vpack.c.bf16 %v1201, %v1199
        %v1240 = vpack.c.bf16 %v1204, %v1202
        %v1241 = vpack.c.bf16 %v1205, %v1203
        %v1242 = vpack.c.bf16 %v1208, %v1206
        %v1243 = vpack.c.bf16 %v1209, %v1207
        %v1244 = vpack.c.bf16 %v1212, %v1210
        %v1245 = vpack.c.bf16 %v1213, %v1211
        %v1246 = vld [vmem:[#allocation5] sm:$0xff]
        %v1247 = vld [vmem:[#allocation5 + $0x8] sm:$0xff]
        %v1248 = vld [vmem:[#allocation5 + $0x10] sm:$0xff]
        %v1249 = vld [vmem:[#allocation5 + $0x18] sm:$0xff]
        %v1250 = vld [vmem:[#allocation5 + $0x20] sm:$0xff]
        %v1251 = vld [vmem:[#allocation5 + $0x28] sm:$0xff]
        %v1252 = vld [vmem:[#allocation5 + $0x30] sm:$0xff]
        %v1253 = vld [vmem:[#allocation5 + $0x38] sm:$0xff]
        %v1254 = vld [vmem:[#allocation5 + $0x40] sm:$0xff]
        %v1255 = vld [vmem:[#allocation5 + $0x48] sm:$0xff]
        %v1256 = vld [vmem:[#allocation5 + $0x50] sm:$0xff]
        %v1257 = vld [vmem:[#allocation5 + $0x58] sm:$0xff]
        %v1258 = vld [vmem:[#allocation5 + $0x60] sm:$0xff]
        %v1259 = vld [vmem:[#allocation5 + $0x68] sm:$0xff]
        %v1260 = vld [vmem:[#allocation5 + $0x70] sm:$0xff]
        %v1261 = vld [vmem:[#allocation5 + $0x78] sm:$0xff]
        %v1262 = vld [vmem:[#allocation5 + $0x80] sm:$0xff]
        %v1263 = vld [vmem:[#allocation5 + $0x88] sm:$0xff]
        %v1264 = vld [vmem:[#allocation5 + $0x90] sm:$0xff]
        %v1265 = vld [vmem:[#allocation5 + $0x98] sm:$0xff]
        %v1266 = vld [vmem:[#allocation5 + $0xa0] sm:$0xff]
        %v1267 = vld [vmem:[#allocation5 + $0xa8] sm:$0xff]
        %v1268 = vld [vmem:[#allocation5 + $0xb0] sm:$0xff]
        %v1269 = vld [vmem:[#allocation5 + $0xb8] sm:$0xff]
        %v1270 = vld [vmem:[#allocation5 + $0xc0] sm:$0xff]
        %v1271 = vld [vmem:[#allocation5 + $0xc8] sm:$0xff]
        %v1272 = vld [vmem:[#allocation5 + $0xd0] sm:$0xff]
        %v1273 = vld [vmem:[#allocation5 + $0xd8] sm:$0xff]
        %v1274 = vld [vmem:[#allocation5 + $0xe0] sm:$0xff]
        %v1275 = vld [vmem:[#allocation5 + $0xe8] sm:$0xff]
        %v1276 = vld [vmem:[#allocation5 + $0xf0] sm:$0xff]
        %v1277 = vld [vmem:[#allocation5 + $0xf8] sm:$0xff]
        %v1278 = vld [vmem:[%s4] sm:$0x3]
        %v1280 = vlaneseq
        %v1281 = vshrl.u32 %v1280, 7
        %v1282 = vsub.s32 0, %v1281
        %v1283 = vrot.slane %v1278, %v1282
        %v1284 = vlaneseq
        %v1285 = vshrl.u32 %v1284, 7
        %v1286 = vsub.s32 1, %v1285
        %v1287 = vrot.slane %v1278, %v1286
        %v1322 = vunpack.c.l.b16 %v1246
        %v1323 = vunpack.c.h.b16 %v1246
        %v1324 = vunpack.c.l.b16 %v1247
        %v1325 = vunpack.c.h.b16 %v1247
        %v1326 = vunpack.c.l.b16 %v1248
        %v1327 = vunpack.c.h.b16 %v1248
        %v1328 = vunpack.c.l.b16 %v1249
        %v1329 = vunpack.c.h.b16 %v1249
        %v1330 = vunpack.c.l.b16 %v1250
        %v1331 = vunpack.c.h.b16 %v1250
        %v1332 = vunpack.c.l.b16 %v1251
        %v1333 = vunpack.c.h.b16 %v1251
        %v1334 = vunpack.c.l.b16 %v1252
        %v1335 = vunpack.c.h.b16 %v1252
        %v1336 = vunpack.c.l.b16 %v1253
        %v1337 = vunpack.c.h.b16 %v1253
        %v1338 = vunpack.c.l.b16 %v1254
        %v1339 = vunpack.c.h.b16 %v1254
        %v1340 = vunpack.c.l.b16 %v1255
        %v1341 = vunpack.c.h.b16 %v1255
        %v1342 = vunpack.c.l.b16 %v1256
        %v1343 = vunpack.c.h.b16 %v1256
        %v1344 = vunpack.c.l.b16 %v1257
        %v1345 = vunpack.c.h.b16 %v1257
        %v1346 = vunpack.c.l.b16 %v1258
        %v1347 = vunpack.c.h.b16 %v1258
        %v1348 = vunpack.c.l.b16 %v1259
        %v1349 = vunpack.c.h.b16 %v1259
        %v1350 = vunpack.c.l.b16 %v1260
        %v1351 = vunpack.c.h.b16 %v1260
        %v1352 = vunpack.c.l.b16 %v1261
        %v1353 = vunpack.c.h.b16 %v1261
        %v1354 = vunpack.c.l.b16 %v1262
        %v1355 = vunpack.c.h.b16 %v1262
        %v1356 = vunpack.c.l.b16 %v1263
        %v1357 = vunpack.c.h.b16 %v1263
        %v1358 = vunpack.c.l.b16 %v1264
        %v1359 = vunpack.c.h.b16 %v1264
        %v1360 = vunpack.c.l.b16 %v1265
        %v1361 = vunpack.c.h.b16 %v1265
        %v1362 = vunpack.c.l.b16 %v1266
        %v1363 = vunpack.c.h.b16 %v1266
        %v1364 = vunpack.c.l.b16 %v1267
        %v1365 = vunpack.c.h.b16 %v1267
        %v1366 = vunpack.c.l.b16 %v1268
        %v1367 = vunpack.c.h.b16 %v1268
        %v1368 = vunpack.c.l.b16 %v1269
        %v1369 = vunpack.c.h.b16 %v1269
        %v1370 = vunpack.c.l.b16 %v1270
        %v1371 = vunpack.c.h.b16 %v1270
        %v1372 = vunpack.c.l.b16 %v1271
        %v1373 = vunpack.c.h.b16 %v1271
        %v1374 = vunpack.c.l.b16 %v1272
        %v1375 = vunpack.c.h.b16 %v1272
        %v1376 = vunpack.c.l.b16 %v1273
        %v1377 = vunpack.c.h.b16 %v1273
        %v1378 = vunpack.c.l.b16 %v1274
        %v1379 = vunpack.c.h.b16 %v1274
        %v1380 = vunpack.c.l.b16 %v1275
        %v1381 = vunpack.c.h.b16 %v1275
        %v1382 = vunpack.c.l.b16 %v1276
        %v1383 = vunpack.c.h.b16 %v1276
        %v1384 = vunpack.c.l.b16 %v1277
        %v1385 = vunpack.c.h.b16 %v1277
        %v1386 = vpack.c.b16 %v1324, %v1322
        %v1387 = vpack.c.b16 %v1325, %v1323
        %v1388 = vpack.c.b16 %v1328, %v1326
        %v1389 = vpack.c.b16 %v1329, %v1327
        %v1390 = vpack.c.b16 %v1332, %v1330
        %v1391 = vpack.c.b16 %v1333, %v1331
        %v1392 = vpack.c.b16 %v1336, %v1334
        %v1393 = vpack.c.b16 %v1337, %v1335
        %v1394 = vpack.c.b16 %v1340, %v1338
        %v1395 = vpack.c.b16 %v1341, %v1339
        %v1396 = vpack.c.b16 %v1344, %v1342
        %v1397 = vpack.c.b16 %v1345, %v1343
        %v1398 = vpack.c.b16 %v1348, %v1346
        %v1399 = vpack.c.b16 %v1349, %v1347
        %v1400 = vpack.c.b16 %v1352, %v1350
        %v1401 = vpack.c.b16 %v1353, %v1351
        %v1402 = vpack.c.b16 %v1356, %v1354
        %v1403 = vpack.c.b16 %v1357, %v1355
        %v1404 = vpack.c.b16 %v1360, %v1358
        %v1405 = vpack.c.b16 %v1361, %v1359
        %v1406 = vpack.c.b16 %v1364, %v1362
        %v1407 = vpack.c.b16 %v1365, %v1363
        %v1408 = vpack.c.b16 %v1368, %v1366
        %v1409 = vpack.c.b16 %v1369, %v1367
        %v1410 = vpack.c.b16 %v1372, %v1370
        %v1411 = vpack.c.b16 %v1373, %v1371
        %v1412 = vpack.c.b16 %v1376, %v1374
        %v1413 = vpack.c.b16 %v1377, %v1375
        %v1414 = vpack.c.b16 %v1380, %v1378
        %v1415 = vpack.c.b16 %v1381, %v1379
        %v1416 = vpack.c.b16 %v1384, %v1382
        %v1417 = vpack.c.b16 %v1385, %v1383
        %1450 = vmatprep.subr.bf16.mxu0 %v1387
        %1451 = vmatpush1.bf16.msra.mxu0 %v1386
        %1452 = vmatprep.subr.bf16.mxu0 %v1389
        %1453 = vmatpush1.bf16.msra.mxu0 %v1388
        %1454 = vmatprep.subr.bf16.mxu0 %v1391
        %1455 = vmatpush1.bf16.msra.mxu0 %v1390
        %1456 = vmatprep.subr.bf16.mxu0 %v1393
        %1457 = vmatpush1.bf16.msra.mxu0 %v1392
        %1458 = vmatprep.subr.bf16.mxu0 %v1395
        %1459 = vmatpush1.bf16.msra.mxu0 %v1394
        %1460 = vmatprep.subr.bf16.mxu0 %v1397
        %1461 = vmatpush1.bf16.msra.mxu0 %v1396
        %1462 = vmatprep.subr.bf16.mxu0 %v1399
        %1463 = vmatpush1.bf16.msra.mxu0 %v1398
        %1464 = vmatprep.subr.bf16.mxu0 %v1401
        %1465 = vmatpush1.bf16.msra.mxu0 %v1400
        %1466 = vmatprep.subr.bf16.mxu0 %v1403
        %1467 = vmatpush1.bf16.msra.mxu0 %v1402
        %1468 = vmatprep.subr.bf16.mxu0 %v1405
        %1469 = vmatpush1.bf16.msra.mxu0 %v1404
        %1470 = vmatprep.subr.bf16.mxu0 %v1407
        %1471 = vmatpush1.bf16.msra.mxu0 %v1406
        %1472 = vmatprep.subr.bf16.mxu0 %v1409
        %1473 = vmatpush1.bf16.msra.mxu0 %v1408
        %1474 = vmatprep.subr.bf16.mxu0 %v1411
        %1475 = vmatpush1.bf16.msra.mxu0 %v1410
        %1476 = vmatprep.subr.bf16.mxu0 %v1413
        %1477 = vmatpush1.bf16.msra.mxu0 %v1412
        %1478 = vmatprep.subr.bf16.mxu0 %v1415
        %1479 = vmatpush1.bf16.msra.mxu0 %v1414
        %1480 = vmatprep.subr.bf16.mxu0 %v1417
        %1481 = vmatpush1.bf16.msra.mxu0 %v1416
        %1482 = vmatprep.mubr.bf16.mxu0 %v1215
        %1483 = vmatmul.mubr.bf16.gmra.mrb[0].mxu0 %v1214
        %v1484 = vpop.f32.mrb[0].mxu0
        %v1485 = vadd.f32 %v1283, %v1484
        %v1486 = vpop.f32.mrb[0].mxu0
        %v1487 = vadd.f32 %v1287, %v1486
        %v1488 = vpop.f32.mrb[0].mxu0
        %v1489 = vadd.f32 %v1283, %v1488
        %v1490 = vpop.f32.mrb[0].mxu0
        %v1491 = vadd.f32 %v1287, %v1490
        %1492 = vmatprep.mubr.bf16.mxu0 %v1217
        %1493 = vmatmul.mubr.bf16.gmra.mrb[0].mxu0 %v1216
        %v1494 = vpop.f32.mrb[0].mxu0
        %v1495 = vadd.f32 %v1283, %v1494
        %v1496 = vpop.f32.mrb[0].mxu0
        %v1497 = vadd.f32 %v1287, %v1496
        %v1498 = vpop.f32.mrb[0].mxu0
        %v1499 = vadd.f32 %v1283, %v1498
        %v1500 = vpop.f32.mrb[0].mxu0
        %v1501 = vadd.f32 %v1287, %v1500
        %1502 = vmatprep.mubr.bf16.mxu0 %v1219
        %1503 = vmatmul.mubr.bf16.gmra.mrb[0].mxu0 %v1218
        %v1504 = vpop.f32.mrb[0].mxu0
        %v1505 = vadd.f32 %v1283, %v1504
        %v1506 = vpop.f32.mrb[0].mxu0
        %v1507 = vadd.f32 %v1287, %v1506
        %v1508 = vpop.f32.mrb[0].mxu0
        %v1509 = vadd.f32 %v1283, %v1508
        %v1510 = vpop.f32.mrb[0].mxu0
        %v1511 = vadd.f32 %v1287, %v1510
        %1512 = vmatprep.mubr.bf16.mxu0 %v1221
        %1513 = vmatmul.mubr.bf16.gmra.mrb[0].mxu0 %v1220
        %v1514 = vpop.f32.mrb[0].mxu0
        %v1515 = vadd.f32 %v1283, %v1514
        %v1516 = vpop.f32.mrb[0].mxu0
        %v1517 = vadd.f32 %v1287, %v1516
        %v1518 = vpop.f32.mrb[0].mxu0
        %v1519 = vadd.f32 %v1283, %v1518
        %v1520 = vpop.f32.mrb[0].mxu0
        %v1521 = vadd.f32 %v1287, %v1520
        %1522 = vmatprep.mubr.bf16.mxu0 %v1223
        %1523 = vmatmul.mubr.bf16.gmra.mrb[0].mxu0 %v1222
        %v1524 = vpop.f32.mrb[0].mxu0
        %v1525 = vadd.f32 %v1283, %v1524
        %v1526 = vpop.f32.mrb[0].mxu0
        %v1527 = vadd.f32 %v1287, %v1526
        %v1528 = vpop.f32.mrb[0].mxu0
        %v1529 = vadd.f32 %v1283, %v1528
        %v1530 = vpop.f32.mrb[0].mxu0
        %v1531 = vadd.f32 %v1287, %v1530
        %1532 = vmatprep.mubr.bf16.mxu0 %v1225
        %1533 = vmatmul.mubr.bf16.gmra.mrb[0].mxu0 %v1224
        %v1534 = vpop.f32.mrb[0].mxu0
        %v1535 = vadd.f32 %v1283, %v1534
        %v1536 = vpop.f32.mrb[0].mxu0
        %v1537 = vadd.f32 %v1287, %v1536
        %v1538 = vpop.f32.mrb[0].mxu0
        %v1539 = vadd.f32 %v1283, %v1538
        %v1540 = vpop.f32.mrb[0].mxu0
        %v1541 = vadd.f32 %v1287, %v1540
        %1542 = vmatprep.mubr.bf16.mxu0 %v1227
        %1543 = vmatmul.mubr.bf16.gmra.mrb[0].mxu0 %v1226
        %v1544 = vpop.f32.mrb[0].mxu0
        %v1545 = vadd.f32 %v1283, %v1544
        %v1546 = vpop.f32.mrb[0].mxu0
        %v1547 = vadd.f32 %v1287, %v1546
        %v1548 = vpop.f32.mrb[0].mxu0
        %v1549 = vadd.f32 %v1283, %v1548
        %v1550 = vpop.f32.mrb[0].mxu0
        %v1551 = vadd.f32 %v1287, %v1550
        %1552 = vmatprep.mubr.bf16.mxu0 %v1229
        %1553 = vmatmul.mubr.bf16.gmra.mrb[0].mxu0 %v1228
        %v1554 = vpop.f32.mrb[0].mxu0
        %v1555 = vadd.f32 %v1283, %v1554
        %v1556 = vpop.f32.mrb[0].mxu0
        %v1557 = vadd.f32 %v1287, %v1556
        %v1558 = vpop.f32.mrb[0].mxu0
        %v1559 = vadd.f32 %v1283, %v1558
        %v1560 = vpop.f32.mrb[0].mxu0
        %v1561 = vadd.f32 %v1287, %v1560
        %1562 = vmatprep.mubr.bf16.mxu0 %v1231
        %1563 = vmatmul.mubr.bf16.gmra.mrb[0].mxu0 %v1230
        %v1564 = vpop.f32.mrb[0].mxu0
        %v1565 = vadd.f32 %v1283, %v1564
        %v1566 = vpop.f32.mrb[0].mxu0
        %v1567 = vadd.f32 %v1287, %v1566
        %v1568 = vpop.f32.mrb[0].mxu0
        %v1569 = vadd.f32 %v1283, %v1568
        %v1570 = vpop.f32.mrb[0].mxu0
        %v1571 = vadd.f32 %v1287, %v1570
        %1572 = vmatprep.mubr.bf16.mxu0 %v1233
        %1573 = vmatmul.mubr.bf16.gmra.mrb[0].mxu0 %v1232
        %v1574 = vpop.f32.mrb[0].mxu0
        %v1575 = vadd.f32 %v1283, %v1574
        %v1576 = vpop.f32.mrb[0].mxu0
        %v1577 = vadd.f32 %v1287, %v1576
        %v1578 = vpop.f32.mrb[0].mxu0
        %v1579 = vadd.f32 %v1283, %v1578
        %v1580 = vpop.f32.mrb[0].mxu0
        %v1581 = vadd.f32 %v1287, %v1580
        %1582 = vmatprep.mubr.bf16.mxu0 %v1235
        %1583 = vmatmul.mubr.bf16.gmra.mrb[0].mxu0 %v1234
        %v1584 = vpop.f32.mrb[0].mxu0
        %v1585 = vadd.f32 %v1283, %v1584
        %v1586 = vpop.f32.mrb[0].mxu0
        %v1587 = vadd.f32 %v1287, %v1586
        %v1588 = vpop.f32.mrb[0].mxu0
        %v1589 = vadd.f32 %v1283, %v1588
        %v1590 = vpop.f32.mrb[0].mxu0
        %v1591 = vadd.f32 %v1287, %v1590
        %1592 = vmatprep.mubr.bf16.mxu0 %v1237
        %1593 = vmatmul.mubr.bf16.gmra.mrb[0].mxu0 %v1236
        %v1594 = vpop.f32.mrb[0].mxu0
        %v1595 = vadd.f32 %v1283, %v1594
        %v1596 = vpop.f32.mrb[0].mxu0
        %v1597 = vadd.f32 %v1287, %v1596
        %v1598 = vpop.f32.mrb[0].mxu0
        %v1599 = vadd.f32 %v1283, %v1598
        %v1600 = vpop.f32.mrb[0].mxu0
        %v1601 = vadd.f32 %v1287, %v1600
        %1602 = vmatprep.mubr.bf16.mxu0 %v1239
        %1603 = vmatmul.mubr.bf16.gmra.mrb[0].mxu0 %v1238
        %v1604 = vpop.f32.mrb[0].mxu0
        %v1605 = vadd.f32 %v1283, %v1604
        %v1606 = vpop.f32.mrb[0].mxu0
        %v1607 = vadd.f32 %v1287, %v1606
        %v1608 = vpop.f32.mrb[0].mxu0
        %v1609 = vadd.f32 %v1283, %v1608
        %v1610 = vpop.f32.mrb[0].mxu0
        %v1611 = vadd.f32 %v1287, %v1610
        %1612 = vmatprep.mubr.bf16.mxu0 %v1241
        %1613 = vmatmul.mubr.bf16.gmra.mrb[0].mxu0 %v1240
        %v1614 = vpop.f32.mrb[0].mxu0
        %v1615 = vadd.f32 %v1283, %v1614
        %v1616 = vpop.f32.mrb[0].mxu0
        %v1617 = vadd.f32 %v1287, %v1616
        %v1618 = vpop.f32.mrb[0].mxu0
        %v1619 = vadd.f32 %v1283, %v1618
        %v1620 = vpop.f32.mrb[0].mxu0
        %v1621 = vadd.f32 %v1287, %v1620
        %1622 = vmatprep.mubr.bf16.mxu0 %v1243
        %1623 = vmatmul.mubr.bf16.gmra.mrb[0].mxu0 %v1242
        %v1624 = vpop.f32.mrb[0].mxu0
        %v1625 = vadd.f32 %v1283, %v1624
        %v1626 = vpop.f32.mrb[0].mxu0
        %v1627 = vadd.f32 %v1287, %v1626
        %v1628 = vpop.f32.mrb[0].mxu0
        %v1629 = vadd.f32 %v1283, %v1628
        %v1630 = vpop.f32.mrb[0].mxu0
        %v1631 = vadd.f32 %v1287, %v1630
        %1632 = vmatprep.mubr.bf16.mxu0 %v1245
        %1633 = vmatmul.mubr.bf16.gmra.mrb[0].mxu0 %v1244
        %v1634 = vpop.f32.mrb[0].mxu0
        %v1635 = vadd.f32 %v1283, %v1634
        %v1636 = vpop.f32.mrb[0].mxu0
        %v1637 = vadd.f32 %v1287, %v1636
        %v1638 = vpop.f32.mrb[0].mxu0
        %v1639 = vadd.f32 %v1283, %v1638
        %v1640 = vpop.f32.mrb[0].mxu0
        %v1641 = vadd.f32 %v1287, %v1640
        %1642 = vdwg.mxu0
        %v1643 = vadd.f32 %v485, %v1485
        %v1644 = vadd.f32 %v486, %v1487
        %v1645 = vadd.f32 %v487, %v1489
        %v1646 = vadd.f32 %v488, %v1491
        %v1647 = vadd.f32 %v489, %v1495
        %v1648 = vadd.f32 %v490, %v1497
        %v1649 = vadd.f32 %v491, %v1499
        %v1650 = vadd.f32 %v492, %v1501
        %v1651 = vadd.f32 %v493, %v1505
        %v1652 = vadd.f32 %v494, %v1507
        %v1653 = vadd.f32 %v495, %v1509
        %v1654 = vadd.f32 %v496, %v1511
        %v1655 = vadd.f32 %v497, %v1515
        %v1656 = vadd.f32 %v498, %v1517
        %v1657 = vadd.f32 %v499, %v1519
        %v1658 = vadd.f32 %v500, %v1521
        %v1659 = vadd.f32 %v501, %v1525
        %v1660 = vadd.f32 %v502, %v1527
        %v1661 = vadd.f32 %v503, %v1529
        %v1662 = vadd.f32 %v504, %v1531
        %v1663 = vadd.f32 %v505, %v1535
        %v1664 = vadd.f32 %v506, %v1537
        %v1665 = vadd.f32 %v507, %v1539
        %v1666 = vadd.f32 %v508, %v1541
        %v1667 = vadd.f32 %v509, %v1545
        %v1668 = vadd.f32 %v510, %v1547
        %v1669 = vadd.f32 %v511, %v1549
        %v1670 = vadd.f32 %v512, %v1551
        %v1671 = vadd.f32 %v513, %v1555
        %v1672 = vadd.f32 %v514, %v1557
        %v1673 = vadd.f32 %v515, %v1559
        %v1674 = vadd.f32 %v516, %v1561
        %v1675 = vadd.f32 %v517, %v1565
        %v1676 = vadd.f32 %v518, %v1567
        %v1677 = vadd.f32 %v519, %v1569
        %v1678 = vadd.f32 %v520, %v1571
        %v1679 = vadd.f32 %v521, %v1575
        %v1680 = vadd.f32 %v522, %v1577
        %v1681 = vadd.f32 %v523, %v1579
        %v1682 = vadd.f32 %v524, %v1581
        %v1683 = vadd.f32 %v525, %v1585
        %v1684 = vadd.f32 %v526, %v1587
        %v1685 = vadd.f32 %v527, %v1589
        %v1686 = vadd.f32 %v528, %v1591
        %v1687 = vadd.f32 %v529, %v1595
        %v1688 = vadd.f32 %v530, %v1597
        %v1689 = vadd.f32 %v531, %v1599
        %v1690 = vadd.f32 %v532, %v1601
        %v1691 = vadd.f32 %v533, %v1605
        %v1692 = vadd.f32 %v534, %v1607
        %v1693 = vadd.f32 %v535, %v1609
        %v1694 = vadd.f32 %v536, %v1611
        %v1695 = vadd.f32 %v537, %v1615
        %v1696 = vadd.f32 %v538, %v1617
        %v1697 = vadd.f32 %v539, %v1619
        %v1698 = vadd.f32 %v540, %v1621
        %v1699 = vadd.f32 %v541, %v1625
        %v1700 = vadd.f32 %v542, %v1627
        %v1701 = vadd.f32 %v543, %v1629
        %v1702 = vadd.f32 %v544, %v1631
        %v1703 = vadd.f32 %v545, %v1635
        %v1704 = vadd.f32 %v546, %v1637
        %v1705 = vadd.f32 %v547, %v1639
        %v1706 = vadd.f32 %v548, %v1641
        %v1707 = vld [vmem:[%s5] sm:$0x3]
        %v1708 = vld [vmem:[%s6] sm:$0x3]
        %v1709 = vadd.f32 %v1643, %v1644
        %1710 = vadd.xlane.f32.xlu0 %v1709
        %v1711 = vpop.xlane.xlu0 %1710
        %v1712 = vadd.f32 %v1645, %v1646
        %1713 = vadd.xlane.f32.xlu0 %v1712
        %v1714 = vpop.xlane.xlu0 %1713
        %v1715 = vadd.f32 %v1647, %v1648
        %1716 = vadd.xlane.f32.xlu0 %v1715
        %v1717 = vpop.xlane.xlu0 %1716
        %v1718 = vadd.f32 %v1649, %v1650
        %1719 = vadd.xlane.f32.xlu0 %v1718
        %v1720 = vpop.xlane.xlu0 %1719
        %v1721 = vadd.f32 %v1651, %v1652
        %1722 = vadd.xlane.f32.xlu0 %v1721
        %v1723 = vpop.xlane.xlu0 %1722
        %v1724 = vadd.f32 %v1653, %v1654
        %1725 = vadd.xlane.f32.xlu0 %v1724
        %v1726 = vpop.xlane.xlu0 %1725
        %v1727 = vadd.f32 %v1655, %v1656
        %1728 = vadd.xlane.f32.xlu0 %v1727
        %v1729 = vpop.xlane.xlu0 %1728
        %v1730 = vadd.f32 %v1657, %v1658
        %1731 = vadd.xlane.f32.xlu0 %v1730
        %v1732 = vpop.xlane.xlu0 %1731
        %v1733 = vadd.f32 %v1659, %v1660
        %1734 = vadd.xlane.f32.xlu0 %v1733
        %v1735 = vpop.xlane.xlu0 %1734
        %v1736 = vadd.f32 %v1661, %v1662
        %1737 = vadd.xlane.f32.xlu0 %v1736
        %v1738 = vpop.xlane.xlu0 %1737
        %v1739 = vadd.f32 %v1663, %v1664
        %1740 = vadd.xlane.f32.xlu0 %v1739
        %v1741 = vpop.xlane.xlu0 %1740
        %v1742 = vadd.f32 %v1665, %v1666
        %1743 = vadd.xlane.f32.xlu0 %v1742
        %v1744 = vpop.xlane.xlu0 %1743
        %v1745 = vadd.f32 %v1667, %v1668
        %1746 = vadd.xlane.f32.xlu0 %v1745
        %v1747 = vpop.xlane.xlu0 %1746
        %v1748 = vadd.f32 %v1669, %v1670
        %1749 = vadd.xlane.f32.xlu0 %v1748
        %v1750 = vpop.xlane.xlu0 %1749
        %v1751 = vadd.f32 %v1671, %v1672
        %1752 = vadd.xlane.f32.xlu0 %v1751
        %v1753 = vpop.xlane.xlu0 %1752
        %v1754 = vadd.f32 %v1673, %v1674
        %1755 = vadd.xlane.f32.xlu0 %v1754
        %v1756 = vpop.xlane.xlu0 %1755
        %v1757 = vadd.f32 %v1675, %v1676
        %1758 = vadd.xlane.f32.xlu0 %v1757
        %v1759 = vpop.xlane.xlu0 %1758
        %v1760 = vadd.f32 %v1677, %v1678
        %1761 = vadd.xlane.f32.xlu0 %v1760
        %v1762 = vpop.xlane.xlu0 %1761
        %v1763 = vadd.f32 %v1679, %v1680
        %1764 = vadd.xlane.f32.xlu0 %v1763
        %v1765 = vpop.xlane.xlu0 %1764
        %v1766 = vadd.f32 %v1681, %v1682
        %1767 = vadd.xlane.f32.xlu0 %v1766
        %v1768 = vpop.xlane.xlu0 %1767
        %v1769 = vadd.f32 %v1683, %v1684
        %1770 = vadd.xlane.f32.xlu0 %v1769
        %v1771 = vpop.xlane.xlu0 %1770
        %v1772 = vadd.f32 %v1685, %v1686
        %1773 = vadd.xlane.f32.xlu0 %v1772
        %v1774 = vpop.xlane.xlu0 %1773
        %v1775 = vadd.f32 %v1687, %v1688
        %1776 = vadd.xlane.f32.xlu0 %v1775
        %v1777 = vpop.xlane.xlu0 %1776
        %v1778 = vadd.f32 %v1689, %v1690
        %1779 = vadd.xlane.f32.xlu0 %v1778
        %v1780 = vpop.xlane.xlu0 %1779
        %v1781 = vadd.f32 %v1691, %v1692
        %1782 = vadd.xlane.f32.xlu0 %v1781
        %v1783 = vpop.xlane.xlu0 %1782
        %v1784 = vadd.f32 %v1693, %v1694
        %1785 = vadd.xlane.f32.xlu0 %v1784
        %v1786 = vpop.xlane.xlu0 %1785
        %v1787 = vadd.f32 %v1695, %v1696
        %1788 = vadd.xlane.f32.xlu0 %v1787
        %v1789 = vpop.xlane.xlu0 %1788
        %v1790 = vadd.f32 %v1697, %v1698
        %1791 = vadd.xlane.f32.xlu0 %v1790
        %v1792 = vpop.xlane.xlu0 %1791
        %v1793 = vadd.f32 %v1699, %v1700
        %1794 = vadd.xlane.f32.xlu0 %v1793
        %v1795 = vpop.xlane.xlu0 %1794
        %v1796 = vadd.f32 %v1701, %v1702
        %1797 = vadd.xlane.f32.xlu0 %v1796
        %v1798 = vpop.xlane.xlu0 %1797
        %v1799 = vadd.f32 %v1703, %v1704
        %1800 = vadd.xlane.f32.xlu0 %v1799
        %v1801 = vpop.xlane.xlu0 %1800
        %v1802 = vadd.f32 %v1705, %v1706
        %1803 = vadd.xlane.f32.xlu0 %v1802
        %v1804 = vpop.xlane.xlu0 %1803
        %v1805 = vmul.f32 %v1711, %v647
        %v1806 = vmul.f32 %v1714, %v647
        %v1807 = vmul.f32 %v1717, %v647
        %v1808 = vmul.f32 %v1720, %v647
        %v1809 = vmul.f32 %v1723, %v647
        %v1810 = vmul.f32 %v1726, %v647
        %v1811 = vmul.f32 %v1729, %v647
        %v1812 = vmul.f32 %v1732, %v647
        %v1813 = vmul.f32 %v1735, %v647
        %v1814 = vmul.f32 %v1738, %v647
        %v1815 = vmul.f32 %v1741, %v647
        %v1816 = vmul.f32 %v1744, %v647
        %v1817 = vmul.f32 %v1747, %v647
        %v1818 = vmul.f32 %v1750, %v647
        %v1819 = vmul.f32 %v1753, %v647
        %v1820 = vmul.f32 %v1756, %v647
        %v1821 = vmul.f32 %v1759, %v647
        %v1822 = vmul.f32 %v1762, %v647
        %v1823 = vmul.f32 %v1765, %v647
        %v1824 = vmul.f32 %v1768, %v647
        %v1825 = vmul.f32 %v1771, %v647
        %v1826 = vmul.f32 %v1774, %v647
        %v1827 = vmul.f32 %v1777, %v647
        %v1828 = vmul.f32 %v1780, %v647
        %v1829 = vmul.f32 %v1783, %v647
        %v1830 = vmul.f32 %v1786, %v647
        %v1831 = vmul.f32 %v1789, %v647
        %v1832 = vmul.f32 %v1792, %v647
        %v1833 = vmul.f32 %v1795, %v647
        %v1834 = vmul.f32 %v1798, %v647
        %v1835 = vmul.f32 %v1801, %v647
        %v1836 = vmul.f32 %v1804, %v647
        %v1837 = vsub.f32 %v1643, %v1805
        %v1838 = vsub.f32 %v1644, %v1805
        %v1839 = vsub.f32 %v1645, %v1806
        %v1840 = vsub.f32 %v1646, %v1806
        %v1841 = vsub.f32 %v1647, %v1807
        %v1842 = vsub.f32 %v1648, %v1807
        %v1843 = vsub.f32 %v1649, %v1808
        %v1844 = vsub.f32 %v1650, %v1808
        %v1845 = vsub.f32 %v1651, %v1809
        %v1846 = vsub.f32 %v1652, %v1809
        %v1847 = vsub.f32 %v1653, %v1810
        %v1848 = vsub.f32 %v1654, %v1810
        %v1849 = vsub.f32 %v1655, %v1811
        %v1850 = vsub.f32 %v1656, %v1811
        %v1851 = vsub.f32 %v1657, %v1812
        %v1852 = vsub.f32 %v1658, %v1812
        %v1853 = vsub.f32 %v1659, %v1813
        %v1854 = vsub.f32 %v1660, %v1813
        %v1855 = vsub.f32 %v1661, %v1814
        %v1856 = vsub.f32 %v1662, %v1814
        %v1857 = vsub.f32 %v1663, %v1815
        %v1858 = vsub.f32 %v1664, %v1815
        %v1859 = vsub.f32 %v1665, %v1816
        %v1860 = vsub.f32 %v1666, %v1816
        %v1861 = vsub.f32 %v1667, %v1817
        %v1862 = vsub.f32 %v1668, %v1817
        %v1863 = vsub.f32 %v1669, %v1818
        %v1864 = vsub.f32 %v1670, %v1818
        %v1865 = vsub.f32 %v1671, %v1819
        %v1866 = vsub.f32 %v1672, %v1819
        %v1867 = vsub.f32 %v1673, %v1820
        %v1868 = vsub.f32 %v1674, %v1820
        %v1869 = vsub.f32 %v1675, %v1821
        %v1870 = vsub.f32 %v1676, %v1821
        %v1871 = vsub.f32 %v1677, %v1822
        %v1872 = vsub.f32 %v1678, %v1822
        %v1873 = vsub.f32 %v1679, %v1823
        %v1874 = vsub.f32 %v1680, %v1823
        %v1875 = vsub.f32 %v1681, %v1824
        %v1876 = vsub.f32 %v1682, %v1824
        %v1877 = vsub.f32 %v1683, %v1825
        %v1878 = vsub.f32 %v1684, %v1825
        %v1879 = vsub.f32 %v1685, %v1826
        %v1880 = vsub.f32 %v1686, %v1826
        %v1881 = vsub.f32 %v1687, %v1827
        %v1882 = vsub.f32 %v1688, %v1827
        %v1883 = vsub.f32 %v1689, %v1828
        %v1884 = vsub.f32 %v1690, %v1828
        %v1885 = vsub.f32 %v1691, %v1829
        %v1886 = vsub.f32 %v1692, %v1829
        %v1887 = vsub.f32 %v1693, %v1830
        %v1888 = vsub.f32 %v1694, %v1830
        %v1889 = vsub.f32 %v1695, %v1831
        %v1890 = vsub.f32 %v1696, %v1831
        %v1891 = vsub.f32 %v1697, %v1832
        %v1892 = vsub.f32 %v1698, %v1832
        %v1893 = vsub.f32 %v1699, %v1833
        %v1894 = vsub.f32 %v1700, %v1833
        %v1895 = vsub.f32 %v1701, %v1834
        %v1896 = vsub.f32 %v1702, %v1834
        %v1897 = vsub.f32 %v1703, %v1835
        %v1898 = vsub.f32 %v1704, %v1835
        %v1899 = vsub.f32 %v1705, %v1836
        %v1900 = vsub.f32 %v1706, %v1836
        %v1901 = vmul.f32 %v1837, %v1837
        %v1902 = vmul.f32 %v1838, %v1838
        %v1903 = vmul.f32 %v1839, %v1839
        %v1904 = vmul.f32 %v1840, %v1840
        %v1905 = vmul.f32 %v1841, %v1841
        %v1906 = vmul.f32 %v1842, %v1842
        %v1907 = vmul.f32 %v1843, %v1843
        %v1908 = vmul.f32 %v1844, %v1844
        %v1909 = vmul.f32 %v1845, %v1845
        %v1910 = vmul.f32 %v1846, %v1846
        %v1911 = vmul.f32 %v1847, %v1847
        %v1912 = vmul.f32 %v1848, %v1848
        %v1913 = vmul.f32 %v1849, %v1849
        %v1914 = vmul.f32 %v1850, %v1850
        %v1915 = vmul.f32 %v1851, %v1851
        %v1916 = vmul.f32 %v1852, %v1852
        %v1917 = vmul.f32 %v1853, %v1853
        %v1918 = vmul.f32 %v1854, %v1854
        %v1919 = vmul.f32 %v1855, %v1855
        %v1920 = vmul.f32 %v1856, %v1856
        %v1921 = vmul.f32 %v1857, %v1857
        %v1922 = vmul.f32 %v1858, %v1858
        %v1923 = vmul.f32 %v1859, %v1859
        %v1924 = vmul.f32 %v1860, %v1860
        %v1925 = vmul.f32 %v1861, %v1861
        %v1926 = vmul.f32 %v1862, %v1862
        %v1927 = vmul.f32 %v1863, %v1863
        %v1928 = vmul.f32 %v1864, %v1864
        %v1929 = vmul.f32 %v1865, %v1865
        %v1930 = vmul.f32 %v1866, %v1866
        %v1931 = vmul.f32 %v1867, %v1867
        %v1932 = vmul.f32 %v1868, %v1868
        %v1933 = vmul.f32 %v1869, %v1869
        %v1934 = vmul.f32 %v1870, %v1870
        %v1935 = vmul.f32 %v1871, %v1871
        %v1936 = vmul.f32 %v1872, %v1872
        %v1937 = vmul.f32 %v1873, %v1873
        %v1938 = vmul.f32 %v1874, %v1874
        %v1939 = vmul.f32 %v1875, %v1875
        %v1940 = vmul.f32 %v1876, %v1876
        %v1941 = vmul.f32 %v1877, %v1877
        %v1942 = vmul.f32 %v1878, %v1878
        %v1943 = vmul.f32 %v1879, %v1879
        %v1944 = vmul.f32 %v1880, %v1880
        %v1945 = vmul.f32 %v1881, %v1881
        %v1946 = vmul.f32 %v1882, %v1882
        %v1947 = vmul.f32 %v1883, %v1883
        %v1948 = vmul.f32 %v1884, %v1884
        %v1949 = vmul.f32 %v1885, %v1885
        %v1950 = vmul.f32 %v1886, %v1886
        %v1951 = vmul.f32 %v1887, %v1887
        %v1952 = vmul.f32 %v1888, %v1888
        %v1953 = vmul.f32 %v1889, %v1889
        %v1954 = vmul.f32 %v1890, %v1890
        %v1955 = vmul.f32 %v1891, %v1891
        %v1956 = vmul.f32 %v1892, %v1892
        %v1957 = vmul.f32 %v1893, %v1893
        %v1958 = vmul.f32 %v1894, %v1894
        %v1959 = vmul.f32 %v1895, %v1895
        %v1960 = vmul.f32 %v1896, %v1896
        %v1961 = vmul.f32 %v1897, %v1897
        %v1962 = vmul.f32 %v1898, %v1898
        %v1963 = vmul.f32 %v1899, %v1899
        %v1964 = vmul.f32 %v1900, %v1900
        %v1965 = vadd.f32 %v1901, %v1902
        %1966 = vadd.xlane.f32.xlu0 %v1965
        %v1967 = vpop.xlane.xlu0 %1966
        %v1968 = vadd.f32 %v1903, %v1904
        %1969 = vadd.xlane.f32.xlu0 %v1968
        %v1970 = vpop.xlane.xlu0 %1969
        %v1971 = vadd.f32 %v1905, %v1906
        %1972 = vadd.xlane.f32.xlu0 %v1971
        %v1973 = vpop.xlane.xlu0 %1972
        %v1974 = vadd.f32 %v1907, %v1908
        %1975 = vadd.xlane.f32.xlu0 %v1974
        %v1976 = vpop.xlane.xlu0 %1975
        %v1977 = vadd.f32 %v1909, %v1910
        %1978 = vadd.xlane.f32.xlu0 %v1977
        %v1979 = vpop.xlane.xlu0 %1978
        %v1980 = vadd.f32 %v1911, %v1912
        %1981 = vadd.xlane.f32.xlu0 %v1980
        %v1982 = vpop.xlane.xlu0 %1981
        %v1983 = vadd.f32 %v1913, %v1914
        %1984 = vadd.xlane.f32.xlu0 %v1983
        %v1985 = vpop.xlane.xlu0 %1984
        %v1986 = vadd.f32 %v1915, %v1916
        %1987 = vadd.xlane.f32.xlu0 %v1986
        %v1988 = vpop.xlane.xlu0 %1987
        %v1989 = vadd.f32 %v1917, %v1918
        %1990 = vadd.xlane.f32.xlu0 %v1989
        %v1991 = vpop.xlane.xlu0 %1990
        %v1992 = vadd.f32 %v1919, %v1920
        %1993 = vadd.xlane.f32.xlu0 %v1992
        %v1994 = vpop.xlane.xlu0 %1993
        %v1995 = vadd.f32 %v1921, %v1922
        %1996 = vadd.xlane.f32.xlu0 %v1995
        %v1997 = vpop.xlane.xlu0 %1996
        %v1998 = vadd.f32 %v1923, %v1924
        %1999 = vadd.xlane.f32.xlu0 %v1998
        %v2000 = vpop.xlane.xlu0 %1999
        %v2001 = vadd.f32 %v1925, %v1926
        %2002 = vadd.xlane.f32.xlu0 %v2001
        %v2003 = vpop.xlane.xlu0 %2002
        %v2004 = vadd.f32 %v1927, %v1928
        %2005 = vadd.xlane.f32.xlu0 %v2004
        %v2006 = vpop.xlane.xlu0 %2005
        %v2007 = vadd.f32 %v1929, %v1930
        %2008 = vadd.xlane.f32.xlu0 %v2007
        %v2009 = vpop.xlane.xlu0 %2008
        %v2010 = vadd.f32 %v1931, %v1932
        %2011 = vadd.xlane.f32.xlu0 %v2010
        %v2012 = vpop.xlane.xlu0 %2011
        %v2013 = vadd.f32 %v1933, %v1934
        %2014 = vadd.xlane.f32.xlu0 %v2013
        %v2015 = vpop.xlane.xlu0 %2014
        %v2016 = vadd.f32 %v1935, %v1936
        %2017 = vadd.xlane.f32.xlu0 %v2016
        %v2018 = vpop.xlane.xlu0 %2017
        %v2019 = vadd.f32 %v1937, %v1938
        %2020 = vadd.xlane.f32.xlu0 %v2019
        %v2021 = vpop.xlane.xlu0 %2020
        %v2022 = vadd.f32 %v1939, %v1940
        %2023 = vadd.xlane.f32.xlu0 %v2022
        %v2024 = vpop.xlane.xlu0 %2023
        %v2025 = vadd.f32 %v1941, %v1942
        %2026 = vadd.xlane.f32.xlu0 %v2025
        %v2027 = vpop.xlane.xlu0 %2026
        %v2028 = vadd.f32 %v1943, %v1944
        %2029 = vadd.xlane.f32.xlu0 %v2028
        %v2030 = vpop.xlane.xlu0 %2029
        %v2031 = vadd.f32 %v1945, %v1946
        %2032 = vadd.xlane.f32.xlu0 %v2031
        %v2033 = vpop.xlane.xlu0 %2032
        %v2034 = vadd.f32 %v1947, %v1948
        %2035 = vadd.xlane.f32.xlu0 %v2034
        %v2036 = vpop.xlane.xlu0 %2035
        %v2037 = vadd.f32 %v1949, %v1950
        %2038 = vadd.xlane.f32.xlu0 %v2037
        %v2039 = vpop.xlane.xlu0 %2038
        %v2040 = vadd.f32 %v1951, %v1952
        %2041 = vadd.xlane.f32.xlu0 %v2040
        %v2042 = vpop.xlane.xlu0 %2041
        %v2043 = vadd.f32 %v1953, %v1954
        %2044 = vadd.xlane.f32.xlu0 %v2043
        %v2045 = vpop.xlane.xlu0 %2044
        %v2046 = vadd.f32 %v1955, %v1956
        %2047 = vadd.xlane.f32.xlu0 %v2046
        %v2048 = vpop.xlane.xlu0 %2047
        %v2049 = vadd.f32 %v1957, %v1958
        %2050 = vadd.xlane.f32.xlu0 %v2049
        %v2051 = vpop.xlane.xlu0 %2050
        %v2052 = vadd.f32 %v1959, %v1960
        %2053 = vadd.xlane.f32.xlu0 %v2052
        %v2054 = vpop.xlane.xlu0 %2053
        %v2055 = vadd.f32 %v1961, %v1962
        %2056 = vadd.xlane.f32.xlu0 %v2055
        %v2057 = vpop.xlane.xlu0 %2056
        %v2058 = vadd.f32 %v1963, %v1964
        %2059 = vadd.xlane.f32.xlu0 %v2058
        %v2060 = vpop.xlane.xlu0 %2059
        %v2061 = vmul.f32 %v1967, %v647
        %v2062 = vmul.f32 %v1970, %v647
        %v2063 = vmul.f32 %v1973, %v647
        %v2064 = vmul.f32 %v1976, %v647
        %v2065 = vmul.f32 %v1979, %v647
        %v2066 = vmul.f32 %v1982, %v647
        %v2067 = vmul.f32 %v1985, %v647
        %v2068 = vmul.f32 %v1988, %v647
        %v2069 = vmul.f32 %v1991, %v647
        %v2070 = vmul.f32 %v1994, %v647
        %v2071 = vmul.f32 %v1997, %v647
        %v2072 = vmul.f32 %v2000, %v647
        %v2073 = vmul.f32 %v2003, %v647
        %v2074 = vmul.f32 %v2006, %v647
        %v2075 = vmul.f32 %v2009, %v647
        %v2076 = vmul.f32 %v2012, %v647
        %v2077 = vmul.f32 %v2015, %v647
        %v2078 = vmul.f32 %v2018, %v647
        %v2079 = vmul.f32 %v2021, %v647
        %v2080 = vmul.f32 %v2024, %v647
        %v2081 = vmul.f32 %v2027, %v647
        %v2082 = vmul.f32 %v2030, %v647
        %v2083 = vmul.f32 %v2033, %v647
        %v2084 = vmul.f32 %v2036, %v647
        %v2085 = vmul.f32 %v2039, %v647
        %v2086 = vmul.f32 %v2042, %v647
        %v2087 = vmul.f32 %v2045, %v647
        %v2088 = vmul.f32 %v2048, %v647
        %v2089 = vmul.f32 %v2051, %v647
        %v2090 = vmul.f32 %v2054, %v647
        %v2091 = vmul.f32 %v2057, %v647
        %v2092 = vmul.f32 %v2060, %v647
        %v2093 = vadd.f32 %v2061, 1e-05
        %v2094 = vadd.f32 %v2062, 1e-05
        %v2095 = vadd.f32 %v2063, 1e-05
        %v2096 = vadd.f32 %v2064, 1e-05
        %v2097 = vadd.f32 %v2065, 1e-05
        %v2098 = vadd.f32 %v2066, 1e-05
        %v2099 = vadd.f32 %v2067, 1e-05
        %v2100 = vadd.f32 %v2068, 1e-05
        %v2101 = vadd.f32 %v2069, 1e-05
        %v2102 = vadd.f32 %v2070, 1e-05
        %v2103 = vadd.f32 %v2071, 1e-05
        %v2104 = vadd.f32 %v2072, 1e-05
        %v2105 = vadd.f32 %v2073, 1e-05
        %v2106 = vadd.f32 %v2074, 1e-05
        %v2107 = vadd.f32 %v2075, 1e-05
        %v2108 = vadd.f32 %v2076, 1e-05
        %v2109 = vadd.f32 %v2077, 1e-05
        %v2110 = vadd.f32 %v2078, 1e-05
        %v2111 = vadd.f32 %v2079, 1e-05
        %v2112 = vadd.f32 %v2080, 1e-05
        %v2113 = vadd.f32 %v2081, 1e-05
        %v2114 = vadd.f32 %v2082, 1e-05
        %v2115 = vadd.f32 %v2083, 1e-05
        %v2116 = vadd.f32 %v2084, 1e-05
        %v2117 = vadd.f32 %v2085, 1e-05
        %v2118 = vadd.f32 %v2086, 1e-05
        %v2119 = vadd.f32 %v2087, 1e-05
        %v2120 = vadd.f32 %v2088, 1e-05
        %v2121 = vadd.f32 %v2089, 1e-05
        %v2122 = vadd.f32 %v2090, 1e-05
        %v2123 = vadd.f32 %v2091, 1e-05
        %v2124 = vadd.f32 %v2092, 1e-05
        %v2125 = vrsqrt.pop %v2093
        %v2126 = vrsqrt.pop %v2094
        %v2127 = vrsqrt.pop %v2095
        %v2128 = vrsqrt.pop %v2096
        %v2129 = vrsqrt.pop %v2097
        %v2130 = vrsqrt.pop %v2098
        %v2131 = vrsqrt.pop %v2099
        %v2132 = vrsqrt.pop %v2100
        %v2133 = vrsqrt.pop %v2101
        %v2134 = vrsqrt.pop %v2102
        %v2135 = vrsqrt.pop %v2103
        %v2136 = vrsqrt.pop %v2104
        %v2137 = vrsqrt.pop %v2105
        %v2138 = vrsqrt.pop %v2106
        %v2139 = vrsqrt.pop %v2107
        %v2140 = vrsqrt.pop %v2108
        %v2141 = vrsqrt.pop %v2109
        %v2142 = vrsqrt.pop %v2110
        %v2143 = vrsqrt.pop %v2111
        %v2144 = vrsqrt.pop %v2112
        %v2145 = vrsqrt.pop %v2113
        %v2146 = vrsqrt.pop %v2114
        %v2147 = vrsqrt.pop %v2115
        %v2148 = vrsqrt.pop %v2116
        %v2149 = vrsqrt.pop %v2117
        %v2150 = vrsqrt.pop %v2118
        %v2151 = vrsqrt.pop %v2119
        %v2152 = vrsqrt.pop %v2120
        %v2153 = vrsqrt.pop %v2121
        %v2154 = vrsqrt.pop %v2122
        %v2155 = vrsqrt.pop %v2123
        %v2156 = vrsqrt.pop %v2124
        %v2157 = vmul.f32 %v1837, %v2125
        %v2158 = vmul.f32 %v1838, %v2125
        %v2159 = vmul.f32 %v1839, %v2126
        %v2160 = vmul.f32 %v1840, %v2126
        %v2161 = vmul.f32 %v1841, %v2127
        %v2162 = vmul.f32 %v1842, %v2127
        %v2163 = vmul.f32 %v1843, %v2128
        %v2164 = vmul.f32 %v1844, %v2128
        %v2165 = vmul.f32 %v1845, %v2129
        %v2166 = vmul.f32 %v1846, %v2129
        %v2167 = vmul.f32 %v1847, %v2130
        %v2168 = vmul.f32 %v1848, %v2130
        %v2169 = vmul.f32 %v1849, %v2131
        %v2170 = vmul.f32 %v1850, %v2131
        %v2171 = vmul.f32 %v1851, %v2132
        %v2172 = vmul.f32 %v1852, %v2132
        %v2173 = vmul.f32 %v1853, %v2133
        %v2174 = vmul.f32 %v1854, %v2133
        %v2175 = vmul.f32 %v1855, %v2134
        %v2176 = vmul.f32 %v1856, %v2134
        %v2177 = vmul.f32 %v1857, %v2135
        %v2178 = vmul.f32 %v1858, %v2135
        %v2179 = vmul.f32 %v1859, %v2136
        %v2180 = vmul.f32 %v1860, %v2136
        %v2181 = vmul.f32 %v1861, %v2137
        %v2182 = vmul.f32 %v1862, %v2137
        %v2183 = vmul.f32 %v1863, %v2138
        %v2184 = vmul.f32 %v1864, %v2138
        %v2185 = vmul.f32 %v1865, %v2139
        %v2186 = vmul.f32 %v1866, %v2139
        %v2187 = vmul.f32 %v1867, %v2140
        %v2188 = vmul.f32 %v1868, %v2140
        %v2189 = vmul.f32 %v1869, %v2141
        %v2190 = vmul.f32 %v1870, %v2141
        %v2191 = vmul.f32 %v1871, %v2142
        %v2192 = vmul.f32 %v1872, %v2142
        %v2193 = vmul.f32 %v1873, %v2143
        %v2194 = vmul.f32 %v1874, %v2143
        %v2195 = vmul.f32 %v1875, %v2144
        %v2196 = vmul.f32 %v1876, %v2144
        %v2197 = vmul.f32 %v1877, %v2145
        %v2198 = vmul.f32 %v1878, %v2145
        %v2199 = vmul.f32 %v1879, %v2146
        %v2200 = vmul.f32 %v1880, %v2146
        %v2201 = vmul.f32 %v1881, %v2147
        %v2202 = vmul.f32 %v1882, %v2147
        %v2203 = vmul.f32 %v1883, %v2148
        %v2204 = vmul.f32 %v1884, %v2148
        %v2205 = vmul.f32 %v1885, %v2149
        %v2206 = vmul.f32 %v1886, %v2149
        %v2207 = vmul.f32 %v1887, %v2150
        %v2208 = vmul.f32 %v1888, %v2150
        %v2209 = vmul.f32 %v1889, %v2151
        %v2210 = vmul.f32 %v1890, %v2151
        %v2211 = vmul.f32 %v1891, %v2152
        %v2212 = vmul.f32 %v1892, %v2152
        %v2213 = vmul.f32 %v1893, %v2153
        %v2214 = vmul.f32 %v1894, %v2153
        %v2215 = vmul.f32 %v1895, %v2154
        %v2216 = vmul.f32 %v1896, %v2154
        %v2217 = vmul.f32 %v1897, %v2155
        %v2218 = vmul.f32 %v1898, %v2155
        %v2219 = vmul.f32 %v1899, %v2156
        %v2220 = vmul.f32 %v1900, %v2156
        %v2222 = vlaneseq
        %v2223 = vshrl.u32 %v2222, 7
        %v2224 = vsub.s32 0, %v2223
        %v2225 = vrot.slane %v1707, %v2224
        %v2226 = vlaneseq
        %v2227 = vshrl.u32 %v2226, 7
        %v2228 = vsub.s32 1, %v2227
        %v2229 = vrot.slane %v1707, %v2228
        %v2232 = vmul.f32 %v2157, %v2225
        %v2233 = vmul.f32 %v2158, %v2229
        %v2234 = vmul.f32 %v2159, %v2225
        %v2235 = vmul.f32 %v2160, %v2229
        %v2236 = vmul.f32 %v2161, %v2225
        %v2237 = vmul.f32 %v2162, %v2229
        %v2238 = vmul.f32 %v2163, %v2225
        %v2239 = vmul.f32 %v2164, %v2229
        %v2240 = vmul.f32 %v2165, %v2225
        %v2241 = vmul.f32 %v2166, %v2229
        %v2242 = vmul.f32 %v2167, %v2225
        %v2243 = vmul.f32 %v2168, %v2229
        %v2244 = vmul.f32 %v2169, %v2225
        %v2245 = vmul.f32 %v2170, %v2229
        %v2246 = vmul.f32 %v2171, %v2225
        %v2247 = vmul.f32 %v2172, %v2229
        %v2248 = vmul.f32 %v2173, %v2225
        %v2249 = vmul.f32 %v2174, %v2229
        %v2250 = vmul.f32 %v2175, %v2225
        %v2251 = vmul.f32 %v2176, %v2229
        %v2252 = vmul.f32 %v2177, %v2225
        %v2253 = vmul.f32 %v2178, %v2229
        %v2254 = vmul.f32 %v2179, %v2225
        %v2255 = vmul.f32 %v2180, %v2229
        %v2256 = vmul.f32 %v2181, %v2225
        %v2257 = vmul.f32 %v2182, %v2229
        %v2258 = vmul.f32 %v2183, %v2225
        %v2259 = vmul.f32 %v2184, %v2229
        %v2260 = vmul.f32 %v2185, %v2225
        %v2261 = vmul.f32 %v2186, %v2229
        %v2262 = vmul.f32 %v2187, %v2225
        %v2263 = vmul.f32 %v2188, %v2229
        %v2264 = vmul.f32 %v2189, %v2225
        %v2265 = vmul.f32 %v2190, %v2229
        %v2266 = vmul.f32 %v2191, %v2225
        %v2267 = vmul.f32 %v2192, %v2229
        %v2268 = vmul.f32 %v2193, %v2225
        %v2269 = vmul.f32 %v2194, %v2229
        %v2270 = vmul.f32 %v2195, %v2225
        %v2271 = vmul.f32 %v2196, %v2229
        %v2272 = vmul.f32 %v2197, %v2225
        %v2273 = vmul.f32 %v2198, %v2229
        %v2274 = vmul.f32 %v2199, %v2225
        %v2275 = vmul.f32 %v2200, %v2229
        %v2276 = vmul.f32 %v2201, %v2225
        %v2277 = vmul.f32 %v2202, %v2229
        %v2278 = vmul.f32 %v2203, %v2225
        %v2279 = vmul.f32 %v2204, %v2229
        %v2280 = vmul.f32 %v2205, %v2225
        %v2281 = vmul.f32 %v2206, %v2229
        %v2282 = vmul.f32 %v2207, %v2225
        %v2283 = vmul.f32 %v2208, %v2229
        %v2284 = vmul.f32 %v2209, %v2225
        %v2285 = vmul.f32 %v2210, %v2229
        %v2286 = vmul.f32 %v2211, %v2225
        %v2287 = vmul.f32 %v2212, %v2229
        %v2288 = vmul.f32 %v2213, %v2225
        %v2289 = vmul.f32 %v2214, %v2229
        %v2290 = vmul.f32 %v2215, %v2225
        %v2291 = vmul.f32 %v2216, %v2229
        %v2292 = vmul.f32 %v2217, %v2225
        %v2293 = vmul.f32 %v2218, %v2229
        %v2294 = vmul.f32 %v2219, %v2225
        %v2295 = vmul.f32 %v2220, %v2229
        %v2297 = vlaneseq
        %v2298 = vshrl.u32 %v2297, 7
        %v2299 = vsub.s32 0, %v2298
        %v2300 = vrot.slane %v1708, %v2299
        %v2301 = vlaneseq
        %v2302 = vshrl.u32 %v2301, 7
        %v2303 = vsub.s32 1, %v2302
        %v2304 = vrot.slane %v1708, %v2303
        %v2307 = vadd.f32 %v2232, %v2300
        %v2308 = vadd.f32 %v2233, %v2304
        %v2309 = vadd.f32 %v2234, %v2300
        %v2310 = vadd.f32 %v2235, %v2304
        %v2311 = vadd.f32 %v2236, %v2300
        %v2312 = vadd.f32 %v2237, %v2304
        %v2313 = vadd.f32 %v2238, %v2300
        %v2314 = vadd.f32 %v2239, %v2304
        %v2315 = vadd.f32 %v2240, %v2300
        %v2316 = vadd.f32 %v2241, %v2304
        %v2317 = vadd.f32 %v2242, %v2300
        %v2318 = vadd.f32 %v2243, %v2304
        %v2319 = vadd.f32 %v2244, %v2300
        %v2320 = vadd.f32 %v2245, %v2304
        %v2321 = vadd.f32 %v2246, %v2300
        %v2322 = vadd.f32 %v2247, %v2304
        %v2323 = vadd.f32 %v2248, %v2300
        %v2324 = vadd.f32 %v2249, %v2304
        %v2325 = vadd.f32 %v2250, %v2300
        %v2326 = vadd.f32 %v2251, %v2304
        %v2327 = vadd.f32 %v2252, %v2300
        %v2328 = vadd.f32 %v2253, %v2304
        %v2329 = vadd.f32 %v2254, %v2300
        %v2330 = vadd.f32 %v2255, %v2304
        %v2331 = vadd.f32 %v2256, %v2300
        %v2332 = vadd.f32 %v2257, %v2304
        %v2333 = vadd.f32 %v2258, %v2300
        %v2334 = vadd.f32 %v2259, %v2304
        %v2335 = vadd.f32 %v2260, %v2300
        %v2336 = vadd.f32 %v2261, %v2304
        %v2337 = vadd.f32 %v2262, %v2300
        %v2338 = vadd.f32 %v2263, %v2304
        %v2339 = vadd.f32 %v2264, %v2300
        %v2340 = vadd.f32 %v2265, %v2304
        %v2341 = vadd.f32 %v2266, %v2300
        %v2342 = vadd.f32 %v2267, %v2304
        %v2343 = vadd.f32 %v2268, %v2300
        %v2344 = vadd.f32 %v2269, %v2304
        %v2345 = vadd.f32 %v2270, %v2300
        %v2346 = vadd.f32 %v2271, %v2304
        %v2347 = vadd.f32 %v2272, %v2300
        %v2348 = vadd.f32 %v2273, %v2304
        %v2349 = vadd.f32 %v2274, %v2300
        %v2350 = vadd.f32 %v2275, %v2304
        %v2351 = vadd.f32 %v2276, %v2300
        %v2352 = vadd.f32 %v2277, %v2304
        %v2353 = vadd.f32 %v2278, %v2300
        %v2354 = vadd.f32 %v2279, %v2304
        %v2355 = vadd.f32 %v2280, %v2300
        %v2356 = vadd.f32 %v2281, %v2304
        %v2357 = vadd.f32 %v2282, %v2300
        %v2358 = vadd.f32 %v2283, %v2304
        %v2359 = vadd.f32 %v2284, %v2300
        %v2360 = vadd.f32 %v2285, %v2304
        %v2361 = vadd.f32 %v2286, %v2300
        %v2362 = vadd.f32 %v2287, %v2304
        %v2363 = vadd.f32 %v2288, %v2300
        %v2364 = vadd.f32 %v2289, %v2304
        %v2365 = vadd.f32 %v2290, %v2300
        %v2366 = vadd.f32 %v2291, %v2304
        %v2367 = vadd.f32 %v2292, %v2300
        %v2368 = vadd.f32 %v2293, %v2304
        %v2369 = vadd.f32 %v2294, %v2300
        %v2370 = vadd.f32 %v2295, %v2304
        %v2371 = vpack.c.bf16 %v2309, %v2307
        %v2372 = vpack.c.bf16 %v2310, %v2308
        %v2373 = vpack.c.bf16 %v2313, %v2311
        %v2374 = vpack.c.bf16 %v2314, %v2312
        %v2375 = vpack.c.bf16 %v2317, %v2315
        %v2376 = vpack.c.bf16 %v2318, %v2316
        %v2377 = vpack.c.bf16 %v2321, %v2319
        %v2378 = vpack.c.bf16 %v2322, %v2320
        %v2379 = vpack.c.bf16 %v2325, %v2323
        %v2380 = vpack.c.bf16 %v2326, %v2324
        %v2381 = vpack.c.bf16 %v2329, %v2327
        %v2382 = vpack.c.bf16 %v2330, %v2328
        %v2383 = vpack.c.bf16 %v2333, %v2331
        %v2384 = vpack.c.bf16 %v2334, %v2332
        %v2385 = vpack.c.bf16 %v2337, %v2335
        %v2386 = vpack.c.bf16 %v2338, %v2336
        %v2387 = vpack.c.bf16 %v2341, %v2339
        %v2388 = vpack.c.bf16 %v2342, %v2340
        %v2389 = vpack.c.bf16 %v2345, %v2343
        %v2390 = vpack.c.bf16 %v2346, %v2344
        %v2391 = vpack.c.bf16 %v2349, %v2347
        %v2392 = vpack.c.bf16 %v2350, %v2348
        %v2393 = vpack.c.bf16 %v2353, %v2351
        %v2394 = vpack.c.bf16 %v2354, %v2352
        %v2395 = vpack.c.bf16 %v2357, %v2355
        %v2396 = vpack.c.bf16 %v2358, %v2356
        %v2397 = vpack.c.bf16 %v2361, %v2359
        %v2398 = vpack.c.bf16 %v2362, %v2360
        %v2399 = vpack.c.bf16 %v2365, %v2363
        %v2400 = vpack.c.bf16 %v2366, %v2364
        %v2401 = vpack.c.bf16 %v2369, %v2367
        %v2402 = vpack.c.bf16 %v2370, %v2368
        %v2403 = vld [vmem:[#allocation7] sm:$0xff]
        %v2404 = vld [vmem:[#allocation7 + $0x8] sm:$0xff]
        %v2405 = vld [vmem:[#allocation7 + $0x10] sm:$0xff]
        %v2406 = vld [vmem:[#allocation7 + $0x18] sm:$0xff]
        %v2407 = vld [vmem:[#allocation7 + $0x20] sm:$0xff]
        %v2408 = vld [vmem:[#allocation7 + $0x28] sm:$0xff]
        %v2409 = vld [vmem:[#allocation7 + $0x30] sm:$0xff]
        %v2410 = vld [vmem:[#allocation7 + $0x38] sm:$0xff]
        %v2411 = vld [vmem:[#allocation7 + $0x40] sm:$0xff]
        %v2412 = vld [vmem:[#allocation7 + $0x48] sm:$0xff]
        %v2413 = vld [vmem:[#allocation7 + $0x50] sm:$0xff]
        %v2414 = vld [vmem:[#allocation7 + $0x58] sm:$0xff]
        %v2415 = vld [vmem:[#allocation7 + $0x60] sm:$0xff]
        %v2416 = vld [vmem:[#allocation7 + $0x68] sm:$0xff]
        %v2417 = vld [vmem:[#allocation7 + $0x70] sm:$0xff]
        %v2418 = vld [vmem:[#allocation7 + $0x78] sm:$0xff]
        %v2419 = vld [vmem:[#allocation7 + $0x80] sm:$0xff]
        %v2420 = vld [vmem:[#allocation7 + $0x88] sm:$0xff]
        %v2421 = vld [vmem:[#allocation7 + $0x90] sm:$0xff]
        %v2422 = vld [vmem:[#allocation7 + $0x98] sm:$0xff]
        %v2423 = vld [vmem:[#allocation7 + $0xa0] sm:$0xff]
        %v2424 = vld [vmem:[#allocation7 + $0xa8] sm:$0xff]
        %v2425 = vld [vmem:[#allocation7 + $0xb0] sm:$0xff]
        %v2426 = vld [vmem:[#allocation7 + $0xb8] sm:$0xff]
        %v2427 = vld [vmem:[#allocation7 + $0xc0] sm:$0xff]
        %v2428 = vld [vmem:[#allocation7 + $0xc8] sm:$0xff]
        %v2429 = vld [vmem:[#allocation7 + $0xd0] sm:$0xff]
        %v2430 = vld [vmem:[#allocation7 + $0xd8] sm:$0xff]
        %v2431 = vld [vmem:[#allocation7 + $0xe0] sm:$0xff]
        %v2432 = vld [vmem:[#allocation7 + $0xe8] sm:$0xff]
        %v2433 = vld [vmem:[#allocation7 + $0xf0] sm:$0xff]
        %v2434 = vld [vmem:[#allocation7 + $0xf8] sm:$0xff]
        %v2435 = vld [vmem:[#allocation7 + $0x100] sm:$0xff]
        %v2436 = vld [vmem:[#allocation7 + $0x108] sm:$0xff]
        %v2437 = vld [vmem:[#allocation7 + $0x110] sm:$0xff]
        %v2438 = vld [vmem:[#allocation7 + $0x118] sm:$0xff]
        %v2439 = vld [vmem:[#allocation7 + $0x120] sm:$0xff]
        %v2440 = vld [vmem:[#allocation7 + $0x128] sm:$0xff]
        %v2441 = vld [vmem:[#allocation7 + $0x130] sm:$0xff]
        %v2442 = vld [vmem:[#allocation7 + $0x138] sm:$0xff]
        %v2443 = vld [vmem:[#allocation7 + $0x140] sm:$0xff]
        %v2444 = vld [vmem:[#allocation7 + $0x148] sm:$0xff]
        %v2445 = vld [vmem:[#allocation7 + $0x150] sm:$0xff]
        %v2446 = vld [vmem:[#allocation7 + $0x158] sm:$0xff]
        %v2447 = vld [vmem:[#allocation7 + $0x160] sm:$0xff]
        %v2448 = vld [vmem:[#allocation7 + $0x168] sm:$0xff]
        %v2449 = vld [vmem:[#allocation7 + $0x170] sm:$0xff]
        %v2450 = vld [vmem:[#allocation7 + $0x178] sm:$0xff]
        %v2451 = vld [vmem:[#allocation7 + $0x180] sm:$0xff]
        %v2452 = vld [vmem:[#allocation7 + $0x188] sm:$0xff]
        %v2453 = vld [vmem:[#allocation7 + $0x190] sm:$0xff]
        %v2454 = vld [vmem:[#allocation7 + $0x198] sm:$0xff]
        %v2455 = vld [vmem:[#allocation7 + $0x1a0] sm:$0xff]
        %v2456 = vld [vmem:[#allocation7 + $0x1a8] sm:$0xff]
        %v2457 = vld [vmem:[#allocation7 + $0x1b0] sm:$0xff]
        %v2458 = vld [vmem:[#allocation7 + $0x1b8] sm:$0xff]
        %v2459 = vld [vmem:[#allocation7 + $0x1c0] sm:$0xff]
        %v2460 = vld [vmem:[#allocation7 + $0x1c8] sm:$0xff]
        %v2461 = vld [vmem:[#allocation7 + $0x1d0] sm:$0xff]
        %v2462 = vld [vmem:[#allocation7 + $0x1d8] sm:$0xff]
        %v2463 = vld [vmem:[#allocation7 + $0x1e0] sm:$0xff]
        %v2464 = vld [vmem:[#allocation7 + $0x1e8] sm:$0xff]
        %v2465 = vld [vmem:[#allocation7 + $0x1f0] sm:$0xff]
        %v2466 = vld [vmem:[#allocation7 + $0x1f8] sm:$0xff]
        %v2467 = vld [vmem:[#allocation7 + $0x200] sm:$0xff]
        %v2468 = vld [vmem:[#allocation7 + $0x208] sm:$0xff]
        %v2469 = vld [vmem:[#allocation7 + $0x210] sm:$0xff]
        %v2470 = vld [vmem:[#allocation7 + $0x218] sm:$0xff]
        %v2471 = vld [vmem:[#allocation7 + $0x220] sm:$0xff]
        %v2472 = vld [vmem:[#allocation7 + $0x228] sm:$0xff]
        %v2473 = vld [vmem:[#allocation7 + $0x230] sm:$0xff]
        %v2474 = vld [vmem:[#allocation7 + $0x238] sm:$0xff]
        %v2475 = vld [vmem:[#allocation7 + $0x240] sm:$0xff]
        %v2476 = vld [vmem:[#allocation7 + $0x248] sm:$0xff]
        %v2477 = vld [vmem:[#allocation7 + $0x250] sm:$0xff]
        %v2478 = vld [vmem:[#allocation7 + $0x258] sm:$0xff]
        %v2479 = vld [vmem:[#allocation7 + $0x260] sm:$0xff]
        %v2480 = vld [vmem:[#allocation7 + $0x268] sm:$0xff]
        %v2481 = vld [vmem:[#allocation7 + $0x270] sm:$0xff]
        %v2482 = vld [vmem:[#allocation7 + $0x278] sm:$0xff]
        %v2483 = vld [vmem:[#allocation7 + $0x280] sm:$0xff]
        %v2484 = vld [vmem:[#allocation7 + $0x288] sm:$0xff]
        %v2485 = vld [vmem:[#allocation7 + $0x290] sm:$0xff]
        %v2486 = vld [vmem:[#allocation7 + $0x298] sm:$0xff]
        %v2487 = vld [vmem:[#allocation7 + $0x2a0] sm:$0xff]
        %v2488 = vld [vmem:[#allocation7 + $0x2a8] sm:$0xff]
        %v2489 = vld [vmem:[#allocation7 + $0x2b0] sm:$0xff]
        %v2490 = vld [vmem:[#allocation7 + $0x2b8] sm:$0xff]
        %v2491 = vld [vmem:[#allocation7 + $0x2c0] sm:$0xff]
        %v2492 = vld [vmem:[#allocation7 + $0x2c8] sm:$0xff]
        %v2493 = vld [vmem:[#allocation7 + $0x2d0] sm:$0xff]
        %v2494 = vld [vmem:[#allocation7 + $0x2d8] sm:$0xff]
        %v2495 = vld [vmem:[#allocation7 + $0x2e0] sm:$0xff]
        %v2496 = vld [vmem:[#allocation7 + $0x2e8] sm:$0xff]
        %v2497 = vld [vmem:[#allocation7 + $0x2f0] sm:$0xff]
        %v2498 = vld [vmem:[#allocation7 + $0x2f8] sm:$0xff]
        %v2499 = vld [vmem:[#allocation7 + $0x300] sm:$0xff]
        %v2500 = vld [vmem:[#allocation7 + $0x308] sm:$0xff]
        %v2501 = vld [vmem:[#allocation7 + $0x310] sm:$0xff]
        %v2502 = vld [vmem:[#allocation7 + $0x318] sm:$0xff]
        %v2503 = vld [vmem:[#allocation7 + $0x320] sm:$0xff]
        %v2504 = vld [vmem:[#allocation7 + $0x328] sm:$0xff]
        %v2505 = vld [vmem:[#allocation7 + $0x330] sm:$0xff]
        %v2506 = vld [vmem:[#allocation7 + $0x338] sm:$0xff]
        %v2507 = vld [vmem:[#allocation7 + $0x340] sm:$0xff]
        %v2508 = vld [vmem:[#allocation7 + $0x348] sm:$0xff]
        %v2509 = vld [vmem:[#allocation7 + $0x350] sm:$0xff]
        %v2510 = vld [vmem:[#allocation7 + $0x358] sm:$0xff]
        %v2511 = vld [vmem:[#allocation7 + $0x360] sm:$0xff]
        %v2512 = vld [vmem:[#allocation7 + $0x368] sm:$0xff]
        %v2513 = vld [vmem:[#allocation7 + $0x370] sm:$0xff]
        %v2514 = vld [vmem:[#allocation7 + $0x378] sm:$0xff]
        %v2515 = vld [vmem:[#allocation7 + $0x380] sm:$0xff]
        %v2516 = vld [vmem:[#allocation7 + $0x388] sm:$0xff]
        %v2517 = vld [vmem:[#allocation7 + $0x390] sm:$0xff]
        %v2518 = vld [vmem:[#allocation7 + $0x398] sm:$0xff]
        %v2519 = vld [vmem:[#allocation7 + $0x3a0] sm:$0xff]
        %v2520 = vld [vmem:[#allocation7 + $0x3a8] sm:$0xff]
        %v2521 = vld [vmem:[#allocation7 + $0x3b0] sm:$0xff]
        %v2522 = vld [vmem:[#allocation7 + $0x3b8] sm:$0xff]
        %v2523 = vld [vmem:[#allocation7 + $0x3c0] sm:$0xff]
        %v2524 = vld [vmem:[#allocation7 + $0x3c8] sm:$0xff]
        %v2525 = vld [vmem:[#allocation7 + $0x3d0] sm:$0xff]
        %v2526 = vld [vmem:[#allocation7 + $0x3d8] sm:$0xff]
        %v2527 = vld [vmem:[#allocation7 + $0x3e0] sm:$0xff]
        %v2528 = vld [vmem:[#allocation7 + $0x3e8] sm:$0xff]
        %v2529 = vld [vmem:[#allocation7 + $0x3f0] sm:$0xff]
        %v2530 = vld [vmem:[#allocation7 + $0x3f8] sm:$0xff]
        %v2531 = vld [vmem:[#allocation7 + $0x400] sm:$0xff]
        %v2532 = vld [vmem:[#allocation7 + $0x408] sm:$0xff]
        %v2533 = vld [vmem:[#allocation7 + $0x410] sm:$0xff]
        %v2534 = vld [vmem:[#allocation7 + $0x418] sm:$0xff]
        %v2535 = vld [vmem:[#allocation7 + $0x420] sm:$0xff]
        %v2536 = vld [vmem:[#allocation7 + $0x428] sm:$0xff]
        %v2537 = vld [vmem:[#allocation7 + $0x430] sm:$0xff]
        %v2538 = vld [vmem:[#allocation7 + $0x438] sm:$0xff]
        %v2539 = vld [vmem:[#allocation7 + $0x440] sm:$0xff]
        %v2540 = vld [vmem:[#allocation7 + $0x448] sm:$0xff]
        %v2541 = vld [vmem:[#allocation7 + $0x450] sm:$0xff]
        %v2542 = vld [vmem:[#allocation7 + $0x458] sm:$0xff]
        %v2543 = vld [vmem:[#allocation7 + $0x460] sm:$0xff]
        %v2544 = vld [vmem:[#allocation7 + $0x468] sm:$0xff]
        %v2545 = vld [vmem:[#allocation7 + $0x470] sm:$0xff]
        %v2546 = vld [vmem:[#allocation7 + $0x478] sm:$0xff]
        %v2547 = vld [vmem:[#allocation7 + $0x480] sm:$0xff]
        %v2548 = vld [vmem:[#allocation7 + $0x488] sm:$0xff]
        %v2549 = vld [vmem:[#allocation7 + $0x490] sm:$0xff]
        %v2550 = vld [vmem:[#allocation7 + $0x498] sm:$0xff]
        %v2551 = vld [vmem:[#allocation7 + $0x4a0] sm:$0xff]
        %v2552 = vld [vmem:[#allocation7 + $0x4a8] sm:$0xff]
        %v2553 = vld [vmem:[#allocation7 + $0x4b0] sm:$0xff]
        %v2554 = vld [vmem:[#allocation7 + $0x4b8] sm:$0xff]
        %v2555 = vld [vmem:[#allocation7 + $0x4c0] sm:$0xff]
        %v2556 = vld [vmem:[#allocation7 + $0x4c8] sm:$0xff]
        %v2557 = vld [vmem:[#allocation7 + $0x4d0] sm:$0xff]
        %v2558 = vld [vmem:[#allocation7 + $0x4d8] sm:$0xff]
        %v2559 = vld [vmem:[#allocation7 + $0x4e0] sm:$0xff]
        %v2560 = vld [vmem:[#allocation7 + $0x4e8] sm:$0xff]
        %v2561 = vld [vmem:[#allocation7 + $0x4f0] sm:$0xff]
        %v2562 = vld [vmem:[#allocation7 + $0x4f8] sm:$0xff]
        %v2563 = vld [vmem:[%s8] sm:$0xff]
        %v2564 = vld [vmem:[%s8 + $0x8] sm:$0x3]
        %v2567 = vlaneseq
        %v2568 = vshrl.u32 %v2567, 7
        %v2569 = vsub.s32 0, %v2568
        %v2570 = vrot.slane %v2563, %v2569
        %v2571 = vlaneseq
        %v2572 = vshrl.u32 %v2571, 7
        %v2573 = vsub.s32 1, %v2572
        %v2574 = vrot.slane %v2563, %v2573
        %v2575 = vlaneseq
        %v2576 = vshrl.u32 %v2575, 7
        %v2577 = vsub.s32 2, %v2576
        %v2578 = vrot.slane %v2563, %v2577
        %v2579 = vlaneseq
        %v2580 = vshrl.u32 %v2579, 7
        %v2581 = vsub.s32 3, %v2580
        %v2582 = vrot.slane %v2563, %v2581
        %v2583 = vlaneseq
        %v2584 = vshrl.u32 %v2583, 7
        %v2585 = vsub.s32 4, %v2584
        %v2586 = vrot.slane %v2563, %v2585
        %v2587 = vlaneseq
        %v2588 = vshrl.u32 %v2587, 7
        %v2589 = vsub.s32 5, %v2588
        %v2590 = vrot.slane %v2563, %v2589
        %v2591 = vlaneseq
        %v2592 = vshrl.u32 %v2591, 7
        %v2593 = vsub.s32 6, %v2592
        %v2594 = vrot.slane %v2563, %v2593
        %v2595 = vlaneseq
        %v2596 = vshrl.u32 %v2595, 7
        %v2597 = vsub.s32 7, %v2596
        %v2598 = vrot.slane %v2563, %v2597
        %v2599 = vlaneseq
        %v2600 = vshrl.u32 %v2599, 7
        %v2601 = vsub.s32 0, %v2600
        %v2602 = vrot.slane %v2564, %v2601
        %v2603 = vlaneseq
        %v2604 = vshrl.u32 %v2603, 7
        %v2605 = vsub.s32 1, %v2604
        %v2606 = vrot.slane %v2564, %v2605
        %v2777 = vunpack.c.l.b16 %v2403
        %v2778 = vunpack.c.h.b16 %v2403
        %v2779 = vunpack.c.l.b16 %v2404
        %v2780 = vunpack.c.h.b16 %v2404
        %v2781 = vunpack.c.l.b16 %v2405
        %v2782 = vunpack.c.h.b16 %v2405
        %v2783 = vunpack.c.l.b16 %v2406
        %v2784 = vunpack.c.h.b16 %v2406
        %v2785 = vunpack.c.l.b16 %v2407
        %v2786 = vunpack.c.h.b16 %v2407
        %v2787 = vunpack.c.l.b16 %v2408
        %v2788 = vunpack.c.h.b16 %v2408
        %v2789 = vunpack.c.l.b16 %v2409
        %v2790 = vunpack.c.h.b16 %v2409
        %v2791 = vunpack.c.l.b16 %v2410
        %v2792 = vunpack.c.h.b16 %v2410
        %v2793 = vunpack.c.l.b16 %v2411
        %v2794 = vunpack.c.h.b16 %v2411
        %v2795 = vunpack.c.l.b16 %v2412
        %v2796 = vunpack.c.h.b16 %v2412
        %v2797 = vunpack.c.l.b16 %v2413
        %v2798 = vunpack.c.h.b16 %v2413
        %v2799 = vunpack.c.l.b16 %v2414
        %v2800 = vunpack.c.h.b16 %v2414
        %v2801 = vunpack.c.l.b16 %v2415
        %v2802 = vunpack.c.h.b16 %v2415
        %v2803 = vunpack.c.l.b16 %v2416
        %v2804 = vunpack.c.h.b16 %v2416
        %v2805 = vunpack.c.l.b16 %v2417
        %v2806 = vunpack.c.h.b16 %v2417
        %v2807 = vunpack.c.l.b16 %v2418
        %v2808 = vunpack.c.h.b16 %v2418
        %v2809 = vunpack.c.l.b16 %v2419
        %v2810 = vunpack.c.h.b16 %v2419
        %v2811 = vunpack.c.l.b16 %v2420
        %v2812 = vunpack.c.h.b16 %v2420
        %v2813 = vunpack.c.l.b16 %v2421
        %v2814 = vunpack.c.h.b16 %v2421
        %v2815 = vunpack.c.l.b16 %v2422
        %v2816 = vunpack.c.h.b16 %v2422
        %v2817 = vunpack.c.l.b16 %v2423
        %v2818 = vunpack.c.h.b16 %v2423
        %v2819 = vunpack.c.l.b16 %v2424
        %v2820 = vunpack.c.h.b16 %v2424
        %v2821 = vunpack.c.l.b16 %v2425
        %v2822 = vunpack.c.h.b16 %v2425
        %v2823 = vunpack.c.l.b16 %v2426
        %v2824 = vunpack.c.h.b16 %v2426
        %v2825 = vunpack.c.l.b16 %v2427
        %v2826 = vunpack.c.h.b16 %v2427
        %v2827 = vunpack.c.l.b16 %v2428
        %v2828 = vunpack.c.h.b16 %v2428
        %v2829 = vunpack.c.l.b16 %v2429
        %v2830 = vunpack.c.h.b16 %v2429
        %v2831 = vunpack.c.l.b16 %v2430
        %v2832 = vunpack.c.h.b16 %v2430
        %v2833 = vunpack.c.l.b16 %v2431
        %v2834 = vunpack.c.h.b16 %v2431
        %v2835 = vunpack.c.l.b16 %v2432
        %v2836 = vunpack.c.h.b16 %v2432
        %v2837 = vunpack.c.l.b16 %v2433
        %v2838 = vunpack.c.h.b16 %v2433
        %v2839 = vunpack.c.l.b16 %v2434
        %v2840 = vunpack.c.h.b16 %v2434
        %v2841 = vunpack.c.l.b16 %v2435
        %v2842 = vunpack.c.h.b16 %v2435
        %v2843 = vunpack.c.l.b16 %v2436
        %v2844 = vunpack.c.h.b16 %v2436
        %v2845 = vunpack.c.l.b16 %v2437
        %v2846 = vunpack.c.h.b16 %v2437
        %v2847 = vunpack.c.l.b16 %v2438
        %v2848 = vunpack.c.h.b16 %v2438
        %v2849 = vunpack.c.l.b16 %v2439
        %v2850 = vunpack.c.h.b16 %v2439
        %v2851 = vunpack.c.l.b16 %v2440
        %v2852 = vunpack.c.h.b16 %v2440
        %v2853 = vunpack.c.l.b16 %v2441
        %v2854 = vunpack.c.h.b16 %v2441
        %v2855 = vunpack.c.l.b16 %v2442
        %v2856 = vunpack.c.h.b16 %v2442
        %v2857 = vunpack.c.l.b16 %v2443
        %v2858 = vunpack.c.h.b16 %v2443
        %v2859 = vunpack.c.l.b16 %v2444
        %v2860 = vunpack.c.h.b16 %v2444
        %v2861 = vunpack.c.l.b16 %v2445
        %v2862 = vunpack.c.h.b16 %v2445
        %v2863 = vunpack.c.l.b16 %v2446
        %v2864 = vunpack.c.h.b16 %v2446
        %v2865 = vunpack.c.l.b16 %v2447
        %v2866 = vunpack.c.h.b16 %v2447
        %v2867 = vunpack.c.l.b16 %v2448
        %v2868 = vunpack.c.h.b16 %v2448
        %v2869 = vunpack.c.l.b16 %v2449
        %v2870 = vunpack.c.h.b16 %v2449
        %v2871 = vunpack.c.l.b16 %v2450
        %v2872 = vunpack.c.h.b16 %v2450
        %v2873 = vunpack.c.l.b16 %v2451
        %v2874 = vunpack.c.h.b16 %v2451
        %v2875 = vunpack.c.l.b16 %v2452
        %v2876 = vunpack.c.h.b16 %v2452
        %v2877 = vunpack.c.l.b16 %v2453
        %v2878 = vunpack.c.h.b16 %v2453
        %v2879 = vunpack.c.l.b16 %v2454
        %v2880 = vunpack.c.h.b16 %v2454
        %v2881 = vunpack.c.l.b16 %v2455
        %v2882 = vunpack.c.h.b16 %v2455
        %v2883 = vunpack.c.l.b16 %v2456
        %v2884 = vunpack.c.h.b16 %v2456
        %v2885 = vunpack.c.l.b16 %v2457
        %v2886 = vunpack.c.h.b16 %v2457
        %v2887 = vunpack.c.l.b16 %v2458
        %v2888 = vunpack.c.h.b16 %v2458
        %v2889 = vunpack.c.l.b16 %v2459
        %v2890 = vunpack.c.h.b16 %v2459
        %v2891 = vunpack.c.l.b16 %v2460
        %v2892 = vunpack.c.h.b16 %v2460
        %v2893 = vunpack.c.l.b16 %v2461
        %v2894 = vunpack.c.h.b16 %v2461
        %v2895 = vunpack.c.l.b16 %v2462
        %v2896 = vunpack.c.h.b16 %v2462
        %v2897 = vunpack.c.l.b16 %v2463
        %v2898 = vunpack.c.h.b16 %v2463
        %v2899 = vunpack.c.l.b16 %v2464
        %v2900 = vunpack.c.h.b16 %v2464
        %v2901 = vunpack.c.l.b16 %v2465
        %v2902 = vunpack.c.h.b16 %v2465
        %v2903 = vunpack.c.l.b16 %v2466
        %v2904 = vunpack.c.h.b16 %v2466
        %v2905 = vunpack.c.l.b16 %v2467
        %v2906 = vunpack.c.h.b16 %v2467
        %v2907 = vunpack.c.l.b16 %v2468
        %v2908 = vunpack.c.h.b16 %v2468
        %v2909 = vunpack.c.l.b16 %v2469
        %v2910 = vunpack.c.h.b16 %v2469
        %v2911 = vunpack.c.l.b16 %v2470
        %v2912 = vunpack.c.h.b16 %v2470
        %v2913 = vunpack.c.l.b16 %v2471
        %v2914 = vunpack.c.h.b16 %v2471
        %v2915 = vunpack.c.l.b16 %v2472
        %v2916 = vunpack.c.h.b16 %v2472
        %v2917 = vunpack.c.l.b16 %v2473
        %v2918 = vunpack.c.h.b16 %v2473
        %v2919 = vunpack.c.l.b16 %v2474
        %v2920 = vunpack.c.h.b16 %v2474
        %v2921 = vunpack.c.l.b16 %v2475
        %v2922 = vunpack.c.h.b16 %v2475
        %v2923 = vunpack.c.l.b16 %v2476
        %v2924 = vunpack.c.h.b16 %v2476
        %v2925 = vunpack.c.l.b16 %v2477
        %v2926 = vunpack.c.h.b16 %v2477
        %v2927 = vunpack.c.l.b16 %v2478
        %v2928 = vunpack.c.h.b16 %v2478
        %v2929 = vunpack.c.l.b16 %v2479
        %v2930 = vunpack.c.h.b16 %v2479
        %v2931 = vunpack.c.l.b16 %v2480
        %v2932 = vunpack.c.h.b16 %v2480
        %v2933 = vunpack.c.l.b16 %v2481
        %v2934 = vunpack.c.h.b16 %v2481
        %v2935 = vunpack.c.l.b16 %v2482
        %v2936 = vunpack.c.h.b16 %v2482
        %v2937 = vunpack.c.l.b16 %v2483
        %v2938 = vunpack.c.h.b16 %v2483
        %v2939 = vunpack.c.l.b16 %v2484
        %v2940 = vunpack.c.h.b16 %v2484
        %v2941 = vunpack.c.l.b16 %v2485
        %v2942 = vunpack.c.h.b16 %v2485
        %v2943 = vunpack.c.l.b16 %v2486
        %v2944 = vunpack.c.h.b16 %v2486
        %v2945 = vunpack.c.l.b16 %v2487
        %v2946 = vunpack.c.h.b16 %v2487
        %v2947 = vunpack.c.l.b16 %v2488
        %v2948 = vunpack.c.h.b16 %v2488
        %v2949 = vunpack.c.l.b16 %v2489
        %v2950 = vunpack.c.h.b16 %v2489
        %v2951 = vunpack.c.l.b16 %v2490
        %v2952 = vunpack.c.h.b16 %v2490
        %v2953 = vunpack.c.l.b16 %v2491
        %v2954 = vunpack.c.h.b16 %v2491
        %v2955 = vunpack.c.l.b16 %v2492
        %v2956 = vunpack.c.h.b16 %v2492
        %v2957 = vunpack.c.l.b16 %v2493
        %v2958 = vunpack.c.h.b16 %v2493
        %v2959 = vunpack.c.l.b16 %v2494
        %v2960 = vunpack.c.h.b16 %v2494
        %v2961 = vunpack.c.l.b16 %v2495
        %v2962 = vunpack.c.h.b16 %v2495
        %v2963 = vunpack.c.l.b16 %v2496
        %v2964 = vunpack.c.h.b16 %v2496
        %v2965 = vunpack.c.l.b16 %v2497
        %v2966 = vunpack.c.h.b16 %v2497
        %v2967 = vunpack.c.l.b16 %v2498
        %v2968 = vunpack.c.h.b16 %v2498
        %v2969 = vunpack.c.l.b16 %v2499
        %v2970 = vunpack.c.h.b16 %v2499
        %v2971 = vunpack.c.l.b16 %v2500
        %v2972 = vunpack.c.h.b16 %v2500
        %v2973 = vunpack.c.l.b16 %v2501
        %v2974 = vunpack.c.h.b16 %v2501
        %v2975 = vunpack.c.l.b16 %v2502
        %v2976 = vunpack.c.h.b16 %v2502
        %v2977 = vunpack.c.l.b16 %v2503
        %v2978 = vunpack.c.h.b16 %v2503
        %v2979 = vunpack.c.l.b16 %v2504
        %v2980 = vunpack.c.h.b16 %v2504
        %v2981 = vunpack.c.l.b16 %v2505
        %v2982 = vunpack.c.h.b16 %v2505
        %v2983 = vunpack.c.l.b16 %v2506
        %v2984 = vunpack.c.h.b16 %v2506
        %v2985 = vunpack.c.l.b16 %v2507
        %v2986 = vunpack.c.h.b16 %v2507
        %v2987 = vunpack.c.l.b16 %v2508
        %v2988 = vunpack.c.h.b16 %v2508
        %v2989 = vunpack.c.l.b16 %v2509
        %v2990 = vunpack.c.h.b16 %v2509
        %v2991 = vunpack.c.l.b16 %v2510
        %v2992 = vunpack.c.h.b16 %v2510
        %v2993 = vunpack.c.l.b16 %v2511
        %v2994 = vunpack.c.h.b16 %v2511
        %v2995 = vunpack.c.l.b16 %v2512
        %v2996 = vunpack.c.h.b16 %v2512
        %v2997 = vunpack.c.l.b16 %v2513
        %v2998 = vunpack.c.h.b16 %v2513
        %v2999 = vunpack.c.l.b16 %v2514
        %v3000 = vunpack.c.h.b16 %v2514
        %v3001 = vunpack.c.l.b16 %v2515
        %v3002 = vunpack.c.h.b16 %v2515
        %v3003 = vunpack.c.l.b16 %v2516
        %v3004 = vunpack.c.h.b16 %v2516
        %v3005 = vunpack.c.l.b16 %v2517
        %v3006 = vunpack.c.h.b16 %v2517
        %v3007 = vunpack.c.l.b16 %v2518
        %v3008 = vunpack.c.h.b16 %v2518
        %v3009 = vunpack.c.l.b16 %v2519
        %v3010 = vunpack.c.h.b16 %v2519
        %v3011 = vunpack.c.l.b16 %v2520
        %v3012 = vunpack.c.h.b16 %v2520
        %v3013 = vunpack.c.l.b16 %v2521
        %v3014 = vunpack.c.h.b16 %v2521
        %v3015 = vunpack.c.l.b16 %v2522
        %v3016 = vunpack.c.h.b16 %v2522
        %v3017 = vunpack.c.l.b16 %v2523
        %v3018 = vunpack.c.h.b16 %v2523
        %v3019 = vunpack.c.l.b16 %v2524
        %v3020 = vunpack.c.h.b16 %v2524
        %v3021 = vunpack.c.l.b16 %v2525
        %v3022 = vunpack.c.h.b16 %v2525
        %v3023 = vunpack.c.l.b16 %v2526
        %v3024 = vunpack.c.h.b16 %v2526
        %v3025 = vunpack.c.l.b16 %v2527
        %v3026 = vunpack.c.h.b16 %v2527
        %v3027 = vunpack.c.l.b16 %v2528
        %v3028 = vunpack.c.h.b16 %v2528
        %v3029 = vunpack.c.l.b16 %v2529
        %v3030 = vunpack.c.h.b16 %v2529
        %v3031 = vunpack.c.l.b16 %v2530
        %v3032 = vunpack.c.h.b16 %v2530
        %v3033 = vunpack.c.l.b16 %v2531
        %v3034 = vunpack.c.h.b16 %v2531
        %v3035 = vunpack.c.l.b16 %v2532
        %v3036 = vunpack.c.h.b16 %v2532
        %v3037 = vunpack.c.l.b16 %v2533
        %v3038 = vunpack.c.h.b16 %v2533
        %v3039 = vunpack.c.l.b16 %v2534
        %v3040 = vunpack.c.h.b16 %v2534
        %v3041 = vunpack.c.l.b16 %v2535
        %v3042 = vunpack.c.h.b16 %v2535
        %v3043 = vunpack.c.l.b16 %v2536
        %v3044 = vunpack.c.h.b16 %v2536
        %v3045 = vunpack.c.l.b16 %v2537
        %v3046 = vunpack.c.h.b16 %v2537
        %v3047 = vunpack.c.l.b16 %v2538
        %v3048 = vunpack.c.h.b16 %v2538
        %v3049 = vunpack.c.l.b16 %v2539
        %v3050 = vunpack.c.h.b16 %v2539
        %v3051 = vunpack.c.l.b16 %v2540
        %v3052 = vunpack.c.h.b16 %v2540
        %v3053 = vunpack.c.l.b16 %v2541
        %v3054 = vunpack.c.h.b16 %v2541
        %v3055 = vunpack.c.l.b16 %v2542
        %v3056 = vunpack.c.h.b16 %v2542
        %v3057 = vunpack.c.l.b16 %v2543
        %v3058 = vunpack.c.h.b16 %v2543
        %v3059 = vunpack.c.l.b16 %v2544
        %v3060 = vunpack.c.h.b16 %v2544
        %v3061 = vunpack.c.l.b16 %v2545
        %v3062 = vunpack.c.h.b16 %v2545
        %v3063 = vunpack.c.l.b16 %v2546
        %v3064 = vunpack.c.h.b16 %v2546
        %v3065 = vunpack.c.l.b16 %v2547
        %v3066 = vunpack.c.h.b16 %v2547
        %v3067 = vunpack.c.l.b16 %v2548
        %v3068 = vunpack.c.h.b16 %v2548
        %v3069 = vunpack.c.l.b16 %v2549
        %v3070 = vunpack.c.h.b16 %v2549
        %v3071 = vunpack.c.l.b16 %v2550
        %v3072 = vunpack.c.h.b16 %v2550
        %v3073 = vunpack.c.l.b16 %v2551
        %v3074 = vunpack.c.h.b16 %v2551
        %v3075 = vunpack.c.l.b16 %v2552
        %v3076 = vunpack.c.h.b16 %v2552
        %v3077 = vunpack.c.l.b16 %v2553
        %v3078 = vunpack.c.h.b16 %v2553
        %v3079 = vunpack.c.l.b16 %v2554
        %v3080 = vunpack.c.h.b16 %v2554
        %v3081 = vunpack.c.l.b16 %v2555
        %v3082 = vunpack.c.h.b16 %v2555
        %v3083 = vunpack.c.l.b16 %v2556
        %v3084 = vunpack.c.h.b16 %v2556
        %v3085 = vunpack.c.l.b16 %v2557
        %v3086 = vunpack.c.h.b16 %v2557
        %v3087 = vunpack.c.l.b16 %v2558
        %v3088 = vunpack.c.h.b16 %v2558
        %v3089 = vunpack.c.l.b16 %v2559
        %v3090 = vunpack.c.h.b16 %v2559
        %v3091 = vunpack.c.l.b16 %v2560
        %v3092 = vunpack.c.h.b16 %v2560
        %v3093 = vunpack.c.l.b16 %v2561
        %v3094 = vunpack.c.h.b16 %v2561
        %v3095 = vunpack.c.l.b16 %v2562
        %v3096 = vunpack.c.h.b16 %v2562
        %v3097 = vpack.c.b16 %v2787, %v2777
        %v3098 = vpack.c.b16 %v2788, %v2778
        %v3099 = vpack.c.b16 %v2789, %v2779
        %v3100 = vpack.c.b16 %v2790, %v2780
        %v3101 = vpack.c.b16 %v2791, %v2781
        %v3102 = vpack.c.b16 %v2792, %v2782
        %v3103 = vpack.c.b16 %v2793, %v2783
        %v3104 = vpack.c.b16 %v2794, %v2784
        %v3105 = vpack.c.b16 %v2795, %v2785
        %v3106 = vpack.c.b16 %v2796, %v2786
        %v3107 = vpack.c.b16 %v2807, %v2797
        %v3108 = vpack.c.b16 %v2808, %v2798
        %v3109 = vpack.c.b16 %v2809, %v2799
        %v3110 = vpack.c.b16 %v2810, %v2800
        %v3111 = vpack.c.b16 %v2811, %v2801
        %v3112 = vpack.c.b16 %v2812, %v2802
        %v3113 = vpack.c.b16 %v2813, %v2803
        %v3114 = vpack.c.b16 %v2814, %v2804
        %v3115 = vpack.c.b16 %v2815, %v2805
        %v3116 = vpack.c.b16 %v2816, %v2806
        %v3117 = vpack.c.b16 %v2827, %v2817
        %v3118 = vpack.c.b16 %v2828, %v2818
        %v3119 = vpack.c.b16 %v2829, %v2819
        %v3120 = vpack.c.b16 %v2830, %v2820
        %v3121 = vpack.c.b16 %v2831, %v2821
        %v3122 = vpack.c.b16 %v2832, %v2822
        %v3123 = vpack.c.b16 %v2833, %v2823
        %v3124 = vpack.c.b16 %v2834, %v2824
        %v3125 = vpack.c.b16 %v2835, %v2825
        %v3126 = vpack.c.b16 %v2836, %v2826
        %v3127 = vpack.c.b16 %v2847, %v2837
        %v3128 = vpack.c.b16 %v2848, %v2838
        %v3129 = vpack.c.b16 %v2849, %v2839
        %v3130 = vpack.c.b16 %v2850, %v2840
        %v3131 = vpack.c.b16 %v2851, %v2841
        %v3132 = vpack.c.b16 %v2852, %v2842
        %v3133 = vpack.c.b16 %v2853, %v2843
        %v3134 = vpack.c.b16 %v2854, %v2844
        %v3135 = vpack.c.b16 %v2855, %v2845
        %v3136 = vpack.c.b16 %v2856, %v2846
        %v3137 = vpack.c.b16 %v2867, %v2857
        %v3138 = vpack.c.b16 %v2868, %v2858
        %v3139 = vpack.c.b16 %v2869, %v2859
        %v3140 = vpack.c.b16 %v2870, %v2860
        %v3141 = vpack.c.b16 %v2871, %v2861
        %v3142 = vpack.c.b16 %v2872, %v2862
        %v3143 = vpack.c.b16 %v2873, %v2863
        %v3144 = vpack.c.b16 %v2874, %v2864
        %v3145 = vpack.c.b16 %v2875, %v2865
        %v3146 = vpack.c.b16 %v2876, %v2866
        %v3147 = vpack.c.b16 %v2887, %v2877
        %v3148 = vpack.c.b16 %v2888, %v2878
        %v3149 = vpack.c.b16 %v2889, %v2879
        %v3150 = vpack.c.b16 %v2890, %v2880
        %v3151 = vpack.c.b16 %v2891, %v2881
        %v3152 = vpack.c.b16 %v2892, %v2882
        %v3153 = vpack.c.b16 %v2893, %v2883
        %v3154 = vpack.c.b16 %v2894, %v2884
        %v3155 = vpack.c.b16 %v2895, %v2885
        %v3156 = vpack.c.b16 %v2896, %v2886
        %v3157 = vpack.c.b16 %v2907, %v2897
        %v3158 = vpack.c.b16 %v2908, %v2898
        %v3159 = vpack.c.b16 %v2909, %v2899
        %v3160 = vpack.c.b16 %v2910, %v2900
        %v3161 = vpack.c.b16 %v2911, %v2901
        %v3162 = vpack.c.b16 %v2912, %v2902
        %v3163 = vpack.c.b16 %v2913, %v2903
        %v3164 = vpack.c.b16 %v2914, %v2904
        %v3165 = vpack.c.b16 %v2915, %v2905
        %v3166 = vpack.c.b16 %v2916, %v2906
        %v3167 = vpack.c.b16 %v2927, %v2917
        %v3168 = vpack.c.b16 %v2928, %v2918
        %v3169 = vpack.c.b16 %v2929, %v2919
        %v3170 = vpack.c.b16 %v2930, %v2920
        %v3171 = vpack.c.b16 %v2931, %v2921
        %v3172 = vpack.c.b16 %v2932, %v2922
        %v3173 = vpack.c.b16 %v2933, %v2923
        %v3174 = vpack.c.b16 %v2934, %v2924
        %v3175 = vpack.c.b16 %v2935, %v2925
        %v3176 = vpack.c.b16 %v2936, %v2926
        %v3177 = vpack.c.b16 %v2947, %v2937
        %v3178 = vpack.c.b16 %v2948, %v2938
        %v3179 = vpack.c.b16 %v2949, %v2939
        %v3180 = vpack.c.b16 %v2950, %v2940
        %v3181 = vpack.c.b16 %v2951, %v2941
        %v3182 = vpack.c.b16 %v2952, %v2942
        %v3183 = vpack.c.b16 %v2953, %v2943
        %v3184 = vpack.c.b16 %v2954, %v2944
        %v3185 = vpack.c.b16 %v2955, %v2945
        %v3186 = vpack.c.b16 %v2956, %v2946
        %v3187 = vpack.c.b16 %v2967, %v2957
        %v3188 = vpack.c.b16 %v2968, %v2958
        %v3189 = vpack.c.b16 %v2969, %v2959
        %v3190 = vpack.c.b16 %v2970, %v2960
        %v3191 = vpack.c.b16 %v2971, %v2961
        %v3192 = vpack.c.b16 %v2972, %v2962
        %v3193 = vpack.c.b16 %v2973, %v2963
        %v3194 = vpack.c.b16 %v2974, %v2964
        %v3195 = vpack.c.b16 %v2975, %v2965
        %v3196 = vpack.c.b16 %v2976, %v2966
        %v3197 = vpack.c.b16 %v2987, %v2977
        %v3198 = vpack.c.b16 %v2988, %v2978
        %v3199 = vpack.c.b16 %v2989, %v2979
        %v3200 = vpack.c.b16 %v2990, %v2980
        %v3201 = vpack.c.b16 %v2991, %v2981
        %v3202 = vpack.c.b16 %v2992, %v2982
        %v3203 = vpack.c.b16 %v2993, %v2983
        %v3204 = vpack.c.b16 %v2994, %v2984
        %v3205 = vpack.c.b16 %v2995, %v2985
        %v3206 = vpack.c.b16 %v2996, %v2986
        %v3207 = vpack.c.b16 %v3007, %v2997
        %v3208 = vpack.c.b16 %v3008, %v2998
        %v3209 = vpack.c.b16 %v3009, %v2999
        %v3210 = vpack.c.b16 %v3010, %v3000
        %v3211 = vpack.c.b16 %v3011, %v3001
        %v3212 = vpack.c.b16 %v3012, %v3002
        %v3213 = vpack.c.b16 %v3013, %v3003
        %v3214 = vpack.c.b16 %v3014, %v3004
        %v3215 = vpack.c.b16 %v3015, %v3005
        %v3216 = vpack.c.b16 %v3016, %v3006
        %v3217 = vpack.c.b16 %v3027, %v3017
        %v3218 = vpack.c.b16 %v3028, %v3018
        %v3219 = vpack.c.b16 %v3029, %v3019
        %v3220 = vpack.c.b16 %v3030, %v3020
        %v3221 = vpack.c.b16 %v3031, %v3021
        %v3222 = vpack.c.b16 %v3032, %v3022
        %v3223 = vpack.c.b16 %v3033, %v3023
        %v3224 = vpack.c.b16 %v3034, %v3024
        %v3225 = vpack.c.b16 %v3035, %v3025
        %v3226 = vpack.c.b16 %v3036, %v3026
        %v3227 = vpack.c.b16 %v3047, %v3037
        %v3228 = vpack.c.b16 %v3048, %v3038
        %v3229 = vpack.c.b16 %v3049, %v3039
        %v3230 = vpack.c.b16 %v3050, %v3040
        %v3231 = vpack.c.b16 %v3051, %v3041
        %v3232 = vpack.c.b16 %v3052, %v3042
        %v3233 = vpack.c.b16 %v3053, %v3043
        %v3234 = vpack.c.b16 %v3054, %v3044
        %v3235 = vpack.c.b16 %v3055, %v3045
        %v3236 = vpack.c.b16 %v3056, %v3046
        %v3237 = vpack.c.b16 %v3067, %v3057
        %v3238 = vpack.c.b16 %v3068, %v3058
        %v3239 = vpack.c.b16 %v3069, %v3059
        %v3240 = vpack.c.b16 %v3070, %v3060
        %v3241 = vpack.c.b16 %v3071, %v3061
        %v3242 = vpack.c.b16 %v3072, %v3062
        %v3243 = vpack.c.b16 %v3073, %v3063
        %v3244 = vpack.c.b16 %v3074, %v3064
        %v3245 = vpack.c.b16 %v3075, %v3065
        %v3246 = vpack.c.b16 %v3076, %v3066
        %v3247 = vpack.c.b16 %v3087, %v3077
        %v3248 = vpack.c.b16 %v3088, %v3078
        %v3249 = vpack.c.b16 %v3089, %v3079
        %v3250 = vpack.c.b16 %v3090, %v3080
        %v3251 = vpack.c.b16 %v3091, %v3081
        %v3252 = vpack.c.b16 %v3092, %v3082
        %v3253 = vpack.c.b16 %v3093, %v3083
        %v3254 = vpack.c.b16 %v3094, %v3084
        %v3255 = vpack.c.b16 %v3095, %v3085
        %v3256 = vpack.c.b16 %v3096, %v3086
        %3417 = vmatprep.subr.bf16.mxu0 %v3098
        %3418 = vmatpush1.bf16.msra.mxu0 %v3097
        %3419 = vmatprep.subr.bf16.mxu0 %v3108
        %3420 = vmatpush1.bf16.msra.mxu0 %v3107
        %3421 = vmatprep.subr.bf16.mxu0 %v3118
        %3422 = vmatpush1.bf16.msra.mxu0 %v3117
        %3423 = vmatprep.subr.bf16.mxu0 %v3128
        %3424 = vmatpush1.bf16.msra.mxu0 %v3127
        %3425 = vmatprep.subr.bf16.mxu0 %v3138
        %3426 = vmatpush1.bf16.msra.mxu0 %v3137
        %3427 = vmatprep.subr.bf16.mxu0 %v3148
        %3428 = vmatpush1.bf16.msra.mxu0 %v3147
        %3429 = vmatprep.subr.bf16.mxu0 %v3158
        %3430 = vmatpush1.bf16.msra.mxu0 %v3157
        %3431 = vmatprep.subr.bf16.mxu0 %v3168
        %3432 = vmatpush1.bf16.msra.mxu0 %v3167
        %3433 = vmatprep.subr.bf16.mxu0 %v3178
        %3434 = vmatpush1.bf16.msra.mxu0 %v3177
        %3435 = vmatprep.subr.bf16.mxu0 %v3188
        %3436 = vmatpush1.bf16.msra.mxu0 %v3187
        %3437 = vmatprep.subr.bf16.mxu0 %v3198
        %3438 = vmatpush1.bf16.msra.mxu0 %v3197
        %3439 = vmatprep.subr.bf16.mxu0 %v3208
        %3440 = vmatpush1.bf16.msra.mxu0 %v3207
        %3441 = vmatprep.subr.bf16.mxu0 %v3218
        %3442 = vmatpush1.bf16.msra.mxu0 %v3217
        %3443 = vmatprep.subr.bf16.mxu0 %v3228
        %3444 = vmatpush1.bf16.msra.mxu0 %v3227
        %3445 = vmatprep.subr.bf16.mxu0 %v3238
        %3446 = vmatpush1.bf16.msra.mxu0 %v3237
        %3447 = vmatprep.subr.bf16.mxu0 %v3248
        %3448 = vmatpush1.bf16.msra.mxu0 %v3247
        %3449 = vmatprep.mubr.bf16.mxu0 %v2372
        %3450 = vmatmul.mubr.bf16.gmra.mrb[0].mxu0 %v2371
        %v3451 = vpop.f32.mrb[0].mxu0
        %v3452 = vadd.f32 %v2570, %v3451
        %v3453 = vpop.f32.mrb[0].mxu0
        %v3454 = vadd.f32 %v2574, %v3453
        %v3455 = vpop.f32.mrb[0].mxu0
        %v3456 = vadd.f32 %v2570, %v3455
        %v3457 = vpop.f32.mrb[0].mxu0
        %v3458 = vadd.f32 %v2574, %v3457
        %3459 = vmatprep.mubr.bf16.mxu0 %v2374
        %3460 = vmatmul.mubr.bf16.gmra.mrb[0].mxu0 %v2373
        %v3461 = vpop.f32.mrb[0].mxu0
        %v3462 = vadd.f32 %v2570, %v3461
        %v3463 = vpop.f32.mrb[0].mxu0
        %v3464 = vadd.f32 %v2574, %v3463
        %v3465 = vpop.f32.mrb[0].mxu0
        %v3466 = vadd.f32 %v2570, %v3465
        %v3467 = vpop.f32.mrb[0].mxu0
        %v3468 = vadd.f32 %v2574, %v3467
        %3469 = vmatprep.mubr.bf16.mxu0 %v2376
        %3470 = vmatmul.mubr.bf16.gmra.mrb[0].mxu0 %v2375
        %v3471 = vpop.f32.mrb[0].mxu0
        %v3472 = vadd.f32 %v2570, %v3471
        %v3473 = vpop.f32.mrb[0].mxu0
        %v3474 = vadd.f32 %v2574, %v3473
        %v3475 = vpop.f32.mrb[0].mxu0
        %v3476 = vadd.f32 %v2570, %v3475
        %v3477 = vpop.f32.mrb[0].mxu0
        %v3478 = vadd.f32 %v2574, %v3477
        %3479 = vmatprep.mubr.bf16.mxu0 %v2378
        %3480 = vmatmul.mubr.bf16.gmra.mrb[0].mxu0 %v2377
        %v3481 = vpop.f32.mrb[0].mxu0
        %v3482 = vadd.f32 %v2570, %v3481
        %v3483 = vpop.f32.mrb[0].mxu0
        %v3484 = vadd.f32 %v2574, %v3483
        %v3485 = vpop.f32.mrb[0].mxu0
        %v3486 = vadd.f32 %v2570, %v3485
        %v3487 = vpop.f32.mrb[0].mxu0
        %v3488 = vadd.f32 %v2574, %v3487
        %3489 = vmatprep.mubr.bf16.mxu0 %v2380
        %3490 = vmatmul.mubr.bf16.gmra.mrb[0].mxu0 %v2379
        %v3491 = vpop.f32.mrb[0].mxu0
        %v3492 = vadd.f32 %v2570, %v3491
        %v3493 = vpop.f32.mrb[0].mxu0
        %v3494 = vadd.f32 %v2574, %v3493
        %v3495 = vpop.f32.mrb[0].mxu0
        %v3496 = vadd.f32 %v2570, %v3495
        %v3497 = vpop.f32.mrb[0].mxu0
        %v3498 = vadd.f32 %v2574, %v3497
        %3499 = vmatprep.mubr.bf16.mxu0 %v2382
        %3500 = vmatmul.mubr.bf16.gmra.mrb[0].mxu0 %v2381
        %v3501 = vpop.f32.mrb[0].mxu0
        %v3502 = vadd.f32 %v2570, %v3501
        %v3503 = vpop.f32.mrb[0].mxu0
        %v3504 = vadd.f32 %v2574, %v3503
        %v3505 = vpop.f32.mrb[0].mxu0
        %v3506 = vadd.f32 %v2570, %v3505
        %v3507 = vpop.f32.mrb[0].mxu0
        %v3508 = vadd.f32 %v2574, %v3507
        %3509 = vmatprep.mubr.bf16.mxu0 %v2384
        %3510 = vmatmul.mubr.bf16.gmra.mrb[0].mxu0 %v2383
        %v3511 = vpop.f32.mrb[0].mxu0
        %v3512 = vadd.f32 %v2570, %v3511
        %v3513 = vpop.f32.mrb[0].mxu0
        %v3514 = vadd.f32 %v2574, %v3513
        %v3515 = vpop.f32.mrb[0].mxu0
        %v3516 = vadd.f32 %v2570, %v3515
        %v3517 = vpop.f32.mrb[0].mxu0
        %v3518 = vadd.f32 %v2574, %v3517
        %3519 = vmatprep.mubr.bf16.mxu0 %v2386
        %3520 = vmatmul.mubr.bf16.gmra.mrb[0].mxu0 %v2385
        %v3521 = vpop.f32.mrb[0].mxu0
        %v3522 = vadd.f32 %v2570, %v3521
        %v3523 = vpop.f32.mrb[0].mxu0
        %v3524 = vadd.f32 %v2574, %v3523
        %v3525 = vpop.f32.mrb[0].mxu0
        %v3526 = vadd.f32 %v2570, %v3525
        %v3527 = vpop.f32.mrb[0].mxu0
        %v3528 = vadd.f32 %v2574, %v3527
        %3529 = vmatprep.mubr.bf16.mxu0 %v2388
        %3530 = vmatmul.mubr.bf16.gmra.mrb[0].mxu0 %v2387
        %v3531 = vpop.f32.mrb[0].mxu0
        %v3532 = vadd.f32 %v2570, %v3531
        %v3533 = vpop.f32.mrb[0].mxu0
        %v3534 = vadd.f32 %v2574, %v3533
        %v3535 = vpop.f32.mrb[0].mxu0
        %v3536 = vadd.f32 %v2570, %v3535
        %v3537 = vpop.f32.mrb[0].mxu0
        %v3538 = vadd.f32 %v2574, %v3537
        %3539 = vmatprep.mubr.bf16.mxu0 %v2390
        %3540 = vmatmul.mubr.bf16.gmra.mrb[0].mxu0 %v2389
        %v3541 = vpop.f32.mrb[0].mxu0
        %v3542 = vadd.f32 %v2570, %v3541
        %v3543 = vpop.f32.mrb[0].mxu0
        %v3544 = vadd.f32 %v2574, %v3543
        %v3545 = vpop.f32.mrb[0].mxu0
        %v3546 = vadd.f32 %v2570, %v3545
        %v3547 = vpop.f32.mrb[0].mxu0
        %v3548 = vadd.f32 %v2574, %v3547
        %3549 = vmatprep.mubr.bf16.mxu0 %v2392
        %3550 = vmatmul.mubr.bf16.gmra.mrb[0].mxu0 %v2391
        %v3551 = vpop.f32.mrb[0].mxu0
        %v3552 = vadd.f32 %v2570, %v3551
        %v3553 = vpop.f32.mrb[0].mxu0
        %v3554 = vadd.f32 %v2574, %v3553
        %v3555 = vpop.f32.mrb[0].mxu0
        %v3556 = vadd.f32 %v2570, %v3555
        %v3557 = vpop.f32.mrb[0].mxu0
        %v3558 = vadd.f32 %v2574, %v3557
        %3559 = vmatprep.mubr.bf16.mxu0 %v2394
        %3560 = vmatmul.mubr.bf16.gmra.mrb[0].mxu0 %v2393
        %v3561 = vpop.f32.mrb[0].mxu0
        %v3562 = vadd.f32 %v2570, %v3561
        %v3563 = vpop.f32.mrb[0].mxu0
        %v3564 = vadd.f32 %v2574, %v3563
        %v3565 = vpop.f32.mrb[0].mxu0
        %v3566 = vadd.f32 %v2570, %v3565
        %v3567 = vpop.f32.mrb[0].mxu0
        %v3568 = vadd.f32 %v2574, %v3567
        %3569 = vmatprep.mubr.bf16.mxu0 %v2396
        %3570 = vmatmul.mubr.bf16.gmra.mrb[0].mxu0 %v2395
        %v3571 = vpop.f32.mrb[0].mxu0
        %v3572 = vadd.f32 %v2570, %v3571
        %v3573 = vpop.f32.mrb[0].mxu0
        %v3574 = vadd.f32 %v2574, %v3573
        %v3575 = vpop.f32.mrb[0].mxu0
        %v3576 = vadd.f32 %v2570, %v3575
        %v3577 = vpop.f32.mrb[0].mxu0
        %v3578 = vadd.f32 %v2574, %v3577
        %3579 = vmatprep.mubr.bf16.mxu0 %v2398
        %3580 = vmatmul.mubr.bf16.gmra.mrb[0].mxu0 %v2397
        %v3581 = vpop.f32.mrb[0].mxu0
        %v3582 = vadd.f32 %v2570, %v3581
        %v3583 = vpop.f32.mrb[0].mxu0
        %v3584 = vadd.f32 %v2574, %v3583
        %v3585 = vpop.f32.mrb[0].mxu0
        %v3586 = vadd.f32 %v2570, %v3585
        %v3587 = vpop.f32.mrb[0].mxu0
        %v3588 = vadd.f32 %v2574, %v3587
        %3589 = vmatprep.mubr.bf16.mxu0 %v2400
        %3590 = vmatmul.mubr.bf16.gmra.mrb[0].mxu0 %v2399
        %v3591 = vpop.f32.mrb[0].mxu0
        %v3592 = vadd.f32 %v2570, %v3591
        %v3593 = vpop.f32.mrb[0].mxu0
        %v3594 = vadd.f32 %v2574, %v3593
        %v3595 = vpop.f32.mrb[0].mxu0
        %v3596 = vadd.f32 %v2570, %v3595
        %v3597 = vpop.f32.mrb[0].mxu0
        %v3598 = vadd.f32 %v2574, %v3597
        %3599 = vmatprep.mubr.bf16.mxu0 %v2402
        %3600 = vmatmul.mubr.bf16.gmra.mrb[0].mxu0 %v2401
        %v3601 = vpop.f32.mrb[0].mxu0
        %v3602 = vadd.f32 %v2570, %v3601
        %v3603 = vpop.f32.mrb[0].mxu0
        %v3604 = vadd.f32 %v2574, %v3603
        %v3605 = vpop.f32.mrb[0].mxu0
        %v3606 = vadd.f32 %v2570, %v3605
        %v3607 = vpop.f32.mrb[0].mxu0
        %v3608 = vadd.f32 %v2574, %v3607
        %3609 = vdwg.mxu0
        %3610 = vmatprep.subr.bf16.mxu0 %v3100
        %3611 = vmatpush1.bf16.msra.mxu0 %v3099
        %3612 = vmatprep.subr.bf16.mxu0 %v3110
        %3613 = vmatpush1.bf16.msra.mxu0 %v3109
        %3614 = vmatprep.subr.bf16.mxu0 %v3120
        %3615 = vmatpush1.bf16.msra.mxu0 %v3119
        %3616 = vmatprep.subr.bf16.mxu0 %v3130
        %3617 = vmatpush1.bf16.msra.mxu0 %v3129
        %3618 = vmatprep.subr.bf16.mxu0 %v3140
        %3619 = vmatpush1.bf16.msra.mxu0 %v3139
        %3620 = vmatprep.subr.bf16.mxu0 %v3150
        %3621 = vmatpush1.bf16.msra.mxu0 %v3149
        %3622 = vmatprep.subr.bf16.mxu0 %v3160
        %3623 = vmatpush1.bf16.msra.mxu0 %v3159
        %3624 = vmatprep.subr.bf16.mxu0 %v3170
        %3625 = vmatpush1.bf16.msra.mxu0 %v3169
        %3626 = vmatprep.subr.bf16.mxu0 %v3180
        %3627 = vmatpush1.bf16.msra.mxu0 %v3179
        %3628 = vmatprep.subr.bf16.mxu0 %v3190
        %3629 = vmatpush1.bf16.msra.mxu0 %v3189
        %3630 = vmatprep.subr.bf16.mxu0 %v3200
        %3631 = vmatpush1.bf16.msra.mxu0 %v3199
        %3632 = vmatprep.subr.bf16.mxu0 %v3210
        %3633 = vmatpush1.bf16.msra.mxu0 %v3209
        %3634 = vmatprep.subr.bf16.mxu0 %v3220
        %3635 = vmatpush1.bf16.msra.mxu0 %v3219
        %3636 = vmatprep.subr.bf16.mxu0 %v3230
        %3637 = vmatpush1.bf16.msra.mxu0 %v3229
        %3638 = vmatprep.subr.bf16.mxu0 %v3240
        %3639 = vmatpush1.bf16.msra.mxu0 %v3239
        %3640 = vmatprep.subr.bf16.mxu0 %v3250
        %3641 = vmatpush1.bf16.msra.mxu0 %v3249
        %3642 = vmatprep.mubr.bf16.mxu0 %v2372
        %3643 = vmatmul.mubr.bf16.gmra.mrb[0].mxu0 %v2371
        %v3644 = vpop.f32.mrb[0].mxu0
        %v3645 = vadd.f32 %v2578, %v3644
        %v3646 = vpop.f32.mrb[0].mxu0
        %v3647 = vadd.f32 %v2582, %v3646
        %v3648 = vpop.f32.mrb[0].mxu0
        %v3649 = vadd.f32 %v2578, %v3648
        %v3650 = vpop.f32.mrb[0].mxu0
        %v3651 = vadd.f32 %v2582, %v3650
        %3652 = vmatprep.mubr.bf16.mxu0 %v2374
        %3653 = vmatmul.mubr.bf16.gmra.mrb[0].mxu0 %v2373
        %v3654 = vpop.f32.mrb[0].mxu0
        %v3655 = vadd.f32 %v2578, %v3654
        %v3656 = vpop.f32.mrb[0].mxu0
        %v3657 = vadd.f32 %v2582, %v3656
        %v3658 = vpop.f32.mrb[0].mxu0
        %v3659 = vadd.f32 %v2578, %v3658
        %v3660 = vpop.f32.mrb[0].mxu0
        %v3661 = vadd.f32 %v2582, %v3660
        %3662 = vmatprep.mubr.bf16.mxu0 %v2376
        %3663 = vmatmul.mubr.bf16.gmra.mrb[0].mxu0 %v2375
        %v3664 = vpop.f32.mrb[0].mxu0
        %v3665 = vadd.f32 %v2578, %v3664
        %v3666 = vpop.f32.mrb[0].mxu0
        %v3667 = vadd.f32 %v2582, %v3666
        %v3668 = vpop.f32.mrb[0].mxu0
        %v3669 = vadd.f32 %v2578, %v3668
        %v3670 = vpop.f32.mrb[0].mxu0
        %v3671 = vadd.f32 %v2582, %v3670
        %3672 = vmatprep.mubr.bf16.mxu0 %v2378
        %3673 = vmatmul.mubr.bf16.gmra.mrb[0].mxu0 %v2377
        %v3674 = vpop.f32.mrb[0].mxu0
        %v3675 = vadd.f32 %v2578, %v3674
        %v3676 = vpop.f32.mrb[0].mxu0
        %v3677 = vadd.f32 %v2582, %v3676
        %v3678 = vpop.f32.mrb[0].mxu0
        %v3679 = vadd.f32 %v2578, %v3678
        %v3680 = vpop.f32.mrb[0].mxu0
        %v3681 = vadd.f32 %v2582, %v3680
        %3682 = vmatprep.mubr.bf16.mxu0 %v2380
        %3683 = vmatmul.mubr.bf16.gmra.mrb[0].mxu0 %v2379
        %v3684 = vpop.f32.mrb[0].mxu0
        %v3685 = vadd.f32 %v2578, %v3684
        %v3686 = vpop.f32.mrb[0].mxu0
        %v3687 = vadd.f32 %v2582, %v3686
        %v3688 = vpop.f32.mrb[0].mxu0
        %v3689 = vadd.f32 %v2578, %v3688
        %v3690 = vpop.f32.mrb[0].mxu0
        %v3691 = vadd.f32 %v2582, %v3690
        %3692 = vmatprep.mubr.bf16.mxu0 %v2382
        %3693 = vmatmul.mubr.bf16.gmra.mrb[0].mxu0 %v2381
        %v3694 = vpop.f32.mrb[0].mxu0
        %v3695 = vadd.f32 %v2578, %v3694
        %v3696 = vpop.f32.mrb[0].mxu0
        %v3697 = vadd.f32 %v2582, %v3696
        %v3698 = vpop.f32.mrb[0].mxu0
        %v3699 = vadd.f32 %v2578, %v3698
        %v3700 = vpop.f32.mrb[0].mxu0
        %v3701 = vadd.f32 %v2582, %v3700
        %3702 = vmatprep.mubr.bf16.mxu0 %v2384
        %3703 = vmatmul.mubr.bf16.gmra.mrb[0].mxu0 %v2383
        %v3704 = vpop.f32.mrb[0].mxu0
        %v3705 = vadd.f32 %v2578, %v3704
        %v3706 = vpop.f32.mrb[0].mxu0
        %v3707 = vadd.f32 %v2582, %v3706
        %v3708 = vpop.f32.mrb[0].mxu0
        %v3709 = vadd.f32 %v2578, %v3708
        %v3710 = vpop.f32.mrb[0].mxu0
        %v3711 = vadd.f32 %v2582, %v3710
        %3712 = vmatprep.mubr.bf16.mxu0 %v2386
        %3713 = vmatmul.mubr.bf16.gmra.mrb[0].mxu0 %v2385
        %v3714 = vpop.f32.mrb[0].mxu0
        %v3715 = vadd.f32 %v2578, %v3714
        %v3716 = vpop.f32.mrb[0].mxu0
        %v3717 = vadd.f32 %v2582, %v3716
        %v3718 = vpop.f32.mrb[0].mxu0
        %v3719 = vadd.f32 %v2578, %v3718
        %v3720 = vpop.f32.mrb[0].mxu0
        %v3721 = vadd.f32 %v2582, %v3720
        %3722 = vmatprep.mubr.bf16.mxu0 %v2388
        %3723 = vmatmul.mubr.bf16.gmra.mrb[0].mxu0 %v2387
        %v3724 = vpop.f32.mrb[0].mxu0
        %v3725 = vadd.f32 %v2578, %v3724
        %v3726 = vpop.f32.mrb[0].mxu0
        %v3727 = vadd.f32 %v2582, %v3726
        %v3728 = vpop.f32.mrb[0].mxu0
        %v3729 = vadd.f32 %v2578, %v3728
        %v3730 = vpop.f32.mrb[0].mxu0
        %v3731 = vadd.f32 %v2582, %v3730
        %3732 = vmatprep.mubr.bf16.mxu0 %v2390
        %3733 = vmatmul.mubr.bf16.gmra.mrb[0].mxu0 %v2389
        %v3734 = vpop.f32.mrb[0].mxu0
        %v3735 = vadd.f32 %v2578, %v3734
        %v3736 = vpop.f32.mrb[0].mxu0
        %v3737 = vadd.f32 %v2582, %v3736
        %v3738 = vpop.f32.mrb[0].mxu0
        %v3739 = vadd.f32 %v2578, %v3738
        %v3740 = vpop.f32.mrb[0].mxu0
        %v3741 = vadd.f32 %v2582, %v3740
        %3742 = vmatprep.mubr.bf16.mxu0 %v2392
        %3743 = vmatmul.mubr.bf16.gmra.mrb[0].mxu0 %v2391
        %v3744 = vpop.f32.mrb[0].mxu0
        %v3745 = vadd.f32 %v2578, %v3744
        %v3746 = vpop.f32.mrb[0].mxu0
        %v3747 = vadd.f32 %v2582, %v3746
        %v3748 = vpop.f32.mrb[0].mxu0
        %v3749 = vadd.f32 %v2578, %v3748
        %v3750 = vpop.f32.mrb[0].mxu0
        %v3751 = vadd.f32 %v2582, %v3750
        %3752 = vmatprep.mubr.bf16.mxu0 %v2394
        %3753 = vmatmul.mubr.bf16.gmra.mrb[0].mxu0 %v2393
        %v3754 = vpop.f32.mrb[0].mxu0
        %v3755 = vadd.f32 %v2578, %v3754
        %v3756 = vpop.f32.mrb[0].mxu0
        %v3757 = vadd.f32 %v2582, %v3756
        %v3758 = vpop.f32.mrb[0].mxu0
        %v3759 = vadd.f32 %v2578, %v3758
        %v3760 = vpop.f32.mrb[0].mxu0
        %v3761 = vadd.f32 %v2582, %v3760
        %3762 = vmatprep.mubr.bf16.mxu0 %v2396
        %3763 = vmatmul.mubr.bf16.gmra.mrb[0].mxu0 %v2395
        %v3764 = vpop.f32.mrb[0].mxu0
        %v3765 = vadd.f32 %v2578, %v3764
        %v3766 = vpop.f32.mrb[0].mxu0
        %v3767 = vadd.f32 %v2582, %v3766
        %v3768 = vpop.f32.mrb[0].mxu0
        %v3769 = vadd.f32 %v2578, %v3768
        %v3770 = vpop.f32.mrb[0].mxu0
        %v3771 = vadd.f32 %v2582, %v3770
        %3772 = vmatprep.mubr.bf16.mxu0 %v2398
        %3773 = vmatmul.mubr.bf16.gmra.mrb[0].mxu0 %v2397
        %v3774 = vpop.f32.mrb[0].mxu0
        %v3775 = vadd.f32 %v2578, %v3774
        %v3776 = vpop.f32.mrb[0].mxu0
        %v3777 = vadd.f32 %v2582, %v3776
        %v3778 = vpop.f32.mrb[0].mxu0
        %v3779 = vadd.f32 %v2578, %v3778
        %v3780 = vpop.f32.mrb[0].mxu0
        %v3781 = vadd.f32 %v2582, %v3780
        %3782 = vmatprep.mubr.bf16.mxu0 %v2400
        %3783 = vmatmul.mubr.bf16.gmra.mrb[0].mxu0 %v2399
        %v3784 = vpop.f32.mrb[0].mxu0
        %v3785 = vadd.f32 %v2578, %v3784
        %v3786 = vpop.f32.mrb[0].mxu0
        %v3787 = vadd.f32 %v2582, %v3786
        %v3788 = vpop.f32.mrb[0].mxu0
        %v3789 = vadd.f32 %v2578, %v3788
        %v3790 = vpop.f32.mrb[0].mxu0
        %v3791 = vadd.f32 %v2582, %v3790
        %3792 = vmatprep.mubr.bf16.mxu0 %v2402
        %3793 = vmatmul.mubr.bf16.gmra.mrb[0].mxu0 %v2401
        %v3794 = vpop.f32.mrb[0].mxu0
        %v3795 = vadd.f32 %v2578, %v3794
        %v3796 = vpop.f32.mrb[0].mxu0
        %v3797 = vadd.f32 %v2582, %v3796
        %v3798 = vpop.f32.mrb[0].mxu0
        %v3799 = vadd.f32 %v2578, %v3798
        %v3800 = vpop.f32.mrb[0].mxu0
        %v3801 = vadd.f32 %v2582, %v3800
        %3802 = vdwg.mxu0
        %3803 = vmatprep.subr.bf16.mxu0 %v3102
        %3804 = vmatpush1.bf16.msra.mxu0 %v3101
        %3805 = vmatprep.subr.bf16.mxu0 %v3112
        %3806 = vmatpush1.bf16.msra.mxu0 %v3111
        %3807 = vmatprep.subr.bf16.mxu0 %v3122
        %3808 = vmatpush1.bf16.msra.mxu0 %v3121
        %3809 = vmatprep.subr.bf16.mxu0 %v3132
        %3810 = vmatpush1.bf16.msra.mxu0 %v3131
        %3811 = vmatprep.subr.bf16.mxu0 %v3142
        %3812 = vmatpush1.bf16.msra.mxu0 %v3141
        %3813 = vmatprep.subr.bf16.mxu0 %v3152
        %3814 = vmatpush1.bf16.msra.mxu0 %v3151
        %3815 = vmatprep.subr.bf16.mxu0 %v3162
        %3816 = vmatpush1.bf16.msra.mxu0 %v3161
        %3817 = vmatprep.subr.bf16.mxu0 %v3172
        %3818 = vmatpush1.bf16.msra.mxu0 %v3171
        %3819 = vmatprep.subr.bf16.mxu0 %v3182
        %3820 = vmatpush1.bf16.msra.mxu0 %v3181
        %3821 = vmatprep.subr.bf16.mxu0 %v3192
        %3822 = vmatpush1.bf16.msra.mxu0 %v3191
        %3823 = vmatprep.subr.bf16.mxu0 %v3202
        %3824 = vmatpush1.bf16.msra.mxu0 %v3201
        %3825 = vmatprep.subr.bf16.mxu0 %v3212
        %3826 = vmatpush1.bf16.msra.mxu0 %v3211
        %3827 = vmatprep.subr.bf16.mxu0 %v3222
        %3828 = vmatpush1.bf16.msra.mxu0 %v3221
        %3829 = vmatprep.subr.bf16.mxu0 %v3232
        %3830 = vmatpush1.bf16.msra.mxu0 %v3231
        %3831 = vmatprep.subr.bf16.mxu0 %v3242
        %3832 = vmatpush1.bf16.msra.mxu0 %v3241
        %3833 = vmatprep.subr.bf16.mxu0 %v3252
        %3834 = vmatpush1.bf16.msra.mxu0 %v3251
        %3835 = vmatprep.mubr.bf16.mxu0 %v2372
        %3836 = vmatmul.mubr.bf16.gmra.mrb[0].mxu0 %v2371
        %v3837 = vpop.f32.mrb[0].mxu0
        %v3838 = vadd.f32 %v2586, %v3837
        %v3839 = vpop.f32.mrb[0].mxu0
        %v3840 = vadd.f32 %v2590, %v3839
        %v3841 = vpop.f32.mrb[0].mxu0
        %v3842 = vadd.f32 %v2586, %v3841
        %v3843 = vpop.f32.mrb[0].mxu0
        %v3844 = vadd.f32 %v2590, %v3843
        %3845 = vmatprep.mubr.bf16.mxu0 %v2374
        %3846 = vmatmul.mubr.bf16.gmra.mrb[0].mxu0 %v2373
        %v3847 = vpop.f32.mrb[0].mxu0
        %v3848 = vadd.f32 %v2586, %v3847
        %v3849 = vpop.f32.mrb[0].mxu0
        %v3850 = vadd.f32 %v2590, %v3849
        %v3851 = vpop.f32.mrb[0].mxu0
        %v3852 = vadd.f32 %v2586, %v3851
        %v3853 = vpop.f32.mrb[0].mxu0
        %v3854 = vadd.f32 %v2590, %v3853
        %3855 = vmatprep.mubr.bf16.mxu0 %v2376
        %3856 = vmatmul.mubr.bf16.gmra.mrb[0].mxu0 %v2375
        %v3857 = vpop.f32.mrb[0].mxu0
        %v3858 = vadd.f32 %v2586, %v3857
        %v3859 = vpop.f32.mrb[0].mxu0
        %v3860 = vadd.f32 %v2590, %v3859
        %v3861 = vpop.f32.mrb[0].mxu0
        %v3862 = vadd.f32 %v2586, %v3861
        %v3863 = vpop.f32.mrb[0].mxu0
        %v3864 = vadd.f32 %v2590, %v3863
        %3865 = vmatprep.mubr.bf16.mxu0 %v2378
        %3866 = vmatmul.mubr.bf16.gmra.mrb[0].mxu0 %v2377
        %v3867 = vpop.f32.mrb[0].mxu0
        %v3868 = vadd.f32 %v2586, %v3867
        %v3869 = vpop.f32.mrb[0].mxu0
        %v3870 = vadd.f32 %v2590, %v3869
        %v3871 = vpop.f32.mrb[0].mxu0
        %v3872 = vadd.f32 %v2586, %v3871
        %v3873 = vpop.f32.mrb[0].mxu0
        %v3874 = vadd.f32 %v2590, %v3873
        %3875 = vmatprep.mubr.bf16.mxu0 %v2380
        %3876 = vmatmul.mubr.bf16.gmra.mrb[0].mxu0 %v2379
        %v3877 = vpop.f32.mrb[0].mxu0
        %v3878 = vadd.f32 %v2586, %v3877
        %v3879 = vpop.f32.mrb[0].mxu0
        %v3880 = vadd.f32 %v2590, %v3879
        %v3881 = vpop.f32.mrb[0].mxu0
        %v3882 = vadd.f32 %v2586, %v3881
        %v3883 = vpop.f32.mrb[0].mxu0
        %v3884 = vadd.f32 %v2590, %v3883
        %3885 = vmatprep.mubr.bf16.mxu0 %v2382
        %3886 = vmatmul.mubr.bf16.gmra.mrb[0].mxu0 %v2381
        %v3887 = vpop.f32.mrb[0].mxu0
        %v3888 = vadd.f32 %v2586, %v3887
        %v3889 = vpop.f32.mrb[0].mxu0
        %v3890 = vadd.f32 %v2590, %v3889
        %v3891 = vpop.f32.mrb[0].mxu0
        %v3892 = vadd.f32 %v2586, %v3891
        %v3893 = vpop.f32.mrb[0].mxu0
        %v3894 = vadd.f32 %v2590, %v3893
        %3895 = vmatprep.mubr.bf16.mxu0 %v2384
        %3896 = vmatmul.mubr.bf16.gmra.mrb[0].mxu0 %v2383
        %v3897 = vpop.f32.mrb[0].mxu0
        %v3898 = vadd.f32 %v2586, %v3897
        %v3899 = vpop.f32.mrb[0].mxu0
        %v3900 = vadd.f32 %v2590, %v3899
        %v3901 = vpop.f32.mrb[0].mxu0
        %v3902 = vadd.f32 %v2586, %v3901
        %v3903 = vpop.f32.mrb[0].mxu0
        %v3904 = vadd.f32 %v2590, %v3903
        %3905 = vmatprep.mubr.bf16.mxu0 %v2386
        %3906 = vmatmul.mubr.bf16.gmra.mrb[0].mxu0 %v2385
        %v3907 = vpop.f32.mrb[0].mxu0
        %v3908 = vadd.f32 %v2586, %v3907
        %v3909 = vpop.f32.mrb[0].mxu0
        %v3910 = vadd.f32 %v2590, %v3909
        %v3911 = vpop.f32.mrb[0].mxu0
        %v3912 = vadd.f32 %v2586, %v3911
        %v3913 = vpop.f32.mrb[0].mxu0
        %v3914 = vadd.f32 %v2590, %v3913
        %3915 = vmatprep.mubr.bf16.mxu0 %v2388
        %3916 = vmatmul.mubr.bf16.gmra.mrb[0].mxu0 %v2387
        %v3917 = vpop.f32.mrb[0].mxu0
        %v3918 = vadd.f32 %v2586, %v3917
        %v3919 = vpop.f32.mrb[0].mxu0
        %v3920 = vadd.f32 %v2590, %v3919
        %v3921 = vpop.f32.mrb[0].mxu0
        %v3922 = vadd.f32 %v2586, %v3921
        %v3923 = vpop.f32.mrb[0].mxu0
        %v3924 = vadd.f32 %v2590, %v3923
        %3925 = vmatprep.mubr.bf16.mxu0 %v2390
        %3926 = vmatmul.mubr.bf16.gmra.mrb[0].mxu0 %v2389
        %v3927 = vpop.f32.mrb[0].mxu0
        %v3928 = vadd.f32 %v2586, %v3927
        %v3929 = vpop.f32.mrb[0].mxu0
        %v3930 = vadd.f32 %v2590, %v3929
        %v3931 = vpop.f32.mrb[0].mxu0
        %v3932 = vadd.f32 %v2586, %v3931
        %v3933 = vpop.f32.mrb[0].mxu0
        %v3934 = vadd.f32 %v2590, %v3933
        %3935 = vmatprep.mubr.bf16.mxu0 %v2392
        %3936 = vmatmul.mubr.bf16.gmra.mrb[0].mxu0 %v2391
        %v3937 = vpop.f32.mrb[0].mxu0
        %v3938 = vadd.f32 %v2586, %v3937
        %v3939 = vpop.f32.mrb[0].mxu0
        %v3940 = vadd.f32 %v2590, %v3939
        %v3941 = vpop.f32.mrb[0].mxu0
        %v3942 = vadd.f32 %v2586, %v3941
        %v3943 = vpop.f32.mrb[0].mxu0
        %v3944 = vadd.f32 %v2590, %v3943
        %3945 = vmatprep.mubr.bf16.mxu0 %v2394
        %3946 = vmatmul.mubr.bf16.gmra.mrb[0].mxu0 %v2393
        %v3947 = vpop.f32.mrb[0].mxu0
        %v3948 = vadd.f32 %v2586, %v3947
        %v3949 = vpop.f32.mrb[0].mxu0
        %v3950 = vadd.f32 %v2590, %v3949
        %v3951 = vpop.f32.mrb[0].mxu0
        %v3952 = vadd.f32 %v2586, %v3951
        %v3953 = vpop.f32.mrb[0].mxu0
        %v3954 = vadd.f32 %v2590, %v3953
        %3955 = vmatprep.mubr.bf16.mxu0 %v2396
        %3956 = vmatmul.mubr.bf16.gmra.mrb[0].mxu0 %v2395
        %v3957 = vpop.f32.mrb[0].mxu0
        %v3958 = vadd.f32 %v2586, %v3957
        %v3959 = vpop.f32.mrb[0].mxu0
        %v3960 = vadd.f32 %v2590, %v3959
        %v3961 = vpop.f32.mrb[0].mxu0
        %v3962 = vadd.f32 %v2586, %v3961
        %v3963 = vpop.f32.mrb[0].mxu0
        %v3964 = vadd.f32 %v2590, %v3963
        %3965 = vmatprep.mubr.bf16.mxu0 %v2398
        %3966 = vmatmul.mubr.bf16.gmra.mrb[0].mxu0 %v2397
        %v3967 = vpop.f32.mrb[0].mxu0
        %v3968 = vadd.f32 %v2586, %v3967
        %v3969 = vpop.f32.mrb[0].mxu0
        %v3970 = vadd.f32 %v2590, %v3969
        %v3971 = vpop.f32.mrb[0].mxu0
        %v3972 = vadd.f32 %v2586, %v3971
        %v3973 = vpop.f32.mrb[0].mxu0
        %v3974 = vadd.f32 %v2590, %v3973
        %3975 = vmatprep.mubr.bf16.mxu0 %v2400
        %3976 = vmatmul.mubr.bf16.gmra.mrb[0].mxu0 %v2399
        %v3977 = vpop.f32.mrb[0].mxu0
        %v3978 = vadd.f32 %v2586, %v3977
        %v3979 = vpop.f32.mrb[0].mxu0
        %v3980 = vadd.f32 %v2590, %v3979
        %v3981 = vpop.f32.mrb[0].mxu0
        %v3982 = vadd.f32 %v2586, %v3981
        %v3983 = vpop.f32.mrb[0].mxu0
        %v3984 = vadd.f32 %v2590, %v3983
        %3985 = vmatprep.mubr.bf16.mxu0 %v2402
        %3986 = vmatmul.mubr.bf16.gmra.mrb[0].mxu0 %v2401
        %v3987 = vpop.f32.mrb[0].mxu0
        %v3988 = vadd.f32 %v2586, %v3987
        %v3989 = vpop.f32.mrb[0].mxu0
        %v3990 = vadd.f32 %v2590, %v3989
        %v3991 = vpop.f32.mrb[0].mxu0
        %v3992 = vadd.f32 %v2586, %v3991
        %v3993 = vpop.f32.mrb[0].mxu0
        %v3994 = vadd.f32 %v2590, %v3993
        %3995 = vdwg.mxu0
        %3996 = vmatprep.subr.bf16.mxu0 %v3104
        %3997 = vmatpush1.bf16.msra.mxu0 %v3103
        %3998 = vmatprep.subr.bf16.mxu0 %v3114
        %3999 = vmatpush1.bf16.msra.mxu0 %v3113
        %4000 = vmatprep.subr.bf16.mxu0 %v3124
        %4001 = vmatpush1.bf16.msra.mxu0 %v3123
        %4002 = vmatprep.subr.bf16.mxu0 %v3134
        %4003 = vmatpush1.bf16.msra.mxu0 %v3133
        %4004 = vmatprep.subr.bf16.mxu0 %v3144
        %4005 = vmatpush1.bf16.msra.mxu0 %v3143
        %4006 = vmatprep.subr.bf16.mxu0 %v3154
        %4007 = vmatpush1.bf16.msra.mxu0 %v3153
        %4008 = vmatprep.subr.bf16.mxu0 %v3164
        %4009 = vmatpush1.bf16.msra.mxu0 %v3163
        %4010 = vmatprep.subr.bf16.mxu0 %v3174
        %4011 = vmatpush1.bf16.msra.mxu0 %v3173
        %4012 = vmatprep.subr.bf16.mxu0 %v3184
        %4013 = vmatpush1.bf16.msra.mxu0 %v3183
        %4014 = vmatprep.subr.bf16.mxu0 %v3194
        %4015 = vmatpush1.bf16.msra.mxu0 %v3193
        %4016 = vmatprep.subr.bf16.mxu0 %v3204
        %4017 = vmatpush1.bf16.msra.mxu0 %v3203
        %4018 = vmatprep.subr.bf16.mxu0 %v3214
        %4019 = vmatpush1.bf16.msra.mxu0 %v3213
        %4020 = vmatprep.subr.bf16.mxu0 %v3224
        %4021 = vmatpush1.bf16.msra.mxu0 %v3223
        %4022 = vmatprep.subr.bf16.mxu0 %v3234
        %4023 = vmatpush1.bf16.msra.mxu0 %v3233
        %4024 = vmatprep.subr.bf16.mxu0 %v3244
        %4025 = vmatpush1.bf16.msra.mxu0 %v3243
        %4026 = vmatprep.subr.bf16.mxu0 %v3254
        %4027 = vmatpush1.bf16.msra.mxu0 %v3253
        %4028 = vmatprep.mubr.bf16.mxu0 %v2372
        %4029 = vmatmul.mubr.bf16.gmra.mrb[0].mxu0 %v2371
        %v4030 = vpop.f32.mrb[0].mxu0
        %v4031 = vadd.f32 %v2594, %v4030
        %v4032 = vpop.f32.mrb[0].mxu0
        %v4033 = vadd.f32 %v2598, %v4032
        %v4034 = vpop.f32.mrb[0].mxu0
        %v4035 = vadd.f32 %v2594, %v4034
        %v4036 = vpop.f32.mrb[0].mxu0
        %v4037 = vadd.f32 %v2598, %v4036
        %4038 = vmatprep.mubr.bf16.mxu0 %v2374
        %4039 = vmatmul.mubr.bf16.gmra.mrb[0].mxu0 %v2373
        %v4040 = vpop.f32.mrb[0].mxu0
        %v4041 = vadd.f32 %v2594, %v4040
        %v4042 = vpop.f32.mrb[0].mxu0
        %v4043 = vadd.f32 %v2598, %v4042
        %v4044 = vpop.f32.mrb[0].mxu0
        %v4045 = vadd.f32 %v2594, %v4044
        %v4046 = vpop.f32.mrb[0].mxu0
        %v4047 = vadd.f32 %v2598, %v4046
        %4048 = vmatprep.mubr.bf16.mxu0 %v2376
        %4049 = vmatmul.mubr.bf16.gmra.mrb[0].mxu0 %v2375
        %v4050 = vpop.f32.mrb[0].mxu0
        %v4051 = vadd.f32 %v2594, %v4050
        %v4052 = vpop.f32.mrb[0].mxu0
        %v4053 = vadd.f32 %v2598, %v4052
        %v4054 = vpop.f32.mrb[0].mxu0
        %v4055 = vadd.f32 %v2594, %v4054
        %v4056 = vpop.f32.mrb[0].mxu0
        %v4057 = vadd.f32 %v2598, %v4056
        %4058 = vmatprep.mubr.bf16.mxu0 %v2378
        %4059 = vmatmul.mubr.bf16.gmra.mrb[0].mxu0 %v2377
        %v4060 = vpop.f32.mrb[0].mxu0
        %v4061 = vadd.f32 %v2594, %v4060
        %v4062 = vpop.f32.mrb[0].mxu0
        %v4063 = vadd.f32 %v2598, %v4062
        %v4064 = vpop.f32.mrb[0].mxu0
        %v4065 = vadd.f32 %v2594, %v4064
        %v4066 = vpop.f32.mrb[0].mxu0
        %v4067 = vadd.f32 %v2598, %v4066
        %4068 = vmatprep.mubr.bf16.mxu0 %v2380
        %4069 = vmatmul.mubr.bf16.gmra.mrb[0].mxu0 %v2379
        %v4070 = vpop.f32.mrb[0].mxu0
        %v4071 = vadd.f32 %v2594, %v4070
        %v4072 = vpop.f32.mrb[0].mxu0
        %v4073 = vadd.f32 %v2598, %v4072
        %v4074 = vpop.f32.mrb[0].mxu0
        %v4075 = vadd.f32 %v2594, %v4074
        %v4076 = vpop.f32.mrb[0].mxu0
        %v4077 = vadd.f32 %v2598, %v4076
        %4078 = vmatprep.mubr.bf16.mxu0 %v2382
        %4079 = vmatmul.mubr.bf16.gmra.mrb[0].mxu0 %v2381
        %v4080 = vpop.f32.mrb[0].mxu0
        %v4081 = vadd.f32 %v2594, %v4080
        %v4082 = vpop.f32.mrb[0].mxu0
        %v4083 = vadd.f32 %v2598, %v4082
        %v4084 = vpop.f32.mrb[0].mxu0
        %v4085 = vadd.f32 %v2594, %v4084
        %v4086 = vpop.f32.mrb[0].mxu0
        %v4087 = vadd.f32 %v2598, %v4086
        %4088 = vmatprep.mubr.bf16.mxu0 %v2384
        %4089 = vmatmul.mubr.bf16.gmra.mrb[0].mxu0 %v2383
        %v4090 = vpop.f32.mrb[0].mxu0
        %v4091 = vadd.f32 %v2594, %v4090
        %v4092 = vpop.f32.mrb[0].mxu0
        %v4093 = vadd.f32 %v2598, %v4092
        %v4094 = vpop.f32.mrb[0].mxu0
        %v4095 = vadd.f32 %v2594, %v4094
        %v4096 = vpop.f32.mrb[0].mxu0
        %v4097 = vadd.f32 %v2598, %v4096
        %4098 = vmatprep.mubr.bf16.mxu0 %v2386
        %4099 = vmatmul.mubr.bf16.gmra.mrb[0].mxu0 %v2385
        %v4100 = vpop.f32.mrb[0].mxu0
        %v4101 = vadd.f32 %v2594, %v4100
        %v4102 = vpop.f32.mrb[0].mxu0
        %v4103 = vadd.f32 %v2598, %v4102
        %v4104 = vpop.f32.mrb[0].mxu0
        %v4105 = vadd.f32 %v2594, %v4104
        %v4106 = vpop.f32.mrb[0].mxu0
        %v4107 = vadd.f32 %v2598, %v4106
        %4108 = vmatprep.mubr.bf16.mxu0 %v2388
        %4109 = vmatmul.mubr.bf16.gmra.mrb[0].mxu0 %v2387
        %v4110 = vpop.f32.mrb[0].mxu0
        %v4111 = vadd.f32 %v2594, %v4110
        %v4112 = vpop.f32.mrb[0].mxu0
        %v4113 = vadd.f32 %v2598, %v4112
        %v4114 = vpop.f32.mrb[0].mxu0
        %v4115 = vadd.f32 %v2594, %v4114
        %v4116 = vpop.f32.mrb[0].mxu0
        %v4117 = vadd.f32 %v2598, %v4116
        %4118 = vmatprep.mubr.bf16.mxu0 %v2390
        %4119 = vmatmul.mubr.bf16.gmra.mrb[0].mxu0 %v2389
        %v4120 = vpop.f32.mrb[0].mxu0
        %v4121 = vadd.f32 %v2594, %v4120
        %v4122 = vpop.f32.mrb[0].mxu0
        %v4123 = vadd.f32 %v2598, %v4122
        %v4124 = vpop.f32.mrb[0].mxu0
        %v4125 = vadd.f32 %v2594, %v4124
        %v4126 = vpop.f32.mrb[0].mxu0
        %v4127 = vadd.f32 %v2598, %v4126
        %4128 = vmatprep.mubr.bf16.mxu0 %v2392
        %4129 = vmatmul.mubr.bf16.gmra.mrb[0].mxu0 %v2391
        %v4130 = vpop.f32.mrb[0].mxu0
        %v4131 = vadd.f32 %v2594, %v4130
        %v4132 = vpop.f32.mrb[0].mxu0
        %v4133 = vadd.f32 %v2598, %v4132
        %v4134 = vpop.f32.mrb[0].mxu0
        %v4135 = vadd.f32 %v2594, %v4134
        %v4136 = vpop.f32.mrb[0].mxu0
        %v4137 = vadd.f32 %v2598, %v4136
        %4138 = vmatprep.mubr.bf16.mxu0 %v2394
        %4139 = vmatmul.mubr.bf16.gmra.mrb[0].mxu0 %v2393
        %v4140 = vpop.f32.mrb[0].mxu0
        %v4141 = vadd.f32 %v2594, %v4140
        %v4142 = vpop.f32.mrb[0].mxu0
        %v4143 = vadd.f32 %v2598, %v4142
        %v4144 = vpop.f32.mrb[0].mxu0
        %v4145 = vadd.f32 %v2594, %v4144
        %v4146 = vpop.f32.mrb[0].mxu0
        %v4147 = vadd.f32 %v2598, %v4146
        %4148 = vmatprep.mubr.bf16.mxu0 %v2396
        %4149 = vmatmul.mubr.bf16.gmra.mrb[0].mxu0 %v2395
        %v4150 = vpop.f32.mrb[0].mxu0
        %v4151 = vadd.f32 %v2594, %v4150
        %v4152 = vpop.f32.mrb[0].mxu0
        %v4153 = vadd.f32 %v2598, %v4152
        %v4154 = vpop.f32.mrb[0].mxu0
        %v4155 = vadd.f32 %v2594, %v4154
        %v4156 = vpop.f32.mrb[0].mxu0
        %v4157 = vadd.f32 %v2598, %v4156
        %4158 = vmatprep.mubr.bf16.mxu0 %v2398
        %4159 = vmatmul.mubr.bf16.gmra.mrb[0].mxu0 %v2397
        %v4160 = vpop.f32.mrb[0].mxu0
        %v4161 = vadd.f32 %v2594, %v4160
        %v4162 = vpop.f32.mrb[0].mxu0
        %v4163 = vadd.f32 %v2598, %v4162
        %v4164 = vpop.f32.mrb[0].mxu0
        %v4165 = vadd.f32 %v2594, %v4164
        %v4166 = vpop.f32.mrb[0].mxu0
        %v4167 = vadd.f32 %v2598, %v4166
        %4168 = vmatprep.mubr.bf16.mxu0 %v2400
        %4169 = vmatmul.mubr.bf16.gmra.mrb[0].mxu0 %v2399
        %v4170 = vpop.f32.mrb[0].mxu0
        %v4171 = vadd.f32 %v2594, %v4170
        %v4172 = vpop.f32.mrb[0].mxu0
        %v4173 = vadd.f32 %v2598, %v4172
        %v4174 = vpop.f32.mrb[0].mxu0
        %v4175 = vadd.f32 %v2594, %v4174
        %v4176 = vpop.f32.mrb[0].mxu0
        %v4177 = vadd.f32 %v2598, %v4176
        %4178 = vmatprep.mubr.bf16.mxu0 %v2402
        %4179 = vmatmul.mubr.bf16.gmra.mrb[0].mxu0 %v2401
        %v4180 = vpop.f32.mrb[0].mxu0
        %v4181 = vadd.f32 %v2594, %v4180
        %v4182 = vpop.f32.mrb[0].mxu0
        %v4183 = vadd.f32 %v2598, %v4182
        %v4184 = vpop.f32.mrb[0].mxu0
        %v4185 = vadd.f32 %v2594, %v4184
        %v4186 = vpop.f32.mrb[0].mxu0
        %v4187 = vadd.f32 %v2598, %v4186
        %4188 = vdwg.mxu0
        %4189 = vmatprep.subr.bf16.mxu0 %v3106
        %4190 = vmatpush1.bf16.msra.mxu0 %v3105
        %4191 = vmatprep.subr.bf16.mxu0 %v3116
        %4192 = vmatpush1.bf16.msra.mxu0 %v3115
        %4193 = vmatprep.subr.bf16.mxu0 %v3126
        %4194 = vmatpush1.bf16.msra.mxu0 %v3125
        %4195 = vmatprep.subr.bf16.mxu0 %v3136
        %4196 = vmatpush1.bf16.msra.mxu0 %v3135
        %4197 = vmatprep.subr.bf16.mxu0 %v3146
        %4198 = vmatpush1.bf16.msra.mxu0 %v3145
        %4199 = vmatprep.subr.bf16.mxu0 %v3156
        %4200 = vmatpush1.bf16.msra.mxu0 %v3155
        %4201 = vmatprep.subr.bf16.mxu0 %v3166
        %4202 = vmatpush1.bf16.msra.mxu0 %v3165
        %4203 = vmatprep.subr.bf16.mxu0 %v3176
        %4204 = vmatpush1.bf16.msra.mxu0 %v3175
        %4205 = vmatprep.subr.bf16.mxu0 %v3186
        %4206 = vmatpush1.bf16.msra.mxu0 %v3185
        %4207 = vmatprep.subr.bf16.mxu0 %v3196
        %4208 = vmatpush1.bf16.msra.mxu0 %v3195
        %4209 = vmatprep.subr.bf16.mxu0 %v3206
        %4210 = vmatpush1.bf16.msra.mxu0 %v3205
        %4211 = vmatprep.subr.bf16.mxu0 %v3216
        %4212 = vmatpush1.bf16.msra.mxu0 %v3215
        %4213 = vmatprep.subr.bf16.mxu0 %v3226
        %4214 = vmatpush1.bf16.msra.mxu0 %v3225
        %4215 = vmatprep.subr.bf16.mxu0 %v3236
        %4216 = vmatpush1.bf16.msra.mxu0 %v3235
        %4217 = vmatprep.subr.bf16.mxu0 %v3246
        %4218 = vmatpush1.bf16.msra.mxu0 %v3245
        %4219 = vmatprep.subr.bf16.mxu0 %v3256
        %4220 = vmatpush1.bf16.msra.mxu0 %v3255
        %4221 = vmatprep.mubr.bf16.mxu0 %v2372
        %4222 = vmatmul.mubr.bf16.gmra.mrb[0].mxu0 %v2371
        %v4223 = vpop.f32.mrb[0].mxu0
        %v4224 = vadd.f32 %v2602, %v4223
        %v4225 = vpop.f32.mrb[0].mxu0
        %v4226 = vadd.f32 %v2606, %v4225
        %v4227 = vpop.f32.mrb[0].mxu0
        %v4228 = vadd.f32 %v2602, %v4227
        %v4229 = vpop.f32.mrb[0].mxu0
        %v4230 = vadd.f32 %v2606, %v4229
        %4231 = vmatprep.mubr.bf16.mxu0 %v2374
        %4232 = vmatmul.mubr.bf16.gmra.mrb[0].mxu0 %v2373
        %v4233 = vpop.f32.mrb[0].mxu0
        %v4234 = vadd.f32 %v2602, %v4233
        %v4235 = vpop.f32.mrb[0].mxu0
        %v4236 = vadd.f32 %v2606, %v4235
        %v4237 = vpop.f32.mrb[0].mxu0
        %v4238 = vadd.f32 %v2602, %v4237
        %v4239 = vpop.f32.mrb[0].mxu0
        %v4240 = vadd.f32 %v2606, %v4239
        %4241 = vmatprep.mubr.bf16.mxu0 %v2376
        %4242 = vmatmul.mubr.bf16.gmra.mrb[0].mxu0 %v2375
        %v4243 = vpop.f32.mrb[0].mxu0
        %v4244 = vadd.f32 %v2602, %v4243
        %v4245 = vpop.f32.mrb[0].mxu0
        %v4246 = vadd.f32 %v2606, %v4245
        %v4247 = vpop.f32.mrb[0].mxu0
        %v4248 = vadd.f32 %v2602, %v4247
        %v4249 = vpop.f32.mrb[0].mxu0
        %v4250 = vadd.f32 %v2606, %v4249
        %4251 = vmatprep.mubr.bf16.mxu0 %v2378
        %4252 = vmatmul.mubr.bf16.gmra.mrb[0].mxu0 %v2377
        %v4253 = vpop.f32.mrb[0].mxu0
        %v4254 = vadd.f32 %v2602, %v4253
        %v4255 = vpop.f32.mrb[0].mxu0
        %v4256 = vadd.f32 %v2606, %v4255
        %v4257 = vpop.f32.mrb[0].mxu0
        %v4258 = vadd.f32 %v2602, %v4257
        %v4259 = vpop.f32.mrb[0].mxu0
        %v4260 = vadd.f32 %v2606, %v4259
        %4261 = vmatprep.mubr.bf16.mxu0 %v2380
        %4262 = vmatmul.mubr.bf16.gmra.mrb[0].mxu0 %v2379
        %v4263 = vpop.f32.mrb[0].mxu0
        %v4264 = vadd.f32 %v2602, %v4263
        %v4265 = vpop.f32.mrb[0].mxu0
        %v4266 = vadd.f32 %v2606, %v4265
        %v4267 = vpop.f32.mrb[0].mxu0
        %v4268 = vadd.f32 %v2602, %v4267
        %v4269 = vpop.f32.mrb[0].mxu0
        %v4270 = vadd.f32 %v2606, %v4269
        %4271 = vmatprep.mubr.bf16.mxu0 %v2382
        %4272 = vmatmul.mubr.bf16.gmra.mrb[0].mxu0 %v2381
        %v4273 = vpop.f32.mrb[0].mxu0
        %v4274 = vadd.f32 %v2602, %v4273
        %v4275 = vpop.f32.mrb[0].mxu0
        %v4276 = vadd.f32 %v2606, %v4275
        %v4277 = vpop.f32.mrb[0].mxu0
        %v4278 = vadd.f32 %v2602, %v4277
        %v4279 = vpop.f32.mrb[0].mxu0
        %v4280 = vadd.f32 %v2606, %v4279
        %4281 = vmatprep.mubr.bf16.mxu0 %v2384
        %4282 = vmatmul.mubr.bf16.gmra.mrb[0].mxu0 %v2383
        %v4283 = vpop.f32.mrb[0].mxu0
        %v4284 = vadd.f32 %v2602, %v4283
        %v4285 = vpop.f32.mrb[0].mxu0
        %v4286 = vadd.f32 %v2606, %v4285
        %v4287 = vpop.f32.mrb[0].mxu0
        %v4288 = vadd.f32 %v2602, %v4287
        %v4289 = vpop.f32.mrb[0].mxu0
        %v4290 = vadd.f32 %v2606, %v4289
        %4291 = vmatprep.mubr.bf16.mxu0 %v2386
        %4292 = vmatmul.mubr.bf16.gmra.mrb[0].mxu0 %v2385
        %v4293 = vpop.f32.mrb[0].mxu0
        %v4294 = vadd.f32 %v2602, %v4293
        %v4295 = vpop.f32.mrb[0].mxu0
        %v4296 = vadd.f32 %v2606, %v4295
        %v4297 = vpop.f32.mrb[0].mxu0
        %v4298 = vadd.f32 %v2602, %v4297
        %v4299 = vpop.f32.mrb[0].mxu0
        %v4300 = vadd.f32 %v2606, %v4299
        %4301 = vmatprep.mubr.bf16.mxu0 %v2388
        %4302 = vmatmul.mubr.bf16.gmra.mrb[0].mxu0 %v2387
        %v4303 = vpop.f32.mrb[0].mxu0
        %v4304 = vadd.f32 %v2602, %v4303
        %v4305 = vpop.f32.mrb[0].mxu0
        %v4306 = vadd.f32 %v2606, %v4305
        %v4307 = vpop.f32.mrb[0].mxu0
        %v4308 = vadd.f32 %v2602, %v4307
        %v4309 = vpop.f32.mrb[0].mxu0
        %v4310 = vadd.f32 %v2606, %v4309
        %4311 = vmatprep.mubr.bf16.mxu0 %v2390
        %4312 = vmatmul.mubr.bf16.gmra.mrb[0].mxu0 %v2389
        %v4313 = vpop.f32.mrb[0].mxu0
        %v4314 = vadd.f32 %v2602, %v4313
        %v4315 = vpop.f32.mrb[0].mxu0
        %v4316 = vadd.f32 %v2606, %v4315
        %v4317 = vpop.f32.mrb[0].mxu0
        %v4318 = vadd.f32 %v2602, %v4317
        %v4319 = vpop.f32.mrb[0].mxu0
        %v4320 = vadd.f32 %v2606, %v4319
        %4321 = vmatprep.mubr.bf16.mxu0 %v2392
        %4322 = vmatmul.mubr.bf16.gmra.mrb[0].mxu0 %v2391
        %v4323 = vpop.f32.mrb[0].mxu0
        %v4324 = vadd.f32 %v2602, %v4323
        %v4325 = vpop.f32.mrb[0].mxu0
        %v4326 = vadd.f32 %v2606, %v4325
        %v4327 = vpop.f32.mrb[0].mxu0
        %v4328 = vadd.f32 %v2602, %v4327
        %v4329 = vpop.f32.mrb[0].mxu0
        %v4330 = vadd.f32 %v2606, %v4329
        %4331 = vmatprep.mubr.bf16.mxu0 %v2394
        %4332 = vmatmul.mubr.bf16.gmra.mrb[0].mxu0 %v2393
        %v4333 = vpop.f32.mrb[0].mxu0
        %v4334 = vadd.f32 %v2602, %v4333
        %v4335 = vpop.f32.mrb[0].mxu0
        %v4336 = vadd.f32 %v2606, %v4335
        %v4337 = vpop.f32.mrb[0].mxu0
        %v4338 = vadd.f32 %v2602, %v4337
        %v4339 = vpop.f32.mrb[0].mxu0
        %v4340 = vadd.f32 %v2606, %v4339
        %4341 = vmatprep.mubr.bf16.mxu0 %v2396
        %4342 = vmatmul.mubr.bf16.gmra.mrb[0].mxu0 %v2395
        %v4343 = vpop.f32.mrb[0].mxu0
        %v4344 = vadd.f32 %v2602, %v4343
        %v4345 = vpop.f32.mrb[0].mxu0
        %v4346 = vadd.f32 %v2606, %v4345
        %v4347 = vpop.f32.mrb[0].mxu0
        %v4348 = vadd.f32 %v2602, %v4347
        %v4349 = vpop.f32.mrb[0].mxu0
        %v4350 = vadd.f32 %v2606, %v4349
        %4351 = vmatprep.mubr.bf16.mxu0 %v2398
        %4352 = vmatmul.mubr.bf16.gmra.mrb[0].mxu0 %v2397
        %v4353 = vpop.f32.mrb[0].mxu0
        %v4354 = vadd.f32 %v2602, %v4353
        %v4355 = vpop.f32.mrb[0].mxu0
        %v4356 = vadd.f32 %v2606, %v4355
        %v4357 = vpop.f32.mrb[0].mxu0
        %v4358 = vadd.f32 %v2602, %v4357
        %v4359 = vpop.f32.mrb[0].mxu0
        %v4360 = vadd.f32 %v2606, %v4359
        %4361 = vmatprep.mubr.bf16.mxu0 %v2400
        %4362 = vmatmul.mubr.bf16.gmra.mrb[0].mxu0 %v2399
        %v4363 = vpop.f32.mrb[0].mxu0
        %v4364 = vadd.f32 %v2602, %v4363
        %v4365 = vpop.f32.mrb[0].mxu0
        %v4366 = vadd.f32 %v2606, %v4365
        %v4367 = vpop.f32.mrb[0].mxu0
        %v4368 = vadd.f32 %v2602, %v4367
        %v4369 = vpop.f32.mrb[0].mxu0
        %v4370 = vadd.f32 %v2606, %v4369
        %4371 = vmatprep.mubr.bf16.mxu0 %v2402
        %4372 = vmatmul.mubr.bf16.gmra.mrb[0].mxu0 %v2401
        %v4373 = vpop.f32.mrb[0].mxu0
        %v4374 = vadd.f32 %v2602, %v4373
        %v4375 = vpop.f32.mrb[0].mxu0
        %v4376 = vadd.f32 %v2606, %v4375
        %v4377 = vpop.f32.mrb[0].mxu0
        %v4378 = vadd.f32 %v2602, %v4377
        %v4379 = vpop.f32.mrb[0].mxu0
        %v4380 = vadd.f32 %v2606, %v4379
        %4381 = vdwg.mxu0
        %v4382 = vxor.u32 %v3452, 2147483648
        %v4383 = vxor.u32 %v3454, 2147483648
        %v4384 = vxor.u32 %v3645, 2147483648
        %v4385 = vxor.u32 %v3647, 2147483648
        %v4386 = vxor.u32 %v3838, 2147483648
        %v4387 = vxor.u32 %v3456, 2147483648
        %v4388 = vxor.u32 %v3458, 2147483648
        %v4389 = vxor.u32 %v3649, 2147483648
        %v4390 = vxor.u32 %v3651, 2147483648
        %v4391 = vxor.u32 %v3842, 2147483648
        %v4392 = vxor.u32 %v3462, 2147483648
        %v4393 = vxor.u32 %v3464, 2147483648
        %v4394 = vxor.u32 %v3655, 2147483648
        %v4395 = vxor.u32 %v3657, 2147483648
        %v4396 = vxor.u32 %v3848, 2147483648
        %v4397 = vxor.u32 %v3466, 2147483648
        %v4398 = vxor.u32 %v3468, 2147483648
        %v4399 = vxor.u32 %v3659, 2147483648
        %v4400 = vxor.u32 %v3661, 2147483648
        %v4401 = vxor.u32 %v3852, 2147483648
        %v4402 = vxor.u32 %v3472, 2147483648
        %v4403 = vxor.u32 %v3474, 2147483648
        %v4404 = vxor.u32 %v3665, 2147483648
        %v4405 = vxor.u32 %v3667, 2147483648
        %v4406 = vxor.u32 %v3858, 2147483648
        %v4407 = vxor.u32 %v3476, 2147483648
        %v4408 = vxor.u32 %v3478, 2147483648
        %v4409 = vxor.u32 %v3669, 2147483648
        %v4410 = vxor.u32 %v3671, 2147483648
        %v4411 = vxor.u32 %v3862, 2147483648
        %v4412 = vxor.u32 %v3482, 2147483648
        %v4413 = vxor.u32 %v3484, 2147483648
        %v4414 = vxor.u32 %v3675, 2147483648
        %v4415 = vxor.u32 %v3677, 2147483648
        %v4416 = vxor.u32 %v3868, 2147483648
        %v4417 = vxor.u32 %v3486, 2147483648
        %v4418 = vxor.u32 %v3488, 2147483648
        %v4419 = vxor.u32 %v3679, 2147483648
        %v4420 = vxor.u32 %v3681, 2147483648
        %v4421 = vxor.u32 %v3872, 2147483648
        %v4422 = vxor.u32 %v3492, 2147483648
        %v4423 = vxor.u32 %v3494, 2147483648
        %v4424 = vxor.u32 %v3685, 2147483648
        %v4425 = vxor.u32 %v3687, 2147483648
        %v4426 = vxor.u32 %v3878, 2147483648
        %v4427 = vxor.u32 %v3496, 2147483648
        %v4428 = vxor.u32 %v3498, 2147483648
        %v4429 = vxor.u32 %v3689, 2147483648
        %v4430 = vxor.u32 %v3691, 2147483648
        %v4431 = vxor.u32 %v3882, 2147483648
        %v4432 = vxor.u32 %v3502, 2147483648
        %v4433 = vxor.u32 %v3504, 2147483648
        %v4434 = vxor.u32 %v3695, 2147483648
        %v4435 = vxor.u32 %v3697, 2147483648
        %v4436 = vxor.u32 %v3888, 2147483648
        %v4437 = vxor.u32 %v3506, 2147483648
        %v4438 = vxor.u32 %v3508, 2147483648
        %v4439 = vxor.u32 %v3699, 2147483648
        %v4440 = vxor.u32 %v3701, 2147483648
        %v4441 = vxor.u32 %v3892, 2147483648
        %v4442 = vxor.u32 %v3512, 2147483648
        %v4443 = vxor.u32 %v3514, 2147483648
        %v4444 = vxor.u32 %v3705, 2147483648
        %v4445 = vxor.u32 %v3707, 2147483648
        %v4446 = vxor.u32 %v3898, 2147483648
        %v4447 = vxor.u32 %v3516, 2147483648
        %v4448 = vxor.u32 %v3518, 2147483648
        %v4449 = vxor.u32 %v3709, 2147483648
        %v4450 = vxor.u32 %v3711, 2147483648
        %v4451 = vxor.u32 %v3902, 2147483648
        %v4452 = vxor.u32 %v3522, 2147483648
        %v4453 = vxor.u32 %v3524, 2147483648
        %v4454 = vxor.u32 %v3715, 2147483648
        %v4455 = vxor.u32 %v3717, 2147483648
        %v4456 = vxor.u32 %v3908, 2147483648
        %v4457 = vxor.u32 %v3526, 2147483648
        %v4458 = vxor.u32 %v3528, 2147483648
        %v4459 = vxor.u32 %v3719, 2147483648
        %v4460 = vxor.u32 %v3721, 2147483648
        %v4461 = vxor.u32 %v3912, 2147483648
        %v4462 = vxor.u32 %v3532, 2147483648
        %v4463 = vxor.u32 %v3534, 2147483648
        %v4464 = vxor.u32 %v3725, 2147483648
        %v4465 = vxor.u32 %v3727, 2147483648
        %v4466 = vxor.u32 %v3918, 2147483648
        %v4467 = vxor.u32 %v3536, 2147483648
        %v4468 = vxor.u32 %v3538, 2147483648
        %v4469 = vxor.u32 %v3729, 2147483648
        %v4470 = vxor.u32 %v3731, 2147483648
        %v4471 = vxor.u32 %v3922, 2147483648
        %v4472 = vxor.u32 %v3542, 2147483648
        %v4473 = vxor.u32 %v3544, 2147483648
        %v4474 = vxor.u32 %v3735, 2147483648
        %v4475 = vxor.u32 %v3737, 2147483648
        %v4476 = vxor.u32 %v3928, 2147483648
        %v4477 = vxor.u32 %v3546, 2147483648
        %v4478 = vxor.u32 %v3548, 2147483648
        %v4479 = vxor.u32 %v3739, 2147483648
        %v4480 = vxor.u32 %v3741, 2147483648
        %v4481 = vxor.u32 %v3932, 2147483648
        %v4482 = vxor.u32 %v3552, 2147483648
        %v4483 = vxor.u32 %v3554, 2147483648
        %v4484 = vxor.u32 %v3745, 2147483648
        %v4485 = vxor.u32 %v3747, 2147483648
        %v4486 = vxor.u32 %v3938, 2147483648
        %v4487 = vxor.u32 %v3556, 2147483648
        %v4488 = vxor.u32 %v3558, 2147483648
        %v4489 = vxor.u32 %v3749, 2147483648
        %v4490 = vxor.u32 %v3751, 2147483648
        %v4491 = vxor.u32 %v3942, 2147483648
        %v4492 = vxor.u32 %v3562, 2147483648
        %v4493 = vxor.u32 %v3564, 2147483648
        %v4494 = vxor.u32 %v3755, 2147483648
        %v4495 = vxor.u32 %v3757, 2147483648
        %v4496 = vxor.u32 %v3948, 2147483648
        %v4497 = vxor.u32 %v3566, 2147483648
        %v4498 = vxor.u32 %v3568, 2147483648
        %v4499 = vxor.u32 %v3759, 2147483648
        %v4500 = vxor.u32 %v3761, 2147483648
        %v4501 = vxor.u32 %v3952, 2147483648
        %v4502 = vxor.u32 %v3572, 2147483648
        %v4503 = vxor.u32 %v3574, 2147483648
        %v4504 = vxor.u32 %v3765, 2147483648
        %v4505 = vxor.u32 %v3767, 2147483648
        %v4506 = vxor.u32 %v3958, 2147483648
        %v4507 = vxor.u32 %v3576, 2147483648
        %v4508 = vxor.u32 %v3578, 2147483648
        %v4509 = vxor.u32 %v3769, 2147483648
        %v4510 = vxor.u32 %v3771, 2147483648
        %v4511 = vxor.u32 %v3962, 2147483648
        %v4512 = vxor.u32 %v3582, 2147483648
        %v4513 = vxor.u32 %v3584, 2147483648
        %v4514 = vxor.u32 %v3775, 2147483648
        %v4515 = vxor.u32 %v3777, 2147483648
        %v4516 = vxor.u32 %v3968, 2147483648
        %v4517 = vxor.u32 %v3586, 2147483648
        %v4518 = vxor.u32 %v3588, 2147483648
        %v4519 = vxor.u32 %v3779, 2147483648
        %v4520 = vxor.u32 %v3781, 2147483648
        %v4521 = vxor.u32 %v3972, 2147483648
        %v4522 = vxor.u32 %v3592, 2147483648
        %v4523 = vxor.u32 %v3594, 2147483648
        %v4524 = vxor.u32 %v3785, 2147483648
        %v4525 = vxor.u32 %v3787, 2147483648
        %v4526 = vxor.u32 %v3978, 2147483648
        %v4527 = vxor.u32 %v3596, 2147483648
        %v4528 = vxor.u32 %v3598, 2147483648
        %v4529 = vxor.u32 %v3789, 2147483648
        %v4530 = vxor.u32 %v3791, 2147483648
        %v4531 = vxor.u32 %v3982, 2147483648
        %v4532 = vxor.u32 %v3602, 2147483648
        %v4533 = vxor.u32 %v3604, 2147483648
        %v4534 = vxor.u32 %v3795, 2147483648
        %v4535 = vxor.u32 %v3797, 2147483648
        %v4536 = vxor.u32 %v3988, 2147483648
        %v4537 = vxor.u32 %v3606, 2147483648
        %v4538 = vxor.u32 %v3608, 2147483648
        %v4539 = vxor.u32 %v3799, 2147483648
        %v4540 = vxor.u32 %v3801, 2147483648
        %v4541 = vxor.u32 %v3992, 2147483648
        %v4542 = vmul.f32 %v4382, 1.442695
        %v4543 = vpow.pop %v4542
        %v4544 = vmul.f32 %v4383, 1.442695
        %v4545 = vpow.pop %v4544
        %v4546 = vmul.f32 %v4384, 1.442695
        %v4547 = vpow.pop %v4546
        %v4548 = vmul.f32 %v4385, 1.442695
        %v4549 = vpow.pop %v4548
        %v4550 = vmul.f32 %v4386, 1.442695
        %v4551 = vpow.pop %v4550
        %v4552 = vmul.f32 %v4387, 1.442695
        %v4553 = vpow.pop %v4552
        %v4554 = vmul.f32 %v4388, 1.442695
        %v4555 = vpow.pop %v4554
        %v4556 = vmul.f32 %v4389, 1.442695
        %v4557 = vpow.pop %v4556
        %v4558 = vmul.f32 %v4390, 1.442695
        %v4559 = vpow.pop %v4558
        %v4560 = vmul.f32 %v4391, 1.442695
        %v4561 = vpow.pop %v4560
        %v4562 = vmul.f32 %v4392, 1.442695
        %v4563 = vpow.pop %v4562
        %v4564 = vmul.f32 %v4393, 1.442695
        %v4565 = vpow.pop %v4564
        %v4566 = vmul.f32 %v4394, 1.442695
        %v4567 = vpow.pop %v4566
        %v4568 = vmul.f32 %v4395, 1.442695
        %v4569 = vpow.pop %v4568
        %v4570 = vmul.f32 %v4396, 1.442695
        %v4571 = vpow.pop %v4570
        %v4572 = vmul.f32 %v4397, 1.442695
        %v4573 = vpow.pop %v4572
        %v4574 = vmul.f32 %v4398, 1.442695
        %v4575 = vpow.pop %v4574
        %v4576 = vmul.f32 %v4399, 1.442695
        %v4577 = vpow.pop %v4576
        %v4578 = vmul.f32 %v4400, 1.442695
        %v4579 = vpow.pop %v4578
        %v4580 = vmul.f32 %v4401, 1.442695
        %v4581 = vpow.pop %v4580
        %v4582 = vmul.f32 %v4402, 1.442695
        %v4583 = vpow.pop %v4582
        %v4584 = vmul.f32 %v4403, 1.442695
        %v4585 = vpow.pop %v4584
        %v4586 = vmul.f32 %v4404, 1.442695
        %v4587 = vpow.pop %v4586
        %v4588 = vmul.f32 %v4405, 1.442695
        %v4589 = vpow.pop %v4588
        %v4590 = vmul.f32 %v4406, 1.442695
        %v4591 = vpow.pop %v4590
        %v4592 = vmul.f32 %v4407, 1.442695
        %v4593 = vpow.pop %v4592
        %v4594 = vmul.f32 %v4408, 1.442695
        %v4595 = vpow.pop %v4594
        %v4596 = vmul.f32 %v4409, 1.442695
        %v4597 = vpow.pop %v4596
        %v4598 = vmul.f32 %v4410, 1.442695
        %v4599 = vpow.pop %v4598
        %v4600 = vmul.f32 %v4411, 1.442695
        %v4601 = vpow.pop %v4600
        %v4602 = vmul.f32 %v4412, 1.442695
        %v4603 = vpow.pop %v4602
        %v4604 = vmul.f32 %v4413, 1.442695
        %v4605 = vpow.pop %v4604
        %v4606 = vmul.f32 %v4414, 1.442695
        %v4607 = vpow.pop %v4606
        %v4608 = vmul.f32 %v4415, 1.442695
        %v4609 = vpow.pop %v4608
        %v4610 = vmul.f32 %v4416, 1.442695
        %v4611 = vpow.pop %v4610
        %v4612 = vmul.f32 %v4417, 1.442695
        %v4613 = vpow.pop %v4612
        %v4614 = vmul.f32 %v4418, 1.442695
        %v4615 = vpow.pop %v4614
        %v4616 = vmul.f32 %v4419, 1.442695
        %v4617 = vpow.pop %v4616
        %v4618 = vmul.f32 %v4420, 1.442695
        %v4619 = vpow.pop %v4618
        %v4620 = vmul.f32 %v4421, 1.442695
        %v4621 = vpow.pop %v4620
        %v4622 = vmul.f32 %v4422, 1.442695
        %v4623 = vpow.pop %v4622
        %v4624 = vmul.f32 %v4423, 1.442695
        %v4625 = vpow.pop %v4624
        %v4626 = vmul.f32 %v4424, 1.442695
        %v4627 = vpow.pop %v4626
        %v4628 = vmul.f32 %v4425, 1.442695
        %v4629 = vpow.pop %v4628
        %v4630 = vmul.f32 %v4426, 1.442695
        %v4631 = vpow.pop %v4630
        %v4632 = vmul.f32 %v4427, 1.442695
        %v4633 = vpow.pop %v4632
        %v4634 = vmul.f32 %v4428, 1.442695
        %v4635 = vpow.pop %v4634
        %v4636 = vmul.f32 %v4429, 1.442695
        %v4637 = vpow.pop %v4636
        %v4638 = vmul.f32 %v4430, 1.442695
        %v4639 = vpow.pop %v4638
        %v4640 = vmul.f32 %v4431, 1.442695
        %v4641 = vpow.pop %v4640
        %v4642 = vmul.f32 %v4432, 1.442695
        %v4643 = vpow.pop %v4642
        %v4644 = vmul.f32 %v4433, 1.442695
        %v4645 = vpow.pop %v4644
        %v4646 = vmul.f32 %v4434, 1.442695
        %v4647 = vpow.pop %v4646
        %v4648 = vmul.f32 %v4435, 1.442695
        %v4649 = vpow.pop %v4648
        %v4650 = vmul.f32 %v4436, 1.442695
        %v4651 = vpow.pop %v4650
        %v4652 = vmul.f32 %v4437, 1.442695
        %v4653 = vpow.pop %v4652
        %v4654 = vmul.f32 %v4438, 1.442695
        %v4655 = vpow.pop %v4654
        %v4656 = vmul.f32 %v4439, 1.442695
        %v4657 = vpow.pop %v4656
        %v4658 = vmul.f32 %v4440, 1.442695
        %v4659 = vpow.pop %v4658
        %v4660 = vmul.f32 %v4441, 1.442695
        %v4661 = vpow.pop %v4660
        %v4662 = vmul.f32 %v4442, 1.442695
        %v4663 = vpow.pop %v4662
        %v4664 = vmul.f32 %v4443, 1.442695
        %v4665 = vpow.pop %v4664
        %v4666 = vmul.f32 %v4444, 1.442695
        %v4667 = vpow.pop %v4666
        %v4668 = vmul.f32 %v4445, 1.442695
        %v4669 = vpow.pop %v4668
        %v4670 = vmul.f32 %v4446, 1.442695
        %v4671 = vpow.pop %v4670
        %v4672 = vmul.f32 %v4447, 1.442695
        %v4673 = vpow.pop %v4672
        %v4674 = vmul.f32 %v4448, 1.442695
        %v4675 = vpow.pop %v4674
        %v4676 = vmul.f32 %v4449, 1.442695
        %v4677 = vpow.pop %v4676
        %v4678 = vmul.f32 %v4450, 1.442695
        %v4679 = vpow.pop %v4678
        %v4680 = vmul.f32 %v4451, 1.442695
        %v4681 = vpow.pop %v4680
        %v4682 = vmul.f32 %v4452, 1.442695
        %v4683 = vpow.pop %v4682
        %v4684 = vmul.f32 %v4453, 1.442695
        %v4685 = vpow.pop %v4684
        %v4686 = vmul.f32 %v4454, 1.442695
        %v4687 = vpow.pop %v4686
        %v4688 = vmul.f32 %v4455, 1.442695
        %v4689 = vpow.pop %v4688
        %v4690 = vmul.f32 %v4456, 1.442695
        %v4691 = vpow.pop %v4690
        %v4692 = vmul.f32 %v4457, 1.442695
        %v4693 = vpow.pop %v4692
        %v4694 = vmul.f32 %v4458, 1.442695
        %v4695 = vpow.pop %v4694
        %v4696 = vmul.f32 %v4459, 1.442695
        %v4697 = vpow.pop %v4696
        %v4698 = vmul.f32 %v4460, 1.442695
        %v4699 = vpow.pop %v4698
        %v4700 = vmul.f32 %v4461, 1.442695
        %v4701 = vpow.pop %v4700
        %v4702 = vmul.f32 %v4462, 1.442695
        %v4703 = vpow.pop %v4702
        %v4704 = vmul.f32 %v4463, 1.442695
        %v4705 = vpow.pop %v4704
        %v4706 = vmul.f32 %v4464, 1.442695
        %v4707 = vpow.pop %v4706
        %v4708 = vmul.f32 %v4465, 1.442695
        %v4709 = vpow.pop %v4708
        %v4710 = vmul.f32 %v4466, 1.442695
        %v4711 = vpow.pop %v4710
        %v4712 = vmul.f32 %v4467, 1.442695
        %v4713 = vpow.pop %v4712
        %v4714 = vmul.f32 %v4468, 1.442695
        %v4715 = vpow.pop %v4714
        %v4716 = vmul.f32 %v4469, 1.442695
        %v4717 = vpow.pop %v4716
        %v4718 = vmul.f32 %v4470, 1.442695
        %v4719 = vpow.pop %v4718
        %v4720 = vmul.f32 %v4471, 1.442695
        %v4721 = vpow.pop %v4720
        %v4722 = vmul.f32 %v4472, 1.442695
        %v4723 = vpow.pop %v4722
        %v4724 = vmul.f32 %v4473, 1.442695
        %v4725 = vpow.pop %v4724
        %v4726 = vmul.f32 %v4474, 1.442695
        %v4727 = vpow.pop %v4726
        %v4728 = vmul.f32 %v4475, 1.442695
        %v4729 = vpow.pop %v4728
        %v4730 = vmul.f32 %v4476, 1.442695
        %v4731 = vpow.pop %v4730
        %v4732 = vmul.f32 %v4477, 1.442695
        %v4733 = vpow.pop %v4732
        %v4734 = vmul.f32 %v4478, 1.442695
        %v4735 = vpow.pop %v4734
        %v4736 = vmul.f32 %v4479, 1.442695
        %v4737 = vpow.pop %v4736
        %v4738 = vmul.f32 %v4480, 1.442695
        %v4739 = vpow.pop %v4738
        %v4740 = vmul.f32 %v4481, 1.442695
        %v4741 = vpow.pop %v4740
        %v4742 = vmul.f32 %v4482, 1.442695
        %v4743 = vpow.pop %v4742
        %v4744 = vmul.f32 %v4483, 1.442695
        %v4745 = vpow.pop %v4744
        %v4746 = vmul.f32 %v4484, 1.442695
        %v4747 = vpow.pop %v4746
        %v4748 = vmul.f32 %v4485, 1.442695
        %v4749 = vpow.pop %v4748
        %v4750 = vmul.f32 %v4486, 1.442695
        %v4751 = vpow.pop %v4750
        %v4752 = vmul.f32 %v4487, 1.442695
        %v4753 = vpow.pop %v4752
        %v4754 = vmul.f32 %v4488, 1.442695
        %v4755 = vpow.pop %v4754
        %v4756 = vmul.f32 %v4489, 1.442695
        %v4757 = vpow.pop %v4756
        %v4758 = vmul.f32 %v4490, 1.442695
        %v4759 = vpow.pop %v4758
        %v4760 = vmul.f32 %v4491, 1.442695
        %v4761 = vpow.pop %v4760
        %v4762 = vmul.f32 %v4492, 1.442695
        %v4763 = vpow.pop %v4762
        %v4764 = vmul.f32 %v4493, 1.442695
        %v4765 = vpow.pop %v4764
        %v4766 = vmul.f32 %v4494, 1.442695
        %v4767 = vpow.pop %v4766
        %v4768 = vmul.f32 %v4495, 1.442695
        %v4769 = vpow.pop %v4768
        %v4770 = vmul.f32 %v4496, 1.442695
        %v4771 = vpow.pop %v4770
        %v4772 = vmul.f32 %v4497, 1.442695
        %v4773 = vpow.pop %v4772
        %v4774 = vmul.f32 %v4498, 1.442695
        %v4775 = vpow.pop %v4774
        %v4776 = vmul.f32 %v4499, 1.442695
        %v4777 = vpow.pop %v4776
        %v4778 = vmul.f32 %v4500, 1.442695
        %v4779 = vpow.pop %v4778
        %v4780 = vmul.f32 %v4501, 1.442695
        %v4781 = vpow.pop %v4780
        %v4782 = vmul.f32 %v4502, 1.442695
        %v4783 = vpow.pop %v4782
        %v4784 = vmul.f32 %v4503, 1.442695
        %v4785 = vpow.pop %v4784
        %v4786 = vmul.f32 %v4504, 1.442695
        %v4787 = vpow.pop %v4786
        %v4788 = vmul.f32 %v4505, 1.442695
        %v4789 = vpow.pop %v4788
        %v4790 = vmul.f32 %v4506, 1.442695
        %v4791 = vpow.pop %v4790
        %v4792 = vmul.f32 %v4507, 1.442695
        %v4793 = vpow.pop %v4792
        %v4794 = vmul.f32 %v4508, 1.442695
        %v4795 = vpow.pop %v4794
        %v4796 = vmul.f32 %v4509, 1.442695
        %v4797 = vpow.pop %v4796
        %v4798 = vmul.f32 %v4510, 1.442695
        %v4799 = vpow.pop %v4798
        %v4800 = vmul.f32 %v4511, 1.442695
        %v4801 = vpow.pop %v4800
        %v4802 = vmul.f32 %v4512, 1.442695
        %v4803 = vpow.pop %v4802
        %v4804 = vmul.f32 %v4513, 1.442695
        %v4805 = vpow.pop %v4804
        %v4806 = vmul.f32 %v4514, 1.442695
        %v4807 = vpow.pop %v4806
        %v4808 = vmul.f32 %v4515, 1.442695
        %v4809 = vpow.pop %v4808
        %v4810 = vmul.f32 %v4516, 1.442695
        %v4811 = vpow.pop %v4810
        %v4812 = vmul.f32 %v4517, 1.442695
        %v4813 = vpow.pop %v4812
        %v4814 = vmul.f32 %v4518, 1.442695
        %v4815 = vpow.pop %v4814
        %v4816 = vmul.f32 %v4519, 1.442695
        %v4817 = vpow.pop %v4816
        %v4818 = vmul.f32 %v4520, 1.442695
        %v4819 = vpow.pop %v4818
        %v4820 = vmul.f32 %v4521, 1.442695
        %v4821 = vpow.pop %v4820
        %v4822 = vmul.f32 %v4522, 1.442695
        %v4823 = vpow.pop %v4822
        %v4824 = vmul.f32 %v4523, 1.442695
        %v4825 = vpow.pop %v4824
        %v4826 = vmul.f32 %v4524, 1.442695
        %v4827 = vpow.pop %v4826
        %v4828 = vmul.f32 %v4525, 1.442695
        %v4829 = vpow.pop %v4828
        %v4830 = vmul.f32 %v4526, 1.442695
        %v4831 = vpow.pop %v4830
        %v4832 = vmul.f32 %v4527, 1.442695
        %v4833 = vpow.pop %v4832
        %v4834 = vmul.f32 %v4528, 1.442695
        %v4835 = vpow.pop %v4834
        %v4836 = vmul.f32 %v4529, 1.442695
        %v4837 = vpow.pop %v4836
        %v4838 = vmul.f32 %v4530, 1.442695
        %v4839 = vpow.pop %v4838
        %v4840 = vmul.f32 %v4531, 1.442695
        %v4841 = vpow.pop %v4840
        %v4842 = vmul.f32 %v4532, 1.442695
        %v4843 = vpow.pop %v4842
        %v4844 = vmul.f32 %v4533, 1.442695
        %v4845 = vpow.pop %v4844
        %v4846 = vmul.f32 %v4534, 1.442695
        %v4847 = vpow.pop %v4846
        %v4848 = vmul.f32 %v4535, 1.442695
        %v4849 = vpow.pop %v4848
        %v4850 = vmul.f32 %v4536, 1.442695
        %v4851 = vpow.pop %v4850
        %v4852 = vmul.f32 %v4537, 1.442695
        %v4853 = vpow.pop %v4852
        %v4854 = vmul.f32 %v4538, 1.442695
        %v4855 = vpow.pop %v4854
        %v4856 = vmul.f32 %v4539, 1.442695
        %v4857 = vpow.pop %v4856
        %v4858 = vmul.f32 %v4540, 1.442695
        %v4859 = vpow.pop %v4858
        %v4860 = vmul.f32 %v4541, 1.442695
        %v4861 = vpow.pop %v4860
        %v4862 = vadd.f32 %v4543, 1.0
        %v4863 = vadd.f32 %v4545, 1.0
        %v4864 = vadd.f32 %v4547, 1.0
        %v4865 = vadd.f32 %v4549, 1.0
        %v4866 = vadd.f32 %v4551, 1.0
        %v4867 = vadd.f32 %v4553, 1.0
        %v4868 = vadd.f32 %v4555, 1.0
        %v4869 = vadd.f32 %v4557, 1.0
        %v4870 = vadd.f32 %v4559, 1.0
        %v4871 = vadd.f32 %v4561, 1.0
        %v4872 = vadd.f32 %v4563, 1.0
        %v4873 = vadd.f32 %v4565, 1.0
        %v4874 = vadd.f32 %v4567, 1.0
        %v4875 = vadd.f32 %v4569, 1.0
        %v4876 = vadd.f32 %v4571, 1.0
        %v4877 = vadd.f32 %v4573, 1.0
        %v4878 = vadd.f32 %v4575, 1.0
        %v4879 = vadd.f32 %v4577, 1.0
        %v4880 = vadd.f32 %v4579, 1.0
        %v4881 = vadd.f32 %v4581, 1.0
        %v4882 = vadd.f32 %v4583, 1.0
        %v4883 = vadd.f32 %v4585, 1.0
        %v4884 = vadd.f32 %v4587, 1.0
        %v4885 = vadd.f32 %v4589, 1.0
        %v4886 = vadd.f32 %v4591, 1.0
        %v4887 = vadd.f32 %v4593, 1.0
        %v4888 = vadd.f32 %v4595, 1.0
        %v4889 = vadd.f32 %v4597, 1.0
        %v4890 = vadd.f32 %v4599, 1.0
        %v4891 = vadd.f32 %v4601, 1.0
        %v4892 = vadd.f32 %v4603, 1.0
        %v4893 = vadd.f32 %v4605, 1.0
        %v4894 = vadd.f32 %v4607, 1.0
        %v4895 = vadd.f32 %v4609, 1.0
        %v4896 = vadd.f32 %v4611, 1.0
        %v4897 = vadd.f32 %v4613, 1.0
        %v4898 = vadd.f32 %v4615, 1.0
        %v4899 = vadd.f32 %v4617, 1.0
        %v4900 = vadd.f32 %v4619, 1.0
        %v4901 = vadd.f32 %v4621, 1.0
        %v4902 = vadd.f32 %v4623, 1.0
        %v4903 = vadd.f32 %v4625, 1.0
        %v4904 = vadd.f32 %v4627, 1.0
        %v4905 = vadd.f32 %v4629, 1.0
        %v4906 = vadd.f32 %v4631, 1.0
        %v4907 = vadd.f32 %v4633, 1.0
        %v4908 = vadd.f32 %v4635, 1.0
        %v4909 = vadd.f32 %v4637, 1.0
        %v4910 = vadd.f32 %v4639, 1.0
        %v4911 = vadd.f32 %v4641, 1.0
        %v4912 = vadd.f32 %v4643, 1.0
        %v4913 = vadd.f32 %v4645, 1.0
        %v4914 = vadd.f32 %v4647, 1.0
        %v4915 = vadd.f32 %v4649, 1.0
        %v4916 = vadd.f32 %v4651, 1.0
        %v4917 = vadd.f32 %v4653, 1.0
        %v4918 = vadd.f32 %v4655, 1.0
        %v4919 = vadd.f32 %v4657, 1.0
        %v4920 = vadd.f32 %v4659, 1.0
        %v4921 = vadd.f32 %v4661, 1.0
        %v4922 = vadd.f32 %v4663, 1.0
        %v4923 = vadd.f32 %v4665, 1.0
        %v4924 = vadd.f32 %v4667, 1.0
        %v4925 = vadd.f32 %v4669, 1.0
        %v4926 = vadd.f32 %v4671, 1.0
        %v4927 = vadd.f32 %v4673, 1.0
        %v4928 = vadd.f32 %v4675, 1.0
        %v4929 = vadd.f32 %v4677, 1.0
        %v4930 = vadd.f32 %v4679, 1.0
        %v4931 = vadd.f32 %v4681, 1.0
        %v4932 = vadd.f32 %v4683, 1.0
        %v4933 = vadd.f32 %v4685, 1.0
        %v4934 = vadd.f32 %v4687, 1.0
        %v4935 = vadd.f32 %v4689, 1.0
        %v4936 = vadd.f32 %v4691, 1.0
        %v4937 = vadd.f32 %v4693, 1.0
        %v4938 = vadd.f32 %v4695, 1.0
        %v4939 = vadd.f32 %v4697, 1.0
        %v4940 = vadd.f32 %v4699, 1.0
        %v4941 = vadd.f32 %v4701, 1.0
        %v4942 = vadd.f32 %v4703, 1.0
        %v4943 = vadd.f32 %v4705, 1.0
        %v4944 = vadd.f32 %v4707, 1.0
        %v4945 = vadd.f32 %v4709, 1.0
        %v4946 = vadd.f32 %v4711, 1.0
        %v4947 = vadd.f32 %v4713, 1.0
        %v4948 = vadd.f32 %v4715, 1.0
        %v4949 = vadd.f32 %v4717, 1.0
        %v4950 = vadd.f32 %v4719, 1.0
        %v4951 = vadd.f32 %v4721, 1.0
        %v4952 = vadd.f32 %v4723, 1.0
        %v4953 = vadd.f32 %v4725, 1.0
        %v4954 = vadd.f32 %v4727, 1.0
        %v4955 = vadd.f32 %v4729, 1.0
        %v4956 = vadd.f32 %v4731, 1.0
        %v4957 = vadd.f32 %v4733, 1.0
        %v4958 = vadd.f32 %v4735, 1.0
        %v4959 = vadd.f32 %v4737, 1.0
        %v4960 = vadd.f32 %v4739, 1.0
        %v4961 = vadd.f32 %v4741, 1.0
        %v4962 = vadd.f32 %v4743, 1.0
        %v4963 = vadd.f32 %v4745, 1.0
        %v4964 = vadd.f32 %v4747, 1.0
        %v4965 = vadd.f32 %v4749, 1.0
        %v4966 = vadd.f32 %v4751, 1.0
        %v4967 = vadd.f32 %v4753, 1.0
        %v4968 = vadd.f32 %v4755, 1.0
        %v4969 = vadd.f32 %v4757, 1.0
        %v4970 = vadd.f32 %v4759, 1.0
        %v4971 = vadd.f32 %v4761, 1.0
        %v4972 = vadd.f32 %v4763, 1.0
        %v4973 = vadd.f32 %v4765, 1.0
        %v4974 = vadd.f32 %v4767, 1.0
        %v4975 = vadd.f32 %v4769, 1.0
        %v4976 = vadd.f32 %v4771, 1.0
        %v4977 = vadd.f32 %v4773, 1.0
        %v4978 = vadd.f32 %v4775, 1.0
        %v4979 = vadd.f32 %v4777, 1.0
        %v4980 = vadd.f32 %v4779, 1.0
        %v4981 = vadd.f32 %v4781, 1.0
        %v4982 = vadd.f32 %v4783, 1.0
        %v4983 = vadd.f32 %v4785, 1.0
        %v4984 = vadd.f32 %v4787, 1.0
        %v4985 = vadd.f32 %v4789, 1.0
        %v4986 = vadd.f32 %v4791, 1.0
        %v4987 = vadd.f32 %v4793, 1.0
        %v4988 = vadd.f32 %v4795, 1.0
        %v4989 = vadd.f32 %v4797, 1.0
        %v4990 = vadd.f32 %v4799, 1.0
        %v4991 = vadd.f32 %v4801, 1.0
        %v4992 = vadd.f32 %v4803, 1.0
        %v4993 = vadd.f32 %v4805, 1.0
        %v4994 = vadd.f32 %v4807, 1.0
        %v4995 = vadd.f32 %v4809, 1.0
        %v4996 = vadd.f32 %v4811, 1.0
        %v4997 = vadd.f32 %v4813, 1.0
        %v4998 = vadd.f32 %v4815, 1.0
        %v4999 = vadd.f32 %v4817, 1.0
        %v5000 = vadd.f32 %v4819, 1.0
        %v5001 = vadd.f32 %v4821, 1.0
        %v5002 = vadd.f32 %v4823, 1.0
        %v5003 = vadd.f32 %v4825, 1.0
        %v5004 = vadd.f32 %v4827, 1.0
        %v5005 = vadd.f32 %v4829, 1.0
        %v5006 = vadd.f32 %v4831, 1.0
        %v5007 = vadd.f32 %v4833, 1.0
        %v5008 = vadd.f32 %v4835, 1.0
        %v5009 = vadd.f32 %v4837, 1.0
        %v5010 = vadd.f32 %v4839, 1.0
        %v5011 = vadd.f32 %v4841, 1.0
        %v5012 = vadd.f32 %v4843, 1.0
        %v5013 = vadd.f32 %v4845, 1.0
        %v5014 = vadd.f32 %v4847, 1.0
        %v5015 = vadd.f32 %v4849, 1.0
        %v5016 = vadd.f32 %v4851, 1.0
        %v5017 = vadd.f32 %v4853, 1.0
        %v5018 = vadd.f32 %v4855, 1.0
        %v5019 = vadd.f32 %v4857, 1.0
        %v5020 = vadd.f32 %v4859, 1.0
        %v5021 = vadd.f32 %v4861, 1.0
        %v5022 = vrcp.pop %v4862
        %v5023 = vmul.f32 1.0, %v5022
        %v5024 = vrcp.pop %v4863
        %v5025 = vmul.f32 1.0, %v5024
        %v5026 = vrcp.pop %v4864
        %v5027 = vmul.f32 1.0, %v5026
        %v5028 = vrcp.pop %v4865
        %v5029 = vmul.f32 1.0, %v5028
        %v5030 = vrcp.pop %v4866
        %v5031 = vmul.f32 1.0, %v5030
        %v5032 = vrcp.pop %v4867
        %v5033 = vmul.f32 1.0, %v5032
        %v5034 = vrcp.pop %v4868
        %v5035 = vmul.f32 1.0, %v5034
        %v5036 = vrcp.pop %v4869
        %v5037 = vmul.f32 1.0, %v5036
        %v5038 = vrcp.pop %v4870
        %v5039 = vmul.f32 1.0, %v5038
        %v5040 = vrcp.pop %v4871
        %v5041 = vmul.f32 1.0, %v5040
        %v5042 = vrcp.pop %v4872
        %v5043 = vmul.f32 1.0, %v5042
        %v5044 = vrcp.pop %v4873
        %v5045 = vmul.f32 1.0, %v5044
        %v5046 = vrcp.pop %v4874
        %v5047 = vmul.f32 1.0, %v5046
        %v5048 = vrcp.pop %v4875
        %v5049 = vmul.f32 1.0, %v5048
        %v5050 = vrcp.pop %v4876
        %v5051 = vmul.f32 1.0, %v5050
        %v5052 = vrcp.pop %v4877
        %v5053 = vmul.f32 1.0, %v5052
        %v5054 = vrcp.pop %v4878
        %v5055 = vmul.f32 1.0, %v5054
        %v5056 = vrcp.pop %v4879
        %v5057 = vmul.f32 1.0, %v5056
        %v5058 = vrcp.pop %v4880
        %v5059 = vmul.f32 1.0, %v5058
        %v5060 = vrcp.pop %v4881
        %v5061 = vmul.f32 1.0, %v5060
        %v5062 = vrcp.pop %v4882
        %v5063 = vmul.f32 1.0, %v5062
        %v5064 = vrcp.pop %v4883
        %v5065 = vmul.f32 1.0, %v5064
        %v5066 = vrcp.pop %v4884
        %v5067 = vmul.f32 1.0, %v5066
        %v5068 = vrcp.pop %v4885
        %v5069 = vmul.f32 1.0, %v5068
        %v5070 = vrcp.pop %v4886
        %v5071 = vmul.f32 1.0, %v5070
        %v5072 = vrcp.pop %v4887
        %v5073 = vmul.f32 1.0, %v5072
        %v5074 = vrcp.pop %v4888
        %v5075 = vmul.f32 1.0, %v5074
        %v5076 = vrcp.pop %v4889
        %v5077 = vmul.f32 1.0, %v5076
        %v5078 = vrcp.pop %v4890
        %v5079 = vmul.f32 1.0, %v5078
        %v5080 = vrcp.pop %v4891
        %v5081 = vmul.f32 1.0, %v5080
        %v5082 = vrcp.pop %v4892
        %v5083 = vmul.f32 1.0, %v5082
        %v5084 = vrcp.pop %v4893
        %v5085 = vmul.f32 1.0, %v5084
        %v5086 = vrcp.pop %v4894
        %v5087 = vmul.f32 1.0, %v5086
        %v5088 = vrcp.pop %v4895
        %v5089 = vmul.f32 1.0, %v5088
        %v5090 = vrcp.pop %v4896
        %v5091 = vmul.f32 1.0, %v5090
        %v5092 = vrcp.pop %v4897
        %v5093 = vmul.f32 1.0, %v5092
        %v5094 = vrcp.pop %v4898
        %v5095 = vmul.f32 1.0, %v5094
        %v5096 = vrcp.pop %v4899
        %v5097 = vmul.f32 1.0, %v5096
        %v5098 = vrcp.pop %v4900
        %v5099 = vmul.f32 1.0, %v5098
        %v5100 = vrcp.pop %v4901
        %v5101 = vmul.f32 1.0, %v5100
        %v5102 = vrcp.pop %v4902
        %v5103 = vmul.f32 1.0, %v5102
        %v5104 = vrcp.pop %v4903
        %v5105 = vmul.f32 1.0, %v5104
        %v5106 = vrcp.pop %v4904
        %v5107 = vmul.f32 1.0, %v5106
        %v5108 = vrcp.pop %v4905
        %v5109 = vmul.f32 1.0, %v5108
        %v5110 = vrcp.pop %v4906
        %v5111 = vmul.f32 1.0, %v5110
        %v5112 = vrcp.pop %v4907
        %v5113 = vmul.f32 1.0, %v5112
        %v5114 = vrcp.pop %v4908
        %v5115 = vmul.f32 1.0, %v5114
        %v5116 = vrcp.pop %v4909
        %v5117 = vmul.f32 1.0, %v5116
        %v5118 = vrcp.pop %v4910
        %v5119 = vmul.f32 1.0, %v5118
        %v5120 = vrcp.pop %v4911
        %v5121 = vmul.f32 1.0, %v5120
        %v5122 = vrcp.pop %v4912
        %v5123 = vmul.f32 1.0, %v5122
        %v5124 = vrcp.pop %v4913
        %v5125 = vmul.f32 1.0, %v5124
        %v5126 = vrcp.pop %v4914
        %v5127 = vmul.f32 1.0, %v5126
        %v5128 = vrcp.pop %v4915
        %v5129 = vmul.f32 1.0, %v5128
        %v5130 = vrcp.pop %v4916
        %v5131 = vmul.f32 1.0, %v5130
        %v5132 = vrcp.pop %v4917
        %v5133 = vmul.f32 1.0, %v5132
        %v5134 = vrcp.pop %v4918
        %v5135 = vmul.f32 1.0, %v5134
        %v5136 = vrcp.pop %v4919
        %v5137 = vmul.f32 1.0, %v5136
        %v5138 = vrcp.pop %v4920
        %v5139 = vmul.f32 1.0, %v5138
        %v5140 = vrcp.pop %v4921
        %v5141 = vmul.f32 1.0, %v5140
        %v5142 = vrcp.pop %v4922
        %v5143 = vmul.f32 1.0, %v5142
        %v5144 = vrcp.pop %v4923
        %v5145 = vmul.f32 1.0, %v5144
        %v5146 = vrcp.pop %v4924
        %v5147 = vmul.f32 1.0, %v5146
        %v5148 = vrcp.pop %v4925
        %v5149 = vmul.f32 1.0, %v5148
        %v5150 = vrcp.pop %v4926
        %v5151 = vmul.f32 1.0, %v5150
        %v5152 = vrcp.pop %v4927
        %v5153 = vmul.f32 1.0, %v5152
        %v5154 = vrcp.pop %v4928
        %v5155 = vmul.f32 1.0, %v5154
        %v5156 = vrcp.pop %v4929
        %v5157 = vmul.f32 1.0, %v5156
        %v5158 = vrcp.pop %v4930
        %v5159 = vmul.f32 1.0, %v5158
        %v5160 = vrcp.pop %v4931
        %v5161 = vmul.f32 1.0, %v5160
        %v5162 = vrcp.pop %v4932
        %v5163 = vmul.f32 1.0, %v5162
        %v5164 = vrcp.pop %v4933
        %v5165 = vmul.f32 1.0, %v5164
        %v5166 = vrcp.pop %v4934
        %v5167 = vmul.f32 1.0, %v5166
        %v5168 = vrcp.pop %v4935
        %v5169 = vmul.f32 1.0, %v5168
        %v5170 = vrcp.pop %v4936
        %v5171 = vmul.f32 1.0, %v5170
        %v5172 = vrcp.pop %v4937
        %v5173 = vmul.f32 1.0, %v5172
        %v5174 = vrcp.pop %v4938
        %v5175 = vmul.f32 1.0, %v5174
        %v5176 = vrcp.pop %v4939
        %v5177 = vmul.f32 1.0, %v5176
        %v5178 = vrcp.pop %v4940
        %v5179 = vmul.f32 1.0, %v5178
        %v5180 = vrcp.pop %v4941
        %v5181 = vmul.f32 1.0, %v5180
        %v5182 = vrcp.pop %v4942
        %v5183 = vmul.f32 1.0, %v5182
        %v5184 = vrcp.pop %v4943
        %v5185 = vmul.f32 1.0, %v5184
        %v5186 = vrcp.pop %v4944
        %v5187 = vmul.f32 1.0, %v5186
        %v5188 = vrcp.pop %v4945
        %v5189 = vmul.f32 1.0, %v5188
        %v5190 = vrcp.pop %v4946
        %v5191 = vmul.f32 1.0, %v5190
        %v5192 = vrcp.pop %v4947
        %v5193 = vmul.f32 1.0, %v5192
        %v5194 = vrcp.pop %v4948
        %v5195 = vmul.f32 1.0, %v5194
        %v5196 = vrcp.pop %v4949
        %v5197 = vmul.f32 1.0, %v5196
        %v5198 = vrcp.pop %v4950
        %v5199 = vmul.f32 1.0, %v5198
        %v5200 = vrcp.pop %v4951
        %v5201 = vmul.f32 1.0, %v5200
        %v5202 = vrcp.pop %v4952
        %v5203 = vmul.f32 1.0, %v5202
        %v5204 = vrcp.pop %v4953
        %v5205 = vmul.f32 1.0, %v5204
        %v5206 = vrcp.pop %v4954
        %v5207 = vmul.f32 1.0, %v5206
        %v5208 = vrcp.pop %v4955
        %v5209 = vmul.f32 1.0, %v5208
        %v5210 = vrcp.pop %v4956
        %v5211 = vmul.f32 1.0, %v5210
        %v5212 = vrcp.pop %v4957
        %v5213 = vmul.f32 1.0, %v5212
        %v5214 = vrcp.pop %v4958
        %v5215 = vmul.f32 1.0, %v5214
        %v5216 = vrcp.pop %v4959
        %v5217 = vmul.f32 1.0, %v5216
        %v5218 = vrcp.pop %v4960
        %v5219 = vmul.f32 1.0, %v5218
        %v5220 = vrcp.pop %v4961
        %v5221 = vmul.f32 1.0, %v5220
        %v5222 = vrcp.pop %v4962
        %v5223 = vmul.f32 1.0, %v5222
        %v5224 = vrcp.pop %v4963
        %v5225 = vmul.f32 1.0, %v5224
        %v5226 = vrcp.pop %v4964
        %v5227 = vmul.f32 1.0, %v5226
        %v5228 = vrcp.pop %v4965
        %v5229 = vmul.f32 1.0, %v5228
        %v5230 = vrcp.pop %v4966
        %v5231 = vmul.f32 1.0, %v5230
        %v5232 = vrcp.pop %v4967
        %v5233 = vmul.f32 1.0, %v5232
        %v5234 = vrcp.pop %v4968
        %v5235 = vmul.f32 1.0, %v5234
        %v5236 = vrcp.pop %v4969
        %v5237 = vmul.f32 1.0, %v5236
        %v5238 = vrcp.pop %v4970
        %v5239 = vmul.f32 1.0, %v5238
        %v5240 = vrcp.pop %v4971
        %v5241 = vmul.f32 1.0, %v5240
        %v5242 = vrcp.pop %v4972
        %v5243 = vmul.f32 1.0, %v5242
        %v5244 = vrcp.pop %v4973
        %v5245 = vmul.f32 1.0, %v5244
        %v5246 = vrcp.pop %v4974
        %v5247 = vmul.f32 1.0, %v5246
        %v5248 = vrcp.pop %v4975
        %v5249 = vmul.f32 1.0, %v5248
        %v5250 = vrcp.pop %v4976
        %v5251 = vmul.f32 1.0, %v5250
        %v5252 = vrcp.pop %v4977
        %v5253 = vmul.f32 1.0, %v5252
        %v5254 = vrcp.pop %v4978
        %v5255 = vmul.f32 1.0, %v5254
        %v5256 = vrcp.pop %v4979
        %v5257 = vmul.f32 1.0, %v5256
        %v5258 = vrcp.pop %v4980
        %v5259 = vmul.f32 1.0, %v5258
        %v5260 = vrcp.pop %v4981
        %v5261 = vmul.f32 1.0, %v5260
        %v5262 = vrcp.pop %v4982
        %v5263 = vmul.f32 1.0, %v5262
        %v5264 = vrcp.pop %v4983
        %v5265 = vmul.f32 1.0, %v5264
        %v5266 = vrcp.pop %v4984
        %v5267 = vmul.f32 1.0, %v5266
        %v5268 = vrcp.pop %v4985
        %v5269 = vmul.f32 1.0, %v5268
        %v5270 = vrcp.pop %v4986
        %v5271 = vmul.f32 1.0, %v5270
        %v5272 = vrcp.pop %v4987
        %v5273 = vmul.f32 1.0, %v5272
        %v5274 = vrcp.pop %v4988
        %v5275 = vmul.f32 1.0, %v5274
        %v5276 = vrcp.pop %v4989
        %v5277 = vmul.f32 1.0, %v5276
        %v5278 = vrcp.pop %v4990
        %v5279 = vmul.f32 1.0, %v5278
        %v5280 = vrcp.pop %v4991
        %v5281 = vmul.f32 1.0, %v5280
        %v5282 = vrcp.pop %v4992
        %v5283 = vmul.f32 1.0, %v5282
        %v5284 = vrcp.pop %v4993
        %v5285 = vmul.f32 1.0, %v5284
        %v5286 = vrcp.pop %v4994
        %v5287 = vmul.f32 1.0, %v5286
        %v5288 = vrcp.pop %v4995
        %v5289 = vmul.f32 1.0, %v5288
        %v5290 = vrcp.pop %v4996
        %v5291 = vmul.f32 1.0, %v5290
        %v5292 = vrcp.pop %v4997
        %v5293 = vmul.f32 1.0, %v5292
        %v5294 = vrcp.pop %v4998
        %v5295 = vmul.f32 1.0, %v5294
        %v5296 = vrcp.pop %v4999
        %v5297 = vmul.f32 1.0, %v5296
        %v5298 = vrcp.pop %v5000
        %v5299 = vmul.f32 1.0, %v5298
        %v5300 = vrcp.pop %v5001
        %v5301 = vmul.f32 1.0, %v5300
        %v5302 = vrcp.pop %v5002
        %v5303 = vmul.f32 1.0, %v5302
        %v5304 = vrcp.pop %v5003
        %v5305 = vmul.f32 1.0, %v5304
        %v5306 = vrcp.pop %v5004
        %v5307 = vmul.f32 1.0, %v5306
        %v5308 = vrcp.pop %v5005
        %v5309 = vmul.f32 1.0, %v5308
        %v5310 = vrcp.pop %v5006
        %v5311 = vmul.f32 1.0, %v5310
        %v5312 = vrcp.pop %v5007
        %v5313 = vmul.f32 1.0, %v5312
        %v5314 = vrcp.pop %v5008
        %v5315 = vmul.f32 1.0, %v5314
        %v5316 = vrcp.pop %v5009
        %v5317 = vmul.f32 1.0, %v5316
        %v5318 = vrcp.pop %v5010
        %v5319 = vmul.f32 1.0, %v5318
        %v5320 = vrcp.pop %v5011
        %v5321 = vmul.f32 1.0, %v5320
        %v5322 = vrcp.pop %v5012
        %v5323 = vmul.f32 1.0, %v5322
        %v5324 = vrcp.pop %v5013
        %v5325 = vmul.f32 1.0, %v5324
        %v5326 = vrcp.pop %v5014
        %v5327 = vmul.f32 1.0, %v5326
        %v5328 = vrcp.pop %v5015
        %v5329 = vmul.f32 1.0, %v5328
        %v5330 = vrcp.pop %v5016
        %v5331 = vmul.f32 1.0, %v5330
        %v5332 = vrcp.pop %v5017
        %v5333 = vmul.f32 1.0, %v5332
        %v5334 = vrcp.pop %v5018
        %v5335 = vmul.f32 1.0, %v5334
        %v5336 = vrcp.pop %v5019
        %v5337 = vmul.f32 1.0, %v5336
        %v5338 = vrcp.pop %v5020
        %v5339 = vmul.f32 1.0, %v5338
        %v5340 = vrcp.pop %v5021
        %v5341 = vmul.f32 1.0, %v5340
        %v5342 = vmul.f32 %v3452, %v5023
        %v5343 = vmul.f32 %v3454, %v5025
        %v5344 = vmul.f32 %v3645, %v5027
        %v5345 = vmul.f32 %v3647, %v5029
        %v5346 = vmul.f32 %v3838, %v5031
        %v5347 = vmul.f32 %v3456, %v5033
        %v5348 = vmul.f32 %v3458, %v5035
        %v5349 = vmul.f32 %v3649, %v5037
        %v5350 = vmul.f32 %v3651, %v5039
        %v5351 = vmul.f32 %v3842, %v5041
        %v5352 = vmul.f32 %v3462, %v5043
        %v5353 = vmul.f32 %v3464, %v5045
        %v5354 = vmul.f32 %v3655, %v5047
        %v5355 = vmul.f32 %v3657, %v5049
        %v5356 = vmul.f32 %v3848, %v5051
        %v5357 = vmul.f32 %v3466, %v5053
        %v5358 = vmul.f32 %v3468, %v5055
        %v5359 = vmul.f32 %v3659, %v5057
        %v5360 = vmul.f32 %v3661, %v5059
        %v5361 = vmul.f32 %v3852, %v5061
        %v5362 = vmul.f32 %v3472, %v5063
        %v5363 = vmul.f32 %v3474, %v5065
        %v5364 = vmul.f32 %v3665, %v5067
        %v5365 = vmul.f32 %v3667, %v5069
        %v5366 = vmul.f32 %v3858, %v5071
        %v5367 = vmul.f32 %v3476, %v5073
        %v5368 = vmul.f32 %v3478, %v5075
        %v5369 = vmul.f32 %v3669, %v5077
        %v5370 = vmul.f32 %v3671, %v5079
        %v5371 = vmul.f32 %v3862, %v5081
        %v5372 = vmul.f32 %v3482, %v5083
        %v5373 = vmul.f32 %v3484, %v5085
        %v5374 = vmul.f32 %v3675, %v5087
        %v5375 = vmul.f32 %v3677, %v5089
        %v5376 = vmul.f32 %v3868, %v5091
        %v5377 = vmul.f32 %v3486, %v5093
        %v5378 = vmul.f32 %v3488, %v5095
        %v5379 = vmul.f32 %v3679, %v5097
        %v5380 = vmul.f32 %v3681, %v5099
        %v5381 = vmul.f32 %v3872, %v5101
        %v5382 = vmul.f32 %v3492, %v5103
        %v5383 = vmul.f32 %v3494, %v5105
        %v5384 = vmul.f32 %v3685, %v5107
        %v5385 = vmul.f32 %v3687, %v5109
        %v5386 = vmul.f32 %v3878, %v5111
        %v5387 = vmul.f32 %v3496, %v5113
        %v5388 = vmul.f32 %v3498, %v5115
        %v5389 = vmul.f32 %v3689, %v5117
        %v5390 = vmul.f32 %v3691, %v5119
        %v5391 = vmul.f32 %v3882, %v5121
        %v5392 = vmul.f32 %v3502, %v5123
        %v5393 = vmul.f32 %v3504, %v5125
        %v5394 = vmul.f32 %v3695, %v5127
        %v5395 = vmul.f32 %v3697, %v5129
        %v5396 = vmul.f32 %v3888, %v5131
        %v5397 = vmul.f32 %v3506, %v5133
        %v5398 = vmul.f32 %v3508, %v5135
        %v5399 = vmul.f32 %v3699, %v5137
        %v5400 = vmul.f32 %v3701, %v5139
        %v5401 = vmul.f32 %v3892, %v5141
        %v5402 = vmul.f32 %v3512, %v5143
        %v5403 = vmul.f32 %v3514, %v5145
        %v5404 = vmul.f32 %v3705, %v5147
        %v5405 = vmul.f32 %v3707, %v5149
        %v5406 = vmul.f32 %v3898, %v5151
        %v5407 = vmul.f32 %v3516, %v5153
        %v5408 = vmul.f32 %v3518, %v5155
        %v5409 = vmul.f32 %v3709, %v5157
        %v5410 = vmul.f32 %v3711, %v5159
        %v5411 = vmul.f32 %v3902, %v5161
        %v5412 = vmul.f32 %v3522, %v5163
        %v5413 = vmul.f32 %v3524, %v5165
        %v5414 = vmul.f32 %v3715, %v5167
        %v5415 = vmul.f32 %v3717, %v5169
        %v5416 = vmul.f32 %v3908, %v5171
        %v5417 = vmul.f32 %v3526, %v5173
        %v5418 = vmul.f32 %v3528, %v5175
        %v5419 = vmul.f32 %v3719, %v5177
        %v5420 = vmul.f32 %v3721, %v5179
        %v5421 = vmul.f32 %v3912, %v5181
        %v5422 = vmul.f32 %v3532, %v5183
        %v5423 = vmul.f32 %v3534, %v5185
        %v5424 = vmul.f32 %v3725, %v5187
        %v5425 = vmul.f32 %v3727, %v5189
        %v5426 = vmul.f32 %v3918, %v5191
        %v5427 = vmul.f32 %v3536, %v5193
        %v5428 = vmul.f32 %v3538, %v5195
        %v5429 = vmul.f32 %v3729, %v5197
        %v5430 = vmul.f32 %v3731, %v5199
        %v5431 = vmul.f32 %v3922, %v5201
        %v5432 = vmul.f32 %v3542, %v5203
        %v5433 = vmul.f32 %v3544, %v5205
        %v5434 = vmul.f32 %v3735, %v5207
        %v5435 = vmul.f32 %v3737, %v5209
        %v5436 = vmul.f32 %v3928, %v5211
        %v5437 = vmul.f32 %v3546, %v5213
        %v5438 = vmul.f32 %v3548, %v5215
        %v5439 = vmul.f32 %v3739, %v5217
        %v5440 = vmul.f32 %v3741, %v5219
        %v5441 = vmul.f32 %v3932, %v5221
        %v5442 = vmul.f32 %v3552, %v5223
        %v5443 = vmul.f32 %v3554, %v5225
        %v5444 = vmul.f32 %v3745, %v5227
        %v5445 = vmul.f32 %v3747, %v5229
        %v5446 = vmul.f32 %v3938, %v5231
        %v5447 = vmul.f32 %v3556, %v5233
        %v5448 = vmul.f32 %v3558, %v5235
        %v5449 = vmul.f32 %v3749, %v5237
        %v5450 = vmul.f32 %v3751, %v5239
        %v5451 = vmul.f32 %v3942, %v5241
        %v5452 = vmul.f32 %v3562, %v5243
        %v5453 = vmul.f32 %v3564, %v5245
        %v5454 = vmul.f32 %v3755, %v5247
        %v5455 = vmul.f32 %v3757, %v5249
        %v5456 = vmul.f32 %v3948, %v5251
        %v5457 = vmul.f32 %v3566, %v5253
        %v5458 = vmul.f32 %v3568, %v5255
        %v5459 = vmul.f32 %v3759, %v5257
        %v5460 = vmul.f32 %v3761, %v5259
        %v5461 = vmul.f32 %v3952, %v5261
        %v5462 = vmul.f32 %v3572, %v5263
        %v5463 = vmul.f32 %v3574, %v5265
        %v5464 = vmul.f32 %v3765, %v5267
        %v5465 = vmul.f32 %v3767, %v5269
        %v5466 = vmul.f32 %v3958, %v5271
        %v5467 = vmul.f32 %v3576, %v5273
        %v5468 = vmul.f32 %v3578, %v5275
        %v5469 = vmul.f32 %v3769, %v5277
        %v5470 = vmul.f32 %v3771, %v5279
        %v5471 = vmul.f32 %v3962, %v5281
        %v5472 = vmul.f32 %v3582, %v5283
        %v5473 = vmul.f32 %v3584, %v5285
        %v5474 = vmul.f32 %v3775, %v5287
        %v5475 = vmul.f32 %v3777, %v5289
        %v5476 = vmul.f32 %v3968, %v5291
        %v5477 = vmul.f32 %v3586, %v5293
        %v5478 = vmul.f32 %v3588, %v5295
        %v5479 = vmul.f32 %v3779, %v5297
        %v5480 = vmul.f32 %v3781, %v5299
        %v5481 = vmul.f32 %v3972, %v5301
        %v5482 = vmul.f32 %v3592, %v5303
        %v5483 = vmul.f32 %v3594, %v5305
        %v5484 = vmul.f32 %v3785, %v5307
        %v5485 = vmul.f32 %v3787, %v5309
        %v5486 = vmul.f32 %v3978, %v5311
        %v5487 = vmul.f32 %v3596, %v5313
        %v5488 = vmul.f32 %v3598, %v5315
        %v5489 = vmul.f32 %v3789, %v5317
        %v5490 = vmul.f32 %v3791, %v5319
        %v5491 = vmul.f32 %v3982, %v5321
        %v5492 = vmul.f32 %v3602, %v5323
        %v5493 = vmul.f32 %v3604, %v5325
        %v5494 = vmul.f32 %v3795, %v5327
        %v5495 = vmul.f32 %v3797, %v5329
        %v5496 = vmul.f32 %v3988, %v5331
        %v5497 = vmul.f32 %v3606, %v5333
        %v5498 = vmul.f32 %v3608, %v5335
        %v5499 = vmul.f32 %v3799, %v5337
        %v5500 = vmul.f32 %v3801, %v5339
        %v5501 = vmul.f32 %v3992, %v5341
        %v5502 = vmul.f32 %v5342, %v3840
        %v5503 = vmul.f32 %v5343, %v4031
        %v5504 = vmul.f32 %v5344, %v4033
        %v5505 = vmul.f32 %v5345, %v4224
        %v5506 = vmul.f32 %v5346, %v4226
        %v5507 = vmul.f32 %v5347, %v3844
        %v5508 = vmul.f32 %v5348, %v4035
        %v5509 = vmul.f32 %v5349, %v4037
        %v5510 = vmul.f32 %v5350, %v4228
        %v5511 = vmul.f32 %v5351, %v4230
        %v5512 = vmul.f32 %v5352, %v3850
        %v5513 = vmul.f32 %v5353, %v4041
        %v5514 = vmul.f32 %v5354, %v4043
        %v5515 = vmul.f32 %v5355, %v4234
        %v5516 = vmul.f32 %v5356, %v4236
        %v5517 = vmul.f32 %v5357, %v3854
        %v5518 = vmul.f32 %v5358, %v4045
        %v5519 = vmul.f32 %v5359, %v4047
        %v5520 = vmul.f32 %v5360, %v4238
        %v5521 = vmul.f32 %v5361, %v4240
        %v5522 = vmul.f32 %v5362, %v3860
        %v5523 = vmul.f32 %v5363, %v4051
        %v5524 = vmul.f32 %v5364, %v4053
        %v5525 = vmul.f32 %v5365, %v4244
        %v5526 = vmul.f32 %v5366, %v4246
        %v5527 = vmul.f32 %v5367, %v3864
        %v5528 = vmul.f32 %v5368, %v4055
        %v5529 = vmul.f32 %v5369, %v4057
        %v5530 = vmul.f32 %v5370, %v4248
        %v5531 = vmul.f32 %v5371, %v4250
        %v5532 = vmul.f32 %v5372, %v3870
        %v5533 = vmul.f32 %v5373, %v4061
        %v5534 = vmul.f32 %v5374, %v4063
        %v5535 = vmul.f32 %v5375, %v4254
        %v5536 = vmul.f32 %v5376, %v4256
        %v5537 = vmul.f32 %v5377, %v3874
        %v5538 = vmul.f32 %v5378, %v4065
        %v5539 = vmul.f32 %v5379, %v4067
        %v5540 = vmul.f32 %v5380, %v4258
        %v5541 = vmul.f32 %v5381, %v4260
        %v5542 = vmul.f32 %v5382, %v3880
        %v5543 = vmul.f32 %v5383, %v4071
        %v5544 = vmul.f32 %v5384, %v4073
        %v5545 = vmul.f32 %v5385, %v4264
        %v5546 = vmul.f32 %v5386, %v4266
        %v5547 = vmul.f32 %v5387, %v3884
        %v5548 = vmul.f32 %v5388, %v4075
        %v5549 = vmul.f32 %v5389, %v4077
        %v5550 = vmul.f32 %v5390, %v4268
        %v5551 = vmul.f32 %v5391, %v4270
        %v5552 = vmul.f32 %v5392, %v3890
        %v5553 = vmul.f32 %v5393, %v4081
        %v5554 = vmul.f32 %v5394, %v4083
        %v5555 = vmul.f32 %v5395, %v4274
        %v5556 = vmul.f32 %v5396, %v4276
        %v5557 = vmul.f32 %v5397, %v3894
        %v5558 = vmul.f32 %v5398, %v4085
        %v5559 = vmul.f32 %v5399, %v4087
        %v5560 = vmul.f32 %v5400, %v4278
        %v5561 = vmul.f32 %v5401, %v4280
        %v5562 = vmul.f32 %v5402, %v3900
        %v5563 = vmul.f32 %v5403, %v4091
        %v5564 = vmul.f32 %v5404, %v4093
        %v5565 = vmul.f32 %v5405, %v4284
        %v5566 = vmul.f32 %v5406, %v4286
        %v5567 = vmul.f32 %v5407, %v3904
        %v5568 = vmul.f32 %v5408, %v4095
        %v5569 = vmul.f32 %v5409, %v4097
        %v5570 = vmul.f32 %v5410, %v4288
        %v5571 = vmul.f32 %v5411, %v4290
        %v5572 = vmul.f32 %v5412, %v3910
        %v5573 = vmul.f32 %v5413, %v4101
        %v5574 = vmul.f32 %v5414, %v4103
        %v5575 = vmul.f32 %v5415, %v4294
        %v5576 = vmul.f32 %v5416, %v4296
        %v5577 = vmul.f32 %v5417, %v3914
        %v5578 = vmul.f32 %v5418, %v4105
        %v5579 = vmul.f32 %v5419, %v4107
        %v5580 = vmul.f32 %v5420, %v4298
        %v5581 = vmul.f32 %v5421, %v4300
        %v5582 = vmul.f32 %v5422, %v3920
        %v5583 = vmul.f32 %v5423, %v4111
        %v5584 = vmul.f32 %v5424, %v4113
        %v5585 = vmul.f32 %v5425, %v4304
        %v5586 = vmul.f32 %v5426, %v4306
        %v5587 = vmul.f32 %v5427, %v3924
        %v5588 = vmul.f32 %v5428, %v4115
        %v5589 = vmul.f32 %v5429, %v4117
        %v5590 = vmul.f32 %v5430, %v4308
        %v5591 = vmul.f32 %v5431, %v4310
        %v5592 = vmul.f32 %v5432, %v3930
        %v5593 = vmul.f32 %v5433, %v4121
        %v5594 = vmul.f32 %v5434, %v4123
        %v5595 = vmul.f32 %v5435, %v4314
        %v5596 = vmul.f32 %v5436, %v4316
        %v5597 = vmul.f32 %v5437, %v3934
        %v5598 = vmul.f32 %v5438, %v4125
        %v5599 = vmul.f32 %v5439, %v4127
        %v5600 = vmul.f32 %v5440, %v4318
        %v5601 = vmul.f32 %v5441, %v4320
        %v5602 = vmul.f32 %v5442, %v3940
        %v5603 = vmul.f32 %v5443, %v4131
        %v5604 = vmul.f32 %v5444, %v4133
        %v5605 = vmul.f32 %v5445, %v4324
        %v5606 = vmul.f32 %v5446, %v4326
        %v5607 = vmul.f32 %v5447, %v3944
        %v5608 = vmul.f32 %v5448, %v4135
        %v5609 = vmul.f32 %v5449, %v4137
        %v5610 = vmul.f32 %v5450, %v4328
        %v5611 = vmul.f32 %v5451, %v4330
        %v5612 = vmul.f32 %v5452, %v3950
        %v5613 = vmul.f32 %v5453, %v4141
        %v5614 = vmul.f32 %v5454, %v4143
        %v5615 = vmul.f32 %v5455, %v4334
        %v5616 = vmul.f32 %v5456, %v4336
        %v5617 = vmul.f32 %v5457, %v3954
        %v5618 = vmul.f32 %v5458, %v4145
        %v5619 = vmul.f32 %v5459, %v4147
        %v5620 = vmul.f32 %v5460, %v4338
        %v5621 = vmul.f32 %v5461, %v4340
        %v5622 = vmul.f32 %v5462, %v3960
        %v5623 = vmul.f32 %v5463, %v4151
        %v5624 = vmul.f32 %v5464, %v4153
        %v5625 = vmul.f32 %v5465, %v4344
        %v5626 = vmul.f32 %v5466, %v4346
        %v5627 = vmul.f32 %v5467, %v3964
        %v5628 = vmul.f32 %v5468, %v4155
        %v5629 = vmul.f32 %v5469, %v4157
        %v5630 = vmul.f32 %v5470, %v4348
        %v5631 = vmul.f32 %v5471, %v4350
        %v5632 = vmul.f32 %v5472, %v3970
        %v5633 = vmul.f32 %v5473, %v4161
        %v5634 = vmul.f32 %v5474, %v4163
        %v5635 = vmul.f32 %v5475, %v4354
        %v5636 = vmul.f32 %v5476, %v4356
        %v5637 = vmul.f32 %v5477, %v3974
        %v5638 = vmul.f32 %v5478, %v4165
        %v5639 = vmul.f32 %v5479, %v4167
        %v5640 = vmul.f32 %v5480, %v4358
        %v5641 = vmul.f32 %v5481, %v4360
        %v5642 = vmul.f32 %v5482, %v3980
        %v5643 = vmul.f32 %v5483, %v4171
        %v5644 = vmul.f32 %v5484, %v4173
        %v5645 = vmul.f32 %v5485, %v4364
        %v5646 = vmul.f32 %v5486, %v4366
        %v5647 = vmul.f32 %v5487, %v3984
        %v5648 = vmul.f32 %v5488, %v4175
        %v5649 = vmul.f32 %v5489, %v4177
        %v5650 = vmul.f32 %v5490, %v4368
        %v5651 = vmul.f32 %v5491, %v4370
        %v5652 = vmul.f32 %v5492, %v3990
        %v5653 = vmul.f32 %v5493, %v4181
        %v5654 = vmul.f32 %v5494, %v4183
        %v5655 = vmul.f32 %v5495, %v4374
        %v5656 = vmul.f32 %v5496, %v4376
        %v5657 = vmul.f32 %v5497, %v3994
        %v5658 = vmul.f32 %v5498, %v4185
        %v5659 = vmul.f32 %v5499, %v4187
        %v5660 = vmul.f32 %v5500, %v4378
        %v5661 = vmul.f32 %v5501, %v4380
        %v5662 = vpack.c.bf16 %v5507, %v5502
        %v5663 = vpack.c.bf16 %v5508, %v5503
        %v5664 = vpack.c.bf16 %v5509, %v5504
        %v5665 = vpack.c.bf16 %v5510, %v5505
        %v5666 = vpack.c.bf16 %v5511, %v5506
        %v5667 = vpack.c.bf16 %v5517, %v5512
        %v5668 = vpack.c.bf16 %v5518, %v5513
        %v5669 = vpack.c.bf16 %v5519, %v5514
        %v5670 = vpack.c.bf16 %v5520, %v5515
        %v5671 = vpack.c.bf16 %v5521, %v5516
        %v5672 = vpack.c.bf16 %v5527, %v5522
        %v5673 = vpack.c.bf16 %v5528, %v5523
        %v5674 = vpack.c.bf16 %v5529, %v5524
        %v5675 = vpack.c.bf16 %v5530, %v5525
        %v5676 = vpack.c.bf16 %v5531, %v5526
        %v5677 = vpack.c.bf16 %v5537, %v5532
        %v5678 = vpack.c.bf16 %v5538, %v5533
        %v5679 = vpack.c.bf16 %v5539, %v5534
        %v5680 = vpack.c.bf16 %v5540, %v5535
        %v5681 = vpack.c.bf16 %v5541, %v5536
        %v5682 = vpack.c.bf16 %v5547, %v5542
        %v5683 = vpack.c.bf16 %v5548, %v5543
        %v5684 = vpack.c.bf16 %v5549, %v5544
        %v5685 = vpack.c.bf16 %v5550, %v5545
        %v5686 = vpack.c.bf16 %v5551, %v5546
        %v5687 = vpack.c.bf16 %v5557, %v5552
        %v5688 = vpack.c.bf16 %v5558, %v5553
        %v5689 = vpack.c.bf16 %v5559, %v5554
        %v5690 = vpack.c.bf16 %v5560, %v5555
        %v5691 = vpack.c.bf16 %v5561, %v5556
        %v5692 = vpack.c.bf16 %v5567, %v5562
        %v5693 = vpack.c.bf16 %v5568, %v5563
        %v5694 = vpack.c.bf16 %v5569, %v5564
        %v5695 = vpack.c.bf16 %v5570, %v5565
        %v5696 = vpack.c.bf16 %v5571, %v5566
        %v5697 = vpack.c.bf16 %v5577, %v5572
        %v5698 = vpack.c.bf16 %v5578, %v5573
        %v5699 = vpack.c.bf16 %v5579, %v5574
        %v5700 = vpack.c.bf16 %v5580, %v5575
        %v5701 = vpack.c.bf16 %v5581, %v5576
        %v5702 = vpack.c.bf16 %v5587, %v5582
        %v5703 = vpack.c.bf16 %v5588, %v5583
        %v5704 = vpack.c.bf16 %v5589, %v5584
        %v5705 = vpack.c.bf16 %v5590, %v5585
        %v5706 = vpack.c.bf16 %v5591, %v5586
        %v5707 = vpack.c.bf16 %v5597, %v5592
        %v5708 = vpack.c.bf16 %v5598, %v5593
        %v5709 = vpack.c.bf16 %v5599, %v5594
        %v5710 = vpack.c.bf16 %v5600, %v5595
        %v5711 = vpack.c.bf16 %v5601, %v5596
        %v5712 = vpack.c.bf16 %v5607, %v5602
        %v5713 = vpack.c.bf16 %v5608, %v5603
        %v5714 = vpack.c.bf16 %v5609, %v5604
        %v5715 = vpack.c.bf16 %v5610, %v5605
        %v5716 = vpack.c.bf16 %v5611, %v5606
        %v5717 = vpack.c.bf16 %v5617, %v5612
        %v5718 = vpack.c.bf16 %v5618, %v5613
        %v5719 = vpack.c.bf16 %v5619, %v5614
        %v5720 = vpack.c.bf16 %v5620, %v5615
        %v5721 = vpack.c.bf16 %v5621, %v5616
        %v5722 = vpack.c.bf16 %v5627, %v5622
        %v5723 = vpack.c.bf16 %v5628, %v5623
        %v5724 = vpack.c.bf16 %v5629, %v5624
        %v5725 = vpack.c.bf16 %v5630, %v5625
        %v5726 = vpack.c.bf16 %v5631, %v5626
        %v5727 = vpack.c.bf16 %v5637, %v5632
        %v5728 = vpack.c.bf16 %v5638, %v5633
        %v5729 = vpack.c.bf16 %v5639, %v5634
        %v5730 = vpack.c.bf16 %v5640, %v5635
        %v5731 = vpack.c.bf16 %v5641, %v5636
        %v5732 = vpack.c.bf16 %v5647, %v5642
        %v5733 = vpack.c.bf16 %v5648, %v5643
        %v5734 = vpack.c.bf16 %v5649, %v5644
        %v5735 = vpack.c.bf16 %v5650, %v5645
        %v5736 = vpack.c.bf16 %v5651, %v5646
        %v5737 = vpack.c.bf16 %v5657, %v5652
        %v5738 = vpack.c.bf16 %v5658, %v5653
        %v5739 = vpack.c.bf16 %v5659, %v5654
        %v5740 = vpack.c.bf16 %v5660, %v5655
        %v5741 = vpack.c.bf16 %v5661, %v5656
        %v5742 = vld [vmem:[#allocation8] sm:$0xff]
        %v5743 = vld [vmem:[#allocation8 + $0x8] sm:$0xff]
        %v5744 = vld [vmem:[#allocation8 + $0x10] sm:$0xff]
        %v5745 = vld [vmem:[#allocation8 + $0x18] sm:$0xff]
        %v5746 = vld [vmem:[#allocation8 + $0x20] sm:$0xff]
        %v5747 = vld [vmem:[#allocation8 + $0x28] sm:$0xff]
        %v5748 = vld [vmem:[#allocation8 + $0x30] sm:$0xff]
        %v5749 = vld [vmem:[#allocation8 + $0x38] sm:$0xff]
        %v5750 = vld [vmem:[#allocation8 + $0x40] sm:$0xff]
        %v5751 = vld [vmem:[#allocation8 + $0x48] sm:$0xff]
        %v5752 = vld [vmem:[#allocation8 + $0x50] sm:$0xff]
        %v5753 = vld [vmem:[#allocation8 + $0x58] sm:$0xff]
        %v5754 = vld [vmem:[#allocation8 + $0x60] sm:$0xff]
        %v5755 = vld [vmem:[#allocation8 + $0x68] sm:$0xff]
        %v5756 = vld [vmem:[#allocation8 + $0x70] sm:$0xff]
        %v5757 = vld [vmem:[#allocation8 + $0x78] sm:$0xff]
        %v5758 = vld [vmem:[#allocation8 + $0x80] sm:$0xff]
        %v5759 = vld [vmem:[#allocation8 + $0x88] sm:$0xff]
        %v5760 = vld [vmem:[#allocation8 + $0x90] sm:$0xff]
        %v5761 = vld [vmem:[#allocation8 + $0x98] sm:$0xff]
        %v5762 = vld [vmem:[#allocation8 + $0xa0] sm:$0xff]
        %v5763 = vld [vmem:[#allocation8 + $0xa8] sm:$0xff]
        %v5764 = vld [vmem:[#allocation8 + $0xb0] sm:$0xff]
        %v5765 = vld [vmem:[#allocation8 + $0xb8] sm:$0xff]
        %v5766 = vld [vmem:[#allocation8 + $0xc0] sm:$0xff]
        %v5767 = vld [vmem:[#allocation8 + $0xc8] sm:$0xff]
        %v5768 = vld [vmem:[#allocation8 + $0xd0] sm:$0xff]
        %v5769 = vld [vmem:[#allocation8 + $0xd8] sm:$0xff]
        %v5770 = vld [vmem:[#allocation8 + $0xe0] sm:$0xff]
        %v5771 = vld [vmem:[#allocation8 + $0xe8] sm:$0xff]
        %v5772 = vld [vmem:[#allocation8 + $0xf0] sm:$0xff]
        %v5773 = vld [vmem:[#allocation8 + $0xf8] sm:$0xff]
        %v5774 = vld [vmem:[#allocation8 + $0x100] sm:$0xff]
        %v5775 = vld [vmem:[#allocation8 + $0x108] sm:$0xff]
        %v5776 = vld [vmem:[#allocation8 + $0x110] sm:$0xff]
        %v5777 = vld [vmem:[#allocation8 + $0x118] sm:$0xff]
        %v5778 = vld [vmem:[#allocation8 + $0x120] sm:$0xff]
        %v5779 = vld [vmem:[#allocation8 + $0x128] sm:$0xff]
        %v5780 = vld [vmem:[#allocation8 + $0x130] sm:$0xff]
        %v5781 = vld [vmem:[#allocation8 + $0x138] sm:$0xff]
        %v5782 = vld [vmem:[#allocation8 + $0x140] sm:$0xff]
        %v5783 = vld [vmem:[#allocation8 + $0x148] sm:$0xff]
        %v5784 = vld [vmem:[#allocation8 + $0x150] sm:$0xff]
        %v5785 = vld [vmem:[#allocation8 + $0x158] sm:$0xff]
        %v5786 = vld [vmem:[#allocation8 + $0x160] sm:$0xff]
        %v5787 = vld [vmem:[#allocation8 + $0x168] sm:$0xff]
        %v5788 = vld [vmem:[#allocation8 + $0x170] sm:$0xff]
        %v5789 = vld [vmem:[#allocation8 + $0x178] sm:$0xff]
        %v5790 = vld [vmem:[#allocation8 + $0x180] sm:$0xff]
        %v5791 = vld [vmem:[#allocation8 + $0x188] sm:$0xff]
        %v5792 = vld [vmem:[#allocation8 + $0x190] sm:$0xff]
        %v5793 = vld [vmem:[#allocation8 + $0x198] sm:$0xff]
        %v5794 = vld [vmem:[#allocation8 + $0x1a0] sm:$0xff]
        %v5795 = vld [vmem:[#allocation8 + $0x1a8] sm:$0xff]
        %v5796 = vld [vmem:[#allocation8 + $0x1b0] sm:$0xff]
        %v5797 = vld [vmem:[#allocation8 + $0x1b8] sm:$0xff]
        %v5798 = vld [vmem:[#allocation8 + $0x1c0] sm:$0xff]
        %v5799 = vld [vmem:[#allocation8 + $0x1c8] sm:$0xff]
        %v5800 = vld [vmem:[#allocation8 + $0x1d0] sm:$0xff]
        %v5801 = vld [vmem:[#allocation8 + $0x1d8] sm:$0xff]
        %v5802 = vld [vmem:[#allocation8 + $0x1e0] sm:$0xff]
        %v5803 = vld [vmem:[#allocation8 + $0x1e8] sm:$0xff]
        %v5804 = vld [vmem:[#allocation8 + $0x1f0] sm:$0xff]
        %v5805 = vld [vmem:[#allocation8 + $0x1f8] sm:$0xff]
        %v5806 = vld [vmem:[#allocation8 + $0x200] sm:$0xff]
        %v5807 = vld [vmem:[#allocation8 + $0x208] sm:$0xff]
        %v5808 = vld [vmem:[#allocation8 + $0x210] sm:$0xff]
        %v5809 = vld [vmem:[#allocation8 + $0x218] sm:$0xff]
        %v5810 = vld [vmem:[#allocation8 + $0x220] sm:$0xff]
        %v5811 = vld [vmem:[#allocation8 + $0x228] sm:$0xff]
        %v5812 = vld [vmem:[#allocation8 + $0x230] sm:$0xff]
        %v5813 = vld [vmem:[#allocation8 + $0x238] sm:$0xff]
        %v5814 = vld [vmem:[#allocation8 + $0x240] sm:$0xff]
        %v5815 = vld [vmem:[#allocation8 + $0x248] sm:$0xff]
        %v5816 = vld [vmem:[#allocation8 + $0x250] sm:$0xff]
        %v5817 = vld [vmem:[#allocation8 + $0x258] sm:$0xff]
        %v5818 = vld [vmem:[#allocation8 + $0x260] sm:$0xff]
        %v5819 = vld [vmem:[#allocation8 + $0x268] sm:$0xff]
        %v5820 = vld [vmem:[#allocation8 + $0x270] sm:$0xff]
        %v5821 = vld [vmem:[#allocation8 + $0x278] sm:$0xff]
        %v5822 = vld [vmem:[%s10] sm:$0x3]
        %v5824 = vlaneseq
        %v5825 = vshrl.u32 %v5824, 7
        %v5826 = vsub.s32 0, %v5825
        %v5827 = vrot.slane %v5822, %v5826
        %v5828 = vlaneseq
        %v5829 = vshrl.u32 %v5828, 7
        %v5830 = vsub.s32 1, %v5829
        %v5831 = vrot.slane %v5822, %v5830
        %v5914 = vunpack.c.l.b16 %v5742
        %v5915 = vunpack.c.h.b16 %v5742
        %v5916 = vunpack.c.l.b16 %v5743
        %v5917 = vunpack.c.h.b16 %v5743
        %v5918 = vunpack.c.l.b16 %v5744
        %v5919 = vunpack.c.h.b16 %v5744
        %v5920 = vunpack.c.l.b16 %v5745
        %v5921 = vunpack.c.h.b16 %v5745
        %v5922 = vunpack.c.l.b16 %v5746
        %v5923 = vunpack.c.h.b16 %v5746
        %v5924 = vunpack.c.l.b16 %v5747
        %v5925 = vunpack.c.h.b16 %v5747
        %v5926 = vunpack.c.l.b16 %v5748
        %v5927 = vunpack.c.h.b16 %v5748
        %v5928 = vunpack.c.l.b16 %v5749
        %v5929 = vunpack.c.h.b16 %v5749
        %v5930 = vunpack.c.l.b16 %v5750
        %v5931 = vunpack.c.h.b16 %v5750
        %v5932 = vunpack.c.l.b16 %v5751
        %v5933 = vunpack.c.h.b16 %v5751
        %v5934 = vunpack.c.l.b16 %v5752
        %v5935 = vunpack.c.h.b16 %v5752
        %v5936 = vunpack.c.l.b16 %v5753
        %v5937 = vunpack.c.h.b16 %v5753
        %v5938 = vunpack.c.l.b16 %v5754
        %v5939 = vunpack.c.h.b16 %v5754
        %v5940 = vunpack.c.l.b16 %v5755
        %v5941 = vunpack.c.h.b16 %v5755
        %v5942 = vunpack.c.l.b16 %v5756
        %v5943 = vunpack.c.h.b16 %v5756
        %v5944 = vunpack.c.l.b16 %v5757
        %v5945 = vunpack.c.h.b16 %v5757
        %v5946 = vunpack.c.l.b16 %v5758
        %v5947 = vunpack.c.h.b16 %v5758
        %v5948 = vunpack.c.l.b16 %v5759
        %v5949 = vunpack.c.h.b16 %v5759
        %v5950 = vunpack.c.l.b16 %v5760
        %v5951 = vunpack.c.h.b16 %v5760
        %v5952 = vunpack.c.l.b16 %v5761
        %v5953 = vunpack.c.h.b16 %v5761
        %v5954 = vunpack.c.l.b16 %v5762
        %v5955 = vunpack.c.h.b16 %v5762
        %v5956 = vunpack.c.l.b16 %v5763
        %v5957 = vunpack.c.h.b16 %v5763
        %v5958 = vunpack.c.l.b16 %v5764
        %v5959 = vunpack.c.h.b16 %v5764
        %v5960 = vunpack.c.l.b16 %v5765
        %v5961 = vunpack.c.h.b16 %v5765
        %v5962 = vunpack.c.l.b16 %v5766
        %v5963 = vunpack.c.h.b16 %v5766
        %v5964 = vunpack.c.l.b16 %v5767
        %v5965 = vunpack.c.h.b16 %v5767
        %v5966 = vunpack.c.l.b16 %v5768
        %v5967 = vunpack.c.h.b16 %v5768
        %v5968 = vunpack.c.l.b16 %v5769
        %v5969 = vunpack.c.h.b16 %v5769
        %v5970 = vunpack.c.l.b16 %v5770
        %v5971 = vunpack.c.h.b16 %v5770
        %v5972 = vunpack.c.l.b16 %v5771
        %v5973 = vunpack.c.h.b16 %v5771
        %v5974 = vunpack.c.l.b16 %v5772
        %v5975 = vunpack.c.h.b16 %v5772
        %v5976 = vunpack.c.l.b16 %v5773
        %v5977 = vunpack.c.h.b16 %v5773
        %v5978 = vunpack.c.l.b16 %v5774
        %v5979 = vunpack.c.h.b16 %v5774
        %v5980 = vunpack.c.l.b16 %v5775
        %v5981 = vunpack.c.h.b16 %v5775
        %v5982 = vunpack.c.l.b16 %v5776
        %v5983 = vunpack.c.h.b16 %v5776
        %v5984 = vunpack.c.l.b16 %v5777
        %v5985 = vunpack.c.h.b16 %v5777
        %v5986 = vunpack.c.l.b16 %v5778
        %v5987 = vunpack.c.h.b16 %v5778
        %v5988 = vunpack.c.l.b16 %v5779
        %v5989 = vunpack.c.h.b16 %v5779
        %v5990 = vunpack.c.l.b16 %v5780
        %v5991 = vunpack.c.h.b16 %v5780
        %v5992 = vunpack.c.l.b16 %v5781
        %v5993 = vunpack.c.h.b16 %v5781
        %v5994 = vunpack.c.l.b16 %v5782
        %v5995 = vunpack.c.h.b16 %v5782
        %v5996 = vunpack.c.l.b16 %v5783
        %v5997 = vunpack.c.h.b16 %v5783
        %v5998 = vunpack.c.l.b16 %v5784
        %v5999 = vunpack.c.h.b16 %v5784
        %v6000 = vunpack.c.l.b16 %v5785
        %v6001 = vunpack.c.h.b16 %v5785
        %v6002 = vunpack.c.l.b16 %v5786
        %v6003 = vunpack.c.h.b16 %v5786
        %v6004 = vunpack.c.l.b16 %v5787
        %v6005 = vunpack.c.h.b16 %v5787
        %v6006 = vunpack.c.l.b16 %v5788
        %v6007 = vunpack.c.h.b16 %v5788
        %v6008 = vunpack.c.l.b16 %v5789
        %v6009 = vunpack.c.h.b16 %v5789
        %v6010 = vunpack.c.l.b16 %v5790
        %v6011 = vunpack.c.h.b16 %v5790
        %v6012 = vunpack.c.l.b16 %v5791
        %v6013 = vunpack.c.h.b16 %v5791
        %v6014 = vunpack.c.l.b16 %v5792
        %v6015 = vunpack.c.h.b16 %v5792
        %v6016 = vunpack.c.l.b16 %v5793
        %v6017 = vunpack.c.h.b16 %v5793
        %v6018 = vunpack.c.l.b16 %v5794
        %v6019 = vunpack.c.h.b16 %v5794
        %v6020 = vunpack.c.l.b16 %v5795
        %v6021 = vunpack.c.h.b16 %v5795
        %v6022 = vunpack.c.l.b16 %v5796
        %v6023 = vunpack.c.h.b16 %v5796
        %v6024 = vunpack.c.l.b16 %v5797
        %v6025 = vunpack.c.h.b16 %v5797
        %v6026 = vunpack.c.l.b16 %v5798
        %v6027 = vunpack.c.h.b16 %v5798
        %v6028 = vunpack.c.l.b16 %v5799
        %v6029 = vunpack.c.h.b16 %v5799
        %v6030 = vunpack.c.l.b16 %v5800
        %v6031 = vunpack.c.h.b16 %v5800
        %v6032 = vunpack.c.l.b16 %v5801
        %v6033 = vunpack.c.h.b16 %v5801
        %v6034 = vunpack.c.l.b16 %v5802
        %v6035 = vunpack.c.h.b16 %v5802
        %v6036 = vunpack.c.l.b16 %v5803
        %v6037 = vunpack.c.h.b16 %v5803
        %v6038 = vunpack.c.l.b16 %v5804
        %v6039 = vunpack.c.h.b16 %v5804
        %v6040 = vunpack.c.l.b16 %v5805
        %v6041 = vunpack.c.h.b16 %v5805
        %v6042 = vunpack.c.l.b16 %v5806
        %v6043 = vunpack.c.h.b16 %v5806
        %v6044 = vunpack.c.l.b16 %v5807
        %v6045 = vunpack.c.h.b16 %v5807
        %v6046 = vunpack.c.l.b16 %v5808
        %v6047 = vunpack.c.h.b16 %v5808
        %v6048 = vunpack.c.l.b16 %v5809
        %v6049 = vunpack.c.h.b16 %v5809
        %v6050 = vunpack.c.l.b16 %v5810
        %v6051 = vunpack.c.h.b16 %v5810
        %v6052 = vunpack.c.l.b16 %v5811
        %v6053 = vunpack.c.h.b16 %v5811
        %v6054 = vunpack.c.l.b16 %v5812
        %v6055 = vunpack.c.h.b16 %v5812
        %v6056 = vunpack.c.l.b16 %v5813
        %v6057 = vunpack.c.h.b16 %v5813
        %v6058 = vunpack.c.l.b16 %v5814
        %v6059 = vunpack.c.h.b16 %v5814
        %v6060 = vunpack.c.l.b16 %v5815
        %v6061 = vunpack.c.h.b16 %v5815
        %v6062 = vunpack.c.l.b16 %v5816
        %v6063 = vunpack.c.h.b16 %v5816
        %v6064 = vunpack.c.l.b16 %v5817
        %v6065 = vunpack.c.h.b16 %v5817
        %v6066 = vunpack.c.l.b16 %v5818
        %v6067 = vunpack.c.h.b16 %v5818
        %v6068 = vunpack.c.l.b16 %v5819
        %v6069 = vunpack.c.h.b16 %v5819
        %v6070 = vunpack.c.l.b16 %v5820
        %v6071 = vunpack.c.h.b16 %v5820
        %v6072 = vunpack.c.l.b16 %v5821
        %v6073 = vunpack.c.h.b16 %v5821
        %v6074 = vpack.c.b16 %v5916, %v5914
        %v6075 = vpack.c.b16 %v5917, %v5915
        %v6076 = vpack.c.b16 %v5920, %v5918
        %v6077 = vpack.c.b16 %v5921, %v5919
        %v6078 = vpack.c.b16 %v5924, %v5922
        %v6079 = vpack.c.b16 %v5925, %v5923
        %v6080 = vpack.c.b16 %v5928, %v5926
        %v6081 = vpack.c.b16 %v5929, %v5927
        %v6082 = vpack.c.b16 %v5932, %v5930
        %v6083 = vpack.c.b16 %v5933, %v5931
        %v6084 = vpack.c.b16 %v5936, %v5934
        %v6085 = vpack.c.b16 %v5937, %v5935
        %v6086 = vpack.c.b16 %v5940, %v5938
        %v6087 = vpack.c.b16 %v5941, %v5939
        %v6088 = vpack.c.b16 %v5944, %v5942
        %v6089 = vpack.c.b16 %v5945, %v5943
        %v6090 = vpack.c.b16 %v5948, %v5946
        %v6091 = vpack.c.b16 %v5949, %v5947
        %v6092 = vpack.c.b16 %v5952, %v5950
        %v6093 = vpack.c.b16 %v5953, %v5951
        %v6094 = vpack.c.b16 %v5956, %v5954
        %v6095 = vpack.c.b16 %v5957, %v5955
        %v6096 = vpack.c.b16 %v5960, %v5958
        %v6097 = vpack.c.b16 %v5961, %v5959
        %v6098 = vpack.c.b16 %v5964, %v5962
        %v6099 = vpack.c.b16 %v5965, %v5963
        %v6100 = vpack.c.b16 %v5968, %v5966
        %v6101 = vpack.c.b16 %v5969, %v5967
        %v6102 = vpack.c.b16 %v5972, %v5970
        %v6103 = vpack.c.b16 %v5973, %v5971
        %v6104 = vpack.c.b16 %v5976, %v5974
        %v6105 = vpack.c.b16 %v5977, %v5975
        %v6106 = vpack.c.b16 %v5980, %v5978
        %v6107 = vpack.c.b16 %v5981, %v5979
        %v6108 = vpack.c.b16 %v5984, %v5982
        %v6109 = vpack.c.b16 %v5985, %v5983
        %v6110 = vpack.c.b16 %v5988, %v5986
        %v6111 = vpack.c.b16 %v5989, %v5987
        %v6112 = vpack.c.b16 %v5992, %v5990
        %v6113 = vpack.c.b16 %v5993, %v5991
        %v6114 = vpack.c.b16 %v5996, %v5994
        %v6115 = vpack.c.b16 %v5997, %v5995
        %v6116 = vpack.c.b16 %v6000, %v5998
        %v6117 = vpack.c.b16 %v6001, %v5999
        %v6118 = vpack.c.b16 %v6004, %v6002
        %v6119 = vpack.c.b16 %v6005, %v6003
        %v6120 = vpack.c.b16 %v6008, %v6006
        %v6121 = vpack.c.b16 %v6009, %v6007
        %v6122 = vpack.c.b16 %v6012, %v6010
        %v6123 = vpack.c.b16 %v6013, %v6011
        %v6124 = vpack.c.b16 %v6016, %v6014
        %v6125 = vpack.c.b16 %v6017, %v6015
        %v6126 = vpack.c.b16 %v6020, %v6018
        %v6127 = vpack.c.b16 %v6021, %v6019
        %v6128 = vpack.c.b16 %v6024, %v6022
        %v6129 = vpack.c.b16 %v6025, %v6023
        %v6130 = vpack.c.b16 %v6028, %v6026
        %v6131 = vpack.c.b16 %v6029, %v6027
        %v6132 = vpack.c.b16 %v6032, %v6030
        %v6133 = vpack.c.b16 %v6033, %v6031
        %v6134 = vpack.c.b16 %v6036, %v6034
        %v6135 = vpack.c.b16 %v6037, %v6035
        %v6136 = vpack.c.b16 %v6040, %v6038
        %v6137 = vpack.c.b16 %v6041, %v6039
        %v6138 = vpack.c.b16 %v6044, %v6042
        %v6139 = vpack.c.b16 %v6045, %v6043
        %v6140 = vpack.c.b16 %v6048, %v6046
        %v6141 = vpack.c.b16 %v6049, %v6047
        %v6142 = vpack.c.b16 %v6052, %v6050
        %v6143 = vpack.c.b16 %v6053, %v6051
        %v6144 = vpack.c.b16 %v6056, %v6054
        %v6145 = vpack.c.b16 %v6057, %v6055
        %v6146 = vpack.c.b16 %v6060, %v6058
        %v6147 = vpack.c.b16 %v6061, %v6059
        %v6148 = vpack.c.b16 %v6064, %v6062
        %v6149 = vpack.c.b16 %v6065, %v6063
        %v6150 = vpack.c.b16 %v6068, %v6066
        %v6151 = vpack.c.b16 %v6069, %v6067
        %v6152 = vpack.c.b16 %v6072, %v6070
        %v6153 = vpack.c.b16 %v6073, %v6071
        %6234 = vmatprep.subr.bf16.mxu0 %v6075
        %6235 = vmatpush1.bf16.msra.mxu0 %v6074
        %6236 = vmatprep.subr.bf16.mxu0 %v6077
        %6237 = vmatpush1.bf16.msra.mxu0 %v6076
        %6238 = vmatprep.subr.bf16.mxu0 %v6079
        %6239 = vmatpush1.bf16.msra.mxu0 %v6078
        %6240 = vmatprep.subr.bf16.mxu0 %v6081
        %6241 = vmatpush1.bf16.msra.mxu0 %v6080
        %6242 = vmatprep.subr.bf16.mxu0 %v6083
        %6243 = vmatpush1.bf16.msra.mxu0 %v6082
        %6244 = vmatprep.subr.bf16.mxu0 %v6085
        %6245 = vmatpush1.bf16.msra.mxu0 %v6084
        %6246 = vmatprep.subr.bf16.mxu0 %v6087
        %6247 = vmatpush1.bf16.msra.mxu0 %v6086
        %6248 = vmatprep.subr.bf16.mxu0 %v6089
        %6249 = vmatpush1.bf16.msra.mxu0 %v6088
        %6250 = vmatprep.subr.bf16.mxu0 %v6091
        %6251 = vmatpush1.bf16.msra.mxu0 %v6090
        %6252 = vmatprep.subr.bf16.mxu0 %v6093
        %6253 = vmatpush1.bf16.msra.mxu0 %v6092
        %6254 = vmatprep.subr.bf16.mxu0 %v6095
        %6255 = vmatpush1.bf16.msra.mxu0 %v6094
        %6256 = vmatprep.subr.bf16.mxu0 %v6097
        %6257 = vmatpush1.bf16.msra.mxu0 %v6096
        %6258 = vmatprep.subr.bf16.mxu0 %v6099
        %6259 = vmatpush1.bf16.msra.mxu0 %v6098
        %6260 = vmatprep.subr.bf16.mxu0 %v6101
        %6261 = vmatpush1.bf16.msra.mxu0 %v6100
        %6262 = vmatprep.subr.bf16.mxu0 %v6103
        %6263 = vmatpush1.bf16.msra.mxu0 %v6102
        %6264 = vmatprep.subr.bf16.mxu0 %v6105
        %6265 = vmatpush1.bf16.msra.mxu0 %v6104
        %6266 = vmatprep.mubr.bf16.mxu0 %v5663
        %6267 = vmatmul.mubr.bf16.gmra.mrb[0].mxu0 %v5662
        %v6268 = vpop.f32.mrb[0].mxu0
        %v6269 = vadd.f32 %v5827, %v6268
        %v6270 = vpop.f32.mrb[0].mxu0
        %v6271 = vadd.f32 %v5831, %v6270
        %v6272 = vpop.f32.mrb[0].mxu0
        %v6273 = vadd.f32 %v5827, %v6272
        %v6274 = vpop.f32.mrb[0].mxu0
        %v6275 = vadd.f32 %v5831, %v6274
        %6276 = vmatprep.mubr.bf16.mxu0 %v5668
        %6277 = vmatmul.mubr.bf16.gmra.mrb[0].mxu0 %v5667
        %v6278 = vpop.f32.mrb[0].mxu0
        %v6279 = vadd.f32 %v5827, %v6278
        %v6280 = vpop.f32.mrb[0].mxu0
        %v6281 = vadd.f32 %v5831, %v6280
        %v6282 = vpop.f32.mrb[0].mxu0
        %v6283 = vadd.f32 %v5827, %v6282
        %v6284 = vpop.f32.mrb[0].mxu0
        %v6285 = vadd.f32 %v5831, %v6284
        %6286 = vmatprep.mubr.bf16.mxu0 %v5673
        %6287 = vmatmul.mubr.bf16.gmra.mrb[0].mxu0 %v5672
        %v6288 = vpop.f32.mrb[0].mxu0
        %v6289 = vadd.f32 %v5827, %v6288
        %v6290 = vpop.f32.mrb[0].mxu0
        %v6291 = vadd.f32 %v5831, %v6290
        %v6292 = vpop.f32.mrb[0].mxu0
        %v6293 = vadd.f32 %v5827, %v6292
        %v6294 = vpop.f32.mrb[0].mxu0
        %v6295 = vadd.f32 %v5831, %v6294
        %6296 = vmatprep.mubr.bf16.mxu0 %v5678
        %6297 = vmatmul.mubr.bf16.gmra.mrb[0].mxu0 %v5677
        %v6298 = vpop.f32.mrb[0].mxu0
        %v6299 = vadd.f32 %v5827, %v6298
        %v6300 = vpop.f32.mrb[0].mxu0
        %v6301 = vadd.f32 %v5831, %v6300
        %v6302 = vpop.f32.mrb[0].mxu0
        %v6303 = vadd.f32 %v5827, %v6302
        %v6304 = vpop.f32.mrb[0].mxu0
        %v6305 = vadd.f32 %v5831, %v6304
        %6306 = vmatprep.mubr.bf16.mxu0 %v5683
        %6307 = vmatmul.mubr.bf16.gmra.mrb[0].mxu0 %v5682
        %v6308 = vpop.f32.mrb[0].mxu0
        %v6309 = vadd.f32 %v5827, %v6308
        %v6310 = vpop.f32.mrb[0].mxu0
        %v6311 = vadd.f32 %v5831, %v6310
        %v6312 = vpop.f32.mrb[0].mxu0
        %v6313 = vadd.f32 %v5827, %v6312
        %v6314 = vpop.f32.mrb[0].mxu0
        %v6315 = vadd.f32 %v5831, %v6314
        %6316 = vmatprep.mubr.bf16.mxu0 %v5688
        %6317 = vmatmul.mubr.bf16.gmra.mrb[0].mxu0 %v5687
        %v6318 = vpop.f32.mrb[0].mxu0
        %v6319 = vadd.f32 %v5827, %v6318
        %v6320 = vpop.f32.mrb[0].mxu0
        %v6321 = vadd.f32 %v5831, %v6320
        %v6322 = vpop.f32.mrb[0].mxu0
        %v6323 = vadd.f32 %v5827, %v6322
        %v6324 = vpop.f32.mrb[0].mxu0
        %v6325 = vadd.f32 %v5831, %v6324
        %6326 = vmatprep.mubr.bf16.mxu0 %v5693
        %6327 = vmatmul.mubr.bf16.gmra.mrb[0].mxu0 %v5692
        %v6328 = vpop.f32.mrb[0].mxu0
        %v6329 = vadd.f32 %v5827, %v6328
        %v6330 = vpop.f32.mrb[0].mxu0
        %v6331 = vadd.f32 %v5831, %v6330
        %v6332 = vpop.f32.mrb[0].mxu0
        %v6333 = vadd.f32 %v5827, %v6332
        %v6334 = vpop.f32.mrb[0].mxu0
        %v6335 = vadd.f32 %v5831, %v6334
        %6336 = vmatprep.mubr.bf16.mxu0 %v5698
        %6337 = vmatmul.mubr.bf16.gmra.mrb[0].mxu0 %v5697
        %v6338 = vpop.f32.mrb[0].mxu0
        %v6339 = vadd.f32 %v5827, %v6338
        %v6340 = vpop.f32.mrb[0].mxu0
        %v6341 = vadd.f32 %v5831, %v6340
        %v6342 = vpop.f32.mrb[0].mxu0
        %v6343 = vadd.f32 %v5827, %v6342
        %v6344 = vpop.f32.mrb[0].mxu0
        %v6345 = vadd.f32 %v5831, %v6344
        %6346 = vmatprep.mubr.bf16.mxu0 %v5703
        %6347 = vmatmul.mubr.bf16.gmra.mrb[0].mxu0 %v5702
        %v6348 = vpop.f32.mrb[0].mxu0
        %v6349 = vadd.f32 %v5827, %v6348
        %v6350 = vpop.f32.mrb[0].mxu0
        %v6351 = vadd.f32 %v5831, %v6350
        %v6352 = vpop.f32.mrb[0].mxu0
        %v6353 = vadd.f32 %v5827, %v6352
        %v6354 = vpop.f32.mrb[0].mxu0
        %v6355 = vadd.f32 %v5831, %v6354
        %6356 = vmatprep.mubr.bf16.mxu0 %v5708
        %6357 = vmatmul.mubr.bf16.gmra.mrb[0].mxu0 %v5707
        %v6358 = vpop.f32.mrb[0].mxu0
        %v6359 = vadd.f32 %v5827, %v6358
        %v6360 = vpop.f32.mrb[0].mxu0
        %v6361 = vadd.f32 %v5831, %v6360
        %v6362 = vpop.f32.mrb[0].mxu0
        %v6363 = vadd.f32 %v5827, %v6362
        %v6364 = vpop.f32.mrb[0].mxu0
        %v6365 = vadd.f32 %v5831, %v6364
        %6366 = vmatprep.mubr.bf16.mxu0 %v5713
        %6367 = vmatmul.mubr.bf16.gmra.mrb[0].mxu0 %v5712
        %v6368 = vpop.f32.mrb[0].mxu0
        %v6369 = vadd.f32 %v5827, %v6368
        %v6370 = vpop.f32.mrb[0].mxu0
        %v6371 = vadd.f32 %v5831, %v6370
        %v6372 = vpop.f32.mrb[0].mxu0
        %v6373 = vadd.f32 %v5827, %v6372
        %v6374 = vpop.f32.mrb[0].mxu0
        %v6375 = vadd.f32 %v5831, %v6374
        %6376 = vmatprep.mubr.bf16.mxu0 %v5718
        %6377 = vmatmul.mubr.bf16.gmra.mrb[0].mxu0 %v5717
        %v6378 = vpop.f32.mrb[0].mxu0
        %v6379 = vadd.f32 %v5827, %v6378
        %v6380 = vpop.f32.mrb[0].mxu0
        %v6381 = vadd.f32 %v5831, %v6380
        %v6382 = vpop.f32.mrb[0].mxu0
        %v6383 = vadd.f32 %v5827, %v6382
        %v6384 = vpop.f32.mrb[0].mxu0
        %v6385 = vadd.f32 %v5831, %v6384
        %6386 = vmatprep.mubr.bf16.mxu0 %v5723
        %6387 = vmatmul.mubr.bf16.gmra.mrb[0].mxu0 %v5722
        %v6388 = vpop.f32.mrb[0].mxu0
        %v6389 = vadd.f32 %v5827, %v6388
        %v6390 = vpop.f32.mrb[0].mxu0
        %v6391 = vadd.f32 %v5831, %v6390
        %v6392 = vpop.f32.mrb[0].mxu0
        %v6393 = vadd.f32 %v5827, %v6392
        %v6394 = vpop.f32.mrb[0].mxu0
        %v6395 = vadd.f32 %v5831, %v6394
        %6396 = vmatprep.mubr.bf16.mxu0 %v5728
        %6397 = vmatmul.mubr.bf16.gmra.mrb[0].mxu0 %v5727
        %v6398 = vpop.f32.mrb[0].mxu0
        %v6399 = vadd.f32 %v5827, %v6398
        %v6400 = vpop.f32.mrb[0].mxu0
        %v6401 = vadd.f32 %v5831, %v6400
        %v6402 = vpop.f32.mrb[0].mxu0
        %v6403 = vadd.f32 %v5827, %v6402
        %v6404 = vpop.f32.mrb[0].mxu0
        %v6405 = vadd.f32 %v5831, %v6404
        %6406 = vmatprep.mubr.bf16.mxu0 %v5733
        %6407 = vmatmul.mubr.bf16.gmra.mrb[0].mxu0 %v5732
        %v6408 = vpop.f32.mrb[0].mxu0
        %v6409 = vadd.f32 %v5827, %v6408
        %v6410 = vpop.f32.mrb[0].mxu0
        %v6411 = vadd.f32 %v5831, %v6410
        %v6412 = vpop.f32.mrb[0].mxu0
        %v6413 = vadd.f32 %v5827, %v6412
        %v6414 = vpop.f32.mrb[0].mxu0
        %v6415 = vadd.f32 %v5831, %v6414
        %6416 = vmatprep.mubr.bf16.mxu0 %v5738
        %6417 = vmatmul.mubr.bf16.gmra.mrb[0].mxu0 %v5737
        %v6418 = vpop.f32.mrb[0].mxu0
        %v6419 = vadd.f32 %v5827, %v6418
        %v6420 = vpop.f32.mrb[0].mxu0
        %v6421 = vadd.f32 %v5831, %v6420
        %v6422 = vpop.f32.mrb[0].mxu0
        %v6423 = vadd.f32 %v5827, %v6422
        %v6424 = vpop.f32.mrb[0].mxu0
        %v6425 = vadd.f32 %v5831, %v6424
        %6426 = vdwg.mxu0
        %6427 = vmatprep.subr.bf16.mxu0 %v6107
        %6428 = vmatpush1.bf16.msra.mxu0 %v6106
        %6429 = vmatprep.subr.bf16.mxu0 %v6109
        %6430 = vmatpush1.bf16.msra.mxu0 %v6108
        %6431 = vmatprep.subr.bf16.mxu0 %v6111
        %6432 = vmatpush1.bf16.msra.mxu0 %v6110
        %6433 = vmatprep.subr.bf16.mxu0 %v6113
        %6434 = vmatpush1.bf16.msra.mxu0 %v6112
        %6435 = vmatprep.subr.bf16.mxu0 %v6115
        %6436 = vmatpush1.bf16.msra.mxu0 %v6114
        %6437 = vmatprep.subr.bf16.mxu0 %v6117
        %6438 = vmatpush1.bf16.msra.mxu0 %v6116
        %6439 = vmatprep.subr.bf16.mxu0 %v6119
        %6440 = vmatpush1.bf16.msra.mxu0 %v6118
        %6441 = vmatprep.subr.bf16.mxu0 %v6121
        %6442 = vmatpush1.bf16.msra.mxu0 %v6120
        %6443 = vmatprep.subr.bf16.mxu0 %v6123
        %6444 = vmatpush1.bf16.msra.mxu0 %v6122
        %6445 = vmatprep.subr.bf16.mxu0 %v6125
        %6446 = vmatpush1.bf16.msra.mxu0 %v6124
        %6447 = vmatprep.subr.bf16.mxu0 %v6127
        %6448 = vmatpush1.bf16.msra.mxu0 %v6126
        %6449 = vmatprep.subr.bf16.mxu0 %v6129
        %6450 = vmatpush1.bf16.msra.mxu0 %v6128
        %6451 = vmatprep.subr.bf16.mxu0 %v6131
        %6452 = vmatpush1.bf16.msra.mxu0 %v6130
        %6453 = vmatprep.subr.bf16.mxu0 %v6133
        %6454 = vmatpush1.bf16.msra.mxu0 %v6132
        %6455 = vmatprep.subr.bf16.mxu0 %v6135
        %6456 = vmatpush1.bf16.msra.mxu0 %v6134
        %6457 = vmatprep.subr.bf16.mxu0 %v6137
        %6458 = vmatpush1.bf16.msra.mxu0 %v6136
        %6459 = vmatprep.mubr.bf16.mxu0 %v5665
        %6460 = vmatmul.mubr.bf16.gmra.mrb[0].mxu0 %v5664
        %v6461 = vpop.f32.mrb[0].mxu0
        %v6462 = vadd.f32 %v6269, %v6461
        %v6463 = vpop.f32.mrb[0].mxu0
        %v6464 = vadd.f32 %v6271, %v6463
        %v6465 = vpop.f32.mrb[0].mxu0
        %v6466 = vadd.f32 %v6273, %v6465
        %v6467 = vpop.f32.mrb[0].mxu0
        %v6468 = vadd.f32 %v6275, %v6467
        %6469 = vmatprep.mubr.bf16.mxu0 %v5670
        %6470 = vmatmul.mubr.bf16.gmra.mrb[0].mxu0 %v5669
        %v6471 = vpop.f32.mrb[0].mxu0
        %v6472 = vadd.f32 %v6279, %v6471
        %v6473 = vpop.f32.mrb[0].mxu0
        %v6474 = vadd.f32 %v6281, %v6473
        %v6475 = vpop.f32.mrb[0].mxu0
        %v6476 = vadd.f32 %v6283, %v6475
        %v6477 = vpop.f32.mrb[0].mxu0
        %v6478 = vadd.f32 %v6285, %v6477
        %6479 = vmatprep.mubr.bf16.mxu0 %v5675
        %6480 = vmatmul.mubr.bf16.gmra.mrb[0].mxu0 %v5674
        %v6481 = vpop.f32.mrb[0].mxu0
        %v6482 = vadd.f32 %v6289, %v6481
        %v6483 = vpop.f32.mrb[0].mxu0
        %v6484 = vadd.f32 %v6291, %v6483
        %v6485 = vpop.f32.mrb[0].mxu0
        %v6486 = vadd.f32 %v6293, %v6485
        %v6487 = vpop.f32.mrb[0].mxu0
        %v6488 = vadd.f32 %v6295, %v6487
        %6489 = vmatprep.mubr.bf16.mxu0 %v5680
        %6490 = vmatmul.mubr.bf16.gmra.mrb[0].mxu0 %v5679
        %v6491 = vpop.f32.mrb[0].mxu0
        %v6492 = vadd.f32 %v6299, %v6491
        %v6493 = vpop.f32.mrb[0].mxu0
        %v6494 = vadd.f32 %v6301, %v6493
        %v6495 = vpop.f32.mrb[0].mxu0
        %v6496 = vadd.f32 %v6303, %v6495
        %v6497 = vpop.f32.mrb[0].mxu0
        %v6498 = vadd.f32 %v6305, %v6497
        %6499 = vmatprep.mubr.bf16.mxu0 %v5685
        %6500 = vmatmul.mubr.bf16.gmra.mrb[0].mxu0 %v5684
        %v6501 = vpop.f32.mrb[0].mxu0
        %v6502 = vadd.f32 %v6309, %v6501
        %v6503 = vpop.f32.mrb[0].mxu0
        %v6504 = vadd.f32 %v6311, %v6503
        %v6505 = vpop.f32.mrb[0].mxu0
        %v6506 = vadd.f32 %v6313, %v6505
        %v6507 = vpop.f32.mrb[0].mxu0
        %v6508 = vadd.f32 %v6315, %v6507
        %6509 = vmatprep.mubr.bf16.mxu0 %v5690
        %6510 = vmatmul.mubr.bf16.gmra.mrb[0].mxu0 %v5689
        %v6511 = vpop.f32.mrb[0].mxu0
        %v6512 = vadd.f32 %v6319, %v6511
        %v6513 = vpop.f32.mrb[0].mxu0
        %v6514 = vadd.f32 %v6321, %v6513
        %v6515 = vpop.f32.mrb[0].mxu0
        %v6516 = vadd.f32 %v6323, %v6515
        %v6517 = vpop.f32.mrb[0].mxu0
        %v6518 = vadd.f32 %v6325, %v6517
        %6519 = vmatprep.mubr.bf16.mxu0 %v5695
        %6520 = vmatmul.mubr.bf16.gmra.mrb[0].mxu0 %v5694
        %v6521 = vpop.f32.mrb[0].mxu0
        %v6522 = vadd.f32 %v6329, %v6521
        %v6523 = vpop.f32.mrb[0].mxu0
        %v6524 = vadd.f32 %v6331, %v6523
        %v6525 = vpop.f32.mrb[0].mxu0
        %v6526 = vadd.f32 %v6333, %v6525
        %v6527 = vpop.f32.mrb[0].mxu0
        %v6528 = vadd.f32 %v6335, %v6527
        %6529 = vmatprep.mubr.bf16.mxu0 %v5700
        %6530 = vmatmul.mubr.bf16.gmra.mrb[0].mxu0 %v5699
        %v6531 = vpop.f32.mrb[0].mxu0
        %v6532 = vadd.f32 %v6339, %v6531
        %v6533 = vpop.f32.mrb[0].mxu0
        %v6534 = vadd.f32 %v6341, %v6533
        %v6535 = vpop.f32.mrb[0].mxu0
        %v6536 = vadd.f32 %v6343, %v6535
        %v6537 = vpop.f32.mrb[0].mxu0
        %v6538 = vadd.f32 %v6345, %v6537
        %6539 = vmatprep.mubr.bf16.mxu0 %v5705
        %6540 = vmatmul.mubr.bf16.gmra.mrb[0].mxu0 %v5704
        %v6541 = vpop.f32.mrb[0].mxu0
        %v6542 = vadd.f32 %v6349, %v6541
        %v6543 = vpop.f32.mrb[0].mxu0
        %v6544 = vadd.f32 %v6351, %v6543
        %v6545 = vpop.f32.mrb[0].mxu0
        %v6546 = vadd.f32 %v6353, %v6545
        %v6547 = vpop.f32.mrb[0].mxu0
        %v6548 = vadd.f32 %v6355, %v6547
        %6549 = vmatprep.mubr.bf16.mxu0 %v5710
        %6550 = vmatmul.mubr.bf16.gmra.mrb[0].mxu0 %v5709
        %v6551 = vpop.f32.mrb[0].mxu0
        %v6552 = vadd.f32 %v6359, %v6551
        %v6553 = vpop.f32.mrb[0].mxu0
        %v6554 = vadd.f32 %v6361, %v6553
        %v6555 = vpop.f32.mrb[0].mxu0
        %v6556 = vadd.f32 %v6363, %v6555
        %v6557 = vpop.f32.mrb[0].mxu0
        %v6558 = vadd.f32 %v6365, %v6557
        %6559 = vmatprep.mubr.bf16.mxu0 %v5715
        %6560 = vmatmul.mubr.bf16.gmra.mrb[0].mxu0 %v5714
        %v6561 = vpop.f32.mrb[0].mxu0
        %v6562 = vadd.f32 %v6369, %v6561
        %v6563 = vpop.f32.mrb[0].mxu0
        %v6564 = vadd.f32 %v6371, %v6563
        %v6565 = vpop.f32.mrb[0].mxu0
        %v6566 = vadd.f32 %v6373, %v6565
        %v6567 = vpop.f32.mrb[0].mxu0
        %v6568 = vadd.f32 %v6375, %v6567
        %6569 = vmatprep.mubr.bf16.mxu0 %v5720
        %6570 = vmatmul.mubr.bf16.gmra.mrb[0].mxu0 %v5719
        %v6571 = vpop.f32.mrb[0].mxu0
        %v6572 = vadd.f32 %v6379, %v6571
        %v6573 = vpop.f32.mrb[0].mxu0
        %v6574 = vadd.f32 %v6381, %v6573
        %v6575 = vpop.f32.mrb[0].mxu0
        %v6576 = vadd.f32 %v6383, %v6575
        %v6577 = vpop.f32.mrb[0].mxu0
        %v6578 = vadd.f32 %v6385, %v6577
        %6579 = vmatprep.mubr.bf16.mxu0 %v5725
        %6580 = vmatmul.mubr.bf16.gmra.mrb[0].mxu0 %v5724
        %v6581 = vpop.f32.mrb[0].mxu0
        %v6582 = vadd.f32 %v6389, %v6581
        %v6583 = vpop.f32.mrb[0].mxu0
        %v6584 = vadd.f32 %v6391, %v6583
        %v6585 = vpop.f32.mrb[0].mxu0
        %v6586 = vadd.f32 %v6393, %v6585
        %v6587 = vpop.f32.mrb[0].mxu0
        %v6588 = vadd.f32 %v6395, %v6587
        %6589 = vmatprep.mubr.bf16.mxu0 %v5730
        %6590 = vmatmul.mubr.bf16.gmra.mrb[0].mxu0 %v5729
        %v6591 = vpop.f32.mrb[0].mxu0
        %v6592 = vadd.f32 %v6399, %v6591
        %v6593 = vpop.f32.mrb[0].mxu0
        %v6594 = vadd.f32 %v6401, %v6593
        %v6595 = vpop.f32.mrb[0].mxu0
        %v6596 = vadd.f32 %v6403, %v6595
        %v6597 = vpop.f32.mrb[0].mxu0
        %v6598 = vadd.f32 %v6405, %v6597
        %6599 = vmatprep.mubr.bf16.mxu0 %v5735
        %6600 = vmatmul.mubr.bf16.gmra.mrb[0].mxu0 %v5734
        %v6601 = vpop.f32.mrb[0].mxu0
        %v6602 = vadd.f32 %v6409, %v6601
        %v6603 = vpop.f32.mrb[0].mxu0
        %v6604 = vadd.f32 %v6411, %v6603
        %v6605 = vpop.f32.mrb[0].mxu0
        %v6606 = vadd.f32 %v6413, %v6605
        %v6607 = vpop.f32.mrb[0].mxu0
        %v6608 = vadd.f32 %v6415, %v6607
        %6609 = vmatprep.mubr.bf16.mxu0 %v5740
        %6610 = vmatmul.mubr.bf16.gmra.mrb[0].mxu0 %v5739
        %v6611 = vpop.f32.mrb[0].mxu0
        %v6612 = vadd.f32 %v6419, %v6611
        %v6613 = vpop.f32.mrb[0].mxu0
        %v6614 = vadd.f32 %v6421, %v6613
        %v6615 = vpop.f32.mrb[0].mxu0
        %v6616 = vadd.f32 %v6423, %v6615
        %v6617 = vpop.f32.mrb[0].mxu0
        %v6618 = vadd.f32 %v6425, %v6617
        %6619 = vdwg.mxu0
        %6620 = vmatprep.subr.bf16.mxu0 %v6139
        %6621 = vmatpush1.bf16.msra.mxu0 %v6138
        %6622 = vmatprep.subr.bf16.mxu0 %v6141
        %6623 = vmatpush1.bf16.msra.mxu0 %v6140
        %6624 = vmatprep.subr.bf16.mxu0 %v6143
        %6625 = vmatpush1.bf16.msra.mxu0 %v6142
        %6626 = vmatprep.subr.bf16.mxu0 %v6145
        %6627 = vmatpush1.bf16.msra.mxu0 %v6144
        %6628 = vmatprep.subr.bf16.mxu0 %v6147
        %6629 = vmatpush1.bf16.msra.mxu0 %v6146
        %6630 = vmatprep.subr.bf16.mxu0 %v6149
        %6631 = vmatpush1.bf16.msra.mxu0 %v6148
        %6632 = vmatprep.subr.bf16.mxu0 %v6151
        %6633 = vmatpush1.bf16.msra.mxu0 %v6150
        %6634 = vmatprep.subr.bf16.mxu0 %v6153
        %6635 = vmatpush1.bf16.msra.mxu0 %v6152
        %6636 = vmatprep.subr.bf16.mxu0 0
        %6637 = vmatpush1.bf16.msra.mxu0 0
        %6638 = vmatprep.subr.bf16.mxu0 0
        %6639 = vmatpush1.bf16.msra.mxu0 0
        %6640 = vmatprep.subr.bf16.mxu0 0
        %6641 = vmatpush1.bf16.msra.mxu0 0
        %6642 = vmatprep.subr.bf16.mxu0 0
        %6643 = vmatpush1.bf16.msra.mxu0 0
        %6644 = vmatprep.subr.bf16.mxu0 0
        %6645 = vmatpush1.bf16.msra.mxu0 0
        %6646 = vmatprep.subr.bf16.mxu0 0
        %6647 = vmatpush1.bf16.msra.mxu0 0
        %6648 = vmatprep.subr.bf16.mxu0 0
        %6649 = vmatpush1.bf16.msra.mxu0 0
        %6650 = vmatprep.subr.bf16.mxu0 0
        %6651 = vmatpush1.bf16.msra.mxu0 0
        %6652 = vmatprep.mubr.bf16.mxu0 0
        %6653 = vmatmul.mubr.bf16.gmra.mrb[0].mxu0 %v5666
        %v6654 = vpop.f32.mrb[0].mxu0
        %v6655 = vadd.f32 %v6462, %v6654
        %v6656 = vpop.f32.mrb[0].mxu0
        %v6657 = vadd.f32 %v6464, %v6656
        %v6658 = vpop.f32.mrb[0].mxu0
        %v6659 = vadd.f32 %v6466, %v6658
        %v6660 = vpop.f32.mrb[0].mxu0
        %v6661 = vadd.f32 %v6468, %v6660
        %6662 = vmatprep.mubr.bf16.mxu0 0
        %6663 = vmatmul.mubr.bf16.gmra.mrb[0].mxu0 %v5671
        %v6664 = vpop.f32.mrb[0].mxu0
        %v6665 = vadd.f32 %v6472, %v6664
        %v6666 = vpop.f32.mrb[0].mxu0
        %v6667 = vadd.f32 %v6474, %v6666
        %v6668 = vpop.f32.mrb[0].mxu0
        %v6669 = vadd.f32 %v6476, %v6668
        %v6670 = vpop.f32.mrb[0].mxu0
        %v6671 = vadd.f32 %v6478, %v6670
        %6672 = vmatprep.mubr.bf16.mxu0 0
        %6673 = vmatmul.mubr.bf16.gmra.mrb[0].mxu0 %v5676
        %v6674 = vpop.f32.mrb[0].mxu0
        %v6675 = vadd.f32 %v6482, %v6674
        %v6676 = vpop.f32.mrb[0].mxu0
        %v6677 = vadd.f32 %v6484, %v6676
        %v6678 = vpop.f32.mrb[0].mxu0
        %v6679 = vadd.f32 %v6486, %v6678
        %v6680 = vpop.f32.mrb[0].mxu0
        %v6681 = vadd.f32 %v6488, %v6680
        %6682 = vmatprep.mubr.bf16.mxu0 0
        %6683 = vmatmul.mubr.bf16.gmra.mrb[0].mxu0 %v5681
        %v6684 = vpop.f32.mrb[0].mxu0
        %v6685 = vadd.f32 %v6492, %v6684
        %v6686 = vpop.f32.mrb[0].mxu0
        %v6687 = vadd.f32 %v6494, %v6686
        %v6688 = vpop.f32.mrb[0].mxu0
        %v6689 = vadd.f32 %v6496, %v6688
        %v6690 = vpop.f32.mrb[0].mxu0
        %v6691 = vadd.f32 %v6498, %v6690
        %6692 = vmatprep.mubr.bf16.mxu0 0
        %6693 = vmatmul.mubr.bf16.gmra.mrb[0].mxu0 %v5686
        %v6694 = vpop.f32.mrb[0].mxu0
        %v6695 = vadd.f32 %v6502, %v6694
        %v6696 = vpop.f32.mrb[0].mxu0
        %v6697 = vadd.f32 %v6504, %v6696
        %v6698 = vpop.f32.mrb[0].mxu0
        %v6699 = vadd.f32 %v6506, %v6698
        %v6700 = vpop.f32.mrb[0].mxu0
        %v6701 = vadd.f32 %v6508, %v6700
        %6702 = vmatprep.mubr.bf16.mxu0 0
        %6703 = vmatmul.mubr.bf16.gmra.mrb[0].mxu0 %v5691
        %v6704 = vpop.f32.mrb[0].mxu0
        %v6705 = vadd.f32 %v6512, %v6704
        %v6706 = vpop.f32.mrb[0].mxu0
        %v6707 = vadd.f32 %v6514, %v6706
        %v6708 = vpop.f32.mrb[0].mxu0
        %v6709 = vadd.f32 %v6516, %v6708
        %v6710 = vpop.f32.mrb[0].mxu0
        %v6711 = vadd.f32 %v6518, %v6710
        %6712 = vmatprep.mubr.bf16.mxu0 0
        %6713 = vmatmul.mubr.bf16.gmra.mrb[0].mxu0 %v5696
        %v6714 = vpop.f32.mrb[0].mxu0
        %v6715 = vadd.f32 %v6522, %v6714
        %v6716 = vpop.f32.mrb[0].mxu0
        %v6717 = vadd.f32 %v6524, %v6716
        %v6718 = vpop.f32.mrb[0].mxu0
        %v6719 = vadd.f32 %v6526, %v6718
        %v6720 = vpop.f32.mrb[0].mxu0
        %v6721 = vadd.f32 %v6528, %v6720
        %6722 = vmatprep.mubr.bf16.mxu0 0
        %6723 = vmatmul.mubr.bf16.gmra.mrb[0].mxu0 %v5701
        %v6724 = vpop.f32.mrb[0].mxu0
        %v6725 = vadd.f32 %v6532, %v6724
        %v6726 = vpop.f32.mrb[0].mxu0
        %v6727 = vadd.f32 %v6534, %v6726
        %v6728 = vpop.f32.mrb[0].mxu0
        %v6729 = vadd.f32 %v6536, %v6728
        %v6730 = vpop.f32.mrb[0].mxu0
        %v6731 = vadd.f32 %v6538, %v6730
        %6732 = vmatprep.mubr.bf16.mxu0 0
        %6733 = vmatmul.mubr.bf16.gmra.mrb[0].mxu0 %v5706
        %v6734 = vpop.f32.mrb[0].mxu0
        %v6735 = vadd.f32 %v6542, %v6734
        %v6736 = vpop.f32.mrb[0].mxu0
        %v6737 = vadd.f32 %v6544, %v6736
        %v6738 = vpop.f32.mrb[0].mxu0
        %v6739 = vadd.f32 %v6546, %v6738
        %v6740 = vpop.f32.mrb[0].mxu0
        %v6741 = vadd.f32 %v6548, %v6740
        %6742 = vmatprep.mubr.bf16.mxu0 0
        %6743 = vmatmul.mubr.bf16.gmra.mrb[0].mxu0 %v5711
        %v6744 = vpop.f32.mrb[0].mxu0
        %v6745 = vadd.f32 %v6552, %v6744
        %v6746 = vpop.f32.mrb[0].mxu0
        %v6747 = vadd.f32 %v6554, %v6746
        %v6748 = vpop.f32.mrb[0].mxu0
        %v6749 = vadd.f32 %v6556, %v6748
        %v6750 = vpop.f32.mrb[0].mxu0
        %v6751 = vadd.f32 %v6558, %v6750
        %6752 = vmatprep.mubr.bf16.mxu0 0
        %6753 = vmatmul.mubr.bf16.gmra.mrb[0].mxu0 %v5716
        %v6754 = vpop.f32.mrb[0].mxu0
        %v6755 = vadd.f32 %v6562, %v6754
        %v6756 = vpop.f32.mrb[0].mxu0
        %v6757 = vadd.f32 %v6564, %v6756
        %v6758 = vpop.f32.mrb[0].mxu0
        %v6759 = vadd.f32 %v6566, %v6758
        %v6760 = vpop.f32.mrb[0].mxu0
        %v6761 = vadd.f32 %v6568, %v6760
        %6762 = vmatprep.mubr.bf16.mxu0 0
        %6763 = vmatmul.mubr.bf16.gmra.mrb[0].mxu0 %v5721
        %v6764 = vpop.f32.mrb[0].mxu0
        %v6765 = vadd.f32 %v6572, %v6764
        %v6766 = vpop.f32.mrb[0].mxu0
        %v6767 = vadd.f32 %v6574, %v6766
        %v6768 = vpop.f32.mrb[0].mxu0
        %v6769 = vadd.f32 %v6576, %v6768
        %v6770 = vpop.f32.mrb[0].mxu0
        %v6771 = vadd.f32 %v6578, %v6770
        %6772 = vmatprep.mubr.bf16.mxu0 0
        %6773 = vmatmul.mubr.bf16.gmra.mrb[0].mxu0 %v5726
        %v6774 = vpop.f32.mrb[0].mxu0
        %v6775 = vadd.f32 %v6582, %v6774
        %v6776 = vpop.f32.mrb[0].mxu0
        %v6777 = vadd.f32 %v6584, %v6776
        %v6778 = vpop.f32.mrb[0].mxu0
        %v6779 = vadd.f32 %v6586, %v6778
        %v6780 = vpop.f32.mrb[0].mxu0
        %v6781 = vadd.f32 %v6588, %v6780
        %6782 = vmatprep.mubr.bf16.mxu0 0
        %6783 = vmatmul.mubr.bf16.gmra.mrb[0].mxu0 %v5731
        %v6784 = vpop.f32.mrb[0].mxu0
        %v6785 = vadd.f32 %v6592, %v6784
        %v6786 = vpop.f32.mrb[0].mxu0
        %v6787 = vadd.f32 %v6594, %v6786
        %v6788 = vpop.f32.mrb[0].mxu0
        %v6789 = vadd.f32 %v6596, %v6788
        %v6790 = vpop.f32.mrb[0].mxu0
        %v6791 = vadd.f32 %v6598, %v6790
        %6792 = vmatprep.mubr.bf16.mxu0 0
        %6793 = vmatmul.mubr.bf16.gmra.mrb[0].mxu0 %v5736
        %v6794 = vpop.f32.mrb[0].mxu0
        %v6795 = vadd.f32 %v6602, %v6794
        %v6796 = vpop.f32.mrb[0].mxu0
        %v6797 = vadd.f32 %v6604, %v6796
        %v6798 = vpop.f32.mrb[0].mxu0
        %v6799 = vadd.f32 %v6606, %v6798
        %v6800 = vpop.f32.mrb[0].mxu0
        %v6801 = vadd.f32 %v6608, %v6800
        %6802 = vmatprep.mubr.bf16.mxu0 0
        %6803 = vmatmul.mubr.bf16.gmra.mrb[0].mxu0 %v5741
        %v6804 = vpop.f32.mrb[0].mxu0
        %v6805 = vadd.f32 %v6612, %v6804
        %v6806 = vpop.f32.mrb[0].mxu0
        %v6807 = vadd.f32 %v6614, %v6806
        %v6808 = vpop.f32.mrb[0].mxu0
        %v6809 = vadd.f32 %v6616, %v6808
        %v6810 = vpop.f32.mrb[0].mxu0
        %v6811 = vadd.f32 %v6618, %v6810
        %6812 = vdwg.mxu0
        %v6813 = vadd.f32 %v1643, %v6655
        %v6814 = vadd.f32 %v1644, %v6657
        %v6815 = vadd.f32 %v1645, %v6659
        %v6816 = vadd.f32 %v1646, %v6661
        %v6817 = vadd.f32 %v1647, %v6665
        %v6818 = vadd.f32 %v1648, %v6667
        %v6819 = vadd.f32 %v1649, %v6669
        %v6820 = vadd.f32 %v1650, %v6671
        %v6821 = vadd.f32 %v1651, %v6675
        %v6822 = vadd.f32 %v1652, %v6677
        %v6823 = vadd.f32 %v1653, %v6679
        %v6824 = vadd.f32 %v1654, %v6681
        %v6825 = vadd.f32 %v1655, %v6685
        %v6826 = vadd.f32 %v1656, %v6687
        %v6827 = vadd.f32 %v1657, %v6689
        %v6828 = vadd.f32 %v1658, %v6691
        %v6829 = vadd.f32 %v1659, %v6695
        %v6830 = vadd.f32 %v1660, %v6697
        %v6831 = vadd.f32 %v1661, %v6699
        %v6832 = vadd.f32 %v1662, %v6701
        %v6833 = vadd.f32 %v1663, %v6705
        %v6834 = vadd.f32 %v1664, %v6707
        %v6835 = vadd.f32 %v1665, %v6709
        %v6836 = vadd.f32 %v1666, %v6711
        %v6837 = vadd.f32 %v1667, %v6715
        %v6838 = vadd.f32 %v1668, %v6717
        %v6839 = vadd.f32 %v1669, %v6719
        %v6840 = vadd.f32 %v1670, %v6721
        %v6841 = vadd.f32 %v1671, %v6725
        %v6842 = vadd.f32 %v1672, %v6727
        %v6843 = vadd.f32 %v1673, %v6729
        %v6844 = vadd.f32 %v1674, %v6731
        %v6845 = vadd.f32 %v1675, %v6735
        %v6846 = vadd.f32 %v1676, %v6737
        %v6847 = vadd.f32 %v1677, %v6739
        %v6848 = vadd.f32 %v1678, %v6741
        %v6849 = vadd.f32 %v1679, %v6745
        %v6850 = vadd.f32 %v1680, %v6747
        %v6851 = vadd.f32 %v1681, %v6749
        %v6852 = vadd.f32 %v1682, %v6751
        %v6853 = vadd.f32 %v1683, %v6755
        %v6854 = vadd.f32 %v1684, %v6757
        %v6855 = vadd.f32 %v1685, %v6759
        %v6856 = vadd.f32 %v1686, %v6761
        %v6857 = vadd.f32 %v1687, %v6765
        %v6858 = vadd.f32 %v1688, %v6767
        %v6859 = vadd.f32 %v1689, %v6769
        %v6860 = vadd.f32 %v1690, %v6771
        %v6861 = vadd.f32 %v1691, %v6775
        %v6862 = vadd.f32 %v1692, %v6777
        %v6863 = vadd.f32 %v1693, %v6779
        %v6864 = vadd.f32 %v1694, %v6781
        %v6865 = vadd.f32 %v1695, %v6785
        %v6866 = vadd.f32 %v1696, %v6787
        %v6867 = vadd.f32 %v1697, %v6789
        %v6868 = vadd.f32 %v1698, %v6791
        %v6869 = vadd.f32 %v1699, %v6795
        %v6870 = vadd.f32 %v1700, %v6797
        %v6871 = vadd.f32 %v1701, %v6799
        %v6872 = vadd.f32 %v1702, %v6801
        %v6873 = vadd.f32 %v1703, %v6805
        %v6874 = vadd.f32 %v1704, %v6807
        %v6875 = vadd.f32 %v1705, %v6809
        %v6876 = vadd.f32 %v1706, %v6811
        %v6877 = vpack.c.bf16 %v6815, %v6813
        %v6878 = vpack.c.bf16 %v6816, %v6814
        %v6879 = vpack.c.bf16 %v6819, %v6817
        %v6880 = vpack.c.bf16 %v6820, %v6818
        %v6881 = vpack.c.bf16 %v6823, %v6821
        %v6882 = vpack.c.bf16 %v6824, %v6822
        %v6883 = vpack.c.bf16 %v6827, %v6825
        %v6884 = vpack.c.bf16 %v6828, %v6826
        %v6885 = vpack.c.bf16 %v6831, %v6829
        %v6886 = vpack.c.bf16 %v6832, %v6830
        %v6887 = vpack.c.bf16 %v6835, %v6833
        %v6888 = vpack.c.bf16 %v6836, %v6834
        %v6889 = vpack.c.bf16 %v6839, %v6837
        %v6890 = vpack.c.bf16 %v6840, %v6838
        %v6891 = vpack.c.bf16 %v6843, %v6841
        %v6892 = vpack.c.bf16 %v6844, %v6842
        %v6893 = vpack.c.bf16 %v6847, %v6845
        %v6894 = vpack.c.bf16 %v6848, %v6846
        %v6895 = vpack.c.bf16 %v6851, %v6849
        %v6896 = vpack.c.bf16 %v6852, %v6850
        %v6897 = vpack.c.bf16 %v6855, %v6853
        %v6898 = vpack.c.bf16 %v6856, %v6854
        %v6899 = vpack.c.bf16 %v6859, %v6857
        %v6900 = vpack.c.bf16 %v6860, %v6858
        %v6901 = vpack.c.bf16 %v6863, %v6861
        %v6902 = vpack.c.bf16 %v6864, %v6862
        %v6903 = vpack.c.bf16 %v6867, %v6865
        %v6904 = vpack.c.bf16 %v6868, %v6866
        %v6905 = vpack.c.bf16 %v6871, %v6869
        %v6906 = vpack.c.bf16 %v6872, %v6870
        %v6907 = vpack.c.bf16 %v6875, %v6873
        %v6908 = vpack.c.bf16 %v6876, %v6874
        %v6941 = vunpack.c.l.b16 %v6877
        %v6942 = vunpack.c.l.b16 %v6878
        %v6943 = vunpack.c.h.b16 %v6877
        %v6944 = vunpack.c.h.b16 %v6878
        %v6945 = vunpack.c.l.b16 %v6879
        %v6946 = vunpack.c.l.b16 %v6880
        %v6947 = vunpack.c.h.b16 %v6879
        %v6948 = vunpack.c.h.b16 %v6880
        %v6949 = vunpack.c.l.b16 %v6881
        %v6950 = vunpack.c.l.b16 %v6882
        %v6951 = vunpack.c.h.b16 %v6881
        %v6952 = vunpack.c.h.b16 %v6882
        %v6953 = vunpack.c.l.b16 %v6883
        %v6954 = vunpack.c.l.b16 %v6884
        %v6955 = vunpack.c.h.b16 %v6883
        %v6956 = vunpack.c.h.b16 %v6884
        %v6957 = vunpack.c.l.b16 %v6885
        %v6958 = vunpack.c.l.b16 %v6886
        %v6959 = vunpack.c.h.b16 %v6885
        %v6960 = vunpack.c.h.b16 %v6886
        %v6961 = vunpack.c.l.b16 %v6887
        %v6962 = vunpack.c.l.b16 %v6888
        %v6963 = vunpack.c.h.b16 %v6887
        %v6964 = vunpack.c.h.b16 %v6888
        %v6965 = vunpack.c.l.b16 %v6889
        %v6966 = vunpack.c.l.b16 %v6890
        %v6967 = vunpack.c.h.b16 %v6889
        %v6968 = vunpack.c.h.b16 %v6890
        %v6969 = vunpack.c.l.b16 %v6891
        %v6970 = vunpack.c.l.b16 %v6892
        %v6971 = vunpack.c.h.b16 %v6891
        %v6972 = vunpack.c.h.b16 %v6892
        %v6973 = vunpack.c.l.b16 %v6893
        %v6974 = vunpack.c.l.b16 %v6894
        %v6975 = vunpack.c.h.b16 %v6893
        %v6976 = vunpack.c.h.b16 %v6894
        %v6977 = vunpack.c.l.b16 %v6895
        %v6978 = vunpack.c.l.b16 %v6896
        %v6979 = vunpack.c.h.b16 %v6895
        %v6980 = vunpack.c.h.b16 %v6896
        %v6981 = vunpack.c.l.b16 %v6897
        %v6982 = vunpack.c.l.b16 %v6898
        %v6983 = vunpack.c.h.b16 %v6897
        %v6984 = vunpack.c.h.b16 %v6898
        %v6985 = vunpack.c.l.b16 %v6899
        %v6986 = vunpack.c.l.b16 %v6900
        %v6987 = vunpack.c.h.b16 %v6899
        %v6988 = vunpack.c.h.b16 %v6900
        %v6989 = vunpack.c.l.b16 %v6901
        %v6990 = vunpack.c.l.b16 %v6902
        %v6991 = vunpack.c.h.b16 %v6901
        %v6992 = vunpack.c.h.b16 %v6902
        %v6993 = vunpack.c.l.b16 %v6903
        %v6994 = vunpack.c.l.b16 %v6904
        %v6995 = vunpack.c.h.b16 %v6903
        %v6996 = vunpack.c.h.b16 %v6904
        %v6997 = vunpack.c.l.b16 %v6905
        %v6998 = vunpack.c.l.b16 %v6906
        %v6999 = vunpack.c.h.b16 %v6905
        %v7000 = vunpack.c.h.b16 %v6906
        %v7001 = vunpack.c.l.b16 %v6907
        %v7002 = vunpack.c.l.b16 %v6908
        %v7003 = vunpack.c.h.b16 %v6907
        %v7004 = vunpack.c.h.b16 %v6908
        %v7005 = vpack.c.b16 %v6942, %v6941
        %v7006 = vpack.c.b16 %v6944, %v6943
        %v7007 = vpack.c.b16 %v6946, %v6945
        %v7008 = vpack.c.b16 %v6948, %v6947
        %v7009 = vpack.c.b16 %v6950, %v6949
        %v7010 = vpack.c.b16 %v6952, %v6951
        %v7011 = vpack.c.b16 %v6954, %v6953
        %v7012 = vpack.c.b16 %v6956, %v6955
        %v7013 = vpack.c.b16 %v6958, %v6957
        %v7014 = vpack.c.b16 %v6960, %v6959
        %v7015 = vpack.c.b16 %v6962, %v6961
        %v7016 = vpack.c.b16 %v6964, %v6963
        %v7017 = vpack.c.b16 %v6966, %v6965
        %v7018 = vpack.c.b16 %v6968, %v6967
        %v7019 = vpack.c.b16 %v6970, %v6969
        %v7020 = vpack.c.b16 %v6972, %v6971
        %v7021 = vpack.c.b16 %v6974, %v6973
        %v7022 = vpack.c.b16 %v6976, %v6975
        %v7023 = vpack.c.b16 %v6978, %v6977
        %v7024 = vpack.c.b16 %v6980, %v6979
        %v7025 = vpack.c.b16 %v6982, %v6981
        %v7026 = vpack.c.b16 %v6984, %v6983
        %v7027 = vpack.c.b16 %v6986, %v6985
        %v7028 = vpack.c.b16 %v6988, %v6987
        %v7029 = vpack.c.b16 %v6990, %v6989
        %v7030 = vpack.c.b16 %v6992, %v6991
        %v7031 = vpack.c.b16 %v6994, %v6993
        %v7032 = vpack.c.b16 %v6996, %v6995
        %v7033 = vpack.c.b16 %v6998, %v6997
        %v7034 = vpack.c.b16 %v7000, %v6999
        %v7035 = vpack.c.b16 %v7002, %v7001
        %v7036 = vpack.c.b16 %v7004, %v7003
        %7069 = vst [vmem:[%s449] sm:$0xff] %v7005
        %7070 = vst [vmem:[%s449 + $0x8] sm:$0xff] %v7006
        %7071 = vst [vmem:[%s449 + $0x10] sm:$0xff] %v7007
        %7072 = vst [vmem:[%s449 + $0x18] sm:$0xff] %v7008
        %7073 = vst [vmem:[%s449 + $0x20] sm:$0xff] %v7009
        %7074 = vst [vmem:[%s449 + $0x28] sm:$0xff] %v7010
        %7075 = vst [vmem:[%s449 + $0x30] sm:$0xff] %v7011
        %7076 = vst [vmem:[%s449 + $0x38] sm:$0xff] %v7012
        %7077 = vst [vmem:[%s449 + $0x40] sm:$0xff] %v7013
        %7078 = vst [vmem:[%s449 + $0x48] sm:$0xff] %v7014
        %7079 = vst [vmem:[%s449 + $0x50] sm:$0xff] %v7015
        %7080 = vst [vmem:[%s449 + $0x58] sm:$0xff] %v7016
        %7081 = vst [vmem:[%s449 + $0x60] sm:$0xff] %v7017
        %7082 = vst [vmem:[%s449 + $0x68] sm:$0xff] %v7018
        %7083 = vst [vmem:[%s449 + $0x70] sm:$0xff] %v7019
        %7084 = vst [vmem:[%s449 + $0x78] sm:$0xff] %v7020
        %7085 = vst [vmem:[%s449 + $0x80] sm:$0xff] %v7021
        %7086 = vst [vmem:[%s449 + $0x88] sm:$0xff] %v7022
        %7087 = vst [vmem:[%s449 + $0x90] sm:$0xff] %v7023
        %7088 = vst [vmem:[%s449 + $0x98] sm:$0xff] %v7024
        %7089 = vst [vmem:[%s449 + $0xa0] sm:$0xff] %v7025
        %7090 = vst [vmem:[%s449 + $0xa8] sm:$0xff] %v7026
        %7091 = vst [vmem:[%s449 + $0xb0] sm:$0xff] %v7027
        %7092 = vst [vmem:[%s449 + $0xb8] sm:$0xff] %v7028
        %7093 = vst [vmem:[%s449 + $0xc0] sm:$0xff] %v7029
        %7094 = vst [vmem:[%s449 + $0xc8] sm:$0xff] %v7030
        %7095 = vst [vmem:[%s449 + $0xd0] sm:$0xff] %v7031
        %7096 = vst [vmem:[%s449 + $0xd8] sm:$0xff] %v7032
        %7097 = vst [vmem:[%s449 + $0xe0] sm:$0xff] %v7033
        %7098 = vst [vmem:[%s449 + $0xe8] sm:$0xff] %v7034
        %7099 = vst [vmem:[%s449 + $0xf0] sm:$0xff] %v7035
        %7100 = vst [vmem:[%s449 + $0xf8] sm:$0xff] %v7036
        %s7101 = sand.u32 %s274, 1
        %s7102 = scalar_lea.sflag [#allocation4], %s7101
        %s7103 = sand.u32 %s274, 1
        %s7104 = smul.addr %s7103, 256
        %s7105 = scalar_lea.vmem [#allocation10], %s7104
        // Predicated region
        $region81: #{tpu_custom_call.1} parent=63 // pred_check
          %p7106 = pneg %p284
        $region82: #{tpu_custom_call.1} parent=63 // pred_check_branch
          %7108 = sbr.rel (%p7106) target = $region84
        $region83: #{tpu_custom_call.1} parent=63 // pred_region
          %s7109 = smul.u32 32, %s30
          %s7111 = ssub.s32 4096, 4096
          %7112 = vsyncadd %s7102, %s7111
          %s7113 = smul.addr %s7109, 2
          %s7114 = smul.addr %s7113, 64
          %s7115 = scalar_lea.hbm %s11, %s7114
          %s7116 = sshll.u32 %s7105, 4
          %s7117 = int_to_ptr.vmem [resolvable:$true] %s7116
          %7122 = dma.vmem_to_hbm [thread:$0]  %s7117, 4096, %s7115, %s7102, 128, 128, 8
        $region84: #{tpu_custom_call.1} parent=63 // pred_fallthru
          _
      $region64: #{tpu_custom_call.1} parent=5 // pred_fallthru
        _
      %p7123 = scmp.le.s32.totalorder 2, %s25
      // Predicated region
      $region85: #{tpu_custom_call.1} parent=5 // pred_check
        %p7124 = pneg %p7123
      $region86: #{tpu_custom_call.1} parent=5 // pred_check_branch
        %7126 = sbr.rel (%p7124) target = $region88
      $region87: #{tpu_custom_call.1} parent=5 // pred_region
        %s7127 = ssub.s32 %s25, 2
        // Predicated region
        $region89: #{tpu_custom_call.1} parent=87 // pred_check
          %p7128 = pneg %p290
        $region90: #{tpu_custom_call.1} parent=87 // pred_check_branch
          %7130 = sbr.rel (%p7128) target = $region92
        $region91: #{tpu_custom_call.1} parent=87 // pred_region
          %s7131 = sand.u32 %s275, 1
          %s7132 = scalar_lea.sflag [#allocation4], %s7131
          %s7133 = sand.u32 %s275, 1
          %s7134 = smul.addr %s7133, 256
          %s7135 = scalar_lea.vmem [#allocation10], %s7134
          %7136 = dma.done %s7132, 4096
        $region92: #{tpu_custom_call.1} parent=87 // pred_fallthru
          _
      $region88: #{tpu_custom_call.1} parent=5 // pred_fallthru
        _
    $region6: #{tpu_custom_call.1} parent=1 // loop_footer
      %s29 = sadd.s32 1, %s25
    $region7: #{tpu_custom_call.1} parent=1 // loop_footer_branch
      %24 = sbr.rel target = $region3
    $region8: #{tpu_custom_call.1} parent=1 // loop_exit
      _
    %7137 = vsyncpa [#allocation3], 1
    %s7138 = scalar_lea.sflag [#allocation3], 1
    %7139 = vsyncpa %s7138, 1
    %7140 = vsyncpa [#allocation6], 1
    %7141 = vsyncpa [#allocation9], 1
    %7142 = vsyncpa [#allocation4], 1
    %s7143 = scalar_lea.sflag [#allocation4], 1
    %7144 = vsyncpa %s7143, 1

</llo_original>
